<compile_context>
chip_gen: v6e
topology: v6e:2x2x1
jax: 0.10.0
libtpu: 0.0.40
codegen_flags: <defaults>
</compile_context>

<pallas_src>
import math

import jax
import jax.numpy as jnp
from jax.experimental import pallas as pl
from jax.experimental.pallas import tpu as pltpu

H_DIM = 128          # module's self.h_dim
BN_EPS = 1e-5        # nn.BatchNorm1d default eps


def _softplus(x):
    # torch.nn.Softplus(beta=1, threshold=20)
    return jnp.where(x > 20.0, x, jnp.log1p(jnp.exp(jnp.minimum(x, 20.0))))


def _bn_train_fused(x, gamma, beta):
    # Training-mode BatchNorm1d with biased batch stats, single reduction pass:
    # scale = gamma * rsqrt(var + eps), shift = beta - mean * scale.
    mean = jnp.mean(x, axis=0, keepdims=True)
    mean_sq = jnp.mean(x * x, axis=0, keepdims=True)
    var = jnp.maximum(mean_sq - mean * mean, 0.0)
    scale = gamma * jax.lax.rsqrt(var + BN_EPS)
    shift = beta - mean * scale
    return x * scale + shift


def _make_kernel(u_max, T, B, z_dim, u_dim, h_dim):
    H = h_dim
    f32 = jnp.float32
    bf16 = jnp.bfloat16

    def kernel(z0_ref, c_ref, u_ref, eps_ref,
               we1, be1, g1, bt1, we2, be2,       # encode
               wih, whh, b_lstm,                  # LSTM (u path on VPU, h path on MXU)
               w_ms1, b_ms1, g_ms, bt_ms,         # fused mu|sigma first layer + BN
               w_out, b_out,                      # block-diag output projection
               z_pred_ref):
        # ---- hoisted loads / broadcasts (reused every unrolled step) ----
        cv = c_ref[...]                                    # (B, H) f32, never advances
        we1_v = we1[...]                                   # (z_dim, H) f32 (VPU path)
        wih_v = wih[...]                                   # (u_dim, 4H) f32 (VPU path)
        g1_v, bt1_v = g1[...], bt1[...]
        g_ms_v, bt_ms_v = g_ms[...], bt_ms[...]
        be1_b = jnp.broadcast_to(be1[...], (B, H))
        be2_b = jnp.broadcast_to(be2[...], (B, H))
        b_lstm_b = jnp.broadcast_to(b_lstm[...], (B, 4 * H))
        b_ms1_b = jnp.broadcast_to(b_ms1[...], (B, 2 * H))
        b_out_b = jnp.broadcast_to(b_out[...], (B, 2 * z_dim))

        zv = z0_ref[...]                                   # (B, z_dim) f32, loop carry
        for t in range(T):                                 # static unroll (T is small)
            # ---- encode(z): Linear(K=z_dim on VPU) -> Sigmoid -> BN(train) -> Linear ----
            e = be1_b
            for k in range(z_dim):                         # K<=4: broadcast-FMAs, f32
                e = e + zv[:, k:k + 1] * we1_v[k:k + 1, :]
            e = _bn_train_fused(jax.nn.sigmoid(e), g1_v, bt1_v)
            h0 = jnp.dot(e.astype(bf16), we2[...], preferred_element_type=f32) + be2_b

            # ---- single-step LSTM cell; recurrent matmul K=H on MXU, u path on VPU ----
            u_t = jnp.clip(u_ref[t], -u_max, u_max)        # (B, u_dim) f32
            gates = jnp.dot(h0.astype(bf16), whh[...], preferred_element_type=f32) + b_lstm_b
            for k in range(u_dim):                         # K<=4: broadcast-FMAs, f32
                gates = gates + u_t[:, k:k + 1] * wih_v[k:k + 1, :]
            i_g = jax.nn.sigmoid(gates[:, 0 * H:1 * H])
            f_g = jax.nn.sigmoid(gates[:, 1 * H:2 * H])
            g_g = jnp.tanh(gates[:, 2 * H:3 * H])
            o_g = jax.nn.sigmoid(gates[:, 3 * H:4 * H])
            c_new = f_g * cv + i_g * g_g                   # c_new discarded (forward()
            trans = o_g * jnp.tanh(c_new)                  #   returns the input c)

            # ---- fused mu|sigma heads: one 256-wide Linear -> Sigmoid -> BN ----
            ms = jax.nn.sigmoid(
                jnp.dot(trans.astype(bf16), w_ms1[...], preferred_element_type=f32) + b_ms1_b)
            ms = _bn_train_fused(ms, g_ms_v, bt_ms_v)
            # block-diagonal output projection: [m@wm2 | s@ws2] in one matmul
            out = jnp.dot(ms.astype(bf16), w_out[...], preferred_element_type=f32) + b_out_b
            mu = out[:, :z_dim]
            sigma = _softplus(out[:, z_dim:])

            # Normal(mu, sigma).rsample() with externally supplied standard-normal noise.
            zv = mu + sigma * eps_ref[t]
            z_pred_ref[t] = zv                             # VMEM store; HBM writeback once

    return kernel


def simple_filter_rollout(z0, u_seq, c0, eps_seq, packed, *, u_max):
    """Run T recurrent forward() steps in a single-program pallas_call
    (weights + sequence fully VMEM-resident, time loop unrolled in-kernel)."""
    T, B, u_dim = u_seq.shape
    z_dim = z0.shape[1]
    h_dim = c0.shape[1]

    operands = (z0, c0, u_seq, eps_seq) + tuple(packed)
    vmem_spec = pl.BlockSpec(memory_space=pltpu.MemorySpace.VMEM)

    z_pred = pl.pallas_call(
        _make_kernel(float(u_max), T, B, z_dim, u_dim, h_dim),
        out_shape=jax.ShapeDtypeStruct((T, B, z_dim), jnp.float32),
        in_specs=[vmem_spec] * len(operands),
        out_specs=vmem_spec,
    )(*operands)
    # forward() returns the *input* cell state c, so c never advances across steps.
    return z_pred, c0


def simple_filter_forward(z, u, c, eps, packed, *, u_max):
    """Single-step SimpleFilter.forward(z, u, c) -> (z_, c). T=1 path of the rollout."""
    if c is None:
        c = jnp.zeros((u.shape[0], H_DIM), jnp.float32)
    z_pred, _ = simple_filter_rollout(z, u[None], c, eps[None], packed, u_max=u_max)
    return z_pred[0], c


# ---------------------------------------------------------------------------
# Parameter construction (PyTorch-style init) and packing (fusion + bf16 cast)
# ---------------------------------------------------------------------------
def init_raw_params(key, z_dim, u_dim, h_dim):
    """PyTorch-style init: U(-1/sqrt(fan_in), 1/sqrt(fan_in)); BN gamma=1, beta=0.
    Linear weights stored transposed as (in_features, out_features)."""
    ks = iter(jax.random.split(key, 16))

    def lin(k, fan_in, fan_out):
        bound = 1.0 / math.sqrt(fan_in)
        kw, kb = jax.random.split(k)
        w = jax.random.uniform(kw, (fan_in, fan_out), jnp.float32, -bound, bound)
        b = jax.random.uniform(kb, (1, fan_out), jnp.float32, -bound, bound)
        return w, b

    ones = jnp.ones((1, h_dim), jnp.float32)
    zeros = jnp.zeros((1, h_dim), jnp.float32)

    we1, be1 = lin(next(ks), z_dim, h_dim)          # encode Linear 1
    g1, bt1 = ones, zeros                           # encode BN
    we2, be2 = lin(next(ks), h_dim, h_dim)          # encode Linear 2

    bound = 1.0 / math.sqrt(h_dim)                  # LSTM: U(-1/sqrt(h), 1/sqrt(h))
    wih = jax.random.uniform(next(ks), (u_dim, 4 * h_dim), jnp.float32, -bound, bound)
    whh = jax.random.uniform(next(ks), (h_dim, 4 * h_dim), jnp.float32, -bound, bound)
    bih = jax.random.uniform(next(ks), (1, 4 * h_dim), jnp.float32, -bound, bound)
    bhh = jax.random.uniform(next(ks), (1, 4 * h_dim), jnp.float32, -bound, bound)

    wm1, bm1 = lin(next(ks), h_dim, h_dim)          # q_trans_mu
    gm, btm = ones, zeros
    wm2, bm2 = lin(next(ks), h_dim, z_dim)

    ws1, bs1 = lin(next(ks), h_dim, h_dim)          # q_trans_sigma
    gs, bts = ones, zeros
    ws2, bs2 = lin(next(ks), h_dim, z_dim)

    return (we1, be1, g1, bt1, we2, be2,
            wih, whh, bih, bhh,
            wm1, bm1, gm, btm, wm2, bm2,
            ws1, bs1, gs, bts, ws2, bs2)


def pack_params(raw, z_dim, u_dim, h_dim):
    """Fuse / cast the raw PyTorch-style params into the kernel layout.
    we1 and wih stay f32 (VPU broadcast-FMA paths); MXU weights are bf16."""
    (we1, be1, g1, bt1, we2, be2,
     wih, whh, bih, bhh,
     wm1, bm1, gm, btm, wm2, bm2,
     ws1, bs1, gs, bts, ws2, bs2) = raw
    bf16 = jnp.bfloat16

    b_lstm = bih + bhh                               # biases folded

    # mu|sigma first layer fused to one 256-wide pass.
    w_ms1 = jnp.concatenate([wm1, ws1], axis=1).astype(bf16)
    b_ms1 = jnp.concatenate([bm1, bs1], axis=1)
    g_ms = jnp.concatenate([gm, gs], axis=1)
    bt_ms = jnp.concatenate([btm, bts], axis=1)

    # block-diag output projection: [m|s] @ blockdiag(wm2, ws2) = [m@wm2 | s@ws2].
    w_out = jnp.zeros((2 * h_dim, 2 * z_dim), jnp.float32)
    w_out = w_out.at[:h_dim, :z_dim].set(wm2).at[h_dim:, z_dim:].set(ws2).astype(bf16)
    b_out = jnp.concatenate([bm2, bs2], axis=1)

    return (we1, be1, g1, bt1, we2.astype(bf16), be2,
            wih, whh.astype(bf16), b_lstm,
            w_ms1, b_ms1, g_ms, bt_ms,
            w_out, b_out)


# ---------------------------------------------------------------------------
# Plain-JAX references (for correctness checks)
# ---------------------------------------------------------------------------
def _bn_ref(x, gamma, beta):
    mean = jnp.mean(x, axis=0, keepdims=True)
    var = jnp.mean((x - mean) ** 2, axis=0, keepdims=True)
    return (x - mean) * jax.lax.rsqrt(var + BN_EPS) * gamma + beta


def reference_step(z, u, c, eps, raw, u_max, mxu_bf16=False):
    """Unfused reference of SimpleFilter.forward.  mxu_bf16=True mimics the kernel's
    quantization (bf16 on the MXU-path weights only; z@we1 and u@wih stay f32)."""
    (we1, be1, g1, bt1, we2, be2,
     wih, whh, bih, bhh,
     wm1, bm1, gm, btm, wm2, bm2,
     ws1, bs1, gs, bts, ws2, bs2) = raw

    def mm_mxu(x, w):
        if mxu_bf16:
            return jnp.dot(x.astype(jnp.bfloat16), w.astype(jnp.bfloat16),
                           preferred_element_type=jnp.float32)
        return jnp.dot(x, w, preferred_element_type=jnp.float32)

    def mm_f32(x, w):
        return jnp.dot(x, w, preferred_element_type=jnp.float32)

    uv = jnp.clip(u, -u_max, u_max)
    e = _bn_ref(jax.nn.sigmoid(mm_f32(z, we1) + be1), g1, bt1)
    h0 = mm_mxu(e, we2) + be2
    gates = mm_f32(uv, wih) + bih + mm_mxu(h0, whh) + bhh
    H = whh.shape[0]
    i_g = jax.nn.sigmoid(gates[:, :H])
    f_g = jax.nn.sigmoid(gates[:, H:2 * H])
    g_g = jnp.tanh(gates[:, 2 * H:3 * H])
    o_g = jax.nn.sigmoid(gates[:, 3 * H:])
    c_new = f_g * c + i_g * g_g
    trans = o_g * jnp.tanh(c_new)
    m = _bn_ref(jax.nn.sigmoid(mm_mxu(trans, wm1) + bm1), gm, btm)
    mu = mm_mxu(m, wm2) + bm2
    s = _bn_ref(jax.nn.sigmoid(mm_mxu(trans, ws1) + bs1), gs, bts)
    sigma = _softplus(mm_mxu(s, ws2) + bs2)
    return mu + sigma * eps, c       # forward() returns the INPUT c


def reference_rollout(z0, u_seq, c0, eps_seq, raw, u_max, mxu_bf16=False):
    z, c = z0, c0
    zs = []
    for t in range(u_seq.shape[0]):
        z, c = reference_step(z, u_seq[t], c, eps_seq[t], raw, u_max, mxu_bf16)
        zs.append(z)
    return jnp.stack(zs, axis=0), c


if __name__ == "__main__":
    # Small shapes consistent with the module: batch=8, z_dim=4, u_dim=2, h_dim=128, T=8.
    B, z_dim, u_dim, h_dim, T, u_max = 8, 4, 2, H_DIM, 8, 1.0

    key = jax.random.PRNGKey(0)
    kz, ku, ke, kc, kp = jax.random.split(key, 5)
    z0 = jax.random.normal(kz, (B, z_dim), jnp.float32)
    u_seq = 2.0 * jax.random.normal(ku, (T, B, u_dim), jnp.float32)   # exercises the clamp
    eps_seq = jax.random.normal(ke, (T, B, z_dim), jnp.float32)       # noise for rsample()
    c0 = jnp.zeros((B, h_dim), jnp.float32)                           # c=None path

    raw = init_raw_params(kp, z_dim, u_dim, h_dim)
    packed = pack_params(raw, z_dim, u_dim, h_dim)

    # ---- multi-step rollout: one kernel program, everything VMEM-resident ----
    z_pred, c_out = simple_filter_rollout(z0, u_seq, c0, eps_seq, packed, u_max=u_max)
    jax.block_until_ready(z_pred)
    assert z_pred.shape == (T, B, z_dim) and c_out.shape == (B, h_dim)

    # quantization-matched reference (bf16 MXU weights, f32 accumulation, unfused)
    z_ref_q, _ = reference_rollout(z0, u_seq, c0, eps_seq, raw, u_max, mxu_bf16=True)
    assert jnp.allclose(z_pred, z_ref_q, atol=2e-2, rtol=2e-2)
    # pure-f32 reference of the original PyTorch math (looser: bf16 weight quantization)
    z_ref_f, _ = reference_rollout(z0, u_seq, c0, eps_seq, raw, u_max, mxu_bf16=False)
    assert jnp.allclose(z_pred, z_ref_f, atol=6e-2, rtol=6e-2)
    assert jnp.allclose(c_out, c0)   # forward() returns the input c

    # ---- single-step forward(z, u, c) API with a nonzero cell state ----
    c1 = jax.random.normal(kc, (B, h_dim), jnp.float32)
    z1, c1_out = simple_filter_forward(z0, u_seq[0], c1, eps_seq[0], packed, u_max=u_max)
    jax.block_until_ready(z1)
    z1_ref, _ = reference_step(z0, u_seq[0], c1, eps_seq[0], raw, u_max, mxu_bf16=True)
    assert jnp.allclose(z1, z1_ref, atol=2e-2, rtol=2e-2)
    assert jnp.allclose(c1_out, c1)

    # TODO(synk): BatchNorm running-stat updates, the Adam optimizer, and the decode /
    # initial-generator networks are host/training machinery outside this forward kernel.
    print("KERNEL_OK")
</pallas_src>

<mosaic_0001>
module attributes {stable_mosaic.version = 11 : i64} {
  func.func @kernel(%arg0: memref<8x4xf32, #tpu.memory_space<vmem>>, %arg1: memref<8x128xf32, #tpu.memory_space<vmem>>, %arg2: memref<8x8x2xf32, #tpu.memory_space<vmem>>, %arg3: memref<8x8x4xf32, #tpu.memory_space<vmem>>, %arg4: memref<4x128xf32, #tpu.memory_space<vmem>>, %arg5: memref<1x128xf32, #tpu.memory_space<vmem>>, %arg6: memref<1x128xf32, #tpu.memory_space<vmem>>, %arg7: memref<1x128xf32, #tpu.memory_space<vmem>>, %arg8: memref<128x128xbf16, #tpu.memory_space<vmem>>, %arg9: memref<1x128xf32, #tpu.memory_space<vmem>>, %arg10: memref<2x512xf32, #tpu.memory_space<vmem>>, %arg11: memref<128x512xbf16, #tpu.memory_space<vmem>>, %arg12: memref<1x512xf32, #tpu.memory_space<vmem>>, %arg13: memref<128x256xbf16, #tpu.memory_space<vmem>>, %arg14: memref<1x256xf32, #tpu.memory_space<vmem>>, %arg15: memref<1x256xf32, #tpu.memory_space<vmem>>, %arg16: memref<1x256xf32, #tpu.memory_space<vmem>>, %arg17: memref<256x8xbf16, #tpu.memory_space<vmem>>, %arg18: memref<1x8xf32, #tpu.memory_space<vmem>>, %arg19: memref<8x8x4xf32, #tpu.memory_space<vmem>>) attributes {dimension_semantics = [], scalar_prefetch = 0 : i64, scratch_operands = 0 : i64, tpu.core_type = #tpu.core_type<tc>} {
    %c0 = arith.constant 0 : index
    %c0_0 = arith.constant 0 : index
    %0 = vector.load %arg1[%c0, %c0_0] : memref<8x128xf32, #tpu.memory_space<vmem>>, vector<8x128xf32>
    %c0_1 = arith.constant 0 : index
    %c0_2 = arith.constant 0 : index
    %1 = vector.load %arg4[%c0_1, %c0_2] : memref<4x128xf32, #tpu.memory_space<vmem>>, vector<4x128xf32>
    %c0_3 = arith.constant 0 : index
    %c0_4 = arith.constant 0 : index
    %2 = vector.load %arg10[%c0_3, %c0_4] : memref<2x512xf32, #tpu.memory_space<vmem>>, vector<2x512xf32>
    %c0_5 = arith.constant 0 : index
    %c0_6 = arith.constant 0 : index
    %3 = vector.load %arg6[%c0_5, %c0_6] : memref<1x128xf32, #tpu.memory_space<vmem>>, vector<1x128xf32>
    %c0_7 = arith.constant 0 : index
    %c0_8 = arith.constant 0 : index
    %4 = vector.load %arg7[%c0_7, %c0_8] : memref<1x128xf32, #tpu.memory_space<vmem>>, vector<1x128xf32>
    %c0_9 = arith.constant 0 : index
    %c0_10 = arith.constant 0 : index
    %5 = vector.load %arg15[%c0_9, %c0_10] : memref<1x256xf32, #tpu.memory_space<vmem>>, vector<1x256xf32>
    %c0_11 = arith.constant 0 : index
    %c0_12 = arith.constant 0 : index
    %6 = vector.load %arg16[%c0_11, %c0_12] : memref<1x256xf32, #tpu.memory_space<vmem>>, vector<1x256xf32>
    %c0_13 = arith.constant 0 : index
    %c0_14 = arith.constant 0 : index
    %7 = vector.load %arg5[%c0_13, %c0_14] : memref<1x128xf32, #tpu.memory_space<vmem>>, vector<1x128xf32>
    %8 = vector.shape_cast %7 : vector<1x128xf32> to vector<1x128xf32>
    %9 = vector.broadcast %8 : vector<1x128xf32> to vector<8x128xf32>
    %c0_15 = arith.constant 0 : index
    %c0_16 = arith.constant 0 : index
    %10 = vector.load %arg9[%c0_15, %c0_16] : memref<1x128xf32, #tpu.memory_space<vmem>>, vector<1x128xf32>
    %11 = vector.shape_cast %10 : vector<1x128xf32> to vector<1x128xf32>
    %12 = vector.broadcast %11 : vector<1x128xf32> to vector<8x128xf32>
    %c0_17 = arith.constant 0 : index
    %c0_18 = arith.constant 0 : index
    %13 = vector.load %arg12[%c0_17, %c0_18] : memref<1x512xf32, #tpu.memory_space<vmem>>, vector<1x512xf32>
    %14 = vector.shape_cast %13 : vector<1x512xf32> to vector<1x512xf32>
    %15 = vector.broadcast %14 : vector<1x512xf32> to vector<8x512xf32>
    %c0_19 = arith.constant 0 : index
    %c0_20 = arith.constant 0 : index
    %16 = vector.load %arg14[%c0_19, %c0_20] : memref<1x256xf32, #tpu.memory_space<vmem>>, vector<1x256xf32>
    %17 = vector.shape_cast %16 : vector<1x256xf32> to vector<1x256xf32>
    %18 = vector.broadcast %17 : vector<1x256xf32> to vector<8x256xf32>
    %c0_21 = arith.constant 0 : index
    %c0_22 = arith.constant 0 : index
    %19 = vector.load %arg18[%c0_21, %c0_22] : memref<1x8xf32, #tpu.memory_space<vmem>>, vector<1x8xf32>
    %20 = vector.shape_cast %19 : vector<1x8xf32> to vector<1x8xf32>
    %21 = vector.broadcast %20 : vector<1x8xf32> to vector<8x8xf32>
    %c0_23 = arith.constant 0 : index
    %c0_24 = arith.constant 0 : index
    %22 = vector.load %arg0[%c0_23, %c0_24] : memref<8x4xf32, #tpu.memory_space<vmem>>, vector<8x4xf32>
    %23 = vector.extract_strided_slice %22 {offsets = [0, 0], sizes = [8, 1], strides = [1, 1]} : vector<8x4xf32> to vector<8x1xf32>
    %24 = vector.extract_strided_slice %1 {offsets = [0, 0], sizes = [1, 128], strides = [1, 1]} : vector<4x128xf32> to vector<1x128xf32>
    %25 = vector.broadcast %23 : vector<8x1xf32> to vector<8x128xf32>
    %26 = vector.broadcast %24 : vector<1x128xf32> to vector<8x128xf32>
    %27 = arith.mulf %25, %26 : vector<8x128xf32>
    %28 = arith.addf %9, %27 : vector<8x128xf32>
    %29 = vector.extract_strided_slice %22 {offsets = [0, 1], sizes = [8, 1], strides = [1, 1]} : vector<8x4xf32> to vector<8x1xf32>
    %30 = vector.extract_strided_slice %1 {offsets = [1, 0], sizes = [1, 128], strides = [1, 1]} : vector<4x128xf32> to vector<1x128xf32>
    %31 = vector.broadcast %29 : vector<8x1xf32> to vector<8x128xf32>
    %32 = vector.broadcast %30 : vector<1x128xf32> to vector<8x128xf32>
    %33 = arith.mulf %31, %32 : vector<8x128xf32>
    %34 = arith.addf %28, %33 : vector<8x128xf32>
    %35 = vector.extract_strided_slice %22 {offsets = [0, 2], sizes = [8, 1], strides = [1, 1]} : vector<8x4xf32> to vector<8x1xf32>
    %36 = vector.extract_strided_slice %1 {offsets = [2, 0], sizes = [1, 128], strides = [1, 1]} : vector<4x128xf32> to vector<1x128xf32>
    %37 = vector.broadcast %35 : vector<8x1xf32> to vector<8x128xf32>
    %38 = vector.broadcast %36 : vector<1x128xf32> to vector<8x128xf32>
    %39 = arith.mulf %37, %38 : vector<8x128xf32>
    %40 = arith.addf %34, %39 : vector<8x128xf32>
    %41 = vector.extract_strided_slice %22 {offsets = [0, 3], sizes = [8, 1], strides = [1, 1]} : vector<8x4xf32> to vector<8x1xf32>
    %42 = vector.extract_strided_slice %1 {offsets = [3, 0], sizes = [1, 128], strides = [1, 1]} : vector<4x128xf32> to vector<1x128xf32>
    %43 = vector.broadcast %41 : vector<8x1xf32> to vector<8x128xf32>
    %44 = vector.broadcast %42 : vector<1x128xf32> to vector<8x128xf32>
    %45 = arith.mulf %43, %44 : vector<8x128xf32>
    %46 = arith.addf %40, %45 : vector<8x128xf32>
    %47 = arith.negf %46 : vector<8x128xf32>
    %48 = math.exp %47 : vector<8x128xf32>
    %cst = arith.constant 1.000000e+00 : f32
    %49 = vector.broadcast %cst : f32 to vector<8x128xf32>
    %50 = arith.addf %49, %48 : vector<8x128xf32>
    %51 = arith.divf %49, %50 : vector<8x128xf32>
    %cst_25 = arith.constant dense<0.000000e+00> : vector<128xf32>
    %52 = vector.multi_reduction <add>, %51, %cst_25 [0] : vector<8x128xf32> to vector<128xf32>
    %53 = vector.shape_cast %52 : vector<128xf32> to vector<1x128xf32>
    %cst_26 = arith.constant 8.000000e+00 : f32
    %54 = vector.broadcast %cst_26 : f32 to vector<1x128xf32>
    %55 = arith.divf %53, %54 : vector<1x128xf32>
    %56 = arith.mulf %51, %51 : vector<8x128xf32>
    %cst_27 = arith.constant dense<0.000000e+00> : vector<128xf32>
    %57 = vector.multi_reduction <add>, %56, %cst_27 [0] : vector<8x128xf32> to vector<128xf32>
    %58 = vector.shape_cast %57 : vector<128xf32> to vector<1x128xf32>
    %cst_28 = arith.constant 8.000000e+00 : f32
    %59 = vector.broadcast %cst_28 : f32 to vector<1x128xf32>
    %60 = arith.divf %58, %59 : vector<1x128xf32>
    %61 = arith.mulf %55, %55 : vector<1x128xf32>
    %62 = arith.subf %60, %61 : vector<1x128xf32>
    %cst_29 = arith.constant 0.000000e+00 : f32
    %63 = vector.broadcast %cst_29 : f32 to vector<1x128xf32>
    %64 = arith.maximumf %62, %63 : vector<1x128xf32>
    %cst_30 = arith.constant 9.99999974E-6 : f32
    %65 = vector.broadcast %cst_30 : f32 to vector<1x128xf32>
    %66 = arith.addf %64, %65 : vector<1x128xf32>
    %67 = math.rsqrt %66 : vector<1x128xf32>
    %68 = arith.mulf %3, %67 : vector<1x128xf32>
    %69 = arith.mulf %55, %68 : vector<1x128xf32>
    %70 = arith.subf %4, %69 : vector<1x128xf32>
    %71 = vector.broadcast %68 : vector<1x128xf32> to vector<8x128xf32>
    %72 = arith.mulf %51, %71 : vector<8x128xf32>
    %73 = vector.broadcast %70 : vector<1x128xf32> to vector<8x128xf32>
    %74 = arith.addf %72, %73 : vector<8x128xf32>
    %75 = arith.truncf %74 : vector<8x128xf32> to vector<8x128xbf16>
    %c0_31 = arith.constant 0 : index
    %c0_32 = arith.constant 0 : index
    %76 = vector.load %arg8[%c0_31, %c0_32] : memref<128x128xbf16, #tpu.memory_space<vmem>>, vector<128x128xbf16>
    %cst_33 = arith.constant dense<0.000000e+00> : vector<8x128xf32>
    %77 = tpu.matmul %75, %76, %cst_33 {dimension_numbers = #tpu.dot_dimension_numbers<[1], [0], [0], [1], [0, 0, 1, 1], [], []>} : vector<8x128xbf16>, vector<128x128xbf16>, vector<8x128xf32> -> vector<8x128xf32>
    %78 = arith.addf %77, %12 : vector<8x128xf32>
    %c0_34 = arith.constant 0 : index
    %c0_35 = arith.constant 0 : index
    %c0_36 = arith.constant 0 : index
    %79 = vector.load %arg2[%c0_34, %c0_35, %c0_36] : memref<8x8x2xf32, #tpu.memory_space<vmem>>, vector<1x8x2xf32>
    %80 = vector.shape_cast %79 : vector<1x8x2xf32> to vector<8x2xf32>
    %cst_37 = arith.constant -1.000000e+00 : f32
    %cst_38 = arith.constant 1.000000e+00 : f32
    %81 = vector.broadcast %cst_37 : f32 to vector<8x2xf32>
    %82 = arith.maximumf %81, %80 : vector<8x2xf32>
    %83 = vector.broadcast %cst_38 : f32 to vector<8x2xf32>
    %84 = arith.minimumf %83, %82 : vector<8x2xf32>
    %85 = arith.truncf %78 : vector<8x128xf32> to vector<8x128xbf16>
    %c0_39 = arith.constant 0 : index
    %c0_40 = arith.constant 0 : index
    %86 = vector.load %arg11[%c0_39, %c0_40] : memref<128x512xbf16, #tpu.memory_space<vmem>>, vector<128x512xbf16>
    %cst_41 = arith.constant dense<0.000000e+00> : vector<8x512xf32>
    %87 = tpu.matmul %85, %86, %cst_41 {dimension_numbers = #tpu.dot_dimension_numbers<[1], [0], [0], [1], [0, 0, 1, 1], [], []>} : vector<8x128xbf16>, vector<128x512xbf16>, vector<8x512xf32> -> vector<8x512xf32>
    %88 = arith.addf %87, %15 : vector<8x512xf32>
    %89 = vector.extract_strided_slice %84 {offsets = [0, 0], sizes = [8, 1], strides = [1, 1]} : vector<8x2xf32> to vector<8x1xf32>
    %90 = vector.extract_strided_slice %2 {offsets = [0, 0], sizes = [1, 512], strides = [1, 1]} : vector<2x512xf32> to vector<1x512xf32>
    %91 = vector.broadcast %89 : vector<8x1xf32> to vector<8x512xf32>
    %92 = vector.broadcast %90 : vector<1x512xf32> to vector<8x512xf32>
    %93 = arith.mulf %91, %92 : vector<8x512xf32>
    %94 = arith.addf %88, %93 : vector<8x512xf32>
    %95 = vector.extract_strided_slice %84 {offsets = [0, 1], sizes = [8, 1], strides = [1, 1]} : vector<8x2xf32> to vector<8x1xf32>
    %96 = vector.extract_strided_slice %2 {offsets = [1, 0], sizes = [1, 512], strides = [1, 1]} : vector<2x512xf32> to vector<1x512xf32>
    %97 = vector.broadcast %95 : vector<8x1xf32> to vector<8x512xf32>
    %98 = vector.broadcast %96 : vector<1x512xf32> to vector<8x512xf32>
    %99 = arith.mulf %97, %98 : vector<8x512xf32>
    %100 = arith.addf %94, %99 : vector<8x512xf32>
    %101 = vector.extract_strided_slice %100 {offsets = [0, 0], sizes = [8, 128], strides = [1, 1]} : vector<8x512xf32> to vector<8x128xf32>
    %102 = arith.negf %101 : vector<8x128xf32>
    %103 = math.exp %102 : vector<8x128xf32>
    %cst_42 = arith.constant 1.000000e+00 : f32
    %104 = vector.broadcast %cst_42 : f32 to vector<8x128xf32>
    %105 = arith.addf %104, %103 : vector<8x128xf32>
    %106 = arith.divf %104, %105 : vector<8x128xf32>
    %107 = vector.extract_strided_slice %100 {offsets = [0, 128], sizes = [8, 128], strides = [1, 1]} : vector<8x512xf32> to vector<8x128xf32>
    %108 = arith.negf %107 : vector<8x128xf32>
    %109 = math.exp %108 : vector<8x128xf32>
    %cst_43 = arith.constant 1.000000e+00 : f32
    %110 = vector.broadcast %cst_43 : f32 to vector<8x128xf32>
    %111 = arith.addf %110, %109 : vector<8x128xf32>
    %112 = arith.divf %110, %111 : vector<8x128xf32>
    %113 = vector.extract_strided_slice %100 {offsets = [0, 256], sizes = [8, 128], strides = [1, 1]} : vector<8x512xf32> to vector<8x128xf32>
    %114 = math.tanh %113 : vector<8x128xf32>
    %115 = vector.extract_strided_slice %100 {offsets = [0, 384], sizes = [8, 128], strides = [1, 1]} : vector<8x512xf32> to vector<8x128xf32>
    %116 = arith.negf %115 : vector<8x128xf32>
    %117 = math.exp %116 : vector<8x128xf32>
    %cst_44 = arith.constant 1.000000e+00 : f32
    %118 = vector.broadcast %cst_44 : f32 to vector<8x128xf32>
    %119 = arith.addf %118, %117 : vector<8x128xf32>
    %120 = arith.divf %118, %119 : vector<8x128xf32>
    %121 = arith.mulf %112, %0 : vector<8x128xf32>
    %122 = arith.mulf %106, %114 : vector<8x128xf32>
    %123 = arith.addf %121, %122 : vector<8x128xf32>
    %124 = math.tanh %123 : vector<8x128xf32>
    %125 = arith.mulf %120, %124 : vector<8x128xf32>
    %126 = arith.truncf %125 : vector<8x128xf32> to vector<8x128xbf16>
    %c0_45 = arith.constant 0 : index
    %c0_46 = arith.constant 0 : index
    %127 = vector.load %arg13[%c0_45, %c0_46] : memref<128x256xbf16, #tpu.memory_space<vmem>>, vector<128x256xbf16>
    %cst_47 = arith.constant dense<0.000000e+00> : vector<8x256xf32>
    %128 = tpu.matmul %126, %127, %cst_47 {dimension_numbers = #tpu.dot_dimension_numbers<[1], [0], [0], [1], [0, 0, 1, 1], [], []>} : vector<8x128xbf16>, vector<128x256xbf16>, vector<8x256xf32> -> vector<8x256xf32>
    %129 = arith.addf %128, %18 : vector<8x256xf32>
    %130 = arith.negf %129 : vector<8x256xf32>
    %131 = math.exp %130 : vector<8x256xf32>
    %cst_48 = arith.constant 1.000000e+00 : f32
    %132 = vector.broadcast %cst_48 : f32 to vector<8x256xf32>
    %133 = arith.addf %132, %131 : vector<8x256xf32>
    %134 = arith.divf %132, %133 : vector<8x256xf32>
    %cst_49 = arith.constant dense<0.000000e+00> : vector<256xf32>
    %135 = vector.multi_reduction <add>, %134, %cst_49 [0] : vector<8x256xf32> to vector<256xf32>
    %136 = vector.shape_cast %135 : vector<256xf32> to vector<1x256xf32>
    %cst_50 = arith.constant 8.000000e+00 : f32
    %137 = vector.broadcast %cst_50 : f32 to vector<1x256xf32>
    %138 = arith.divf %136, %137 : vector<1x256xf32>
    %139 = arith.mulf %134, %134 : vector<8x256xf32>
    %cst_51 = arith.constant dense<0.000000e+00> : vector<256xf32>
    %140 = vector.multi_reduction <add>, %139, %cst_51 [0] : vector<8x256xf32> to vector<256xf32>
    %141 = vector.shape_cast %140 : vector<256xf32> to vector<1x256xf32>
    %cst_52 = arith.constant 8.000000e+00 : f32
    %142 = vector.broadcast %cst_52 : f32 to vector<1x256xf32>
    %143 = arith.divf %141, %142 : vector<1x256xf32>
    %144 = arith.mulf %138, %138 : vector<1x256xf32>
    %145 = arith.subf %143, %144 : vector<1x256xf32>
    %cst_53 = arith.constant 0.000000e+00 : f32
    %146 = vector.broadcast %cst_53 : f32 to vector<1x256xf32>
    %147 = arith.maximumf %145, %146 : vector<1x256xf32>
    %cst_54 = arith.constant 9.99999974E-6 : f32
    %148 = vector.broadcast %cst_54 : f32 to vector<1x256xf32>
    %149 = arith.addf %147, %148 : vector<1x256xf32>
    %150 = math.rsqrt %149 : vector<1x256xf32>
    %151 = arith.mulf %5, %150 : vector<1x256xf32>
    %152 = arith.mulf %138, %151 : vector<1x256xf32>
    %153 = arith.subf %6, %152 : vector<1x256xf32>
    %154 = vector.broadcast %151 : vector<1x256xf32> to vector<8x256xf32>
    %155 = arith.mulf %134, %154 : vector<8x256xf32>
    %156 = vector.broadcast %153 : vector<1x256xf32> to vector<8x256xf32>
    %157 = arith.addf %155, %156 : vector<8x256xf32>
    %158 = arith.truncf %157 : vector<8x256xf32> to vector<8x256xbf16>
    %c0_55 = arith.constant 0 : index
    %c0_56 = arith.constant 0 : index
    %159 = vector.load %arg17[%c0_55, %c0_56] : memref<256x8xbf16, #tpu.memory_space<vmem>>, vector<256x8xbf16>
    %cst_57 = arith.constant dense<0.000000e+00> : vector<8x8xf32>
    %160 = tpu.matmul %158, %159, %cst_57 {dimension_numbers = #tpu.dot_dimension_numbers<[1], [0], [0], [1], [0, 0, 1, 1], [], []>} : vector<8x256xbf16>, vector<256x8xbf16>, vector<8x8xf32> -> vector<8x8xf32>
    %161 = arith.addf %160, %21 : vector<8x8xf32>
    %162 = vector.extract_strided_slice %161 {offsets = [0, 0], sizes = [8, 4], strides = [1, 1]} : vector<8x8xf32> to vector<8x4xf32>
    %163 = vector.extract_strided_slice %161 {offsets = [0, 4], sizes = [8, 4], strides = [1, 1]} : vector<8x8xf32> to vector<8x4xf32>
    %cst_58 = arith.constant 2.000000e+01 : f32
    %164 = vector.broadcast %cst_58 : f32 to vector<8x4xf32>
    %165 = arith.cmpf ogt, %163, %164 : vector<8x4xf32>
    %cst_59 = arith.constant 2.000000e+01 : f32
    %166 = vector.broadcast %cst_59 : f32 to vector<8x4xf32>
    %167 = arith.minimumf %163, %166 : vector<8x4xf32>
    %168 = math.exp %167 : vector<8x4xf32>
    %169 = math.log1p %168 : vector<8x4xf32>
    %170 = arith.select %165, %163, %169 : vector<8x4xi1>, vector<8x4xf32>
    %c0_60 = arith.constant 0 : index
    %c0_61 = arith.constant 0 : index
    %c0_62 = arith.constant 0 : index
    %171 = vector.load %arg3[%c0_60, %c0_61, %c0_62] : memref<8x8x4xf32, #tpu.memory_space<vmem>>, vector<1x8x4xf32>
    %172 = vector.shape_cast %171 : vector<1x8x4xf32> to vector<8x4xf32>
    %173 = arith.mulf %170, %172 : vector<8x4xf32>
    %174 = arith.addf %162, %173 : vector<8x4xf32>
    %c0_63 = arith.constant 0 : index
    %c0_64 = arith.constant 0 : index
    %c0_65 = arith.constant 0 : index
    %175 = vector.load %arg19[%c0_63, %c0_64, %c0_65] : memref<8x8x4xf32, #tpu.memory_space<vmem>>, vector<1x8x4xf32>
    %176 = vector.shape_cast %175 : vector<1x8x4xf32> to vector<8x4xf32>
    %177 = vector.shape_cast %174 : vector<8x4xf32> to vector<1x8x4xf32>
    tpu.vector_store %arg19[%c0_63, %c0_64, %c0_65], %177 {strides = array<i32>} : memref<8x8x4xf32, #tpu.memory_space<vmem>>, vector<1x8x4xf32>,
    %178 = vector.extract_strided_slice %174 {offsets = [0, 0], sizes = [8, 1], strides = [1, 1]} : vector<8x4xf32> to vector<8x1xf32>
    %179 = vector.extract_strided_slice %1 {offsets = [0, 0], sizes = [1, 128], strides = [1, 1]} : vector<4x128xf32> to vector<1x128xf32>
    %180 = vector.broadcast %178 : vector<8x1xf32> to vector<8x128xf32>
    %181 = vector.broadcast %179 : vector<1x128xf32> to vector<8x128xf32>
    %182 = arith.mulf %180, %181 : vector<8x128xf32>
    %183 = arith.addf %9, %182 : vector<8x128xf32>
    %184 = vector.extract_strided_slice %174 {offsets = [0, 1], sizes = [8, 1], strides = [1, 1]} : vector<8x4xf32> to vector<8x1xf32>
    %185 = vector.extract_strided_slice %1 {offsets = [1, 0], sizes = [1, 128], strides = [1, 1]} : vector<4x128xf32> to vector<1x128xf32>
    %186 = vector.broadcast %184 : vector<8x1xf32> to vector<8x128xf32>
    %187 = vector.broadcast %185 : vector<1x128xf32> to vector<8x128xf32>
    %188 = arith.mulf %186, %187 : vector<8x128xf32>
    %189 = arith.addf %183, %188 : vector<8x128xf32>
    %190 = vector.extract_strided_slice %174 {offsets = [0, 2], sizes = [8, 1], strides = [1, 1]} : vector<8x4xf32> to vector<8x1xf32>
    %191 = vector.extract_strided_slice %1 {offsets = [2, 0], sizes = [1, 128], strides = [1, 1]} : vector<4x128xf32> to vector<1x128xf32>
    %192 = vector.broadcast %190 : vector<8x1xf32> to vector<8x128xf32>
    %193 = vector.broadcast %191 : vector<1x128xf32> to vector<8x128xf32>
    %194 = arith.mulf %192, %193 : vector<8x128xf32>
    %195 = arith.addf %189, %194 : vector<8x128xf32>
    %196 = vector.extract_strided_slice %174 {offsets = [0, 3], sizes = [8, 1], strides = [1, 1]} : vector<8x4xf32> to vector<8x1xf32>
    %197 = vector.extract_strided_slice %1 {offsets = [3, 0], sizes = [1, 128], strides = [1, 1]} : vector<4x128xf32> to vector<1x128xf32>
    %198 = vector.broadcast %196 : vector<8x1xf32> to vector<8x128xf32>
    %199 = vector.broadcast %197 : vector<1x128xf32> to vector<8x128xf32>
    %200 = arith.mulf %198, %199 : vector<8x128xf32>
    %201 = arith.addf %195, %200 : vector<8x128xf32>
    %202 = arith.negf %201 : vector<8x128xf32>
    %203 = math.exp %202 : vector<8x128xf32>
    %cst_66 = arith.constant 1.000000e+00 : f32
    %204 = vector.broadcast %cst_66 : f32 to vector<8x128xf32>
    %205 = arith.addf %204, %203 : vector<8x128xf32>
    %206 = arith.divf %204, %205 : vector<8x128xf32>
    %cst_67 = arith.constant dense<0.000000e+00> : vector<128xf32>
    %207 = vector.multi_reduction <add>, %206, %cst_67 [0] : vector<8x128xf32> to vector<128xf32>
    %208 = vector.shape_cast %207 : vector<128xf32> to vector<1x128xf32>
    %cst_68 = arith.constant 8.000000e+00 : f32
    %209 = vector.broadcast %cst_68 : f32 to vector<1x128xf32>
    %210 = arith.divf %208, %209 : vector<1x128xf32>
    %211 = arith.mulf %206, %206 : vector<8x128xf32>
    %cst_69 = arith.constant dense<0.000000e+00> : vector<128xf32>
    %212 = vector.multi_reduction <add>, %211, %cst_69 [0] : vector<8x128xf32> to vector<128xf32>
    %213 = vector.shape_cast %212 : vector<128xf32> to vector<1x128xf32>
    %cst_70 = arith.constant 8.000000e+00 : f32
    %214 = vector.broadcast %cst_70 : f32 to vector<1x128xf32>
    %215 = arith.divf %213, %214 : vector<1x128xf32>
    %216 = arith.mulf %210, %210 : vector<1x128xf32>
    %217 = arith.subf %215, %216 : vector<1x128xf32>
    %cst_71 = arith.constant 0.000000e+00 : f32
    %218 = vector.broadcast %cst_71 : f32 to vector<1x128xf32>
    %219 = arith.maximumf %217, %218 : vector<1x128xf32>
    %cst_72 = arith.constant 9.99999974E-6 : f32
    %220 = vector.broadcast %cst_72 : f32 to vector<1x128xf32>
    %221 = arith.addf %219, %220 : vector<1x128xf32>
    %222 = math.rsqrt %221 : vector<1x128xf32>
    %223 = arith.mulf %3, %222 : vector<1x128xf32>
    %224 = arith.mulf %210, %223 : vector<1x128xf32>
    %225 = arith.subf %4, %224 : vector<1x128xf32>
    %226 = vector.broadcast %223 : vector<1x128xf32> to vector<8x128xf32>
    %227 = arith.mulf %206, %226 : vector<8x128xf32>
    %228 = vector.broadcast %225 : vector<1x128xf32> to vector<8x128xf32>
    %229 = arith.addf %227, %228 : vector<8x128xf32>
    %230 = arith.truncf %229 : vector<8x128xf32> to vector<8x128xbf16>
    %c0_73 = arith.constant 0 : index
    %c0_74 = arith.constant 0 : index
    %231 = vector.load %arg8[%c0_73, %c0_74] : memref<128x128xbf16, #tpu.memory_space<vmem>>, vector<128x128xbf16>
    %cst_75 = arith.constant dense<0.000000e+00> : vector<8x128xf32>
    %232 = tpu.matmul %230, %231, %cst_75 {dimension_numbers = #tpu.dot_dimension_numbers<[1], [0], [0], [1], [0, 0, 1, 1], [], []>} : vector<8x128xbf16>, vector<128x128xbf16>, vector<8x128xf32> -> vector<8x128xf32>
    %233 = arith.addf %232, %12 : vector<8x128xf32>
    %c1 = arith.constant 1 : index
    %c0_76 = arith.constant 0 : index
    %c0_77 = arith.constant 0 : index
    %234 = vector.load %arg2[%c1, %c0_76, %c0_77] : memref<8x8x2xf32, #tpu.memory_space<vmem>>, vector<1x8x2xf32>
    %235 = vector.shape_cast %234 : vector<1x8x2xf32> to vector<8x2xf32>
    %cst_78 = arith.constant -1.000000e+00 : f32
    %cst_79 = arith.constant 1.000000e+00 : f32
    %236 = vector.broadcast %cst_78 : f32 to vector<8x2xf32>
    %237 = arith.maximumf %236, %235 : vector<8x2xf32>
    %238 = vector.broadcast %cst_79 : f32 to vector<8x2xf32>
    %239 = arith.minimumf %238, %237 : vector<8x2xf32>
    %240 = arith.truncf %233 : vector<8x128xf32> to vector<8x128xbf16>
    %c0_80 = arith.constant 0 : index
    %c0_81 = arith.constant 0 : index
    %241 = vector.load %arg11[%c0_80, %c0_81] : memref<128x512xbf16, #tpu.memory_space<vmem>>, vector<128x512xbf16>
    %cst_82 = arith.constant dense<0.000000e+00> : vector<8x512xf32>
    %242 = tpu.matmul %240, %241, %cst_82 {dimension_numbers = #tpu.dot_dimension_numbers<[1], [0], [0], [1], [0, 0, 1, 1], [], []>} : vector<8x128xbf16>, vector<128x512xbf16>, vector<8x512xf32> -> vector<8x512xf32>
    %243 = arith.addf %242, %15 : vector<8x512xf32>
    %244 = vector.extract_strided_slice %239 {offsets = [0, 0], sizes = [8, 1], strides = [1, 1]} : vector<8x2xf32> to vector<8x1xf32>
    %245 = vector.extract_strided_slice %2 {offsets = [0, 0], sizes = [1, 512], strides = [1, 1]} : vector<2x512xf32> to vector<1x512xf32>
    %246 = vector.broadcast %244 : vector<8x1xf32> to vector<8x512xf32>
    %247 = vector.broadcast %245 : vector<1x512xf32> to vector<8x512xf32>
    %248 = arith.mulf %246, %247 : vector<8x512xf32>
    %249 = arith.addf %243, %248 : vector<8x512xf32>
    %250 = vector.extract_strided_slice %239 {offsets = [0, 1], sizes = [8, 1], strides = [1, 1]} : vector<8x2xf32> to vector<8x1xf32>
    %251 = vector.extract_strided_slice %2 {offsets = [1, 0], sizes = [1, 512], strides = [1, 1]} : vector<2x512xf32> to vector<1x512xf32>
    %252 = vector.broadcast %250 : vector<8x1xf32> to vector<8x512xf32>
    %253 = vector.broadcast %251 : vector<1x512xf32> to vector<8x512xf32>
    %254 = arith.mulf %252, %253 : vector<8x512xf32>
    %255 = arith.addf %249, %254 : vector<8x512xf32>
    %256 = vector.extract_strided_slice %255 {offsets = [0, 0], sizes = [8, 128], strides = [1, 1]} : vector<8x512xf32> to vector<8x128xf32>
    %257 = arith.negf %256 : vector<8x128xf32>
    %258 = math.exp %257 : vector<8x128xf32>
    %cst_83 = arith.constant 1.000000e+00 : f32
    %259 = vector.broadcast %cst_83 : f32 to vector<8x128xf32>
    %260 = arith.addf %259, %258 : vector<8x128xf32>
    %261 = arith.divf %259, %260 : vector<8x128xf32>
    %262 = vector.extract_strided_slice %255 {offsets = [0, 128], sizes = [8, 128], strides = [1, 1]} : vector<8x512xf32> to vector<8x128xf32>
    %263 = arith.negf %262 : vector<8x128xf32>
    %264 = math.exp %263 : vector<8x128xf32>
    %cst_84 = arith.constant 1.000000e+00 : f32
    %265 = vector.broadcast %cst_84 : f32 to vector<8x128xf32>
    %266 = arith.addf %265, %264 : vector<8x128xf32>
    %267 = arith.divf %265, %266 : vector<8x128xf32>
    %268 = vector.extract_strided_slice %255 {offsets = [0, 256], sizes = [8, 128], strides = [1, 1]} : vector<8x512xf32> to vector<8x128xf32>
    %269 = math.tanh %268 : vector<8x128xf32>
    %270 = vector.extract_strided_slice %255 {offsets = [0, 384], sizes = [8, 128], strides = [1, 1]} : vector<8x512xf32> to vector<8x128xf32>
    %271 = arith.negf %270 : vector<8x128xf32>
    %272 = math.exp %271 : vector<8x128xf32>
    %cst_85 = arith.constant 1.000000e+00 : f32
    %273 = vector.broadcast %cst_85 : f32 to vector<8x128xf32>
    %274 = arith.addf %273, %272 : vector<8x128xf32>
    %275 = arith.divf %273, %274 : vector<8x128xf32>
    %276 = arith.mulf %267, %0 : vector<8x128xf32>
    %277 = arith.mulf %261, %269 : vector<8x128xf32>
    %278 = arith.addf %276, %277 : vector<8x128xf32>
    %279 = math.tanh %278 : vector<8x128xf32>
    %280 = arith.mulf %275, %279 : vector<8x128xf32>
    %281 = arith.truncf %280 : vector<8x128xf32> to vector<8x128xbf16>
    %c0_86 = arith.constant 0 : index
    %c0_87 = arith.constant 0 : index
    %282 = vector.load %arg13[%c0_86, %c0_87] : memref<128x256xbf16, #tpu.memory_space<vmem>>, vector<128x256xbf16>
    %cst_88 = arith.constant dense<0.000000e+00> : vector<8x256xf32>
    %283 = tpu.matmul %281, %282, %cst_88 {dimension_numbers = #tpu.dot_dimension_numbers<[1], [0], [0], [1], [0, 0, 1, 1], [], []>} : vector<8x128xbf16>, vector<128x256xbf16>, vector<8x256xf32> -> vector<8x256xf32>
    %284 = arith.addf %283, %18 : vector<8x256xf32>
    %285 = arith.negf %284 : vector<8x256xf32>
    %286 = math.exp %285 : vector<8x256xf32>
    %cst_89 = arith.constant 1.000000e+00 : f32
    %287 = vector.broadcast %cst_89 : f32 to vector<8x256xf32>
    %288 = arith.addf %287, %286 : vector<8x256xf32>
    %289 = arith.divf %287, %288 : vector<8x256xf32>
    %cst_90 = arith.constant dense<0.000000e+00> : vector<256xf32>
    %290 = vector.multi_reduction <add>, %289, %cst_90 [0] : vector<8x256xf32> to vector<256xf32>
    %291 = vector.shape_cast %290 : vector<256xf32> to vector<1x256xf32>
    %cst_91 = arith.constant 8.000000e+00 : f32
    %292 = vector.broadcast %cst_91 : f32 to vector<1x256xf32>
    %293 = arith.divf %291, %292 : vector<1x256xf32>
    %294 = arith.mulf %289, %289 : vector<8x256xf32>
    %cst_92 = arith.constant dense<0.000000e+00> : vector<256xf32>
    %295 = vector.multi_reduction <add>, %294, %cst_92 [0] : vector<8x256xf32> to vector<256xf32>
    %296 = vector.shape_cast %295 : vector<256xf32> to vector<1x256xf32>
    %cst_93 = arith.constant 8.000000e+00 : f32
    %297 = vector.broadcast %cst_93 : f32 to vector<1x256xf32>
    %298 = arith.divf %296, %297 : vector<1x256xf32>
    %299 = arith.mulf %293, %293 : vector<1x256xf32>
    %300 = arith.subf %298, %299 : vector<1x256xf32>
    %cst_94 = arith.constant 0.000000e+00 : f32
    %301 = vector.broadcast %cst_94 : f32 to vector<1x256xf32>
    %302 = arith.maximumf %300, %301 : vector<1x256xf32>
    %cst_95 = arith.constant 9.99999974E-6 : f32
    %303 = vector.broadcast %cst_95 : f32 to vector<1x256xf32>
    %304 = arith.addf %302, %303 : vector<1x256xf32>
    %305 = math.rsqrt %304 : vector<1x256xf32>
    %306 = arith.mulf %5, %305 : vector<1x256xf32>
    %307 = arith.mulf %293, %306 : vector<1x256xf32>
    %308 = arith.subf %6, %307 : vector<1x256xf32>
    %309 = vector.broadcast %306 : vector<1x256xf32> to vector<8x256xf32>
    %310 = arith.mulf %289, %309 : vector<8x256xf32>
    %311 = vector.broadcast %308 : vector<1x256xf32> to vector<8x256xf32>
    %312 = arith.addf %310, %311 : vector<8x256xf32>
    %313 = arith.truncf %312 : vector<8x256xf32> to vector<8x256xbf16>
    %c0_96 = arith.constant 0 : index
    %c0_97 = arith.constant 0 : index
    %314 = vector.load %arg17[%c0_96, %c0_97] : memref<256x8xbf16, #tpu.memory_space<vmem>>, vector<256x8xbf16>
    %cst_98 = arith.constant dense<0.000000e+00> : vector<8x8xf32>
    %315 = tpu.matmul %313, %314, %cst_98 {dimension_numbers = #tpu.dot_dimension_numbers<[1], [0], [0], [1], [0, 0, 1, 1], [], []>} : vector<8x256xbf16>, vector<256x8xbf16>, vector<8x8xf32> -> vector<8x8xf32>
    %316 = arith.addf %315, %21 : vector<8x8xf32>
    %317 = vector.extract_strided_slice %316 {offsets = [0, 0], sizes = [8, 4], strides = [1, 1]} : vector<8x8xf32> to vector<8x4xf32>
    %318 = vector.extract_strided_slice %316 {offsets = [0, 4], sizes = [8, 4], strides = [1, 1]} : vector<8x8xf32> to vector<8x4xf32>
    %cst_99 = arith.constant 2.000000e+01 : f32
    %319 = vector.broadcast %cst_99 : f32 to vector<8x4xf32>
    %320 = arith.cmpf ogt, %318, %319 : vector<8x4xf32>
    %cst_100 = arith.constant 2.000000e+01 : f32
    %321 = vector.broadcast %cst_100 : f32 to vector<8x4xf32>
    %322 = arith.minimumf %318, %321 : vector<8x4xf32>
    %323 = math.exp %322 : vector<8x4xf32>
    %324 = math.log1p %323 : vector<8x4xf32>
    %325 = arith.select %320, %318, %324 : vector<8x4xi1>, vector<8x4xf32>
    %c1_101 = arith.constant 1 : index
    %c0_102 = arith.constant 0 : index
    %c0_103 = arith.constant 0 : index
    %326 = vector.load %arg3[%c1_101, %c0_102, %c0_103] : memref<8x8x4xf32, #tpu.memory_space<vmem>>, vector<1x8x4xf32>
    %327 = vector.shape_cast %326 : vector<1x8x4xf32> to vector<8x4xf32>
    %328 = arith.mulf %325, %327 : vector<8x4xf32>
    %329 = arith.addf %317, %328 : vector<8x4xf32>
    %c1_104 = arith.constant 1 : index
    %c0_105 = arith.constant 0 : index
    %c0_106 = arith.constant 0 : index
    %330 = vector.load %arg19[%c1_104, %c0_105, %c0_106] : memref<8x8x4xf32, #tpu.memory_space<vmem>>, vector<1x8x4xf32>
    %331 = vector.shape_cast %330 : vector<1x8x4xf32> to vector<8x4xf32>
    %332 = vector.shape_cast %329 : vector<8x4xf32> to vector<1x8x4xf32>
    tpu.vector_store %arg19[%c1_104, %c0_105, %c0_106], %332 {strides = array<i32>} : memref<8x8x4xf32, #tpu.memory_space<vmem>>, vector<1x8x4xf32>,
    %333 = vector.extract_strided_slice %329 {offsets = [0, 0], sizes = [8, 1], strides = [1, 1]} : vector<8x4xf32> to vector<8x1xf32>
    %334 = vector.extract_strided_slice %1 {offsets = [0, 0], sizes = [1, 128], strides = [1, 1]} : vector<4x128xf32> to vector<1x128xf32>
    %335 = vector.broadcast %333 : vector<8x1xf32> to vector<8x128xf32>
    %336 = vector.broadcast %334 : vector<1x128xf32> to vector<8x128xf32>
    %337 = arith.mulf %335, %336 : vector<8x128xf32>
    %338 = arith.addf %9, %337 : vector<8x128xf32>
    %339 = vector.extract_strided_slice %329 {offsets = [0, 1], sizes = [8, 1], strides = [1, 1]} : vector<8x4xf32> to vector<8x1xf32>
    %340 = vector.extract_strided_slice %1 {offsets = [1, 0], sizes = [1, 128], strides = [1, 1]} : vector<4x128xf32> to vector<1x128xf32>
    %341 = vector.broadcast %339 : vector<8x1xf32> to vector<8x128xf32>
    %342 = vector.broadcast %340 : vector<1x128xf32> to vector<8x128xf32>
    %343 = arith.mulf %341, %342 : vector<8x128xf32>
    %344 = arith.addf %338, %343 : vector<8x128xf32>
    %345 = vector.extract_strided_slice %329 {offsets = [0, 2], sizes = [8, 1], strides = [1, 1]} : vector<8x4xf32> to vector<8x1xf32>
    %346 = vector.extract_strided_slice %1 {offsets = [2, 0], sizes = [1, 128], strides = [1, 1]} : vector<4x128xf32> to vector<1x128xf32>
    %347 = vector.broadcast %345 : vector<8x1xf32> to vector<8x128xf32>
    %348 = vector.broadcast %346 : vector<1x128xf32> to vector<8x128xf32>
    %349 = arith.mulf %347, %348 : vector<8x128xf32>
    %350 = arith.addf %344, %349 : vector<8x128xf32>
    %351 = vector.extract_strided_slice %329 {offsets = [0, 3], sizes = [8, 1], strides = [1, 1]} : vector<8x4xf32> to vector<8x1xf32>
    %352 = vector.extract_strided_slice %1 {offsets = [3, 0], sizes = [1, 128], strides = [1, 1]} : vector<4x128xf32> to vector<1x128xf32>
    %353 = vector.broadcast %351 : vector<8x1xf32> to vector<8x128xf32>
    %354 = vector.broadcast %352 : vector<1x128xf32> to vector<8x128xf32>
    %355 = arith.mulf %353, %354 : vector<8x128xf32>
    %356 = arith.addf %350, %355 : vector<8x128xf32>
    %357 = arith.negf %356 : vector<8x128xf32>
    %358 = math.exp %357 : vector<8x128xf32>
    %cst_107 = arith.constant 1.000000e+00 : f32
    %359 = vector.broadcast %cst_107 : f32 to vector<8x128xf32>
    %360 = arith.addf %359, %358 : vector<8x128xf32>
    %361 = arith.divf %359, %360 : vector<8x128xf32>
    %cst_108 = arith.constant dense<0.000000e+00> : vector<128xf32>
    %362 = vector.multi_reduction <add>, %361, %cst_108 [0] : vector<8x128xf32> to vector<128xf32>
    %363 = vector.shape_cast %362 : vector<128xf32> to vector<1x128xf32>
    %cst_109 = arith.constant 8.000000e+00 : f32
    %364 = vector.broadcast %cst_109 : f32 to vector<1x128xf32>
    %365 = arith.divf %363, %364 : vector<1x128xf32>
    %366 = arith.mulf %361, %361 : vector<8x128xf32>
    %cst_110 = arith.constant dense<0.000000e+00> : vector<128xf32>
    %367 = vector.multi_reduction <add>, %366, %cst_110 [0] : vector<8x128xf32> to vector<128xf32>
    %368 = vector.shape_cast %367 : vector<128xf32> to vector<1x128xf32>
    %cst_111 = arith.constant 8.000000e+00 : f32
    %369 = vector.broadcast %cst_111 : f32 to vector<1x128xf32>
    %370 = arith.divf %368, %369 : vector<1x128xf32>
    %371 = arith.mulf %365, %365 : vector<1x128xf32>
    %372 = arith.subf %370, %371 : vector<1x128xf32>
    %cst_112 = arith.constant 0.000000e+00 : f32
    %373 = vector.broadcast %cst_112 : f32 to vector<1x128xf32>
    %374 = arith.maximumf %372, %373 : vector<1x128xf32>
    %cst_113 = arith.constant 9.99999974E-6 : f32
    %375 = vector.broadcast %cst_113 : f32 to vector<1x128xf32>
    %376 = arith.addf %374, %375 : vector<1x128xf32>
    %377 = math.rsqrt %376 : vector<1x128xf32>
    %378 = arith.mulf %3, %377 : vector<1x128xf32>
    %379 = arith.mulf %365, %378 : vector<1x128xf32>
    %380 = arith.subf %4, %379 : vector<1x128xf32>
    %381 = vector.broadcast %378 : vector<1x128xf32> to vector<8x128xf32>
    %382 = arith.mulf %361, %381 : vector<8x128xf32>
    %383 = vector.broadcast %380 : vector<1x128xf32> to vector<8x128xf32>
    %384 = arith.addf %382, %383 : vector<8x128xf32>
    %385 = arith.truncf %384 : vector<8x128xf32> to vector<8x128xbf16>
    %c0_114 = arith.constant 0 : index
    %c0_115 = arith.constant 0 : index
    %386 = vector.load %arg8[%c0_114, %c0_115] : memref<128x128xbf16, #tpu.memory_space<vmem>>, vector<128x128xbf16>
    %cst_116 = arith.constant dense<0.000000e+00> : vector<8x128xf32>
    %387 = tpu.matmul %385, %386, %cst_116 {dimension_numbers = #tpu.dot_dimension_numbers<[1], [0], [0], [1], [0, 0, 1, 1], [], []>} : vector<8x128xbf16>, vector<128x128xbf16>, vector<8x128xf32> -> vector<8x128xf32>
    %388 = arith.addf %387, %12 : vector<8x128xf32>
    %c2 = arith.constant 2 : index
    %c0_117 = arith.constant 0 : index
    %c0_118 = arith.constant 0 : index
    %389 = vector.load %arg2[%c2, %c0_117, %c0_118] : memref<8x8x2xf32, #tpu.memory_space<vmem>>, vector<1x8x2xf32>
    %390 = vector.shape_cast %389 : vector<1x8x2xf32> to vector<8x2xf32>
    %cst_119 = arith.constant -1.000000e+00 : f32
    %cst_120 = arith.constant 1.000000e+00 : f32
    %391 = vector.broadcast %cst_119 : f32 to vector<8x2xf32>
    %392 = arith.maximumf %391, %390 : vector<8x2xf32>
    %393 = vector.broadcast %cst_120 : f32 to vector<8x2xf32>
    %394 = arith.minimumf %393, %392 : vector<8x2xf32>
    %395 = arith.truncf %388 : vector<8x128xf32> to vector<8x128xbf16>
    %c0_121 = arith.constant 0 : index
    %c0_122 = arith.constant 0 : index
    %396 = vector.load %arg11[%c0_121, %c0_122] : memref<128x512xbf16, #tpu.memory_space<vmem>>, vector<128x512xbf16>
    %cst_123 = arith.constant dense<0.000000e+00> : vector<8x512xf32>
    %397 = tpu.matmul %395, %396, %cst_123 {dimension_numbers = #tpu.dot_dimension_numbers<[1], [0], [0], [1], [0, 0, 1, 1], [], []>} : vector<8x128xbf16>, vector<128x512xbf16>, vector<8x512xf32> -> vector<8x512xf32>
    %398 = arith.addf %397, %15 : vector<8x512xf32>
    %399 = vector.extract_strided_slice %394 {offsets = [0, 0], sizes = [8, 1], strides = [1, 1]} : vector<8x2xf32> to vector<8x1xf32>
    %400 = vector.extract_strided_slice %2 {offsets = [0, 0], sizes = [1, 512], strides = [1, 1]} : vector<2x512xf32> to vector<1x512xf32>
    %401 = vector.broadcast %399 : vector<8x1xf32> to vector<8x512xf32>
    %402 = vector.broadcast %400 : vector<1x512xf32> to vector<8x512xf32>
    %403 = arith.mulf %401, %402 : vector<8x512xf32>
    %404 = arith.addf %398, %403 : vector<8x512xf32>
    %405 = vector.extract_strided_slice %394 {offsets = [0, 1], sizes = [8, 1], strides = [1, 1]} : vector<8x2xf32> to vector<8x1xf32>
    %406 = vector.extract_strided_slice %2 {offsets = [1, 0], sizes = [1, 512], strides = [1, 1]} : vector<2x512xf32> to vector<1x512xf32>
    %407 = vector.broadcast %405 : vector<8x1xf32> to vector<8x512xf32>
    %408 = vector.broadcast %406 : vector<1x512xf32> to vector<8x512xf32>
    %409 = arith.mulf %407, %408 : vector<8x512xf32>
    %410 = arith.addf %404, %409 : vector<8x512xf32>
    %411 = vector.extract_strided_slice %410 {offsets = [0, 0], sizes = [8, 128], strides = [1, 1]} : vector<8x512xf32> to vector<8x128xf32>
    %412 = arith.negf %411 : vector<8x128xf32>
    %413 = math.exp %412 : vector<8x128xf32>
    %cst_124 = arith.constant 1.000000e+00 : f32
    %414 = vector.broadcast %cst_124 : f32 to vector<8x128xf32>
    %415 = arith.addf %414, %413 : vector<8x128xf32>
    %416 = arith.divf %414, %415 : vector<8x128xf32>
    %417 = vector.extract_strided_slice %410 {offsets = [0, 128], sizes = [8, 128], strides = [1, 1]} : vector<8x512xf32> to vector<8x128xf32>
    %418 = arith.negf %417 : vector<8x128xf32>
    %419 = math.exp %418 : vector<8x128xf32>
    %cst_125 = arith.constant 1.000000e+00 : f32
    %420 = vector.broadcast %cst_125 : f32 to vector<8x128xf32>
    %421 = arith.addf %420, %419 : vector<8x128xf32>
    %422 = arith.divf %420, %421 : vector<8x128xf32>
    %423 = vector.extract_strided_slice %410 {offsets = [0, 256], sizes = [8, 128], strides = [1, 1]} : vector<8x512xf32> to vector<8x128xf32>
    %424 = math.tanh %423 : vector<8x128xf32>
    %425 = vector.extract_strided_slice %410 {offsets = [0, 384], sizes = [8, 128], strides = [1, 1]} : vector<8x512xf32> to vector<8x128xf32>
    %426 = arith.negf %425 : vector<8x128xf32>
    %427 = math.exp %426 : vector<8x128xf32>
    %cst_126 = arith.constant 1.000000e+00 : f32
    %428 = vector.broadcast %cst_126 : f32 to vector<8x128xf32>
    %429 = arith.addf %428, %427 : vector<8x128xf32>
    %430 = arith.divf %428, %429 : vector<8x128xf32>
    %431 = arith.mulf %422, %0 : vector<8x128xf32>
    %432 = arith.mulf %416, %424 : vector<8x128xf32>
    %433 = arith.addf %431, %432 : vector<8x128xf32>
    %434 = math.tanh %433 : vector<8x128xf32>
    %435 = arith.mulf %430, %434 : vector<8x128xf32>
    %436 = arith.truncf %435 : vector<8x128xf32> to vector<8x128xbf16>
    %c0_127 = arith.constant 0 : index
    %c0_128 = arith.constant 0 : index
    %437 = vector.load %arg13[%c0_127, %c0_128] : memref<128x256xbf16, #tpu.memory_space<vmem>>, vector<128x256xbf16>
    %cst_129 = arith.constant dense<0.000000e+00> : vector<8x256xf32>
    %438 = tpu.matmul %436, %437, %cst_129 {dimension_numbers = #tpu.dot_dimension_numbers<[1], [0], [0], [1], [0, 0, 1, 1], [], []>} : vector<8x128xbf16>, vector<128x256xbf16>, vector<8x256xf32> -> vector<8x256xf32>
    %439 = arith.addf %438, %18 : vector<8x256xf32>
    %440 = arith.negf %439 : vector<8x256xf32>
    %441 = math.exp %440 : vector<8x256xf32>
    %cst_130 = arith.constant 1.000000e+00 : f32
    %442 = vector.broadcast %cst_130 : f32 to vector<8x256xf32>
    %443 = arith.addf %442, %441 : vector<8x256xf32>
    %444 = arith.divf %442, %443 : vector<8x256xf32>
    %cst_131 = arith.constant dense<0.000000e+00> : vector<256xf32>
    %445 = vector.multi_reduction <add>, %444, %cst_131 [0] : vector<8x256xf32> to vector<256xf32>
    %446 = vector.shape_cast %445 : vector<256xf32> to vector<1x256xf32>
    %cst_132 = arith.constant 8.000000e+00 : f32
    %447 = vector.broadcast %cst_132 : f32 to vector<1x256xf32>
    %448 = arith.divf %446, %447 : vector<1x256xf32>
    %449 = arith.mulf %444, %444 : vector<8x256xf32>
    %cst_133 = arith.constant dense<0.000000e+00> : vector<256xf32>
    %450 = vector.multi_reduction <add>, %449, %cst_133 [0] : vector<8x256xf32> to vector<256xf32>
    %451 = vector.shape_cast %450 : vector<256xf32> to vector<1x256xf32>
    %cst_134 = arith.constant 8.000000e+00 : f32
    %452 = vector.broadcast %cst_134 : f32 to vector<1x256xf32>
    %453 = arith.divf %451, %452 : vector<1x256xf32>
    %454 = arith.mulf %448, %448 : vector<1x256xf32>
    %455 = arith.subf %453, %454 : vector<1x256xf32>
    %cst_135 = arith.constant 0.000000e+00 : f32
    %456 = vector.broadcast %cst_135 : f32 to vector<1x256xf32>
    %457 = arith.maximumf %455, %456 : vector<1x256xf32>
    %cst_136 = arith.constant 9.99999974E-6 : f32
    %458 = vector.broadcast %cst_136 : f32 to vector<1x256xf32>
    %459 = arith.addf %457, %458 : vector<1x256xf32>
    %460 = math.rsqrt %459 : vector<1x256xf32>
    %461 = arith.mulf %5, %460 : vector<1x256xf32>
    %462 = arith.mulf %448, %461 : vector<1x256xf32>
    %463 = arith.subf %6, %462 : vector<1x256xf32>
    %464 = vector.broadcast %461 : vector<1x256xf32> to vector<8x256xf32>
    %465 = arith.mulf %444, %464 : vector<8x256xf32>
    %466 = vector.broadcast %463 : vector<1x256xf32> to vector<8x256xf32>
    %467 = arith.addf %465, %466 : vector<8x256xf32>
    %468 = arith.truncf %467 : vector<8x256xf32> to vector<8x256xbf16>
    %c0_137 = arith.constant 0 : index
    %c0_138 = arith.constant 0 : index
    %469 = vector.load %arg17[%c0_137, %c0_138] : memref<256x8xbf16, #tpu.memory_space<vmem>>, vector<256x8xbf16>
    %cst_139 = arith.constant dense<0.000000e+00> : vector<8x8xf32>
    %470 = tpu.matmul %468, %469, %cst_139 {dimension_numbers = #tpu.dot_dimension_numbers<[1], [0], [0], [1], [0, 0, 1, 1], [], []>} : vector<8x256xbf16>, vector<256x8xbf16>, vector<8x8xf32> -> vector<8x8xf32>
    %471 = arith.addf %470, %21 : vector<8x8xf32>
    %472 = vector.extract_strided_slice %471 {offsets = [0, 0], sizes = [8, 4], strides = [1, 1]} : vector<8x8xf32> to vector<8x4xf32>
    %473 = vector.extract_strided_slice %471 {offsets = [0, 4], sizes = [8, 4], strides = [1, 1]} : vector<8x8xf32> to vector<8x4xf32>
    %cst_140 = arith.constant 2.000000e+01 : f32
    %474 = vector.broadcast %cst_140 : f32 to vector<8x4xf32>
    %475 = arith.cmpf ogt, %473, %474 : vector<8x4xf32>
    %cst_141 = arith.constant 2.000000e+01 : f32
    %476 = vector.broadcast %cst_141 : f32 to vector<8x4xf32>
    %477 = arith.minimumf %473, %476 : vector<8x4xf32>
    %478 = math.exp %477 : vector<8x4xf32>
    %479 = math.log1p %478 : vector<8x4xf32>
    %480 = arith.select %475, %473, %479 : vector<8x4xi1>, vector<8x4xf32>
    %c2_142 = arith.constant 2 : index
    %c0_143 = arith.constant 0 : index
    %c0_144 = arith.constant 0 : index
    %481 = vector.load %arg3[%c2_142, %c0_143, %c0_144] : memref<8x8x4xf32, #tpu.memory_space<vmem>>, vector<1x8x4xf32>
    %482 = vector.shape_cast %481 : vector<1x8x4xf32> to vector<8x4xf32>
    %483 = arith.mulf %480, %482 : vector<8x4xf32>
    %484 = arith.addf %472, %483 : vector<8x4xf32>
    %c2_145 = arith.constant 2 : index
    %c0_146 = arith.constant 0 : index
    %c0_147 = arith.constant 0 : index
    %485 = vector.load %arg19[%c2_145, %c0_146, %c0_147] : memref<8x8x4xf32, #tpu.memory_space<vmem>>, vector<1x8x4xf32>
    %486 = vector.shape_cast %485 : vector<1x8x4xf32> to vector<8x4xf32>
    %487 = vector.shape_cast %484 : vector<8x4xf32> to vector<1x8x4xf32>
    tpu.vector_store %arg19[%c2_145, %c0_146, %c0_147], %487 {strides = array<i32>} : memref<8x8x4xf32, #tpu.memory_space<vmem>>, vector<1x8x4xf32>,
    %488 = vector.extract_strided_slice %484 {offsets = [0, 0], sizes = [8, 1], strides = [1, 1]} : vector<8x4xf32> to vector<8x1xf32>
    %489 = vector.extract_strided_slice %1 {offsets = [0, 0], sizes = [1, 128], strides = [1, 1]} : vector<4x128xf32> to vector<1x128xf32>
    %490 = vector.broadcast %488 : vector<8x1xf32> to vector<8x128xf32>
    %491 = vector.broadcast %489 : vector<1x128xf32> to vector<8x128xf32>
    %492 = arith.mulf %490, %491 : vector<8x128xf32>
    %493 = arith.addf %9, %492 : vector<8x128xf32>
    %494 = vector.extract_strided_slice %484 {offsets = [0, 1], sizes = [8, 1], strides = [1, 1]} : vector<8x4xf32> to vector<8x1xf32>
    %495 = vector.extract_strided_slice %1 {offsets = [1, 0], sizes = [1, 128], strides = [1, 1]} : vector<4x128xf32> to vector<1x128xf32>
    %496 = vector.broadcast %494 : vector<8x1xf32> to vector<8x128xf32>
    %497 = vector.broadcast %495 : vector<1x128xf32> to vector<8x128xf32>
    %498 = arith.mulf %496, %497 : vector<8x128xf32>
    %499 = arith.addf %493, %498 : vector<8x128xf32>
    %500 = vector.extract_strided_slice %484 {offsets = [0, 2], sizes = [8, 1], strides = [1, 1]} : vector<8x4xf32> to vector<8x1xf32>
    %501 = vector.extract_strided_slice %1 {offsets = [2, 0], sizes = [1, 128], strides = [1, 1]} : vector<4x128xf32> to vector<1x128xf32>
    %502 = vector.broadcast %500 : vector<8x1xf32> to vector<8x128xf32>
    %503 = vector.broadcast %501 : vector<1x128xf32> to vector<8x128xf32>
    %504 = arith.mulf %502, %503 : vector<8x128xf32>
    %505 = arith.addf %499, %504 : vector<8x128xf32>
    %506 = vector.extract_strided_slice %484 {offsets = [0, 3], sizes = [8, 1], strides = [1, 1]} : vector<8x4xf32> to vector<8x1xf32>
    %507 = vector.extract_strided_slice %1 {offsets = [3, 0], sizes = [1, 128], strides = [1, 1]} : vector<4x128xf32> to vector<1x128xf32>
    %508 = vector.broadcast %506 : vector<8x1xf32> to vector<8x128xf32>
    %509 = vector.broadcast %507 : vector<1x128xf32> to vector<8x128xf32>
    %510 = arith.mulf %508, %509 : vector<8x128xf32>
    %511 = arith.addf %505, %510 : vector<8x128xf32>
    %512 = arith.negf %511 : vector<8x128xf32>
    %513 = math.exp %512 : vector<8x128xf32>
    %cst_148 = arith.constant 1.000000e+00 : f32
    %514 = vector.broadcast %cst_148 : f32 to vector<8x128xf32>
    %515 = arith.addf %514, %513 : vector<8x128xf32>
    %516 = arith.divf %514, %515 : vector<8x128xf32>
    %cst_149 = arith.constant dense<0.000000e+00> : vector<128xf32>
    %517 = vector.multi_reduction <add>, %516, %cst_149 [0] : vector<8x128xf32> to vector<128xf32>
    %518 = vector.shape_cast %517 : vector<128xf32> to vector<1x128xf32>
    %cst_150 = arith.constant 8.000000e+00 : f32
    %519 = vector.broadcast %cst_150 : f32 to vector<1x128xf32>
    %520 = arith.divf %518, %519 : vector<1x128xf32>
    %521 = arith.mulf %516, %516 : vector<8x128xf32>
    %cst_151 = arith.constant dense<0.000000e+00> : vector<128xf32>
    %522 = vector.multi_reduction <add>, %521, %cst_151 [0] : vector<8x128xf32> to vector<128xf32>
    %523 = vector.shape_cast %522 : vector<128xf32> to vector<1x128xf32>
    %cst_152 = arith.constant 8.000000e+00 : f32
    %524 = vector.broadcast %cst_152 : f32 to vector<1x128xf32>
    %525 = arith.divf %523, %524 : vector<1x128xf32>
    %526 = arith.mulf %520, %520 : vector<1x128xf32>
    %527 = arith.subf %525, %526 : vector<1x128xf32>
    %cst_153 = arith.constant 0.000000e+00 : f32
    %528 = vector.broadcast %cst_153 : f32 to vector<1x128xf32>
    %529 = arith.maximumf %527, %528 : vector<1x128xf32>
    %cst_154 = arith.constant 9.99999974E-6 : f32
    %530 = vector.broadcast %cst_154 : f32 to vector<1x128xf32>
    %531 = arith.addf %529, %530 : vector<1x128xf32>
    %532 = math.rsqrt %531 : vector<1x128xf32>
    %533 = arith.mulf %3, %532 : vector<1x128xf32>
    %534 = arith.mulf %520, %533 : vector<1x128xf32>
    %535 = arith.subf %4, %534 : vector<1x128xf32>
    %536 = vector.broadcast %533 : vector<1x128xf32> to vector<8x128xf32>
    %537 = arith.mulf %516, %536 : vector<8x128xf32>
    %538 = vector.broadcast %535 : vector<1x128xf32> to vector<8x128xf32>
    %539 = arith.addf %537, %538 : vector<8x128xf32>
    %540 = arith.truncf %539 : vector<8x128xf32> to vector<8x128xbf16>
    %c0_155 = arith.constant 0 : index
    %c0_156 = arith.constant 0 : index
    %541 = vector.load %arg8[%c0_155, %c0_156] : memref<128x128xbf16, #tpu.memory_space<vmem>>, vector<128x128xbf16>
    %cst_157 = arith.constant dense<0.000000e+00> : vector<8x128xf32>
    %542 = tpu.matmul %540, %541, %cst_157 {dimension_numbers = #tpu.dot_dimension_numbers<[1], [0], [0], [1], [0, 0, 1, 1], [], []>} : vector<8x128xbf16>, vector<128x128xbf16>, vector<8x128xf32> -> vector<8x128xf32>
    %543 = arith.addf %542, %12 : vector<8x128xf32>
    %c3 = arith.constant 3 : index
    %c0_158 = arith.constant 0 : index
    %c0_159 = arith.constant 0 : index
    %544 = vector.load %arg2[%c3, %c0_158, %c0_159] : memref<8x8x2xf32, #tpu.memory_space<vmem>>, vector<1x8x2xf32>
    %545 = vector.shape_cast %544 : vector<1x8x2xf32> to vector<8x2xf32>
    %cst_160 = arith.constant -1.000000e+00 : f32
    %cst_161 = arith.constant 1.000000e+00 : f32
    %546 = vector.broadcast %cst_160 : f32 to vector<8x2xf32>
    %547 = arith.maximumf %546, %545 : vector<8x2xf32>
    %548 = vector.broadcast %cst_161 : f32 to vector<8x2xf32>
    %549 = arith.minimumf %548, %547 : vector<8x2xf32>
    %550 = arith.truncf %543 : vector<8x128xf32> to vector<8x128xbf16>
    %c0_162 = arith.constant 0 : index
    %c0_163 = arith.constant 0 : index
    %551 = vector.load %arg11[%c0_162, %c0_163] : memref<128x512xbf16, #tpu.memory_space<vmem>>, vector<128x512xbf16>
    %cst_164 = arith.constant dense<0.000000e+00> : vector<8x512xf32>
    %552 = tpu.matmul %550, %551, %cst_164 {dimension_numbers = #tpu.dot_dimension_numbers<[1], [0], [0], [1], [0, 0, 1, 1], [], []>} : vector<8x128xbf16>, vector<128x512xbf16>, vector<8x512xf32> -> vector<8x512xf32>
    %553 = arith.addf %552, %15 : vector<8x512xf32>
    %554 = vector.extract_strided_slice %549 {offsets = [0, 0], sizes = [8, 1], strides = [1, 1]} : vector<8x2xf32> to vector<8x1xf32>
    %555 = vector.extract_strided_slice %2 {offsets = [0, 0], sizes = [1, 512], strides = [1, 1]} : vector<2x512xf32> to vector<1x512xf32>
    %556 = vector.broadcast %554 : vector<8x1xf32> to vector<8x512xf32>
    %557 = vector.broadcast %555 : vector<1x512xf32> to vector<8x512xf32>
    %558 = arith.mulf %556, %557 : vector<8x512xf32>
    %559 = arith.addf %553, %558 : vector<8x512xf32>
    %560 = vector.extract_strided_slice %549 {offsets = [0, 1], sizes = [8, 1], strides = [1, 1]} : vector<8x2xf32> to vector<8x1xf32>
    %561 = vector.extract_strided_slice %2 {offsets = [1, 0], sizes = [1, 512], strides = [1, 1]} : vector<2x512xf32> to vector<1x512xf32>
    %562 = vector.broadcast %560 : vector<8x1xf32> to vector<8x512xf32>
    %563 = vector.broadcast %561 : vector<1x512xf32> to vector<8x512xf32>
    %564 = arith.mulf %562, %563 : vector<8x512xf32>
    %565 = arith.addf %559, %564 : vector<8x512xf32>
    %566 = vector.extract_strided_slice %565 {offsets = [0, 0], sizes = [8, 128], strides = [1, 1]} : vector<8x512xf32> to vector<8x128xf32>
    %567 = arith.negf %566 : vector<8x128xf32>
    %568 = math.exp %567 : vector<8x128xf32>
    %cst_165 = arith.constant 1.000000e+00 : f32
    %569 = vector.broadcast %cst_165 : f32 to vector<8x128xf32>
    %570 = arith.addf %569, %568 : vector<8x128xf32>
    %571 = arith.divf %569, %570 : vector<8x128xf32>
    %572 = vector.extract_strided_slice %565 {offsets = [0, 128], sizes = [8, 128], strides = [1, 1]} : vector<8x512xf32> to vector<8x128xf32>
    %573 = arith.negf %572 : vector<8x128xf32>
    %574 = math.exp %573 : vector<8x128xf32>
    %cst_166 = arith.constant 1.000000e+00 : f32
    %575 = vector.broadcast %cst_166 : f32 to vector<8x128xf32>
    %576 = arith.addf %575, %574 : vector<8x128xf32>
    %577 = arith.divf %575, %576 : vector<8x128xf32>
    %578 = vector.extract_strided_slice %565 {offsets = [0, 256], sizes = [8, 128], strides = [1, 1]} : vector<8x512xf32> to vector<8x128xf32>
    %579 = math.tanh %578 : vector<8x128xf32>
    %580 = vector.extract_strided_slice %565 {offsets = [0, 384], sizes = [8, 128], strides = [1, 1]} : vector<8x512xf32> to vector<8x128xf32>
    %581 = arith.negf %580 : vector<8x128xf32>
    %582 = math.exp %581 : vector<8x128xf32>
    %cst_167 = arith.constant 1.000000e+00 : f32
    %583 = vector.broadcast %cst_167 : f32 to vector<8x128xf32>
    %584 = arith.addf %583, %582 : vector<8x128xf32>
    %585 = arith.divf %583, %584 : vector<8x128xf32>
    %586 = arith.mulf %577, %0 : vector<8x128xf32>
    %587 = arith.mulf %571, %579 : vector<8x128xf32>
    %588 = arith.addf %586, %587 : vector<8x128xf32>
    %589 = math.tanh %588 : vector<8x128xf32>
    %590 = arith.mulf %585, %589 : vector<8x128xf32>
    %591 = arith.truncf %590 : vector<8x128xf32> to vector<8x128xbf16>
    %c0_168 = arith.constant 0 : index
    %c0_169 = arith.constant 0 : index
    %592 = vector.load %arg13[%c0_168, %c0_169] : memref<128x256xbf16, #tpu.memory_space<vmem>>, vector<128x256xbf16>
    %cst_170 = arith.constant dense<0.000000e+00> : vector<8x256xf32>
    %593 = tpu.matmul %591, %592, %cst_170 {dimension_numbers = #tpu.dot_dimension_numbers<[1], [0], [0], [1], [0, 0, 1, 1], [], []>} : vector<8x128xbf16>, vector<128x256xbf16>, vector<8x256xf32> -> vector<8x256xf32>
    %594 = arith.addf %593, %18 : vector<8x256xf32>
    %595 = arith.negf %594 : vector<8x256xf32>
    %596 = math.exp %595 : vector<8x256xf32>
    %cst_171 = arith.constant 1.000000e+00 : f32
    %597 = vector.broadcast %cst_171 : f32 to vector<8x256xf32>
    %598 = arith.addf %597, %596 : vector<8x256xf32>
    %599 = arith.divf %597, %598 : vector<8x256xf32>
    %cst_172 = arith.constant dense<0.000000e+00> : vector<256xf32>
    %600 = vector.multi_reduction <add>, %599, %cst_172 [0] : vector<8x256xf32> to vector<256xf32>
    %601 = vector.shape_cast %600 : vector<256xf32> to vector<1x256xf32>
    %cst_173 = arith.constant 8.000000e+00 : f32
    %602 = vector.broadcast %cst_173 : f32 to vector<1x256xf32>
    %603 = arith.divf %601, %602 : vector<1x256xf32>
    %604 = arith.mulf %599, %599 : vector<8x256xf32>
    %cst_174 = arith.constant dense<0.000000e+00> : vector<256xf32>
    %605 = vector.multi_reduction <add>, %604, %cst_174 [0] : vector<8x256xf32> to vector<256xf32>
    %606 = vector.shape_cast %605 : vector<256xf32> to vector<1x256xf32>
    %cst_175 = arith.constant 8.000000e+00 : f32
    %607 = vector.broadcast %cst_175 : f32 to vector<1x256xf32>
    %608 = arith.divf %606, %607 : vector<1x256xf32>
    %609 = arith.mulf %603, %603 : vector<1x256xf32>
    %610 = arith.subf %608, %609 : vector<1x256xf32>
    %cst_176 = arith.constant 0.000000e+00 : f32
    %611 = vector.broadcast %cst_176 : f32 to vector<1x256xf32>
    %612 = arith.maximumf %610, %611 : vector<1x256xf32>
    %cst_177 = arith.constant 9.99999974E-6 : f32
    %613 = vector.broadcast %cst_177 : f32 to vector<1x256xf32>
    %614 = arith.addf %612, %613 : vector<1x256xf32>
    %615 = math.rsqrt %614 : vector<1x256xf32>
    %616 = arith.mulf %5, %615 : vector<1x256xf32>
    %617 = arith.mulf %603, %616 : vector<1x256xf32>
    %618 = arith.subf %6, %617 : vector<1x256xf32>
    %619 = vector.broadcast %616 : vector<1x256xf32> to vector<8x256xf32>
    %620 = arith.mulf %599, %619 : vector<8x256xf32>
    %621 = vector.broadcast %618 : vector<1x256xf32> to vector<8x256xf32>
    %622 = arith.addf %620, %621 : vector<8x256xf32>
    %623 = arith.truncf %622 : vector<8x256xf32> to vector<8x256xbf16>
    %c0_178 = arith.constant 0 : index
    %c0_179 = arith.constant 0 : index
    %624 = vector.load %arg17[%c0_178, %c0_179] : memref<256x8xbf16, #tpu.memory_space<vmem>>, vector<256x8xbf16>
    %cst_180 = arith.constant dense<0.000000e+00> : vector<8x8xf32>
    %625 = tpu.matmul %623, %624, %cst_180 {dimension_numbers = #tpu.dot_dimension_numbers<[1], [0], [0], [1], [0, 0, 1, 1], [], []>} : vector<8x256xbf16>, vector<256x8xbf16>, vector<8x8xf32> -> vector<8x8xf32>
    %626 = arith.addf %625, %21 : vector<8x8xf32>
    %627 = vector.extract_strided_slice %626 {offsets = [0, 0], sizes = [8, 4], strides = [1, 1]} : vector<8x8xf32> to vector<8x4xf32>
    %628 = vector.extract_strided_slice %626 {offsets = [0, 4], sizes = [8, 4], strides = [1, 1]} : vector<8x8xf32> to vector<8x4xf32>
    %cst_181 = arith.constant 2.000000e+01 : f32
    %629 = vector.broadcast %cst_181 : f32 to vector<8x4xf32>
    %630 = arith.cmpf ogt, %628, %629 : vector<8x4xf32>
    %cst_182 = arith.constant 2.000000e+01 : f32
    %631 = vector.broadcast %cst_182 : f32 to vector<8x4xf32>
    %632 = arith.minimumf %628, %631 : vector<8x4xf32>
    %633 = math.exp %632 : vector<8x4xf32>
    %634 = math.log1p %633 : vector<8x4xf32>
    %635 = arith.select %630, %628, %634 : vector<8x4xi1>, vector<8x4xf32>
    %c3_183 = arith.constant 3 : index
    %c0_184 = arith.constant 0 : index
    %c0_185 = arith.constant 0 : index
    %636 = vector.load %arg3[%c3_183, %c0_184, %c0_185] : memref<8x8x4xf32, #tpu.memory_space<vmem>>, vector<1x8x4xf32>
    %637 = vector.shape_cast %636 : vector<1x8x4xf32> to vector<8x4xf32>
    %638 = arith.mulf %635, %637 : vector<8x4xf32>
    %639 = arith.addf %627, %638 : vector<8x4xf32>
    %c3_186 = arith.constant 3 : index
    %c0_187 = arith.constant 0 : index
    %c0_188 = arith.constant 0 : index
    %640 = vector.load %arg19[%c3_186, %c0_187, %c0_188] : memref<8x8x4xf32, #tpu.memory_space<vmem>>, vector<1x8x4xf32>
    %641 = vector.shape_cast %640 : vector<1x8x4xf32> to vector<8x4xf32>
    %642 = vector.shape_cast %639 : vector<8x4xf32> to vector<1x8x4xf32>
    tpu.vector_store %arg19[%c3_186, %c0_187, %c0_188], %642 {strides = array<i32>} : memref<8x8x4xf32, #tpu.memory_space<vmem>>, vector<1x8x4xf32>,
    %643 = vector.extract_strided_slice %639 {offsets = [0, 0], sizes = [8, 1], strides = [1, 1]} : vector<8x4xf32> to vector<8x1xf32>
    %644 = vector.extract_strided_slice %1 {offsets = [0, 0], sizes = [1, 128], strides = [1, 1]} : vector<4x128xf32> to vector<1x128xf32>
    %645 = vector.broadcast %643 : vector<8x1xf32> to vector<8x128xf32>
    %646 = vector.broadcast %644 : vector<1x128xf32> to vector<8x128xf32>
    %647 = arith.mulf %645, %646 : vector<8x128xf32>
    %648 = arith.addf %9, %647 : vector<8x128xf32>
    %649 = vector.extract_strided_slice %639 {offsets = [0, 1], sizes = [8, 1], strides = [1, 1]} : vector<8x4xf32> to vector<8x1xf32>
    %650 = vector.extract_strided_slice %1 {offsets = [1, 0], sizes = [1, 128], strides = [1, 1]} : vector<4x128xf32> to vector<1x128xf32>
    %651 = vector.broadcast %649 : vector<8x1xf32> to vector<8x128xf32>
    %652 = vector.broadcast %650 : vector<1x128xf32> to vector<8x128xf32>
    %653 = arith.mulf %651, %652 : vector<8x128xf32>
    %654 = arith.addf %648, %653 : vector<8x128xf32>
    %655 = vector.extract_strided_slice %639 {offsets = [0, 2], sizes = [8, 1], strides = [1, 1]} : vector<8x4xf32> to vector<8x1xf32>
    %656 = vector.extract_strided_slice %1 {offsets = [2, 0], sizes = [1, 128], strides = [1, 1]} : vector<4x128xf32> to vector<1x128xf32>
    %657 = vector.broadcast %655 : vector<8x1xf32> to vector<8x128xf32>
    %658 = vector.broadcast %656 : vector<1x128xf32> to vector<8x128xf32>
    %659 = arith.mulf %657, %658 : vector<8x128xf32>
    %660 = arith.addf %654, %659 : vector<8x128xf32>
    %661 = vector.extract_strided_slice %639 {offsets = [0, 3], sizes = [8, 1], strides = [1, 1]} : vector<8x4xf32> to vector<8x1xf32>
    %662 = vector.extract_strided_slice %1 {offsets = [3, 0], sizes = [1, 128], strides = [1, 1]} : vector<4x128xf32> to vector<1x128xf32>
    %663 = vector.broadcast %661 : vector<8x1xf32> to vector<8x128xf32>
    %664 = vector.broadcast %662 : vector<1x128xf32> to vector<8x128xf32>
    %665 = arith.mulf %663, %664 : vector<8x128xf32>
    %666 = arith.addf %660, %665 : vector<8x128xf32>
    %667 = arith.negf %666 : vector<8x128xf32>
    %668 = math.exp %667 : vector<8x128xf32>
    %cst_189 = arith.constant 1.000000e+00 : f32
    %669 = vector.broadcast %cst_189 : f32 to vector<8x128xf32>
    %670 = arith.addf %669, %668 : vector<8x128xf32>
    %671 = arith.divf %669, %670 : vector<8x128xf32>
    %cst_190 = arith.constant dense<0.000000e+00> : vector<128xf32>
    %672 = vector.multi_reduction <add>, %671, %cst_190 [0] : vector<8x128xf32> to vector<128xf32>
    %673 = vector.shape_cast %672 : vector<128xf32> to vector<1x128xf32>
    %cst_191 = arith.constant 8.000000e+00 : f32
    %674 = vector.broadcast %cst_191 : f32 to vector<1x128xf32>
    %675 = arith.divf %673, %674 : vector<1x128xf32>
    %676 = arith.mulf %671, %671 : vector<8x128xf32>
    %cst_192 = arith.constant dense<0.000000e+00> : vector<128xf32>
    %677 = vector.multi_reduction <add>, %676, %cst_192 [0] : vector<8x128xf32> to vector<128xf32>
    %678 = vector.shape_cast %677 : vector<128xf32> to vector<1x128xf32>
    %cst_193 = arith.constant 8.000000e+00 : f32
    %679 = vector.broadcast %cst_193 : f32 to vector<1x128xf32>
    %680 = arith.divf %678, %679 : vector<1x128xf32>
    %681 = arith.mulf %675, %675 : vector<1x128xf32>
    %682 = arith.subf %680, %681 : vector<1x128xf32>
    %cst_194 = arith.constant 0.000000e+00 : f32
    %683 = vector.broadcast %cst_194 : f32 to vector<1x128xf32>
    %684 = arith.maximumf %682, %683 : vector<1x128xf32>
    %cst_195 = arith.constant 9.99999974E-6 : f32
    %685 = vector.broadcast %cst_195 : f32 to vector<1x128xf32>
    %686 = arith.addf %684, %685 : vector<1x128xf32>
    %687 = math.rsqrt %686 : vector<1x128xf32>
    %688 = arith.mulf %3, %687 : vector<1x128xf32>
    %689 = arith.mulf %675, %688 : vector<1x128xf32>
    %690 = arith.subf %4, %689 : vector<1x128xf32>
    %691 = vector.broadcast %688 : vector<1x128xf32> to vector<8x128xf32>
    %692 = arith.mulf %671, %691 : vector<8x128xf32>
    %693 = vector.broadcast %690 : vector<1x128xf32> to vector<8x128xf32>
    %694 = arith.addf %692, %693 : vector<8x128xf32>
    %695 = arith.truncf %694 : vector<8x128xf32> to vector<8x128xbf16>
    %c0_196 = arith.constant 0 : index
    %c0_197 = arith.constant 0 : index
    %696 = vector.load %arg8[%c0_196, %c0_197] : memref<128x128xbf16, #tpu.memory_space<vmem>>, vector<128x128xbf16>
    %cst_198 = arith.constant dense<0.000000e+00> : vector<8x128xf32>
    %697 = tpu.matmul %695, %696, %cst_198 {dimension_numbers = #tpu.dot_dimension_numbers<[1], [0], [0], [1], [0, 0, 1, 1], [], []>} : vector<8x128xbf16>, vector<128x128xbf16>, vector<8x128xf32> -> vector<8x128xf32>
    %698 = arith.addf %697, %12 : vector<8x128xf32>
    %c4 = arith.constant 4 : index
    %c0_199 = arith.constant 0 : index
    %c0_200 = arith.constant 0 : index
    %699 = vector.load %arg2[%c4, %c0_199, %c0_200] : memref<8x8x2xf32, #tpu.memory_space<vmem>>, vector<1x8x2xf32>
    %700 = vector.shape_cast %699 : vector<1x8x2xf32> to vector<8x2xf32>
    %cst_201 = arith.constant -1.000000e+00 : f32
    %cst_202 = arith.constant 1.000000e+00 : f32
    %701 = vector.broadcast %cst_201 : f32 to vector<8x2xf32>
    %702 = arith.maximumf %701, %700 : vector<8x2xf32>
    %703 = vector.broadcast %cst_202 : f32 to vector<8x2xf32>
    %704 = arith.minimumf %703, %702 : vector<8x2xf32>
    %705 = arith.truncf %698 : vector<8x128xf32> to vector<8x128xbf16>
    %c0_203 = arith.constant 0 : index
    %c0_204 = arith.constant 0 : index
    %706 = vector.load %arg11[%c0_203, %c0_204] : memref<128x512xbf16, #tpu.memory_space<vmem>>, vector<128x512xbf16>
    %cst_205 = arith.constant dense<0.000000e+00> : vector<8x512xf32>
    %707 = tpu.matmul %705, %706, %cst_205 {dimension_numbers = #tpu.dot_dimension_numbers<[1], [0], [0], [1], [0, 0, 1, 1], [], []>} : vector<8x128xbf16>, vector<128x512xbf16>, vector<8x512xf32> -> vector<8x512xf32>
    %708 = arith.addf %707, %15 : vector<8x512xf32>
    %709 = vector.extract_strided_slice %704 {offsets = [0, 0], sizes = [8, 1], strides = [1, 1]} : vector<8x2xf32> to vector<8x1xf32>
    %710 = vector.extract_strided_slice %2 {offsets = [0, 0], sizes = [1, 512], strides = [1, 1]} : vector<2x512xf32> to vector<1x512xf32>
    %711 = vector.broadcast %709 : vector<8x1xf32> to vector<8x512xf32>
    %712 = vector.broadcast %710 : vector<1x512xf32> to vector<8x512xf32>
    %713 = arith.mulf %711, %712 : vector<8x512xf32>
    %714 = arith.addf %708, %713 : vector<8x512xf32>
    %715 = vector.extract_strided_slice %704 {offsets = [0, 1], sizes = [8, 1], strides = [1, 1]} : vector<8x2xf32> to vector<8x1xf32>
    %716 = vector.extract_strided_slice %2 {offsets = [1, 0], sizes = [1, 512], strides = [1, 1]} : vector<2x512xf32> to vector<1x512xf32>
    %717 = vector.broadcast %715 : vector<8x1xf32> to vector<8x512xf32>
    %718 = vector.broadcast %716 : vector<1x512xf32> to vector<8x512xf32>
    %719 = arith.mulf %717, %718 : vector<8x512xf32>
    %720 = arith.addf %714, %719 : vector<8x512xf32>
    %721 = vector.extract_strided_slice %720 {offsets = [0, 0], sizes = [8, 128], strides = [1, 1]} : vector<8x512xf32> to vector<8x128xf32>
    %722 = arith.negf %721 : vector<8x128xf32>
    %723 = math.exp %722 : vector<8x128xf32>
    %cst_206 = arith.constant 1.000000e+00 : f32
    %724 = vector.broadcast %cst_206 : f32 to vector<8x128xf32>
    %725 = arith.addf %724, %723 : vector<8x128xf32>
    %726 = arith.divf %724, %725 : vector<8x128xf32>
    %727 = vector.extract_strided_slice %720 {offsets = [0, 128], sizes = [8, 128], strides = [1, 1]} : vector<8x512xf32> to vector<8x128xf32>
    %728 = arith.negf %727 : vector<8x128xf32>
    %729 = math.exp %728 : vector<8x128xf32>
    %cst_207 = arith.constant 1.000000e+00 : f32
    %730 = vector.broadcast %cst_207 : f32 to vector<8x128xf32>
    %731 = arith.addf %730, %729 : vector<8x128xf32>
    %732 = arith.divf %730, %731 : vector<8x128xf32>
    %733 = vector.extract_strided_slice %720 {offsets = [0, 256], sizes = [8, 128], strides = [1, 1]} : vector<8x512xf32> to vector<8x128xf32>
    %734 = math.tanh %733 : vector<8x128xf32>
    %735 = vector.extract_strided_slice %720 {offsets = [0, 384], sizes = [8, 128], strides = [1, 1]} : vector<8x512xf32> to vector<8x128xf32>
    %736 = arith.negf %735 : vector<8x128xf32>
    %737 = math.exp %736 : vector<8x128xf32>
    %cst_208 = arith.constant 1.000000e+00 : f32
    %738 = vector.broadcast %cst_208 : f32 to vector<8x128xf32>
    %739 = arith.addf %738, %737 : vector<8x128xf32>
    %740 = arith.divf %738, %739 : vector<8x128xf32>
    %741 = arith.mulf %732, %0 : vector<8x128xf32>
    %742 = arith.mulf %726, %734 : vector<8x128xf32>
    %743 = arith.addf %741, %742 : vector<8x128xf32>
    %744 = math.tanh %743 : vector<8x128xf32>
    %745 = arith.mulf %740, %744 : vector<8x128xf32>
    %746 = arith.truncf %745 : vector<8x128xf32> to vector<8x128xbf16>
    %c0_209 = arith.constant 0 : index
    %c0_210 = arith.constant 0 : index
    %747 = vector.load %arg13[%c0_209, %c0_210] : memref<128x256xbf16, #tpu.memory_space<vmem>>, vector<128x256xbf16>
    %cst_211 = arith.constant dense<0.000000e+00> : vector<8x256xf32>
    %748 = tpu.matmul %746, %747, %cst_211 {dimension_numbers = #tpu.dot_dimension_numbers<[1], [0], [0], [1], [0, 0, 1, 1], [], []>} : vector<8x128xbf16>, vector<128x256xbf16>, vector<8x256xf32> -> vector<8x256xf32>
    %749 = arith.addf %748, %18 : vector<8x256xf32>
    %750 = arith.negf %749 : vector<8x256xf32>
    %751 = math.exp %750 : vector<8x256xf32>
    %cst_212 = arith.constant 1.000000e+00 : f32
    %752 = vector.broadcast %cst_212 : f32 to vector<8x256xf32>
    %753 = arith.addf %752, %751 : vector<8x256xf32>
    %754 = arith.divf %752, %753 : vector<8x256xf32>
    %cst_213 = arith.constant dense<0.000000e+00> : vector<256xf32>
    %755 = vector.multi_reduction <add>, %754, %cst_213 [0] : vector<8x256xf32> to vector<256xf32>
    %756 = vector.shape_cast %755 : vector<256xf32> to vector<1x256xf32>
    %cst_214 = arith.constant 8.000000e+00 : f32
    %757 = vector.broadcast %cst_214 : f32 to vector<1x256xf32>
    %758 = arith.divf %756, %757 : vector<1x256xf32>
    %759 = arith.mulf %754, %754 : vector<8x256xf32>
    %cst_215 = arith.constant dense<0.000000e+00> : vector<256xf32>
    %760 = vector.multi_reduction <add>, %759, %cst_215 [0] : vector<8x256xf32> to vector<256xf32>
    %761 = vector.shape_cast %760 : vector<256xf32> to vector<1x256xf32>
    %cst_216 = arith.constant 8.000000e+00 : f32
    %762 = vector.broadcast %cst_216 : f32 to vector<1x256xf32>
    %763 = arith.divf %761, %762 : vector<1x256xf32>
    %764 = arith.mulf %758, %758 : vector<1x256xf32>
    %765 = arith.subf %763, %764 : vector<1x256xf32>
    %cst_217 = arith.constant 0.000000e+00 : f32
    %766 = vector.broadcast %cst_217 : f32 to vector<1x256xf32>
    %767 = arith.maximumf %765, %766 : vector<1x256xf32>
    %cst_218 = arith.constant 9.99999974E-6 : f32
    %768 = vector.broadcast %cst_218 : f32 to vector<1x256xf32>
    %769 = arith.addf %767, %768 : vector<1x256xf32>
    %770 = math.rsqrt %769 : vector<1x256xf32>
    %771 = arith.mulf %5, %770 : vector<1x256xf32>
    %772 = arith.mulf %758, %771 : vector<1x256xf32>
    %773 = arith.subf %6, %772 : vector<1x256xf32>
    %774 = vector.broadcast %771 : vector<1x256xf32> to vector<8x256xf32>
    %775 = arith.mulf %754, %774 : vector<8x256xf32>
    %776 = vector.broadcast %773 : vector<1x256xf32> to vector<8x256xf32>
    %777 = arith.addf %775, %776 : vector<8x256xf32>
    %778 = arith.truncf %777 : vector<8x256xf32> to vector<8x256xbf16>
    %c0_219 = arith.constant 0 : index
    %c0_220 = arith.constant 0 : index
    %779 = vector.load %arg17[%c0_219, %c0_220] : memref<256x8xbf16, #tpu.memory_space<vmem>>, vector<256x8xbf16>
    %cst_221 = arith.constant dense<0.000000e+00> : vector<8x8xf32>
    %780 = tpu.matmul %778, %779, %cst_221 {dimension_numbers = #tpu.dot_dimension_numbers<[1], [0], [0], [1], [0, 0, 1, 1], [], []>} : vector<8x256xbf16>, vector<256x8xbf16>, vector<8x8xf32> -> vector<8x8xf32>
    %781 = arith.addf %780, %21 : vector<8x8xf32>
    %782 = vector.extract_strided_slice %781 {offsets = [0, 0], sizes = [8, 4], strides = [1, 1]} : vector<8x8xf32> to vector<8x4xf32>
    %783 = vector.extract_strided_slice %781 {offsets = [0, 4], sizes = [8, 4], strides = [1, 1]} : vector<8x8xf32> to vector<8x4xf32>
    %cst_222 = arith.constant 2.000000e+01 : f32
    %784 = vector.broadcast %cst_222 : f32 to vector<8x4xf32>
    %785 = arith.cmpf ogt, %783, %784 : vector<8x4xf32>
    %cst_223 = arith.constant 2.000000e+01 : f32
    %786 = vector.broadcast %cst_223 : f32 to vector<8x4xf32>
    %787 = arith.minimumf %783, %786 : vector<8x4xf32>
    %788 = math.exp %787 : vector<8x4xf32>
    %789 = math.log1p %788 : vector<8x4xf32>
    %790 = arith.select %785, %783, %789 : vector<8x4xi1>, vector<8x4xf32>
    %c4_224 = arith.constant 4 : index
    %c0_225 = arith.constant 0 : index
    %c0_226 = arith.constant 0 : index
    %791 = vector.load %arg3[%c4_224, %c0_225, %c0_226] : memref<8x8x4xf32, #tpu.memory_space<vmem>>, vector<1x8x4xf32>
    %792 = vector.shape_cast %791 : vector<1x8x4xf32> to vector<8x4xf32>
    %793 = arith.mulf %790, %792 : vector<8x4xf32>
    %794 = arith.addf %782, %793 : vector<8x4xf32>
    %c4_227 = arith.constant 4 : index
    %c0_228 = arith.constant 0 : index
    %c0_229 = arith.constant 0 : index
    %795 = vector.load %arg19[%c4_227, %c0_228, %c0_229] : memref<8x8x4xf32, #tpu.memory_space<vmem>>, vector<1x8x4xf32>
    %796 = vector.shape_cast %795 : vector<1x8x4xf32> to vector<8x4xf32>
    %797 = vector.shape_cast %794 : vector<8x4xf32> to vector<1x8x4xf32>
    tpu.vector_store %arg19[%c4_227, %c0_228, %c0_229], %797 {strides = array<i32>} : memref<8x8x4xf32, #tpu.memory_space<vmem>>, vector<1x8x4xf32>,
    %798 = vector.extract_strided_slice %794 {offsets = [0, 0], sizes = [8, 1], strides = [1, 1]} : vector<8x4xf32> to vector<8x1xf32>
    %799 = vector.extract_strided_slice %1 {offsets = [0, 0], sizes = [1, 128], strides = [1, 1]} : vector<4x128xf32> to vector<1x128xf32>
    %800 = vector.broadcast %798 : vector<8x1xf32> to vector<8x128xf32>
    %801 = vector.broadcast %799 : vector<1x128xf32> to vector<8x128xf32>
    %802 = arith.mulf %800, %801 : vector<8x128xf32>
    %803 = arith.addf %9, %802 : vector<8x128xf32>
    %804 = vector.extract_strided_slice %794 {offsets = [0, 1], sizes = [8, 1], strides = [1, 1]} : vector<8x4xf32> to vector<8x1xf32>
    %805 = vector.extract_strided_slice %1 {offsets = [1, 0], sizes = [1, 128], strides = [1, 1]} : vector<4x128xf32> to vector<1x128xf32>
    %806 = vector.broadcast %804 : vector<8x1xf32> to vector<8x128xf32>
    %807 = vector.broadcast %805 : vector<1x128xf32> to vector<8x128xf32>
    %808 = arith.mulf %806, %807 : vector<8x128xf32>
    %809 = arith.addf %803, %808 : vector<8x128xf32>
    %810 = vector.extract_strided_slice %794 {offsets = [0, 2], sizes = [8, 1], strides = [1, 1]} : vector<8x4xf32> to vector<8x1xf32>
    %811 = vector.extract_strided_slice %1 {offsets = [2, 0], sizes = [1, 128], strides = [1, 1]} : vector<4x128xf32> to vector<1x128xf32>
    %812 = vector.broadcast %810 : vector<8x1xf32> to vector<8x128xf32>
    %813 = vector.broadcast %811 : vector<1x128xf32> to vector<8x128xf32>
    %814 = arith.mulf %812, %813 : vector<8x128xf32>
    %815 = arith.addf %809, %814 : vector<8x128xf32>
    %816 = vector.extract_strided_slice %794 {offsets = [0, 3], sizes = [8, 1], strides = [1, 1]} : vector<8x4xf32> to vector<8x1xf32>
    %817 = vector.extract_strided_slice %1 {offsets = [3, 0], sizes = [1, 128], strides = [1, 1]} : vector<4x128xf32> to vector<1x128xf32>
    %818 = vector.broadcast %816 : vector<8x1xf32> to vector<8x128xf32>
    %819 = vector.broadcast %817 : vector<1x128xf32> to vector<8x128xf32>
    %820 = arith.mulf %818, %819 : vector<8x128xf32>
    %821 = arith.addf %815, %820 : vector<8x128xf32>
    %822 = arith.negf %821 : vector<8x128xf32>
    %823 = math.exp %822 : vector<8x128xf32>
    %cst_230 = arith.constant 1.000000e+00 : f32
    %824 = vector.broadcast %cst_230 : f32 to vector<8x128xf32>
    %825 = arith.addf %824, %823 : vector<8x128xf32>
    %826 = arith.divf %824, %825 : vector<8x128xf32>
    %cst_231 = arith.constant dense<0.000000e+00> : vector<128xf32>
    %827 = vector.multi_reduction <add>, %826, %cst_231 [0] : vector<8x128xf32> to vector<128xf32>
    %828 = vector.shape_cast %827 : vector<128xf32> to vector<1x128xf32>
    %cst_232 = arith.constant 8.000000e+00 : f32
    %829 = vector.broadcast %cst_232 : f32 to vector<1x128xf32>
    %830 = arith.divf %828, %829 : vector<1x128xf32>
    %831 = arith.mulf %826, %826 : vector<8x128xf32>
    %cst_233 = arith.constant dense<0.000000e+00> : vector<128xf32>
    %832 = vector.multi_reduction <add>, %831, %cst_233 [0] : vector<8x128xf32> to vector<128xf32>
    %833 = vector.shape_cast %832 : vector<128xf32> to vector<1x128xf32>
    %cst_234 = arith.constant 8.000000e+00 : f32
    %834 = vector.broadcast %cst_234 : f32 to vector<1x128xf32>
    %835 = arith.divf %833, %834 : vector<1x128xf32>
    %836 = arith.mulf %830, %830 : vector<1x128xf32>
    %837 = arith.subf %835, %836 : vector<1x128xf32>
    %cst_235 = arith.constant 0.000000e+00 : f32
    %838 = vector.broadcast %cst_235 : f32 to vector<1x128xf32>
    %839 = arith.maximumf %837, %838 : vector<1x128xf32>
    %cst_236 = arith.constant 9.99999974E-6 : f32
    %840 = vector.broadcast %cst_236 : f32 to vector<1x128xf32>
    %841 = arith.addf %839, %840 : vector<1x128xf32>
    %842 = math.rsqrt %841 : vector<1x128xf32>
    %843 = arith.mulf %3, %842 : vector<1x128xf32>
    %844 = arith.mulf %830, %843 : vector<1x128xf32>
    %845 = arith.subf %4, %844 : vector<1x128xf32>
    %846 = vector.broadcast %843 : vector<1x128xf32> to vector<8x128xf32>
    %847 = arith.mulf %826, %846 : vector<8x128xf32>
    %848 = vector.broadcast %845 : vector<1x128xf32> to vector<8x128xf32>
    %849 = arith.addf %847, %848 : vector<8x128xf32>
    %850 = arith.truncf %849 : vector<8x128xf32> to vector<8x128xbf16>
    %c0_237 = arith.constant 0 : index
    %c0_238 = arith.constant 0 : index
    %851 = vector.load %arg8[%c0_237, %c0_238] : memref<128x128xbf16, #tpu.memory_space<vmem>>, vector<128x128xbf16>
    %cst_239 = arith.constant dense<0.000000e+00> : vector<8x128xf32>
    %852 = tpu.matmul %850, %851, %cst_239 {dimension_numbers = #tpu.dot_dimension_numbers<[1], [0], [0], [1], [0, 0, 1, 1], [], []>} : vector<8x128xbf16>, vector<128x128xbf16>, vector<8x128xf32> -> vector<8x128xf32>
    %853 = arith.addf %852, %12 : vector<8x128xf32>
    %c5 = arith.constant 5 : index
    %c0_240 = arith.constant 0 : index
    %c0_241 = arith.constant 0 : index
    %854 = vector.load %arg2[%c5, %c0_240, %c0_241] : memref<8x8x2xf32, #tpu.memory_space<vmem>>, vector<1x8x2xf32>
    %855 = vector.shape_cast %854 : vector<1x8x2xf32> to vector<8x2xf32>
    %cst_242 = arith.constant -1.000000e+00 : f32
    %cst_243 = arith.constant 1.000000e+00 : f32
    %856 = vector.broadcast %cst_242 : f32 to vector<8x2xf32>
    %857 = arith.maximumf %856, %855 : vector<8x2xf32>
    %858 = vector.broadcast %cst_243 : f32 to vector<8x2xf32>
    %859 = arith.minimumf %858, %857 : vector<8x2xf32>
    %860 = arith.truncf %853 : vector<8x128xf32> to vector<8x128xbf16>
    %c0_244 = arith.constant 0 : index
    %c0_245 = arith.constant 0 : index
    %861 = vector.load %arg11[%c0_244, %c0_245] : memref<128x512xbf16, #tpu.memory_space<vmem>>, vector<128x512xbf16>
    %cst_246 = arith.constant dense<0.000000e+00> : vector<8x512xf32>
    %862 = tpu.matmul %860, %861, %cst_246 {dimension_numbers = #tpu.dot_dimension_numbers<[1], [0], [0], [1], [0, 0, 1, 1], [], []>} : vector<8x128xbf16>, vector<128x512xbf16>, vector<8x512xf32> -> vector<8x512xf32>
    %863 = arith.addf %862, %15 : vector<8x512xf32>
    %864 = vector.extract_strided_slice %859 {offsets = [0, 0], sizes = [8, 1], strides = [1, 1]} : vector<8x2xf32> to vector<8x1xf32>
    %865 = vector.extract_strided_slice %2 {offsets = [0, 0], sizes = [1, 512], strides = [1, 1]} : vector<2x512xf32> to vector<1x512xf32>
    %866 = vector.broadcast %864 : vector<8x1xf32> to vector<8x512xf32>
    %867 = vector.broadcast %865 : vector<1x512xf32> to vector<8x512xf32>
    %868 = arith.mulf %866, %867 : vector<8x512xf32>
    %869 = arith.addf %863, %868 : vector<8x512xf32>
    %870 = vector.extract_strided_slice %859 {offsets = [0, 1], sizes = [8, 1], strides = [1, 1]} : vector<8x2xf32> to vector<8x1xf32>
    %871 = vector.extract_strided_slice %2 {offsets = [1, 0], sizes = [1, 512], strides = [1, 1]} : vector<2x512xf32> to vector<1x512xf32>
    %872 = vector.broadcast %870 : vector<8x1xf32> to vector<8x512xf32>
    %873 = vector.broadcast %871 : vector<1x512xf32> to vector<8x512xf32>
    %874 = arith.mulf %872, %873 : vector<8x512xf32>
    %875 = arith.addf %869, %874 : vector<8x512xf32>
    %876 = vector.extract_strided_slice %875 {offsets = [0, 0], sizes = [8, 128], strides = [1, 1]} : vector<8x512xf32> to vector<8x128xf32>
    %877 = arith.negf %876 : vector<8x128xf32>
    %878 = math.exp %877 : vector<8x128xf32>
    %cst_247 = arith.constant 1.000000e+00 : f32
    %879 = vector.broadcast %cst_247 : f32 to vector<8x128xf32>
    %880 = arith.addf %879, %878 : vector<8x128xf32>
    %881 = arith.divf %879, %880 : vector<8x128xf32>
    %882 = vector.extract_strided_slice %875 {offsets = [0, 128], sizes = [8, 128], strides = [1, 1]} : vector<8x512xf32> to vector<8x128xf32>
    %883 = arith.negf %882 : vector<8x128xf32>
    %884 = math.exp %883 : vector<8x128xf32>
    %cst_248 = arith.constant 1.000000e+00 : f32
    %885 = vector.broadcast %cst_248 : f32 to vector<8x128xf32>
    %886 = arith.addf %885, %884 : vector<8x128xf32>
    %887 = arith.divf %885, %886 : vector<8x128xf32>
    %888 = vector.extract_strided_slice %875 {offsets = [0, 256], sizes = [8, 128], strides = [1, 1]} : vector<8x512xf32> to vector<8x128xf32>
    %889 = math.tanh %888 : vector<8x128xf32>
    %890 = vector.extract_strided_slice %875 {offsets = [0, 384], sizes = [8, 128], strides = [1, 1]} : vector<8x512xf32> to vector<8x128xf32>
    %891 = arith.negf %890 : vector<8x128xf32>
    %892 = math.exp %891 : vector<8x128xf32>
    %cst_249 = arith.constant 1.000000e+00 : f32
    %893 = vector.broadcast %cst_249 : f32 to vector<8x128xf32>
    %894 = arith.addf %893, %892 : vector<8x128xf32>
    %895 = arith.divf %893, %894 : vector<8x128xf32>
    %896 = arith.mulf %887, %0 : vector<8x128xf32>
    %897 = arith.mulf %881, %889 : vector<8x128xf32>
    %898 = arith.addf %896, %897 : vector<8x128xf32>
    %899 = math.tanh %898 : vector<8x128xf32>
    %900 = arith.mulf %895, %899 : vector<8x128xf32>
    %901 = arith.truncf %900 : vector<8x128xf32> to vector<8x128xbf16>
    %c0_250 = arith.constant 0 : index
    %c0_251 = arith.constant 0 : index
    %902 = vector.load %arg13[%c0_250, %c0_251] : memref<128x256xbf16, #tpu.memory_space<vmem>>, vector<128x256xbf16>
    %cst_252 = arith.constant dense<0.000000e+00> : vector<8x256xf32>
    %903 = tpu.matmul %901, %902, %cst_252 {dimension_numbers = #tpu.dot_dimension_numbers<[1], [0], [0], [1], [0, 0, 1, 1], [], []>} : vector<8x128xbf16>, vector<128x256xbf16>, vector<8x256xf32> -> vector<8x256xf32>
    %904 = arith.addf %903, %18 : vector<8x256xf32>
    %905 = arith.negf %904 : vector<8x256xf32>
    %906 = math.exp %905 : vector<8x256xf32>
    %cst_253 = arith.constant 1.000000e+00 : f32
    %907 = vector.broadcast %cst_253 : f32 to vector<8x256xf32>
    %908 = arith.addf %907, %906 : vector<8x256xf32>
    %909 = arith.divf %907, %908 : vector<8x256xf32>
    %cst_254 = arith.constant dense<0.000000e+00> : vector<256xf32>
    %910 = vector.multi_reduction <add>, %909, %cst_254 [0] : vector<8x256xf32> to vector<256xf32>
    %911 = vector.shape_cast %910 : vector<256xf32> to vector<1x256xf32>
    %cst_255 = arith.constant 8.000000e+00 : f32
    %912 = vector.broadcast %cst_255 : f32 to vector<1x256xf32>
    %913 = arith.divf %911, %912 : vector<1x256xf32>
    %914 = arith.mulf %909, %909 : vector<8x256xf32>
    %cst_256 = arith.constant dense<0.000000e+00> : vector<256xf32>
    %915 = vector.multi_reduction <add>, %914, %cst_256 [0] : vector<8x256xf32> to vector<256xf32>
    %916 = vector.shape_cast %915 : vector<256xf32> to vector<1x256xf32>
    %cst_257 = arith.constant 8.000000e+00 : f32
    %917 = vector.broadcast %cst_257 : f32 to vector<1x256xf32>
    %918 = arith.divf %916, %917 : vector<1x256xf32>
    %919 = arith.mulf %913, %913 : vector<1x256xf32>
    %920 = arith.subf %918, %919 : vector<1x256xf32>
    %cst_258 = arith.constant 0.000000e+00 : f32
    %921 = vector.broadcast %cst_258 : f32 to vector<1x256xf32>
    %922 = arith.maximumf %920, %921 : vector<1x256xf32>
    %cst_259 = arith.constant 9.99999974E-6 : f32
    %923 = vector.broadcast %cst_259 : f32 to vector<1x256xf32>
    %924 = arith.addf %922, %923 : vector<1x256xf32>
    %925 = math.rsqrt %924 : vector<1x256xf32>
    %926 = arith.mulf %5, %925 : vector<1x256xf32>
    %927 = arith.mulf %913, %926 : vector<1x256xf32>
    %928 = arith.subf %6, %927 : vector<1x256xf32>
    %929 = vector.broadcast %926 : vector<1x256xf32> to vector<8x256xf32>
    %930 = arith.mulf %909, %929 : vector<8x256xf32>
    %931 = vector.broadcast %928 : vector<1x256xf32> to vector<8x256xf32>
    %932 = arith.addf %930, %931 : vector<8x256xf32>
    %933 = arith.truncf %932 : vector<8x256xf32> to vector<8x256xbf16>
    %c0_260 = arith.constant 0 : index
    %c0_261 = arith.constant 0 : index
    %934 = vector.load %arg17[%c0_260, %c0_261] : memref<256x8xbf16, #tpu.memory_space<vmem>>, vector<256x8xbf16>
    %cst_262 = arith.constant dense<0.000000e+00> : vector<8x8xf32>
    %935 = tpu.matmul %933, %934, %cst_262 {dimension_numbers = #tpu.dot_dimension_numbers<[1], [0], [0], [1], [0, 0, 1, 1], [], []>} : vector<8x256xbf16>, vector<256x8xbf16>, vector<8x8xf32> -> vector<8x8xf32>
    %936 = arith.addf %935, %21 : vector<8x8xf32>
    %937 = vector.extract_strided_slice %936 {offsets = [0, 0], sizes = [8, 4], strides = [1, 1]} : vector<8x8xf32> to vector<8x4xf32>
    %938 = vector.extract_strided_slice %936 {offsets = [0, 4], sizes = [8, 4], strides = [1, 1]} : vector<8x8xf32> to vector<8x4xf32>
    %cst_263 = arith.constant 2.000000e+01 : f32
    %939 = vector.broadcast %cst_263 : f32 to vector<8x4xf32>
    %940 = arith.cmpf ogt, %938, %939 : vector<8x4xf32>
    %cst_264 = arith.constant 2.000000e+01 : f32
    %941 = vector.broadcast %cst_264 : f32 to vector<8x4xf32>
    %942 = arith.minimumf %938, %941 : vector<8x4xf32>
    %943 = math.exp %942 : vector<8x4xf32>
    %944 = math.log1p %943 : vector<8x4xf32>
    %945 = arith.select %940, %938, %944 : vector<8x4xi1>, vector<8x4xf32>
    %c5_265 = arith.constant 5 : index
    %c0_266 = arith.constant 0 : index
    %c0_267 = arith.constant 0 : index
    %946 = vector.load %arg3[%c5_265, %c0_266, %c0_267] : memref<8x8x4xf32, #tpu.memory_space<vmem>>, vector<1x8x4xf32>
    %947 = vector.shape_cast %946 : vector<1x8x4xf32> to vector<8x4xf32>
    %948 = arith.mulf %945, %947 : vector<8x4xf32>
    %949 = arith.addf %937, %948 : vector<8x4xf32>
    %c5_268 = arith.constant 5 : index
    %c0_269 = arith.constant 0 : index
    %c0_270 = arith.constant 0 : index
    %950 = vector.load %arg19[%c5_268, %c0_269, %c0_270] : memref<8x8x4xf32, #tpu.memory_space<vmem>>, vector<1x8x4xf32>
    %951 = vector.shape_cast %950 : vector<1x8x4xf32> to vector<8x4xf32>
    %952 = vector.shape_cast %949 : vector<8x4xf32> to vector<1x8x4xf32>
    tpu.vector_store %arg19[%c5_268, %c0_269, %c0_270], %952 {strides = array<i32>} : memref<8x8x4xf32, #tpu.memory_space<vmem>>, vector<1x8x4xf32>,
    %953 = vector.extract_strided_slice %949 {offsets = [0, 0], sizes = [8, 1], strides = [1, 1]} : vector<8x4xf32> to vector<8x1xf32>
    %954 = vector.extract_strided_slice %1 {offsets = [0, 0], sizes = [1, 128], strides = [1, 1]} : vector<4x128xf32> to vector<1x128xf32>
    %955 = vector.broadcast %953 : vector<8x1xf32> to vector<8x128xf32>
    %956 = vector.broadcast %954 : vector<1x128xf32> to vector<8x128xf32>
    %957 = arith.mulf %955, %956 : vector<8x128xf32>
    %958 = arith.addf %9, %957 : vector<8x128xf32>
    %959 = vector.extract_strided_slice %949 {offsets = [0, 1], sizes = [8, 1], strides = [1, 1]} : vector<8x4xf32> to vector<8x1xf32>
    %960 = vector.extract_strided_slice %1 {offsets = [1, 0], sizes = [1, 128], strides = [1, 1]} : vector<4x128xf32> to vector<1x128xf32>
    %961 = vector.broadcast %959 : vector<8x1xf32> to vector<8x128xf32>
    %962 = vector.broadcast %960 : vector<1x128xf32> to vector<8x128xf32>
    %963 = arith.mulf %961, %962 : vector<8x128xf32>
    %964 = arith.addf %958, %963 : vector<8x128xf32>
    %965 = vector.extract_strided_slice %949 {offsets = [0, 2], sizes = [8, 1], strides = [1, 1]} : vector<8x4xf32> to vector<8x1xf32>
    %966 = vector.extract_strided_slice %1 {offsets = [2, 0], sizes = [1, 128], strides = [1, 1]} : vector<4x128xf32> to vector<1x128xf32>
    %967 = vector.broadcast %965 : vector<8x1xf32> to vector<8x128xf32>
    %968 = vector.broadcast %966 : vector<1x128xf32> to vector<8x128xf32>
    %969 = arith.mulf %967, %968 : vector<8x128xf32>
    %970 = arith.addf %964, %969 : vector<8x128xf32>
    %971 = vector.extract_strided_slice %949 {offsets = [0, 3], sizes = [8, 1], strides = [1, 1]} : vector<8x4xf32> to vector<8x1xf32>
    %972 = vector.extract_strided_slice %1 {offsets = [3, 0], sizes = [1, 128], strides = [1, 1]} : vector<4x128xf32> to vector<1x128xf32>
    %973 = vector.broadcast %971 : vector<8x1xf32> to vector<8x128xf32>
    %974 = vector.broadcast %972 : vector<1x128xf32> to vector<8x128xf32>
    %975 = arith.mulf %973, %974 : vector<8x128xf32>
    %976 = arith.addf %970, %975 : vector<8x128xf32>
    %977 = arith.negf %976 : vector<8x128xf32>
    %978 = math.exp %977 : vector<8x128xf32>
    %cst_271 = arith.constant 1.000000e+00 : f32
    %979 = vector.broadcast %cst_271 : f32 to vector<8x128xf32>
    %980 = arith.addf %979, %978 : vector<8x128xf32>
    %981 = arith.divf %979, %980 : vector<8x128xf32>
    %cst_272 = arith.constant dense<0.000000e+00> : vector<128xf32>
    %982 = vector.multi_reduction <add>, %981, %cst_272 [0] : vector<8x128xf32> to vector<128xf32>
    %983 = vector.shape_cast %982 : vector<128xf32> to vector<1x128xf32>
    %cst_273 = arith.constant 8.000000e+00 : f32
    %984 = vector.broadcast %cst_273 : f32 to vector<1x128xf32>
    %985 = arith.divf %983, %984 : vector<1x128xf32>
    %986 = arith.mulf %981, %981 : vector<8x128xf32>
    %cst_274 = arith.constant dense<0.000000e+00> : vector<128xf32>
    %987 = vector.multi_reduction <add>, %986, %cst_274 [0] : vector<8x128xf32> to vector<128xf32>
    %988 = vector.shape_cast %987 : vector<128xf32> to vector<1x128xf32>
    %cst_275 = arith.constant 8.000000e+00 : f32
    %989 = vector.broadcast %cst_275 : f32 to vector<1x128xf32>
    %990 = arith.divf %988, %989 : vector<1x128xf32>
    %991 = arith.mulf %985, %985 : vector<1x128xf32>
    %992 = arith.subf %990, %991 : vector<1x128xf32>
    %cst_276 = arith.constant 0.000000e+00 : f32
    %993 = vector.broadcast %cst_276 : f32 to vector<1x128xf32>
    %994 = arith.maximumf %992, %993 : vector<1x128xf32>
    %cst_277 = arith.constant 9.99999974E-6 : f32
    %995 = vector.broadcast %cst_277 : f32 to vector<1x128xf32>
    %996 = arith.addf %994, %995 : vector<1x128xf32>
    %997 = math.rsqrt %996 : vector<1x128xf32>
    %998 = arith.mulf %3, %997 : vector<1x128xf32>
    %999 = arith.mulf %985, %998 : vector<1x128xf32>
    %1000 = arith.subf %4, %999 : vector<1x128xf32>
    %1001 = vector.broadcast %998 : vector<1x128xf32> to vector<8x128xf32>
    %1002 = arith.mulf %981, %1001 : vector<8x128xf32>
    %1003 = vector.broadcast %1000 : vector<1x128xf32> to vector<8x128xf32>
    %1004 = arith.addf %1002, %1003 : vector<8x128xf32>
    %1005 = arith.truncf %1004 : vector<8x128xf32> to vector<8x128xbf16>
    %c0_278 = arith.constant 0 : index
    %c0_279 = arith.constant 0 : index
    %1006 = vector.load %arg8[%c0_278, %c0_279] : memref<128x128xbf16, #tpu.memory_space<vmem>>, vector<128x128xbf16>
    %cst_280 = arith.constant dense<0.000000e+00> : vector<8x128xf32>
    %1007 = tpu.matmul %1005, %1006, %cst_280 {dimension_numbers = #tpu.dot_dimension_numbers<[1], [0], [0], [1], [0, 0, 1, 1], [], []>} : vector<8x128xbf16>, vector<128x128xbf16>, vector<8x128xf32> -> vector<8x128xf32>
    %1008 = arith.addf %1007, %12 : vector<8x128xf32>
    %c6 = arith.constant 6 : index
    %c0_281 = arith.constant 0 : index
    %c0_282 = arith.constant 0 : index
    %1009 = vector.load %arg2[%c6, %c0_281, %c0_282] : memref<8x8x2xf32, #tpu.memory_space<vmem>>, vector<1x8x2xf32>
    %1010 = vector.shape_cast %1009 : vector<1x8x2xf32> to vector<8x2xf32>
    %cst_283 = arith.constant -1.000000e+00 : f32
    %cst_284 = arith.constant 1.000000e+00 : f32
    %1011 = vector.broadcast %cst_283 : f32 to vector<8x2xf32>
    %1012 = arith.maximumf %1011, %1010 : vector<8x2xf32>
    %1013 = vector.broadcast %cst_284 : f32 to vector<8x2xf32>
    %1014 = arith.minimumf %1013, %1012 : vector<8x2xf32>
    %1015 = arith.truncf %1008 : vector<8x128xf32> to vector<8x128xbf16>
    %c0_285 = arith.constant 0 : index
    %c0_286 = arith.constant 0 : index
    %1016 = vector.load %arg11[%c0_285, %c0_286] : memref<128x512xbf16, #tpu.memory_space<vmem>>, vector<128x512xbf16>
    %cst_287 = arith.constant dense<0.000000e+00> : vector<8x512xf32>
    %1017 = tpu.matmul %1015, %1016, %cst_287 {dimension_numbers = #tpu.dot_dimension_numbers<[1], [0], [0], [1], [0, 0, 1, 1], [], []>} : vector<8x128xbf16>, vector<128x512xbf16>, vector<8x512xf32> -> vector<8x512xf32>
    %1018 = arith.addf %1017, %15 : vector<8x512xf32>
    %1019 = vector.extract_strided_slice %1014 {offsets = [0, 0], sizes = [8, 1], strides = [1, 1]} : vector<8x2xf32> to vector<8x1xf32>
    %1020 = vector.extract_strided_slice %2 {offsets = [0, 0], sizes = [1, 512], strides = [1, 1]} : vector<2x512xf32> to vector<1x512xf32>
    %1021 = vector.broadcast %1019 : vector<8x1xf32> to vector<8x512xf32>
    %1022 = vector.broadcast %1020 : vector<1x512xf32> to vector<8x512xf32>
    %1023 = arith.mulf %1021, %1022 : vector<8x512xf32>
    %1024 = arith.addf %1018, %1023 : vector<8x512xf32>
    %1025 = vector.extract_strided_slice %1014 {offsets = [0, 1], sizes = [8, 1], strides = [1, 1]} : vector<8x2xf32> to vector<8x1xf32>
    %1026 = vector.extract_strided_slice %2 {offsets = [1, 0], sizes = [1, 512], strides = [1, 1]} : vector<2x512xf32> to vector<1x512xf32>
    %1027 = vector.broadcast %1025 : vector<8x1xf32> to vector<8x512xf32>
    %1028 = vector.broadcast %1026 : vector<1x512xf32> to vector<8x512xf32>
    %1029 = arith.mulf %1027, %1028 : vector<8x512xf32>
    %1030 = arith.addf %1024, %1029 : vector<8x512xf32>
    %1031 = vector.extract_strided_slice %1030 {offsets = [0, 0], sizes = [8, 128], strides = [1, 1]} : vector<8x512xf32> to vector<8x128xf32>
    %1032 = arith.negf %1031 : vector<8x128xf32>
    %1033 = math.exp %1032 : vector<8x128xf32>
    %cst_288 = arith.constant 1.000000e+00 : f32
    %1034 = vector.broadcast %cst_288 : f32 to vector<8x128xf32>
    %1035 = arith.addf %1034, %1033 : vector<8x128xf32>
    %1036 = arith.divf %1034, %1035 : vector<8x128xf32>
    %1037 = vector.extract_strided_slice %1030 {offsets = [0, 128], sizes = [8, 128], strides = [1, 1]} : vector<8x512xf32> to vector<8x128xf32>
    %1038 = arith.negf %1037 : vector<8x128xf32>
    %1039 = math.exp %1038 : vector<8x128xf32>
    %cst_289 = arith.constant 1.000000e+00 : f32
    %1040 = vector.broadcast %cst_289 : f32 to vector<8x128xf32>
    %1041 = arith.addf %1040, %1039 : vector<8x128xf32>
    %1042 = arith.divf %1040, %1041 : vector<8x128xf32>
    %1043 = vector.extract_strided_slice %1030 {offsets = [0, 256], sizes = [8, 128], strides = [1, 1]} : vector<8x512xf32> to vector<8x128xf32>
    %1044 = math.tanh %1043 : vector<8x128xf32>
    %1045 = vector.extract_strided_slice %1030 {offsets = [0, 384], sizes = [8, 128], strides = [1, 1]} : vector<8x512xf32> to vector<8x128xf32>
    %1046 = arith.negf %1045 : vector<8x128xf32>
    %1047 = math.exp %1046 : vector<8x128xf32>
    %cst_290 = arith.constant 1.000000e+00 : f32
    %1048 = vector.broadcast %cst_290 : f32 to vector<8x128xf32>
    %1049 = arith.addf %1048, %1047 : vector<8x128xf32>
    %1050 = arith.divf %1048, %1049 : vector<8x128xf32>
    %1051 = arith.mulf %1042, %0 : vector<8x128xf32>
    %1052 = arith.mulf %1036, %1044 : vector<8x128xf32>
    %1053 = arith.addf %1051, %1052 : vector<8x128xf32>
    %1054 = math.tanh %1053 : vector<8x128xf32>
    %1055 = arith.mulf %1050, %1054 : vector<8x128xf32>
    %1056 = arith.truncf %1055 : vector<8x128xf32> to vector<8x128xbf16>
    %c0_291 = arith.constant 0 : index
    %c0_292 = arith.constant 0 : index
    %1057 = vector.load %arg13[%c0_291, %c0_292] : memref<128x256xbf16, #tpu.memory_space<vmem>>, vector<128x256xbf16>
    %cst_293 = arith.constant dense<0.000000e+00> : vector<8x256xf32>
    %1058 = tpu.matmul %1056, %1057, %cst_293 {dimension_numbers = #tpu.dot_dimension_numbers<[1], [0], [0], [1], [0, 0, 1, 1], [], []>} : vector<8x128xbf16>, vector<128x256xbf16>, vector<8x256xf32> -> vector<8x256xf32>
    %1059 = arith.addf %1058, %18 : vector<8x256xf32>
    %1060 = arith.negf %1059 : vector<8x256xf32>
    %1061 = math.exp %1060 : vector<8x256xf32>
    %cst_294 = arith.constant 1.000000e+00 : f32
    %1062 = vector.broadcast %cst_294 : f32 to vector<8x256xf32>
    %1063 = arith.addf %1062, %1061 : vector<8x256xf32>
    %1064 = arith.divf %1062, %1063 : vector<8x256xf32>
    %cst_295 = arith.constant dense<0.000000e+00> : vector<256xf32>
    %1065 = vector.multi_reduction <add>, %1064, %cst_295 [0] : vector<8x256xf32> to vector<256xf32>
    %1066 = vector.shape_cast %1065 : vector<256xf32> to vector<1x256xf32>
    %cst_296 = arith.constant 8.000000e+00 : f32
    %1067 = vector.broadcast %cst_296 : f32 to vector<1x256xf32>
    %1068 = arith.divf %1066, %1067 : vector<1x256xf32>
    %1069 = arith.mulf %1064, %1064 : vector<8x256xf32>
    %cst_297 = arith.constant dense<0.000000e+00> : vector<256xf32>
    %1070 = vector.multi_reduction <add>, %1069, %cst_297 [0] : vector<8x256xf32> to vector<256xf32>
    %1071 = vector.shape_cast %1070 : vector<256xf32> to vector<1x256xf32>
    %cst_298 = arith.constant 8.000000e+00 : f32
    %1072 = vector.broadcast %cst_298 : f32 to vector<1x256xf32>
    %1073 = arith.divf %1071, %1072 : vector<1x256xf32>
    %1074 = arith.mulf %1068, %1068 : vector<1x256xf32>
    %1075 = arith.subf %1073, %1074 : vector<1x256xf32>
    %cst_299 = arith.constant 0.000000e+00 : f32
    %1076 = vector.broadcast %cst_299 : f32 to vector<1x256xf32>
    %1077 = arith.maximumf %1075, %1076 : vector<1x256xf32>
    %cst_300 = arith.constant 9.99999974E-6 : f32
    %1078 = vector.broadcast %cst_300 : f32 to vector<1x256xf32>
    %1079 = arith.addf %1077, %1078 : vector<1x256xf32>
    %1080 = math.rsqrt %1079 : vector<1x256xf32>
    %1081 = arith.mulf %5, %1080 : vector<1x256xf32>
    %1082 = arith.mulf %1068, %1081 : vector<1x256xf32>
    %1083 = arith.subf %6, %1082 : vector<1x256xf32>
    %1084 = vector.broadcast %1081 : vector<1x256xf32> to vector<8x256xf32>
    %1085 = arith.mulf %1064, %1084 : vector<8x256xf32>
    %1086 = vector.broadcast %1083 : vector<1x256xf32> to vector<8x256xf32>
    %1087 = arith.addf %1085, %1086 : vector<8x256xf32>
    %1088 = arith.truncf %1087 : vector<8x256xf32> to vector<8x256xbf16>
    %c0_301 = arith.constant 0 : index
    %c0_302 = arith.constant 0 : index
    %1089 = vector.load %arg17[%c0_301, %c0_302] : memref<256x8xbf16, #tpu.memory_space<vmem>>, vector<256x8xbf16>
    %cst_303 = arith.constant dense<0.000000e+00> : vector<8x8xf32>
    %1090 = tpu.matmul %1088, %1089, %cst_303 {dimension_numbers = #tpu.dot_dimension_numbers<[1], [0], [0], [1], [0, 0, 1, 1], [], []>} : vector<8x256xbf16>, vector<256x8xbf16>, vector<8x8xf32> -> vector<8x8xf32>
    %1091 = arith.addf %1090, %21 : vector<8x8xf32>
    %1092 = vector.extract_strided_slice %1091 {offsets = [0, 0], sizes = [8, 4], strides = [1, 1]} : vector<8x8xf32> to vector<8x4xf32>
    %1093 = vector.extract_strided_slice %1091 {offsets = [0, 4], sizes = [8, 4], strides = [1, 1]} : vector<8x8xf32> to vector<8x4xf32>
    %cst_304 = arith.constant 2.000000e+01 : f32
    %1094 = vector.broadcast %cst_304 : f32 to vector<8x4xf32>
    %1095 = arith.cmpf ogt, %1093, %1094 : vector<8x4xf32>
    %cst_305 = arith.constant 2.000000e+01 : f32
    %1096 = vector.broadcast %cst_305 : f32 to vector<8x4xf32>
    %1097 = arith.minimumf %1093, %1096 : vector<8x4xf32>
    %1098 = math.exp %1097 : vector<8x4xf32>
    %1099 = math.log1p %1098 : vector<8x4xf32>
    %1100 = arith.select %1095, %1093, %1099 : vector<8x4xi1>, vector<8x4xf32>
    %c6_306 = arith.constant 6 : index
    %c0_307 = arith.constant 0 : index
    %c0_308 = arith.constant 0 : index
    %1101 = vector.load %arg3[%c6_306, %c0_307, %c0_308] : memref<8x8x4xf32, #tpu.memory_space<vmem>>, vector<1x8x4xf32>
    %1102 = vector.shape_cast %1101 : vector<1x8x4xf32> to vector<8x4xf32>
    %1103 = arith.mulf %1100, %1102 : vector<8x4xf32>
    %1104 = arith.addf %1092, %1103 : vector<8x4xf32>
    %c6_309 = arith.constant 6 : index
    %c0_310 = arith.constant 0 : index
    %c0_311 = arith.constant 0 : index
    %1105 = vector.load %arg19[%c6_309, %c0_310, %c0_311] : memref<8x8x4xf32, #tpu.memory_space<vmem>>, vector<1x8x4xf32>
    %1106 = vector.shape_cast %1105 : vector<1x8x4xf32> to vector<8x4xf32>
    %1107 = vector.shape_cast %1104 : vector<8x4xf32> to vector<1x8x4xf32>
    tpu.vector_store %arg19[%c6_309, %c0_310, %c0_311], %1107 {strides = array<i32>} : memref<8x8x4xf32, #tpu.memory_space<vmem>>, vector<1x8x4xf32>,
    %1108 = vector.extract_strided_slice %1104 {offsets = [0, 0], sizes = [8, 1], strides = [1, 1]} : vector<8x4xf32> to vector<8x1xf32>
    %1109 = vector.extract_strided_slice %1 {offsets = [0, 0], sizes = [1, 128], strides = [1, 1]} : vector<4x128xf32> to vector<1x128xf32>
    %1110 = vector.broadcast %1108 : vector<8x1xf32> to vector<8x128xf32>
    %1111 = vector.broadcast %1109 : vector<1x128xf32> to vector<8x128xf32>
    %1112 = arith.mulf %1110, %1111 : vector<8x128xf32>
    %1113 = arith.addf %9, %1112 : vector<8x128xf32>
    %1114 = vector.extract_strided_slice %1104 {offsets = [0, 1], sizes = [8, 1], strides = [1, 1]} : vector<8x4xf32> to vector<8x1xf32>
    %1115 = vector.extract_strided_slice %1 {offsets = [1, 0], sizes = [1, 128], strides = [1, 1]} : vector<4x128xf32> to vector<1x128xf32>
    %1116 = vector.broadcast %1114 : vector<8x1xf32> to vector<8x128xf32>
    %1117 = vector.broadcast %1115 : vector<1x128xf32> to vector<8x128xf32>
    %1118 = arith.mulf %1116, %1117 : vector<8x128xf32>
    %1119 = arith.addf %1113, %1118 : vector<8x128xf32>
    %1120 = vector.extract_strided_slice %1104 {offsets = [0, 2], sizes = [8, 1], strides = [1, 1]} : vector<8x4xf32> to vector<8x1xf32>
    %1121 = vector.extract_strided_slice %1 {offsets = [2, 0], sizes = [1, 128], strides = [1, 1]} : vector<4x128xf32> to vector<1x128xf32>
    %1122 = vector.broadcast %1120 : vector<8x1xf32> to vector<8x128xf32>
    %1123 = vector.broadcast %1121 : vector<1x128xf32> to vector<8x128xf32>
    %1124 = arith.mulf %1122, %1123 : vector<8x128xf32>
    %1125 = arith.addf %1119, %1124 : vector<8x128xf32>
    %1126 = vector.extract_strided_slice %1104 {offsets = [0, 3], sizes = [8, 1], strides = [1, 1]} : vector<8x4xf32> to vector<8x1xf32>
    %1127 = vector.extract_strided_slice %1 {offsets = [3, 0], sizes = [1, 128], strides = [1, 1]} : vector<4x128xf32> to vector<1x128xf32>
    %1128 = vector.broadcast %1126 : vector<8x1xf32> to vector<8x128xf32>
    %1129 = vector.broadcast %1127 : vector<1x128xf32> to vector<8x128xf32>
    %1130 = arith.mulf %1128, %1129 : vector<8x128xf32>
    %1131 = arith.addf %1125, %1130 : vector<8x128xf32>
    %1132 = arith.negf %1131 : vector<8x128xf32>
    %1133 = math.exp %1132 : vector<8x128xf32>
    %cst_312 = arith.constant 1.000000e+00 : f32
    %1134 = vector.broadcast %cst_312 : f32 to vector<8x128xf32>
    %1135 = arith.addf %1134, %1133 : vector<8x128xf32>
    %1136 = arith.divf %1134, %1135 : vector<8x128xf32>
    %cst_313 = arith.constant dense<0.000000e+00> : vector<128xf32>
    %1137 = vector.multi_reduction <add>, %1136, %cst_313 [0] : vector<8x128xf32> to vector<128xf32>
    %1138 = vector.shape_cast %1137 : vector<128xf32> to vector<1x128xf32>
    %cst_314 = arith.constant 8.000000e+00 : f32
    %1139 = vector.broadcast %cst_314 : f32 to vector<1x128xf32>
    %1140 = arith.divf %1138, %1139 : vector<1x128xf32>
    %1141 = arith.mulf %1136, %1136 : vector<8x128xf32>
    %cst_315 = arith.constant dense<0.000000e+00> : vector<128xf32>
    %1142 = vector.multi_reduction <add>, %1141, %cst_315 [0] : vector<8x128xf32> to vector<128xf32>
    %1143 = vector.shape_cast %1142 : vector<128xf32> to vector<1x128xf32>
    %cst_316 = arith.constant 8.000000e+00 : f32
    %1144 = vector.broadcast %cst_316 : f32 to vector<1x128xf32>
    %1145 = arith.divf %1143, %1144 : vector<1x128xf32>
    %1146 = arith.mulf %1140, %1140 : vector<1x128xf32>
    %1147 = arith.subf %1145, %1146 : vector<1x128xf32>
    %cst_317 = arith.constant 0.000000e+00 : f32
    %1148 = vector.broadcast %cst_317 : f32 to vector<1x128xf32>
    %1149 = arith.maximumf %1147, %1148 : vector<1x128xf32>
    %cst_318 = arith.constant 9.99999974E-6 : f32
    %1150 = vector.broadcast %cst_318 : f32 to vector<1x128xf32>
    %1151 = arith.addf %1149, %1150 : vector<1x128xf32>
    %1152 = math.rsqrt %1151 : vector<1x128xf32>
    %1153 = arith.mulf %3, %1152 : vector<1x128xf32>
    %1154 = arith.mulf %1140, %1153 : vector<1x128xf32>
    %1155 = arith.subf %4, %1154 : vector<1x128xf32>
    %1156 = vector.broadcast %1153 : vector<1x128xf32> to vector<8x128xf32>
    %1157 = arith.mulf %1136, %1156 : vector<8x128xf32>
    %1158 = vector.broadcast %1155 : vector<1x128xf32> to vector<8x128xf32>
    %1159 = arith.addf %1157, %1158 : vector<8x128xf32>
    %1160 = arith.truncf %1159 : vector<8x128xf32> to vector<8x128xbf16>
    %c0_319 = arith.constant 0 : index
    %c0_320 = arith.constant 0 : index
    %1161 = vector.load %arg8[%c0_319, %c0_320] : memref<128x128xbf16, #tpu.memory_space<vmem>>, vector<128x128xbf16>
    %cst_321 = arith.constant dense<0.000000e+00> : vector<8x128xf32>
    %1162 = tpu.matmul %1160, %1161, %cst_321 {dimension_numbers = #tpu.dot_dimension_numbers<[1], [0], [0], [1], [0, 0, 1, 1], [], []>} : vector<8x128xbf16>, vector<128x128xbf16>, vector<8x128xf32> -> vector<8x128xf32>
    %1163 = arith.addf %1162, %12 : vector<8x128xf32>
    %c7 = arith.constant 7 : index
    %c0_322 = arith.constant 0 : index
    %c0_323 = arith.constant 0 : index
    %1164 = vector.load %arg2[%c7, %c0_322, %c0_323] : memref<8x8x2xf32, #tpu.memory_space<vmem>>, vector<1x8x2xf32>
    %1165 = vector.shape_cast %1164 : vector<1x8x2xf32> to vector<8x2xf32>
    %cst_324 = arith.constant -1.000000e+00 : f32
    %cst_325 = arith.constant 1.000000e+00 : f32
    %1166 = vector.broadcast %cst_324 : f32 to vector<8x2xf32>
    %1167 = arith.maximumf %1166, %1165 : vector<8x2xf32>
    %1168 = vector.broadcast %cst_325 : f32 to vector<8x2xf32>
    %1169 = arith.minimumf %1168, %1167 : vector<8x2xf32>
    %1170 = arith.truncf %1163 : vector<8x128xf32> to vector<8x128xbf16>
    %c0_326 = arith.constant 0 : index
    %c0_327 = arith.constant 0 : index
    %1171 = vector.load %arg11[%c0_326, %c0_327] : memref<128x512xbf16, #tpu.memory_space<vmem>>, vector<128x512xbf16>
    %cst_328 = arith.constant dense<0.000000e+00> : vector<8x512xf32>
    %1172 = tpu.matmul %1170, %1171, %cst_328 {dimension_numbers = #tpu.dot_dimension_numbers<[1], [0], [0], [1], [0, 0, 1, 1], [], []>} : vector<8x128xbf16>, vector<128x512xbf16>, vector<8x512xf32> -> vector<8x512xf32>
    %1173 = arith.addf %1172, %15 : vector<8x512xf32>
    %1174 = vector.extract_strided_slice %1169 {offsets = [0, 0], sizes = [8, 1], strides = [1, 1]} : vector<8x2xf32> to vector<8x1xf32>
    %1175 = vector.extract_strided_slice %2 {offsets = [0, 0], sizes = [1, 512], strides = [1, 1]} : vector<2x512xf32> to vector<1x512xf32>
    %1176 = vector.broadcast %1174 : vector<8x1xf32> to vector<8x512xf32>
    %1177 = vector.broadcast %1175 : vector<1x512xf32> to vector<8x512xf32>
    %1178 = arith.mulf %1176, %1177 : vector<8x512xf32>
    %1179 = arith.addf %1173, %1178 : vector<8x512xf32>
    %1180 = vector.extract_strided_slice %1169 {offsets = [0, 1], sizes = [8, 1], strides = [1, 1]} : vector<8x2xf32> to vector<8x1xf32>
    %1181 = vector.extract_strided_slice %2 {offsets = [1, 0], sizes = [1, 512], strides = [1, 1]} : vector<2x512xf32> to vector<1x512xf32>
    %1182 = vector.broadcast %1180 : vector<8x1xf32> to vector<8x512xf32>
    %1183 = vector.broadcast %1181 : vector<1x512xf32> to vector<8x512xf32>
    %1184 = arith.mulf %1182, %1183 : vector<8x512xf32>
    %1185 = arith.addf %1179, %1184 : vector<8x512xf32>
    %1186 = vector.extract_strided_slice %1185 {offsets = [0, 0], sizes = [8, 128], strides = [1, 1]} : vector<8x512xf32> to vector<8x128xf32>
    %1187 = arith.negf %1186 : vector<8x128xf32>
    %1188 = math.exp %1187 : vector<8x128xf32>
    %cst_329 = arith.constant 1.000000e+00 : f32
    %1189 = vector.broadcast %cst_329 : f32 to vector<8x128xf32>
    %1190 = arith.addf %1189, %1188 : vector<8x128xf32>
    %1191 = arith.divf %1189, %1190 : vector<8x128xf32>
    %1192 = vector.extract_strided_slice %1185 {offsets = [0, 128], sizes = [8, 128], strides = [1, 1]} : vector<8x512xf32> to vector<8x128xf32>
    %1193 = arith.negf %1192 : vector<8x128xf32>
    %1194 = math.exp %1193 : vector<8x128xf32>
    %cst_330 = arith.constant 1.000000e+00 : f32
    %1195 = vector.broadcast %cst_330 : f32 to vector<8x128xf32>
    %1196 = arith.addf %1195, %1194 : vector<8x128xf32>
    %1197 = arith.divf %1195, %1196 : vector<8x128xf32>
    %1198 = vector.extract_strided_slice %1185 {offsets = [0, 256], sizes = [8, 128], strides = [1, 1]} : vector<8x512xf32> to vector<8x128xf32>
    %1199 = math.tanh %1198 : vector<8x128xf32>
    %1200 = vector.extract_strided_slice %1185 {offsets = [0, 384], sizes = [8, 128], strides = [1, 1]} : vector<8x512xf32> to vector<8x128xf32>
    %1201 = arith.negf %1200 : vector<8x128xf32>
    %1202 = math.exp %1201 : vector<8x128xf32>
    %cst_331 = arith.constant 1.000000e+00 : f32
    %1203 = vector.broadcast %cst_331 : f32 to vector<8x128xf32>
    %1204 = arith.addf %1203, %1202 : vector<8x128xf32>
    %1205 = arith.divf %1203, %1204 : vector<8x128xf32>
    %1206 = arith.mulf %1197, %0 : vector<8x128xf32>
    %1207 = arith.mulf %1191, %1199 : vector<8x128xf32>
    %1208 = arith.addf %1206, %1207 : vector<8x128xf32>
    %1209 = math.tanh %1208 : vector<8x128xf32>
    %1210 = arith.mulf %1205, %1209 : vector<8x128xf32>
    %1211 = arith.truncf %1210 : vector<8x128xf32> to vector<8x128xbf16>
    %c0_332 = arith.constant 0 : index
    %c0_333 = arith.constant 0 : index
    %1212 = vector.load %arg13[%c0_332, %c0_333] : memref<128x256xbf16, #tpu.memory_space<vmem>>, vector<128x256xbf16>
    %cst_334 = arith.constant dense<0.000000e+00> : vector<8x256xf32>
    %1213 = tpu.matmul %1211, %1212, %cst_334 {dimension_numbers = #tpu.dot_dimension_numbers<[1], [0], [0], [1], [0, 0, 1, 1], [], []>} : vector<8x128xbf16>, vector<128x256xbf16>, vector<8x256xf32> -> vector<8x256xf32>
    %1214 = arith.addf %1213, %18 : vector<8x256xf32>
    %1215 = arith.negf %1214 : vector<8x256xf32>
    %1216 = math.exp %1215 : vector<8x256xf32>
    %cst_335 = arith.constant 1.000000e+00 : f32
    %1217 = vector.broadcast %cst_335 : f32 to vector<8x256xf32>
    %1218 = arith.addf %1217, %1216 : vector<8x256xf32>
    %1219 = arith.divf %1217, %1218 : vector<8x256xf32>
    %cst_336 = arith.constant dense<0.000000e+00> : vector<256xf32>
    %1220 = vector.multi_reduction <add>, %1219, %cst_336 [0] : vector<8x256xf32> to vector<256xf32>
    %1221 = vector.shape_cast %1220 : vector<256xf32> to vector<1x256xf32>
    %cst_337 = arith.constant 8.000000e+00 : f32
    %1222 = vector.broadcast %cst_337 : f32 to vector<1x256xf32>
    %1223 = arith.divf %1221, %1222 : vector<1x256xf32>
    %1224 = arith.mulf %1219, %1219 : vector<8x256xf32>
    %cst_338 = arith.constant dense<0.000000e+00> : vector<256xf32>
    %1225 = vector.multi_reduction <add>, %1224, %cst_338 [0] : vector<8x256xf32> to vector<256xf32>
    %1226 = vector.shape_cast %1225 : vector<256xf32> to vector<1x256xf32>
    %cst_339 = arith.constant 8.000000e+00 : f32
    %1227 = vector.broadcast %cst_339 : f32 to vector<1x256xf32>
    %1228 = arith.divf %1226, %1227 : vector<1x256xf32>
    %1229 = arith.mulf %1223, %1223 : vector<1x256xf32>
    %1230 = arith.subf %1228, %1229 : vector<1x256xf32>
    %cst_340 = arith.constant 0.000000e+00 : f32
    %1231 = vector.broadcast %cst_340 : f32 to vector<1x256xf32>
    %1232 = arith.maximumf %1230, %1231 : vector<1x256xf32>
    %cst_341 = arith.constant 9.99999974E-6 : f32
    %1233 = vector.broadcast %cst_341 : f32 to vector<1x256xf32>
    %1234 = arith.addf %1232, %1233 : vector<1x256xf32>
    %1235 = math.rsqrt %1234 : vector<1x256xf32>
    %1236 = arith.mulf %5, %1235 : vector<1x256xf32>
    %1237 = arith.mulf %1223, %1236 : vector<1x256xf32>
    %1238 = arith.subf %6, %1237 : vector<1x256xf32>
    %1239 = vector.broadcast %1236 : vector<1x256xf32> to vector<8x256xf32>
    %1240 = arith.mulf %1219, %1239 : vector<8x256xf32>
    %1241 = vector.broadcast %1238 : vector<1x256xf32> to vector<8x256xf32>
    %1242 = arith.addf %1240, %1241 : vector<8x256xf32>
    %1243 = arith.truncf %1242 : vector<8x256xf32> to vector<8x256xbf16>
    %c0_342 = arith.constant 0 : index
    %c0_343 = arith.constant 0 : index
    %1244 = vector.load %arg17[%c0_342, %c0_343] : memref<256x8xbf16, #tpu.memory_space<vmem>>, vector<256x8xbf16>
    %cst_344 = arith.constant dense<0.000000e+00> : vector<8x8xf32>
    %1245 = tpu.matmul %1243, %1244, %cst_344 {dimension_numbers = #tpu.dot_dimension_numbers<[1], [0], [0], [1], [0, 0, 1, 1], [], []>} : vector<8x256xbf16>, vector<256x8xbf16>, vector<8x8xf32> -> vector<8x8xf32>
    %1246 = arith.addf %1245, %21 : vector<8x8xf32>
    %1247 = vector.extract_strided_slice %1246 {offsets = [0, 0], sizes = [8, 4], strides = [1, 1]} : vector<8x8xf32> to vector<8x4xf32>
    %1248 = vector.extract_strided_slice %1246 {offsets = [0, 4], sizes = [8, 4], strides = [1, 1]} : vector<8x8xf32> to vector<8x4xf32>
    %cst_345 = arith.constant 2.000000e+01 : f32
    %1249 = vector.broadcast %cst_345 : f32 to vector<8x4xf32>
    %1250 = arith.cmpf ogt, %1248, %1249 : vector<8x4xf32>
    %cst_346 = arith.constant 2.000000e+01 : f32
    %1251 = vector.broadcast %cst_346 : f32 to vector<8x4xf32>
    %1252 = arith.minimumf %1248, %1251 : vector<8x4xf32>
    %1253 = math.exp %1252 : vector<8x4xf32>
    %1254 = math.log1p %1253 : vector<8x4xf32>
    %1255 = arith.select %1250, %1248, %1254 : vector<8x4xi1>, vector<8x4xf32>
    %c7_347 = arith.constant 7 : index
    %c0_348 = arith.constant 0 : index
    %c0_349 = arith.constant 0 : index
    %1256 = vector.load %arg3[%c7_347, %c0_348, %c0_349] : memref<8x8x4xf32, #tpu.memory_space<vmem>>, vector<1x8x4xf32>
    %1257 = vector.shape_cast %1256 : vector<1x8x4xf32> to vector<8x4xf32>
    %1258 = arith.mulf %1255, %1257 : vector<8x4xf32>
    %1259 = arith.addf %1247, %1258 : vector<8x4xf32>
    %c7_350 = arith.constant 7 : index
    %c0_351 = arith.constant 0 : index
    %c0_352 = arith.constant 0 : index
    %1260 = vector.load %arg19[%c7_350, %c0_351, %c0_352] : memref<8x8x4xf32, #tpu.memory_space<vmem>>, vector<1x8x4xf32>
    %1261 = vector.shape_cast %1260 : vector<1x8x4xf32> to vector<8x4xf32>
    %1262 = vector.shape_cast %1259 : vector<8x4xf32> to vector<1x8x4xf32>
    tpu.vector_store %arg19[%c7_350, %c0_351, %c0_352], %1262 {strides = array<i32>} : memref<8x8x4xf32, #tpu.memory_space<vmem>>, vector<1x8x4xf32>,
    return
  }
}

</mosaic_0001>

<llo_original>
// kernel: tpu_custom_call.1
$region0: #{tpu_custom_call.1}
  #allocation0 [shape = 'u32[]', space=smem, size = 0x4, offset = 0x4, fixed_abs, tag = 'smem constant byte address 0x4 - core index']
  #allocation1 [shape = 'u32[144,128]{1,0:T(1,128)}', space=vmem, size = 0x12000, scoped, tag = 'internal scratch']
  %s0 = inlined_call_operand.vmem [shape: f32[8,4], index: 0, kind: input, shape index: {}]
  %s1 = inlined_call_operand.vmem [shape: f32[8,128], index: 1, kind: input, shape index: {}]
  %s2 = inlined_call_operand.vmem [shape: f32[8,8,2], index: 2, kind: input, shape index: {}]
  %s3 = inlined_call_operand.vmem [shape: f32[8,8,4], index: 3, kind: input, shape index: {}]
  %s4 = inlined_call_operand.hbm [shape: f32[4,128], index: 4, kind: input, shape index: {}]
  %s5 = inlined_call_operand.vmem [shape: f32[1,128], index: 5, kind: input, shape index: {}]
  %s6 = inlined_call_operand.hbm [shape: f32[1,128], index: 6, kind: input, shape index: {}]
  %s7 = inlined_call_operand.hbm [shape: f32[1,128], index: 7, kind: input, shape index: {}]
  %s8 = inlined_call_operand.vmem [shape: bf16[128,128], index: 8, kind: input, shape index: {}]
  %s9 = inlined_call_operand.hbm [shape: f32[1,128], index: 9, kind: input, shape index: {}]
  %s10 = inlined_call_operand.vmem [shape: f32[2,512], index: 10, kind: input, shape index: {}]
  %s11 = inlined_call_operand.vmem [shape: bf16[128,512], index: 11, kind: input, shape index: {}]
  %s12 = inlined_call_operand.hbm [shape: f32[1,512], index: 12, kind: input, shape index: {}]
  %s13 = inlined_call_operand.hbm [shape: bf16[128,256], index: 13, kind: input, shape index: {}]
  %s14 = inlined_call_operand.vmem [shape: f32[1,256], index: 14, kind: input, shape index: {}]
  %s15 = inlined_call_operand.vmem [shape: f32[1,256], index: 15, kind: input, shape index: {}]
  %s16 = inlined_call_operand.vmem [shape: f32[1,256], index: 16, kind: input, shape index: {}]
  %s17 = inlined_call_operand.vmem [shape: bf16[256,8], index: 17, kind: input, shape index: {}]
  %s18 = inlined_call_operand.vmem [shape: f32[1,8], index: 18, kind: input, shape index: {}]
  %s19 = inlined_call_operand.vmem [shape: f32[8,8,4], index: 19, kind: output, shape index: {}]
  %s20 = sld [smem:[#allocation0]]
  $region110: #{tpu_custom_call.1} parent=0
    _
  %s22 = ssub.s32 1, %s20
  %s23 = scalar_select 0, %s22, %s20
  $region1: #{tpu_custom_call.1} parent=0
    #allocation2 [shape = 'u8[2048]{0}', space=vmem, size = 0x800, scoped, tag = 'input window, operand 4, single buffered']
    #allocation3 [shape = 's32[1]{0}', space=sflag, size = 0x4, scoped, tag = 'scoped memory for tpu_custom_call.1']
    #allocation4 [shape = 'u8[512]{0}', space=vmem, size = 0x400, scoped, tag = 'input window, operand 6, single buffered']
    #allocation5 [shape = 's32[1]{0}', space=sflag, size = 0x4, scoped, tag = 'scoped memory for tpu_custom_call.1']
    #allocation6 [shape = 'u8[512]{0}', space=vmem, size = 0x400, scoped, tag = 'input window, operand 7, single buffered']
    #allocation7 [shape = 'u8[512]{0}', space=vmem, size = 0x400, scoped, tag = 'input window, operand 9, single buffered']
    #allocation8 [shape = 's32[1]{0}', space=sflag, size = 0x4, scoped, tag = 'scoped memory for tpu_custom_call.1']
    #allocation9 [shape = 'u8[2048]{0}', space=vmem, size = 0x800, scoped, tag = 'input window, operand 12, single buffered']
    #allocation10 [shape = 'u8[65536]{0}', space=vmem, size = 0x10000, scoped, tag = 'input window, operand 13, single buffered']
    #allocation11 [shape = 's32[1]{0}', space=sflag, size = 0x4, scoped, tag = 'scoped memory for tpu_custom_call.1']
    %24 = vsyncpa [#allocation3], 0
    %25 = vsyncpa [#allocation5], 0
    %26 = vsyncpa [#allocation8], 0
    %27 = vsyncpa [#allocation11], 0
    // Predicated region
    $region2: #{tpu_custom_call.1} parent=1 // pred_check
      _
    $region3: #{tpu_custom_call.1} parent=1 // pred_check_branch
      %29 = sbr.rel (0) target = $region5
    $region4: #{tpu_custom_call.1} parent=1 // pred_region
      _
    $region5: #{tpu_custom_call.1} parent=1 // pred_fallthru
      _
    // Predicated region
    $region6: #{tpu_custom_call.1} parent=1 // pred_check
      _
    $region7: #{tpu_custom_call.1} parent=1 // pred_check_branch
      %31 = sbr.rel (0) target = $region9
    $region8: #{tpu_custom_call.1} parent=1 // pred_region
      _
    $region9: #{tpu_custom_call.1} parent=1 // pred_fallthru
      _
    // Predicated region
    $region10: #{tpu_custom_call.1} parent=1 // pred_check
      _
    $region11: #{tpu_custom_call.1} parent=1 // pred_check_branch
      %33 = sbr.rel (0) target = $region13
    $region12: #{tpu_custom_call.1} parent=1 // pred_region
      _
    $region13: #{tpu_custom_call.1} parent=1 // pred_fallthru
      _
    // Predicated region
    $region14: #{tpu_custom_call.1} parent=1 // pred_check
      _
    $region15: #{tpu_custom_call.1} parent=1 // pred_check_branch
      %35 = sbr.rel (0) target = $region17
    $region16: #{tpu_custom_call.1} parent=1 // pred_region
      _
    $region17: #{tpu_custom_call.1} parent=1 // pred_fallthru
      _
    // Predicated region
    $region18: #{tpu_custom_call.1} parent=1 // pred_check
      _
    $region19: #{tpu_custom_call.1} parent=1 // pred_check_branch
      %37 = sbr.rel (0) target = $region21
    $region20: #{tpu_custom_call.1} parent=1 // pred_region
      %s39 = ssub.s32 64, 64
      %40 = vsyncadd [#allocation3], %s39
      %s42 = sshll.u32 [#allocation2], 4
      %s43 = int_to_ptr.vmem [resolvable:$true] %s42
      %45 = dma.hbm_to_vmem [thread:$0]  %s4, 64, %s43, [#allocation3]
    $region21: #{tpu_custom_call.1} parent=1 // pred_fallthru
      _
    // Predicated region
    $region22: #{tpu_custom_call.1} parent=1 // pred_check
      _
    $region23: #{tpu_custom_call.1} parent=1 // pred_check_branch
      %47 = sbr.rel (0) target = $region25
    $region24: #{tpu_custom_call.1} parent=1 // pred_region
      _
    $region25: #{tpu_custom_call.1} parent=1 // pred_fallthru
      _
    // Predicated region
    $region26: #{tpu_custom_call.1} parent=1 // pred_check
      _
    $region27: #{tpu_custom_call.1} parent=1 // pred_check_branch
      %49 = sbr.rel (0) target = $region29
    $region28: #{tpu_custom_call.1} parent=1 // pred_region
      %s51 = ssub.s32 16, 16
      %52 = vsyncadd [#allocation5], %s51
      %s54 = sshll.u32 [#allocation4], 4
      %s55 = int_to_ptr.vmem [resolvable:$true] %s54
      %57 = dma.hbm_to_vmem [thread:$0]  %s6, 16, %s55, [#allocation5]
    $region29: #{tpu_custom_call.1} parent=1 // pred_fallthru
      _
    // Predicated region
    $region30: #{tpu_custom_call.1} parent=1 // pred_check
      _
    $region31: #{tpu_custom_call.1} parent=1 // pred_check_branch
      %59 = sbr.rel (0) target = $region33
    $region32: #{tpu_custom_call.1} parent=1 // pred_region
      %s61 = ssub.s32 16, 16
      %62 = vsyncadd [#allocation5], %s61
      %s64 = sshll.u32 [#allocation6], 4
      %s65 = int_to_ptr.vmem [resolvable:$true] %s64
      %67 = dma.hbm_to_vmem [thread:$0]  %s7, 16, %s65, [#allocation5]
    $region33: #{tpu_custom_call.1} parent=1 // pred_fallthru
      _
    // Predicated region
    $region34: #{tpu_custom_call.1} parent=1 // pred_check
      _
    $region35: #{tpu_custom_call.1} parent=1 // pred_check_branch
      %69 = sbr.rel (0) target = $region37
    $region36: #{tpu_custom_call.1} parent=1 // pred_region
      _
    $region37: #{tpu_custom_call.1} parent=1 // pred_fallthru
      _
    // Predicated region
    $region38: #{tpu_custom_call.1} parent=1 // pred_check
      _
    $region39: #{tpu_custom_call.1} parent=1 // pred_check_branch
      %71 = sbr.rel (0) target = $region41
    $region40: #{tpu_custom_call.1} parent=1 // pred_region
      %s73 = ssub.s32 16, 16
      %74 = vsyncadd [#allocation8], %s73
      %s76 = sshll.u32 [#allocation7], 4
      %s77 = int_to_ptr.vmem [resolvable:$true] %s76
      %79 = dma.hbm_to_vmem [thread:$0]  %s9, 16, %s77, [#allocation8]
    $region41: #{tpu_custom_call.1} parent=1 // pred_fallthru
      _
    // Predicated region
    $region42: #{tpu_custom_call.1} parent=1 // pred_check
      _
    $region43: #{tpu_custom_call.1} parent=1 // pred_check_branch
      %81 = sbr.rel (0) target = $region45
    $region44: #{tpu_custom_call.1} parent=1 // pred_region
      _
    $region45: #{tpu_custom_call.1} parent=1 // pred_fallthru
      _
    // Predicated region
    $region46: #{tpu_custom_call.1} parent=1 // pred_check
      _
    $region47: #{tpu_custom_call.1} parent=1 // pred_check_branch
      %83 = sbr.rel (0) target = $region49
    $region48: #{tpu_custom_call.1} parent=1 // pred_region
      _
    $region49: #{tpu_custom_call.1} parent=1 // pred_fallthru
      _
    // Predicated region
    $region50: #{tpu_custom_call.1} parent=1 // pred_check
      _
    $region51: #{tpu_custom_call.1} parent=1 // pred_check_branch
      %85 = sbr.rel (0) target = $region53
    $region52: #{tpu_custom_call.1} parent=1 // pred_region
      %s87 = ssub.s32 64, 64
      %88 = vsyncadd [#allocation8], %s87
      %s90 = sshll.u32 [#allocation9], 4
      %s91 = int_to_ptr.vmem [resolvable:$true] %s90
      %93 = dma.hbm_to_vmem [thread:$0]  %s12, 64, %s91, [#allocation8]
    $region53: #{tpu_custom_call.1} parent=1 // pred_fallthru
      _
    // Predicated region
    $region54: #{tpu_custom_call.1} parent=1 // pred_check
      _
    $region55: #{tpu_custom_call.1} parent=1 // pred_check_branch
      %95 = sbr.rel (0) target = $region57
    $region56: #{tpu_custom_call.1} parent=1 // pred_region
      %s97 = ssub.s32 2048, 2048
      %98 = vsyncadd [#allocation11], %s97
      %s99 = sshll.u32 [#allocation10], 4
      %s100 = int_to_ptr.vmem [resolvable:$true] %s99
      %105 = dma.hbm_to_vmem [thread:$0]  %s13, 2048, %s100, [#allocation11], 128, 128, 8
    $region57: #{tpu_custom_call.1} parent=1 // pred_fallthru
      _
    // Predicated region
    $region58: #{tpu_custom_call.1} parent=1 // pred_check
      _
    $region59: #{tpu_custom_call.1} parent=1 // pred_check_branch
      %107 = sbr.rel (0) target = $region61
    $region60: #{tpu_custom_call.1} parent=1 // pred_region
      _
    $region61: #{tpu_custom_call.1} parent=1 // pred_fallthru
      _
    // Predicated region
    $region62: #{tpu_custom_call.1} parent=1 // pred_check
      _
    $region63: #{tpu_custom_call.1} parent=1 // pred_check_branch
      %109 = sbr.rel (0) target = $region65
    $region64: #{tpu_custom_call.1} parent=1 // pred_region
      _
    $region65: #{tpu_custom_call.1} parent=1 // pred_fallthru
      _
    // Predicated region
    $region66: #{tpu_custom_call.1} parent=1 // pred_check
      _
    $region67: #{tpu_custom_call.1} parent=1 // pred_check_branch
      %111 = sbr.rel (0) target = $region69
    $region68: #{tpu_custom_call.1} parent=1 // pred_region
      _
    $region69: #{tpu_custom_call.1} parent=1 // pred_fallthru
      _
    // Predicated region
    $region70: #{tpu_custom_call.1} parent=1 // pred_check
      _
    $region71: #{tpu_custom_call.1} parent=1 // pred_check_branch
      %113 = sbr.rel (0) target = $region73
    $region72: #{tpu_custom_call.1} parent=1 // pred_region
      _
    $region73: #{tpu_custom_call.1} parent=1 // pred_fallthru
      _
    // Predicated region
    $region74: #{tpu_custom_call.1} parent=1 // pred_check
      _
    $region75: #{tpu_custom_call.1} parent=1 // pred_check_branch
      %115 = sbr.rel (0) target = $region77
    $region76: #{tpu_custom_call.1} parent=1 // pred_region
      _
    $region77: #{tpu_custom_call.1} parent=1 // pred_fallthru
      _
    // Predicated region
    $region78: #{tpu_custom_call.1} parent=1 // pred_check
      _
    $region79: #{tpu_custom_call.1} parent=1 // pred_check_branch
      %117 = sbr.rel (0) target = $region81
    $region80: #{tpu_custom_call.1} parent=1 // pred_region
      %118 = dma.done [#allocation3], 64
    $region81: #{tpu_custom_call.1} parent=1 // pred_fallthru
      _
    // Predicated region
    $region82: #{tpu_custom_call.1} parent=1 // pred_check
      _
    $region83: #{tpu_custom_call.1} parent=1 // pred_check_branch
      %120 = sbr.rel (0) target = $region85
    $region84: #{tpu_custom_call.1} parent=1 // pred_region
      %121 = dma.done [#allocation5], 16
    $region85: #{tpu_custom_call.1} parent=1 // pred_fallthru
      _
    // Predicated region
    $region86: #{tpu_custom_call.1} parent=1 // pred_check
      _
    $region87: #{tpu_custom_call.1} parent=1 // pred_check_branch
      %123 = sbr.rel (0) target = $region89
    $region88: #{tpu_custom_call.1} parent=1 // pred_region
      %124 = dma.done [#allocation5], 16
    $region89: #{tpu_custom_call.1} parent=1 // pred_fallthru
      _
    // Predicated region
    $region90: #{tpu_custom_call.1} parent=1 // pred_check
      _
    $region91: #{tpu_custom_call.1} parent=1 // pred_check_branch
      %126 = sbr.rel (0) target = $region93
    $region92: #{tpu_custom_call.1} parent=1 // pred_region
      %127 = dma.done [#allocation8], 16
    $region93: #{tpu_custom_call.1} parent=1 // pred_fallthru
      _
    // Predicated region
    $region94: #{tpu_custom_call.1} parent=1 // pred_check
      _
    $region95: #{tpu_custom_call.1} parent=1 // pred_check_branch
      %129 = sbr.rel (0) target = $region97
    $region96: #{tpu_custom_call.1} parent=1 // pred_region
      %130 = dma.done [#allocation8], 64
    $region97: #{tpu_custom_call.1} parent=1 // pred_fallthru
      _
    // Predicated region
    $region98: #{tpu_custom_call.1} parent=1 // pred_check
      _
    $region99: #{tpu_custom_call.1} parent=1 // pred_check_branch
      %132 = sbr.rel (0) target = $region101
    $region100: #{tpu_custom_call.1} parent=1 // pred_region
      %133 = dma.done [#allocation11], 2048
    $region101: #{tpu_custom_call.1} parent=1 // pred_fallthru
      _
    %v135 = vld [vmem:[%s1] sm:$0xff]
    %v136 = vld [vmem:[#allocation2] sm:$0xf]
    %v137 = vld [vmem:[%s10] sm:$0xff]
    %v138 = vld [vmem:[#allocation4] sm:$0x1]
    %v139 = vld [vmem:[#allocation6] sm:$0x1]
    %v140 = vld [vmem:[%s15] sm:$0x3]
    %v141 = vld [vmem:[%s16] sm:$0x3]
    %v142 = vld [vmem:[%s5] sm:$0x1]
    %v144 = vlaneseq
    %v145 = vshrl.u32 %v144, 7
    %v146 = vsub.s32 0, %v145
    %v147 = vrot.slane %v142, %v146
    %v149 = vld [vmem:[#allocation7] sm:$0x1]
    %v151 = vlaneseq
    %v152 = vshrl.u32 %v151, 7
    %v153 = vsub.s32 0, %v152
    %v154 = vrot.slane %v149, %v153
    %v156 = vld [vmem:[#allocation9] sm:$0xf]
    %v158 = vlaneseq
    %v159 = vshrl.u32 %v158, 7
    %v160 = vsub.s32 0, %v159
    %v161 = vrot.slane %v156, %v160
    %v162 = vlaneseq
    %v163 = vshrl.u32 %v162, 7
    %v164 = vsub.s32 1, %v163
    %v165 = vrot.slane %v156, %v164
    %v166 = vlaneseq
    %v167 = vshrl.u32 %v166, 7
    %v168 = vsub.s32 2, %v167
    %v169 = vrot.slane %v156, %v168
    %v170 = vlaneseq
    %v171 = vshrl.u32 %v170, 7
    %v172 = vsub.s32 3, %v171
    %v173 = vrot.slane %v156, %v172
    %v178 = vld [vmem:[%s14] sm:$0x3]
    %v180 = vlaneseq
    %v181 = vshrl.u32 %v180, 7
    %v182 = vsub.s32 0, %v181
    %v183 = vrot.slane %v178, %v182
    %v184 = vlaneseq
    %v185 = vshrl.u32 %v184, 7
    %v186 = vsub.s32 1, %v185
    %v187 = vrot.slane %v178, %v186
    %v190 = vld [vmem:[%s18] sm:$0x1]
    %v192 = vlaneseq
    %v193 = vshrl.u32 %v192, 7
    %v194 = vsub.s32 0, %v193
    %v195 = vrot.slane %v190, %v194
    %v197 = vld [vmem:[%s0] sm:$0xff]
    %199 = vset.pattern.permute.xlu0 0
    %200 = vperm.xlu0 %199, %v197
    %v201 = vpop.permute.xlu0 %200
    %v203 = vlaneseq
    %v204 = vshrl.u32 %v203, 7
    %v205 = vsub.s32 0, %v204
    %v206 = vrot.slane %v136, %v205
    %v207 = vmul.f32 %v201, %v206
    %v208 = vadd.f32 %v147, %v207
    %209 = vset.pattern.permute.xlu0 1
    %210 = vperm.xlu0 %209, %v197
    %v211 = vpop.permute.xlu0 %210
    %v213 = vlaneseq
    %v214 = vshrl.u32 %v213, 7
    %v215 = vsub.s32 1, %v214
    %v216 = vrot.slane %v136, %v215
    %v217 = vmul.f32 %v211, %v216
    %v218 = vadd.f32 %v208, %v217
    %219 = vset.pattern.permute.xlu0 2
    %220 = vperm.xlu0 %219, %v197
    %v221 = vpop.permute.xlu0 %220
    %v223 = vlaneseq
    %v224 = vshrl.u32 %v223, 7
    %v225 = vsub.s32 2, %v224
    %v226 = vrot.slane %v136, %v225
    %v227 = vmul.f32 %v221, %v226
    %v228 = vadd.f32 %v218, %v227
    %229 = vset.pattern.permute.xlu0 3
    %230 = vperm.xlu0 %229, %v197
    %v231 = vpop.permute.xlu0 %230
    %v233 = vlaneseq
    %v234 = vshrl.u32 %v233, 7
    %v235 = vsub.s32 3, %v234
    %v236 = vrot.slane %v136, %v235
    %v237 = vmul.f32 %v231, %v236
    %v238 = vadd.f32 %v228, %v237
    %v239 = vxor.u32 %v238, 2147483648
    %v240 = vmul.f32 %v239, 1.442695
    %v241 = vpow.pop %v240
    %v242 = vadd.f32 %v241, 1.0
    %v243 = vrcp.pop %v242
    %v244 = vmul.f32 1.0, %v243
    %v245 = vrot.slane %v244, 4
    %v246 = vadd.f32 %v244, %v245
    %v247 = vrot.slane %v246, 2
    %v248 = vadd.f32 %v246, %v247
    %v249 = vrot.slane %v248, 1
    %v250 = vadd.f32 %v248, %v249
    %v251 = vrcp.pop 8.0
    %v252 = vmul.f32 %v250, %v251
    %v253 = vmul.f32 %v244, %v244
    %v254 = vrot.slane %v253, 4
    %v255 = vadd.f32 %v253, %v254
    %v256 = vrot.slane %v255, 2
    %v257 = vadd.f32 %v255, %v256
    %v258 = vrot.slane %v257, 1
    %v259 = vadd.f32 %v257, %v258
    %v260 = vmul.f32 %v259, %v251
    %v261 = vmul.f32 %v252, %v252
    %v262 = vsub.f32 %v260, %v261
    %v263 = vmax.f32 %v262, 0.0
    %v264 = vadd.f32 %v263, 1e-05
    %v265 = vrsqrt.pop %v264
    %v266 = vmul.f32 %v138, %v265
    %v267 = vmul.f32 %v252, %v266
    %v268 = vsub.f32 %v139, %v267
    %v270 = vlaneseq
    %v271 = vshrl.u32 %v270, 7
    %v272 = vsub.s32 0, %v271
    %v273 = vrot.slane %v266, %v272
    %v275 = vmul.f32 %v244, %v273
    %v277 = vlaneseq
    %v278 = vshrl.u32 %v277, 7
    %v279 = vsub.s32 0, %v278
    %v280 = vrot.slane %v268, %v279
    %v282 = vadd.f32 %v275, %v280
    %v283 = vpack.c.bf16 %v282, %v282
    %v284 = vld [vmem:[%s8] sm:$0xf]
    %v285 = vld [vmem:[%s8 + $0x4] sm:$0xf]
    %v286 = vld [vmem:[%s8 + $0x8] sm:$0xf]
    %v287 = vld [vmem:[%s8 + $0xc] sm:$0xf]
    %v288 = vld [vmem:[%s8 + $0x10] sm:$0xf]
    %v289 = vld [vmem:[%s8 + $0x14] sm:$0xf]
    %v290 = vld [vmem:[%s8 + $0x18] sm:$0xf]
    %v291 = vld [vmem:[%s8 + $0x1c] sm:$0xf]
    %v292 = vld [vmem:[%s8 + $0x20] sm:$0xf]
    %v293 = vld [vmem:[%s8 + $0x24] sm:$0xf]
    %v294 = vld [vmem:[%s8 + $0x28] sm:$0xf]
    %v295 = vld [vmem:[%s8 + $0x2c] sm:$0xf]
    %v296 = vld [vmem:[%s8 + $0x30] sm:$0xf]
    %v297 = vld [vmem:[%s8 + $0x34] sm:$0xf]
    %v298 = vld [vmem:[%s8 + $0x38] sm:$0xf]
    %v299 = vld [vmem:[%s8 + $0x3c] sm:$0xf]
    %v316 = vunpack.c.l.b16 %v284
    %v317 = vunpack.c.l.b16 %v285
    %v318 = vunpack.c.l.b16 %v286
    %v319 = vunpack.c.l.b16 %v287
    %v320 = vunpack.c.l.b16 %v288
    %v321 = vunpack.c.l.b16 %v289
    %v322 = vunpack.c.l.b16 %v290
    %v323 = vunpack.c.l.b16 %v291
    %v324 = vunpack.c.l.b16 %v292
    %v325 = vunpack.c.l.b16 %v293
    %v326 = vunpack.c.l.b16 %v294
    %v327 = vunpack.c.l.b16 %v295
    %v328 = vunpack.c.l.b16 %v296
    %v329 = vunpack.c.l.b16 %v297
    %v330 = vunpack.c.l.b16 %v298
    %v331 = vunpack.c.l.b16 %v299
    %v332 = vpack.c.b16 %v317, %v316
    %v333 = vpack.c.b16 %v319, %v318
    %v334 = vpack.c.b16 %v321, %v320
    %v335 = vpack.c.b16 %v323, %v322
    %v336 = vpack.c.b16 %v325, %v324
    %v337 = vpack.c.b16 %v327, %v326
    %v338 = vpack.c.b16 %v329, %v328
    %v339 = vpack.c.b16 %v331, %v330
    %348 = vmatprep.subr.bf16.mxu0 0
    %349 = vmatpush1.bf16.msra.mxu0 %v339
    %350 = vmatprep.subr.bf16.mxu0 0
    %351 = vmatpush1.bf16.msra.mxu0 %v338
    %352 = vmatprep.subr.bf16.mxu0 0
    %353 = vmatpush1.bf16.msra.mxu0 %v337
    %354 = vmatprep.subr.bf16.mxu0 0
    %355 = vmatpush1.bf16.msra.mxu0 %v336
    %356 = vmatprep.subr.bf16.mxu0 0
    %357 = vmatpush1.bf16.msra.mxu0 %v335
    %358 = vmatprep.subr.bf16.mxu0 0
    %359 = vmatpush1.bf16.msra.mxu0 %v334
    %360 = vmatprep.subr.bf16.mxu0 0
    %361 = vmatpush1.bf16.msra.mxu0 %v333
    %362 = vmatprep.subr.bf16.mxu0 0
    %363 = vmatpush1.bf16.msra.mxu0 %v332
    %364 = vmatprep.subr.bf16.mxu0 0
    %365 = vmatpush2.bf16.msra.mxu0 0
    %366 = vmatprep.subr.bf16.mxu0 0
    %367 = vmatpush2.bf16.msra.mxu0 0
    %368 = vmatprep.subr.bf16.mxu0 0
    %369 = vmatpush2.bf16.msra.mxu0 0
    %370 = vmatprep.subr.bf16.mxu0 0
    %371 = vmatpush2.bf16.msra.mxu0 0
    %372 = vmatprep.subr.bf16.mxu0 0
    %373 = vmatpush2.bf16.msra.mxu0 0
    %374 = vmatprep.subr.bf16.mxu0 0
    %375 = vmatpush2.bf16.msra.mxu0 0
    %376 = vmatprep.subr.bf16.mxu0 0
    %377 = vmatpush2.bf16.msra.mxu0 0
    %378 = vmatprep.subr.bf16.mxu0 0
    %379 = vmatpush2.bf16.msra.mxu0 0
    %380 = vmatprep.mubr.bf16.mxu0 0
    %381 = vmatmul.mubr.bf16.gmra.mxu0 %v283
    %v382 = vpop.f32.mrf.mxu0
    %v383 = vadd.f32 %v154, %v382
    %v384 = vpop.f32.mrf.mxu0
    %v385 = vpop.f32.mrf.mxu0
    %v386 = vpop.f32.mrf.mxu0
    %387 = vdwg.mxu0
    %v388 = vld [vmem:[%s2] sm:$0xff]
    %v389 = vmax.f32 %v388, -1.0
    %v390 = vmin.f32 %v389, 1.0
    %v391 = vpack.c.bf16 %v383, %v383
    %v392 = vld [vmem:[%s11] sm:$0xff]
    %v393 = vld [vmem:[%s11 + $0x8] sm:$0xff]
    %v394 = vld [vmem:[%s11 + $0x10] sm:$0xff]
    %v395 = vld [vmem:[%s11 + $0x18] sm:$0xff]
    %v396 = vld [vmem:[%s11 + $0x20] sm:$0xff]
    %v397 = vld [vmem:[%s11 + $0x28] sm:$0xff]
    %v398 = vld [vmem:[%s11 + $0x30] sm:$0xff]
    %v399 = vld [vmem:[%s11 + $0x38] sm:$0xff]
    %v400 = vld [vmem:[%s11 + $0x40] sm:$0xff]
    %v401 = vld [vmem:[%s11 + $0x48] sm:$0xff]
    %v402 = vld [vmem:[%s11 + $0x50] sm:$0xff]
    %v403 = vld [vmem:[%s11 + $0x58] sm:$0xff]
    %v404 = vld [vmem:[%s11 + $0x60] sm:$0xff]
    %v405 = vld [vmem:[%s11 + $0x68] sm:$0xff]
    %v406 = vld [vmem:[%s11 + $0x70] sm:$0xff]
    %v407 = vld [vmem:[%s11 + $0x78] sm:$0xff]
    %v408 = vld [vmem:[%s11 + $0x80] sm:$0xff]
    %v409 = vld [vmem:[%s11 + $0x88] sm:$0xff]
    %v410 = vld [vmem:[%s11 + $0x90] sm:$0xff]
    %v411 = vld [vmem:[%s11 + $0x98] sm:$0xff]
    %v412 = vld [vmem:[%s11 + $0xa0] sm:$0xff]
    %v413 = vld [vmem:[%s11 + $0xa8] sm:$0xff]
    %v414 = vld [vmem:[%s11 + $0xb0] sm:$0xff]
    %v415 = vld [vmem:[%s11 + $0xb8] sm:$0xff]
    %v416 = vld [vmem:[%s11 + $0xc0] sm:$0xff]
    %v417 = vld [vmem:[%s11 + $0xc8] sm:$0xff]
    %v418 = vld [vmem:[%s11 + $0xd0] sm:$0xff]
    %v419 = vld [vmem:[%s11 + $0xd8] sm:$0xff]
    %v420 = vld [vmem:[%s11 + $0xe0] sm:$0xff]
    %v421 = vld [vmem:[%s11 + $0xe8] sm:$0xff]
    %v422 = vld [vmem:[%s11 + $0xf0] sm:$0xff]
    %v423 = vld [vmem:[%s11 + $0xf8] sm:$0xff]
    %v456 = vunpack.c.l.b16 %v392
    %v457 = vunpack.c.h.b16 %v392
    %v458 = vunpack.c.l.b16 %v393
    %v459 = vunpack.c.h.b16 %v393
    %v460 = vunpack.c.l.b16 %v394
    %v461 = vunpack.c.h.b16 %v394
    %v462 = vunpack.c.l.b16 %v395
    %v463 = vunpack.c.h.b16 %v395
    %v464 = vunpack.c.l.b16 %v396
    %v465 = vunpack.c.h.b16 %v396
    %v466 = vunpack.c.l.b16 %v397
    %v467 = vunpack.c.h.b16 %v397
    %v468 = vunpack.c.l.b16 %v398
    %v469 = vunpack.c.h.b16 %v398
    %v470 = vunpack.c.l.b16 %v399
    %v471 = vunpack.c.h.b16 %v399
    %v472 = vunpack.c.l.b16 %v400
    %v473 = vunpack.c.h.b16 %v400
    %v474 = vunpack.c.l.b16 %v401
    %v475 = vunpack.c.h.b16 %v401
    %v476 = vunpack.c.l.b16 %v402
    %v477 = vunpack.c.h.b16 %v402
    %v478 = vunpack.c.l.b16 %v403
    %v479 = vunpack.c.h.b16 %v403
    %v480 = vunpack.c.l.b16 %v404
    %v481 = vunpack.c.h.b16 %v404
    %v482 = vunpack.c.l.b16 %v405
    %v483 = vunpack.c.h.b16 %v405
    %v484 = vunpack.c.l.b16 %v406
    %v485 = vunpack.c.h.b16 %v406
    %v486 = vunpack.c.l.b16 %v407
    %v487 = vunpack.c.h.b16 %v407
    %v488 = vunpack.c.l.b16 %v408
    %v489 = vunpack.c.h.b16 %v408
    %v490 = vunpack.c.l.b16 %v409
    %v491 = vunpack.c.h.b16 %v409
    %v492 = vunpack.c.l.b16 %v410
    %v493 = vunpack.c.h.b16 %v410
    %v494 = vunpack.c.l.b16 %v411
    %v495 = vunpack.c.h.b16 %v411
    %v496 = vunpack.c.l.b16 %v412
    %v497 = vunpack.c.h.b16 %v412
    %v498 = vunpack.c.l.b16 %v413
    %v499 = vunpack.c.h.b16 %v413
    %v500 = vunpack.c.l.b16 %v414
    %v501 = vunpack.c.h.b16 %v414
    %v502 = vunpack.c.l.b16 %v415
    %v503 = vunpack.c.h.b16 %v415
    %v504 = vunpack.c.l.b16 %v416
    %v505 = vunpack.c.h.b16 %v416
    %v506 = vunpack.c.l.b16 %v417
    %v507 = vunpack.c.h.b16 %v417
    %v508 = vunpack.c.l.b16 %v418
    %v509 = vunpack.c.h.b16 %v418
    %v510 = vunpack.c.l.b16 %v419
    %v511 = vunpack.c.h.b16 %v419
    %v512 = vunpack.c.l.b16 %v420
    %v513 = vunpack.c.h.b16 %v420
    %v514 = vunpack.c.l.b16 %v421
    %v515 = vunpack.c.h.b16 %v421
    %v516 = vunpack.c.l.b16 %v422
    %v517 = vunpack.c.h.b16 %v422
    %v518 = vunpack.c.l.b16 %v423
    %v519 = vunpack.c.h.b16 %v423
    %v520 = vpack.c.b16 %v460, %v456
    %v521 = vpack.c.b16 %v461, %v457
    %v522 = vpack.c.b16 %v462, %v458
    %v523 = vpack.c.b16 %v463, %v459
    %v524 = vpack.c.b16 %v468, %v464
    %v525 = vpack.c.b16 %v469, %v465
    %v526 = vpack.c.b16 %v470, %v466
    %v527 = vpack.c.b16 %v471, %v467
    %v528 = vpack.c.b16 %v476, %v472
    %v529 = vpack.c.b16 %v477, %v473
    %v530 = vpack.c.b16 %v478, %v474
    %v531 = vpack.c.b16 %v479, %v475
    %v532 = vpack.c.b16 %v484, %v480
    %v533 = vpack.c.b16 %v485, %v481
    %v534 = vpack.c.b16 %v486, %v482
    %v535 = vpack.c.b16 %v487, %v483
    %v536 = vpack.c.b16 %v492, %v488
    %v537 = vpack.c.b16 %v493, %v489
    %v538 = vpack.c.b16 %v494, %v490
    %v539 = vpack.c.b16 %v495, %v491
    %v540 = vpack.c.b16 %v500, %v496
    %v541 = vpack.c.b16 %v501, %v497
    %v542 = vpack.c.b16 %v502, %v498
    %v543 = vpack.c.b16 %v503, %v499
    %v544 = vpack.c.b16 %v508, %v504
    %v545 = vpack.c.b16 %v509, %v505
    %v546 = vpack.c.b16 %v510, %v506
    %v547 = vpack.c.b16 %v511, %v507
    %v548 = vpack.c.b16 %v516, %v512
    %v549 = vpack.c.b16 %v517, %v513
    %v550 = vpack.c.b16 %v518, %v514
    %v551 = vpack.c.b16 %v519, %v515
    %584 = vmatprep.subr.bf16.mxu0 %v549
    %585 = vmatpush1.bf16.msra.mxu0 %v548
    %586 = vmatprep.subr.bf16.mxu0 %v545
    %587 = vmatpush1.bf16.msra.mxu0 %v544
    %588 = vmatprep.subr.bf16.mxu0 %v541
    %589 = vmatpush1.bf16.msra.mxu0 %v540
    %590 = vmatprep.subr.bf16.mxu0 %v537
    %591 = vmatpush1.bf16.msra.mxu0 %v536
    %592 = vmatprep.subr.bf16.mxu0 %v533
    %593 = vmatpush1.bf16.msra.mxu0 %v532
    %594 = vmatprep.subr.bf16.mxu0 %v529
    %595 = vmatpush1.bf16.msra.mxu0 %v528
    %596 = vmatprep.subr.bf16.mxu0 %v525
    %597 = vmatpush1.bf16.msra.mxu0 %v524
    %598 = vmatprep.subr.bf16.mxu0 %v521
    %599 = vmatpush1.bf16.msra.mxu0 %v520
    %600 = vmatprep.subr.bf16.mxu0 0
    %601 = vmatpush2.bf16.msra.mxu0 0
    %602 = vmatprep.subr.bf16.mxu0 0
    %603 = vmatpush2.bf16.msra.mxu0 0
    %604 = vmatprep.subr.bf16.mxu0 0
    %605 = vmatpush2.bf16.msra.mxu0 0
    %606 = vmatprep.subr.bf16.mxu0 0
    %607 = vmatpush2.bf16.msra.mxu0 0
    %608 = vmatprep.subr.bf16.mxu0 0
    %609 = vmatpush2.bf16.msra.mxu0 0
    %610 = vmatprep.subr.bf16.mxu0 0
    %611 = vmatpush2.bf16.msra.mxu0 0
    %612 = vmatprep.subr.bf16.mxu0 0
    %613 = vmatpush2.bf16.msra.mxu0 0
    %614 = vmatprep.subr.bf16.mxu0 0
    %615 = vmatpush2.bf16.msra.mxu0 0
    %616 = vmatprep.mubr.bf16.mxu0 0
    %617 = vmatmul.mubr.bf16.gmra.mxu0 %v391
    %v618 = vpop.f32.mrf.mxu0
    %v619 = vadd.f32 %v161, %v618
    %v620 = vpop.f32.mrf.mxu0
    %v621 = vadd.f32 %v165, %v620
    %v622 = vpop.f32.mrf.mxu0
    %v623 = vpop.f32.mrf.mxu0
    %624 = vdwg.mxu0
    %625 = vmatprep.subr.bf16.mxu0 %v551
    %626 = vmatpush1.bf16.msra.mxu0 %v550
    %627 = vmatprep.subr.bf16.mxu0 %v547
    %628 = vmatpush1.bf16.msra.mxu0 %v546
    %629 = vmatprep.subr.bf16.mxu0 %v543
    %630 = vmatpush1.bf16.msra.mxu0 %v542
    %631 = vmatprep.subr.bf16.mxu0 %v539
    %632 = vmatpush1.bf16.msra.mxu0 %v538
    %633 = vmatprep.subr.bf16.mxu0 %v535
    %634 = vmatpush1.bf16.msra.mxu0 %v534
    %635 = vmatprep.subr.bf16.mxu0 %v531
    %636 = vmatpush1.bf16.msra.mxu0 %v530
    %637 = vmatprep.subr.bf16.mxu0 %v527
    %638 = vmatpush1.bf16.msra.mxu0 %v526
    %639 = vmatprep.subr.bf16.mxu0 %v523
    %640 = vmatpush1.bf16.msra.mxu0 %v522
    %641 = vmatprep.subr.bf16.mxu0 0
    %642 = vmatpush2.bf16.msra.mxu0 0
    %643 = vmatprep.subr.bf16.mxu0 0
    %644 = vmatpush2.bf16.msra.mxu0 0
    %645 = vmatprep.subr.bf16.mxu0 0
    %646 = vmatpush2.bf16.msra.mxu0 0
    %647 = vmatprep.subr.bf16.mxu0 0
    %648 = vmatpush2.bf16.msra.mxu0 0
    %649 = vmatprep.subr.bf16.mxu0 0
    %650 = vmatpush2.bf16.msra.mxu0 0
    %651 = vmatprep.subr.bf16.mxu0 0
    %652 = vmatpush2.bf16.msra.mxu0 0
    %653 = vmatprep.subr.bf16.mxu0 0
    %654 = vmatpush2.bf16.msra.mxu0 0
    %655 = vmatprep.subr.bf16.mxu0 0
    %656 = vmatpush2.bf16.msra.mxu0 0
    %657 = vmatprep.mubr.bf16.mxu0 0
    %658 = vmatmul.mubr.bf16.gmra.mxu0 %v391
    %v659 = vpop.f32.mrf.mxu0
    %v660 = vadd.f32 %v169, %v659
    %v661 = vpop.f32.mrf.mxu0
    %v662 = vadd.f32 %v173, %v661
    %v663 = vpop.f32.mrf.mxu0
    %v664 = vpop.f32.mrf.mxu0
    %665 = vdwg.mxu0
    %667 = vset.pattern.permute.xlu0 0
    %668 = vperm.xlu0 %667, %v390
    %v669 = vpop.permute.xlu0 %668
    %v672 = vlaneseq
    %v673 = vshrl.u32 %v672, 7
    %v674 = vsub.s32 0, %v673
    %v675 = vrot.slane %v137, %v674
    %v676 = vlaneseq
    %v677 = vshrl.u32 %v676, 7
    %v678 = vsub.s32 2, %v677
    %v679 = vrot.slane %v137, %v678
    %v680 = vlaneseq
    %v681 = vshrl.u32 %v680, 7
    %v682 = vsub.s32 4, %v681
    %v683 = vrot.slane %v137, %v682
    %v684 = vlaneseq
    %v685 = vshrl.u32 %v684, 7
    %v686 = vsub.s32 6, %v685
    %v687 = vrot.slane %v137, %v686
    %v692 = vlaneseq
    %v693 = vshrl.u32 %v692, 7
    %v694 = vsub.s32 0, %v693
    %v695 = vrot.slane %v675, %v694
    %v696 = vlaneseq
    %v697 = vshrl.u32 %v696, 7
    %v698 = vsub.s32 0, %v697
    %v699 = vrot.slane %v679, %v698
    %v700 = vlaneseq
    %v701 = vshrl.u32 %v700, 7
    %v702 = vsub.s32 0, %v701
    %v703 = vrot.slane %v683, %v702
    %v704 = vlaneseq
    %v705 = vshrl.u32 %v704, 7
    %v706 = vsub.s32 0, %v705
    %v707 = vrot.slane %v687, %v706
    %v708 = vmul.f32 %v669, %v695
    %v709 = vmul.f32 %v669, %v699
    %v710 = vmul.f32 %v669, %v703
    %v711 = vmul.f32 %v669, %v707
    %v712 = vadd.f32 %v619, %v708
    %v713 = vadd.f32 %v621, %v709
    %v714 = vadd.f32 %v660, %v710
    %v715 = vadd.f32 %v662, %v711
    %716 = vset.pattern.permute.xlu0 1
    %717 = vperm.xlu0 %716, %v390
    %v718 = vpop.permute.xlu0 %717
    %v720 = vlaneseq
    %v721 = vshrl.u32 %v720, 7
    %v722 = vsub.s32 1, %v721
    %v723 = vrot.slane %v137, %v722
    %v724 = vlaneseq
    %v725 = vshrl.u32 %v724, 7
    %v726 = vsub.s32 3, %v725
    %v727 = vrot.slane %v137, %v726
    %v728 = vlaneseq
    %v729 = vshrl.u32 %v728, 7
    %v730 = vsub.s32 5, %v729
    %v731 = vrot.slane %v137, %v730
    %v732 = vlaneseq
    %v733 = vshrl.u32 %v732, 7
    %v734 = vsub.s32 7, %v733
    %v735 = vrot.slane %v137, %v734
    %v740 = vlaneseq
    %v741 = vshrl.u32 %v740, 7
    %v742 = vsub.s32 1, %v741
    %v743 = vrot.slane %v723, %v742
    %v744 = vlaneseq
    %v745 = vshrl.u32 %v744, 7
    %v746 = vsub.s32 1, %v745
    %v747 = vrot.slane %v727, %v746
    %v748 = vlaneseq
    %v749 = vshrl.u32 %v748, 7
    %v750 = vsub.s32 1, %v749
    %v751 = vrot.slane %v731, %v750
    %v752 = vlaneseq
    %v753 = vshrl.u32 %v752, 7
    %v754 = vsub.s32 1, %v753
    %v755 = vrot.slane %v735, %v754
    %v756 = vmul.f32 %v718, %v743
    %v757 = vmul.f32 %v718, %v747
    %v758 = vmul.f32 %v718, %v751
    %v759 = vmul.f32 %v718, %v755
    %v760 = vadd.f32 %v712, %v756
    %v761 = vadd.f32 %v713, %v757
    %v762 = vadd.f32 %v714, %v758
    %v763 = vadd.f32 %v715, %v759
    %v764 = vxor.u32 %v760, 2147483648
    %v765 = vmul.f32 %v764, 1.442695
    %v766 = vpow.pop %v765
    %v767 = vadd.f32 %v766, 1.0
    %v768 = vrcp.pop %v767
    %v769 = vmul.f32 1.0, %v768
    %v770 = vxor.u32 %v761, 2147483648
    %v771 = vmul.f32 %v770, 1.442695
    %v772 = vpow.pop %v771
    %v773 = vadd.f32 %v772, 1.0
    %v774 = vrcp.pop %v773
    %v775 = vmul.f32 1.0, %v774
    %v776 = vtanh.pop %v762
    %v777 = vxor.u32 %v763, 2147483648
    %v778 = vmul.f32 %v777, 1.442695
    %v779 = vpow.pop %v778
    %v780 = vadd.f32 %v779, 1.0
    %v781 = vrcp.pop %v780
    %v782 = vmul.f32 1.0, %v781
    %v783 = vmul.f32 %v775, %v135
    %v784 = vmul.f32 %v769, %v776
    %v785 = vadd.f32 %v783, %v784
    %v786 = vtanh.pop %v785
    %v787 = vmul.f32 %v782, %v786
    %v788 = vpack.c.bf16 %v787, %v787
    %v789 = vld [vmem:[#allocation10] sm:$0xff]
    %v790 = vld [vmem:[#allocation10 + $0x8] sm:$0xff]
    %v791 = vld [vmem:[#allocation10 + $0x10] sm:$0xff]
    %v792 = vld [vmem:[#allocation10 + $0x18] sm:$0xff]
    %v793 = vld [vmem:[#allocation10 + $0x20] sm:$0xff]
    %v794 = vld [vmem:[#allocation10 + $0x28] sm:$0xff]
    %v795 = vld [vmem:[#allocation10 + $0x30] sm:$0xff]
    %v796 = vld [vmem:[#allocation10 + $0x38] sm:$0xff]
    %v797 = vld [vmem:[#allocation10 + $0x40] sm:$0xff]
    %v798 = vld [vmem:[#allocation10 + $0x48] sm:$0xff]
    %v799 = vld [vmem:[#allocation10 + $0x50] sm:$0xff]
    %v800 = vld [vmem:[#allocation10 + $0x58] sm:$0xff]
    %v801 = vld [vmem:[#allocation10 + $0x60] sm:$0xff]
    %v802 = vld [vmem:[#allocation10 + $0x68] sm:$0xff]
    %v803 = vld [vmem:[#allocation10 + $0x70] sm:$0xff]
    %v804 = vld [vmem:[#allocation10 + $0x78] sm:$0xff]
    %v821 = vunpack.c.l.b16 %v789
    %v822 = vunpack.c.h.b16 %v789
    %v823 = vunpack.c.l.b16 %v790
    %v824 = vunpack.c.h.b16 %v790
    %v825 = vunpack.c.l.b16 %v791
    %v826 = vunpack.c.h.b16 %v791
    %v827 = vunpack.c.l.b16 %v792
    %v828 = vunpack.c.h.b16 %v792
    %v829 = vunpack.c.l.b16 %v793
    %v830 = vunpack.c.h.b16 %v793
    %v831 = vunpack.c.l.b16 %v794
    %v832 = vunpack.c.h.b16 %v794
    %v833 = vunpack.c.l.b16 %v795
    %v834 = vunpack.c.h.b16 %v795
    %v835 = vunpack.c.l.b16 %v796
    %v836 = vunpack.c.h.b16 %v796
    %v837 = vunpack.c.l.b16 %v797
    %v838 = vunpack.c.h.b16 %v797
    %v839 = vunpack.c.l.b16 %v798
    %v840 = vunpack.c.h.b16 %v798
    %v841 = vunpack.c.l.b16 %v799
    %v842 = vunpack.c.h.b16 %v799
    %v843 = vunpack.c.l.b16 %v800
    %v844 = vunpack.c.h.b16 %v800
    %v845 = vunpack.c.l.b16 %v801
    %v846 = vunpack.c.h.b16 %v801
    %v847 = vunpack.c.l.b16 %v802
    %v848 = vunpack.c.h.b16 %v802
    %v849 = vunpack.c.l.b16 %v803
    %v850 = vunpack.c.h.b16 %v803
    %v851 = vunpack.c.l.b16 %v804
    %v852 = vunpack.c.h.b16 %v804
    %v853 = vpack.c.b16 %v823, %v821
    %v854 = vpack.c.b16 %v824, %v822
    %v855 = vpack.c.b16 %v827, %v825
    %v856 = vpack.c.b16 %v828, %v826
    %v857 = vpack.c.b16 %v831, %v829
    %v858 = vpack.c.b16 %v832, %v830
    %v859 = vpack.c.b16 %v835, %v833
    %v860 = vpack.c.b16 %v836, %v834
    %v861 = vpack.c.b16 %v839, %v837
    %v862 = vpack.c.b16 %v840, %v838
    %v863 = vpack.c.b16 %v843, %v841
    %v864 = vpack.c.b16 %v844, %v842
    %v865 = vpack.c.b16 %v847, %v845
    %v866 = vpack.c.b16 %v848, %v846
    %v867 = vpack.c.b16 %v851, %v849
    %v868 = vpack.c.b16 %v852, %v850
    %885 = vmatprep.subr.bf16.mxu0 %v868
    %886 = vmatpush1.bf16.msra.mxu0 %v867
    %887 = vmatprep.subr.bf16.mxu0 %v866
    %888 = vmatpush1.bf16.msra.mxu0 %v865
    %889 = vmatprep.subr.bf16.mxu0 %v864
    %890 = vmatpush1.bf16.msra.mxu0 %v863
    %891 = vmatprep.subr.bf16.mxu0 %v862
    %892 = vmatpush1.bf16.msra.mxu0 %v861
    %893 = vmatprep.subr.bf16.mxu0 %v860
    %894 = vmatpush1.bf16.msra.mxu0 %v859
    %895 = vmatprep.subr.bf16.mxu0 %v858
    %896 = vmatpush1.bf16.msra.mxu0 %v857
    %897 = vmatprep.subr.bf16.mxu0 %v856
    %898 = vmatpush1.bf16.msra.mxu0 %v855
    %899 = vmatprep.subr.bf16.mxu0 %v854
    %900 = vmatpush1.bf16.msra.mxu0 %v853
    %901 = vmatprep.subr.bf16.mxu0 0
    %902 = vmatpush2.bf16.msra.mxu0 0
    %903 = vmatprep.subr.bf16.mxu0 0
    %904 = vmatpush2.bf16.msra.mxu0 0
    %905 = vmatprep.subr.bf16.mxu0 0
    %906 = vmatpush2.bf16.msra.mxu0 0
    %907 = vmatprep.subr.bf16.mxu0 0
    %908 = vmatpush2.bf16.msra.mxu0 0
    %909 = vmatprep.subr.bf16.mxu0 0
    %910 = vmatpush2.bf16.msra.mxu0 0
    %911 = vmatprep.subr.bf16.mxu0 0
    %912 = vmatpush2.bf16.msra.mxu0 0
    %913 = vmatprep.subr.bf16.mxu0 0
    %914 = vmatpush2.bf16.msra.mxu0 0
    %915 = vmatprep.subr.bf16.mxu0 0
    %916 = vmatpush2.bf16.msra.mxu0 0
    %917 = vmatprep.mubr.bf16.mxu0 0
    %918 = vmatmul.mubr.bf16.gmra.mxu0 %v788
    %v919 = vpop.f32.mrf.mxu0
    %v920 = vadd.f32 %v183, %v919
    %v921 = vpop.f32.mrf.mxu0
    %v922 = vadd.f32 %v187, %v921
    %v923 = vpop.f32.mrf.mxu0
    %v924 = vpop.f32.mrf.mxu0
    %925 = vdwg.mxu0
    %v926 = vxor.u32 %v920, 2147483648
    %v927 = vxor.u32 %v922, 2147483648
    %v928 = vmul.f32 %v926, 1.442695
    %v929 = vpow.pop %v928
    %v930 = vmul.f32 %v927, 1.442695
    %v931 = vpow.pop %v930
    %v932 = vadd.f32 %v929, 1.0
    %v933 = vadd.f32 %v931, 1.0
    %v934 = vrcp.pop %v932
    %v935 = vmul.f32 1.0, %v934
    %v936 = vrcp.pop %v933
    %v937 = vmul.f32 1.0, %v936
    %v938 = vrot.slane %v935, 4
    %v939 = vadd.f32 %v935, %v938
    %v940 = vrot.slane %v939, 2
    %v941 = vadd.f32 %v939, %v940
    %v942 = vrot.slane %v941, 1
    %v943 = vadd.f32 %v941, %v942
    %v944 = vrot.slane %v937, 4
    %v945 = vadd.f32 %v937, %v944
    %v946 = vrot.slane %v945, 2
    %v947 = vadd.f32 %v945, %v946
    %v948 = vrot.slane %v947, 1
    %v949 = vadd.f32 %v947, %v948
    %v950 = vmul.f32 %v943, %v251
    %v951 = vmul.f32 %v949, %v251
    %v952 = vmul.f32 %v935, %v935
    %v953 = vmul.f32 %v937, %v937
    %v954 = vrot.slane %v952, 4
    %v955 = vadd.f32 %v952, %v954
    %v956 = vrot.slane %v955, 2
    %v957 = vadd.f32 %v955, %v956
    %v958 = vrot.slane %v957, 1
    %v959 = vadd.f32 %v957, %v958
    %v960 = vrot.slane %v953, 4
    %v961 = vadd.f32 %v953, %v960
    %v962 = vrot.slane %v961, 2
    %v963 = vadd.f32 %v961, %v962
    %v964 = vrot.slane %v963, 1
    %v965 = vadd.f32 %v963, %v964
    %v966 = vmul.f32 %v959, %v251
    %v967 = vmul.f32 %v965, %v251
    %v968 = vmul.f32 %v950, %v950
    %v969 = vmul.f32 %v951, %v951
    %v970 = vsub.f32 %v966, %v968
    %v971 = vsub.f32 %v967, %v969
    %v972 = vmax.f32 %v970, 0.0
    %v973 = vmax.f32 %v971, 0.0
    %v974 = vadd.f32 %v972, 1e-05
    %v975 = vadd.f32 %v973, 1e-05
    %v976 = vrsqrt.pop %v974
    %v977 = vrsqrt.pop %v975
    %v980 = vcombine.low %v976, %v977
    %v982 = vunpack.c.l.s4 1966171168
    %v983 = vunpack.c.0.s8 %v982
    %v984 = vlaneseq
    %v985 = vshrl.u32 %v984, 7
    %v986 = vsub.s32 %v983, %v985
    %v987 = vrot.slane %v980, %v986
    %v989 = vunpack.c.l.s4 1966171168
    %v990 = vunpack.c.0.s8 %v989
    %v991 = vlaneseq
    %v992 = vshrl.u32 %v991, 7
    %v993 = vsub.s32 %v990, %v992
    %v994 = vrot.slane %v987, %v993
    %v996 = vmul.f32 %v140, %v994
    %v998 = vlaneseq
    %v999 = vshrl.u32 %v998, 7
    %v1000 = vsub.s32 0, %v999
    %v1001 = vrot.slane %v996, %v1000
    %v1002 = vlaneseq
    %v1003 = vshrl.u32 %v1002, 7
    %v1004 = vsub.s32 1, %v1003
    %v1005 = vrot.slane %v996, %v1004
    %v1008 = vmul.f32 %v950, %v1001
    %v1009 = vmul.f32 %v951, %v1005
    %v1012 = vcombine.low %v1008, %v1009
    %v1014 = vunpack.c.l.s4 1966171168
    %v1015 = vunpack.c.0.s8 %v1014
    %v1016 = vlaneseq
    %v1017 = vshrl.u32 %v1016, 7
    %v1018 = vsub.s32 %v1015, %v1017
    %v1019 = vrot.slane %v1012, %v1018
    %v1021 = vunpack.c.l.s4 1966171168
    %v1022 = vunpack.c.0.s8 %v1021
    %v1023 = vlaneseq
    %v1024 = vshrl.u32 %v1023, 7
    %v1025 = vsub.s32 %v1022, %v1024
    %v1026 = vrot.slane %v1019, %v1025
    %v1028 = vsub.f32 %v141, %v1026
    %v1029 = vmul.f32 %v935, %v1001
    %v1030 = vmul.f32 %v937, %v1005
    %v1032 = vlaneseq
    %v1033 = vshrl.u32 %v1032, 7
    %v1034 = vsub.s32 0, %v1033
    %v1035 = vrot.slane %v1028, %v1034
    %v1036 = vlaneseq
    %v1037 = vshrl.u32 %v1036, 7
    %v1038 = vsub.s32 1, %v1037
    %v1039 = vrot.slane %v1028, %v1038
    %v1042 = vadd.f32 %v1029, %v1035
    %v1043 = vadd.f32 %v1030, %v1039
    %v1044 = vpack.c.bf16 %v1042, %v1042
    %v1045 = vpack.c.bf16 %v1043, %v1043
    %v1046 = vld [vmem:[%s17] sm:$0xf]
    %v1047 = vld [vmem:[%s17 + $0x4] sm:$0xf]
    %v1048 = vld [vmem:[%s17 + $0x8] sm:$0xf]
    %v1049 = vld [vmem:[%s17 + $0xc] sm:$0xf]
    %v1050 = vld [vmem:[%s17 + $0x10] sm:$0xf]
    %v1051 = vld [vmem:[%s17 + $0x14] sm:$0xf]
    %v1052 = vld [vmem:[%s17 + $0x18] sm:$0xf]
    %v1053 = vld [vmem:[%s17 + $0x1c] sm:$0xf]
    %v1054 = vld [vmem:[%s17 + $0x20] sm:$0xf]
    %v1055 = vld [vmem:[%s17 + $0x24] sm:$0xf]
    %v1056 = vld [vmem:[%s17 + $0x28] sm:$0xf]
    %v1057 = vld [vmem:[%s17 + $0x2c] sm:$0xf]
    %v1058 = vld [vmem:[%s17 + $0x30] sm:$0xf]
    %v1059 = vld [vmem:[%s17 + $0x34] sm:$0xf]
    %v1060 = vld [vmem:[%s17 + $0x38] sm:$0xf]
    %v1061 = vld [vmem:[%s17 + $0x3c] sm:$0xf]
    %v1062 = vld [vmem:[%s17 + $0x40] sm:$0xf]
    %v1063 = vld [vmem:[%s17 + $0x44] sm:$0xf]
    %v1064 = vld [vmem:[%s17 + $0x48] sm:$0xf]
    %v1065 = vld [vmem:[%s17 + $0x4c] sm:$0xf]
    %v1066 = vld [vmem:[%s17 + $0x50] sm:$0xf]
    %v1067 = vld [vmem:[%s17 + $0x54] sm:$0xf]
    %v1068 = vld [vmem:[%s17 + $0x58] sm:$0xf]
    %v1069 = vld [vmem:[%s17 + $0x5c] sm:$0xf]
    %v1070 = vld [vmem:[%s17 + $0x60] sm:$0xf]
    %v1071 = vld [vmem:[%s17 + $0x64] sm:$0xf]
    %v1072 = vld [vmem:[%s17 + $0x68] sm:$0xf]
    %v1073 = vld [vmem:[%s17 + $0x6c] sm:$0xf]
    %v1074 = vld [vmem:[%s17 + $0x70] sm:$0xf]
    %v1075 = vld [vmem:[%s17 + $0x74] sm:$0xf]
    %v1076 = vld [vmem:[%s17 + $0x78] sm:$0xf]
    %v1077 = vld [vmem:[%s17 + $0x7c] sm:$0xf]
    %v1110 = vunpack.c.l.b16 %v1046
    %v1111 = vunpack.c.l.b16 %v1047
    %v1112 = vunpack.c.l.b16 %v1048
    %v1113 = vunpack.c.l.b16 %v1049
    %v1114 = vunpack.c.l.b16 %v1050
    %v1115 = vunpack.c.l.b16 %v1051
    %v1116 = vunpack.c.l.b16 %v1052
    %v1117 = vunpack.c.l.b16 %v1053
    %v1118 = vunpack.c.l.b16 %v1054
    %v1119 = vunpack.c.l.b16 %v1055
    %v1120 = vunpack.c.l.b16 %v1056
    %v1121 = vunpack.c.l.b16 %v1057
    %v1122 = vunpack.c.l.b16 %v1058
    %v1123 = vunpack.c.l.b16 %v1059
    %v1124 = vunpack.c.l.b16 %v1060
    %v1125 = vunpack.c.l.b16 %v1061
    %v1126 = vunpack.c.l.b16 %v1062
    %v1127 = vunpack.c.l.b16 %v1063
    %v1128 = vunpack.c.l.b16 %v1064
    %v1129 = vunpack.c.l.b16 %v1065
    %v1130 = vunpack.c.l.b16 %v1066
    %v1131 = vunpack.c.l.b16 %v1067
    %v1132 = vunpack.c.l.b16 %v1068
    %v1133 = vunpack.c.l.b16 %v1069
    %v1134 = vunpack.c.l.b16 %v1070
    %v1135 = vunpack.c.l.b16 %v1071
    %v1136 = vunpack.c.l.b16 %v1072
    %v1137 = vunpack.c.l.b16 %v1073
    %v1138 = vunpack.c.l.b16 %v1074
    %v1139 = vunpack.c.l.b16 %v1075
    %v1140 = vunpack.c.l.b16 %v1076
    %v1141 = vunpack.c.l.b16 %v1077
    %v1142 = vpack.c.b16 %v1111, %v1110
    %v1143 = vpack.c.b16 %v1113, %v1112
    %v1144 = vpack.c.b16 %v1115, %v1114
    %v1145 = vpack.c.b16 %v1117, %v1116
    %v1146 = vpack.c.b16 %v1119, %v1118
    %v1147 = vpack.c.b16 %v1121, %v1120
    %v1148 = vpack.c.b16 %v1123, %v1122
    %v1149 = vpack.c.b16 %v1125, %v1124
    %v1150 = vpack.c.b16 %v1127, %v1126
    %v1151 = vpack.c.b16 %v1129, %v1128
    %v1152 = vpack.c.b16 %v1131, %v1130
    %v1153 = vpack.c.b16 %v1133, %v1132
    %v1154 = vpack.c.b16 %v1135, %v1134
    %v1155 = vpack.c.b16 %v1137, %v1136
    %v1156 = vpack.c.b16 %v1139, %v1138
    %v1157 = vpack.c.b16 %v1141, %v1140
    %1174 = vmatprep.subr.bf16.mxu0 0
    %1175 = vmatpush1.bf16.msra.mxu0 %v1149
    %1176 = vmatprep.subr.bf16.mxu0 0
    %1177 = vmatpush1.bf16.msra.mxu0 %v1148
    %1178 = vmatprep.subr.bf16.mxu0 0
    %1179 = vmatpush1.bf16.msra.mxu0 %v1147
    %1180 = vmatprep.subr.bf16.mxu0 0
    %1181 = vmatpush1.bf16.msra.mxu0 %v1146
    %1182 = vmatprep.subr.bf16.mxu0 0
    %1183 = vmatpush1.bf16.msra.mxu0 %v1145
    %1184 = vmatprep.subr.bf16.mxu0 0
    %1185 = vmatpush1.bf16.msra.mxu0 %v1144
    %1186 = vmatprep.subr.bf16.mxu0 0
    %1187 = vmatpush1.bf16.msra.mxu0 %v1143
    %1188 = vmatprep.subr.bf16.mxu0 0
    %1189 = vmatpush1.bf16.msra.mxu0 %v1142
    %1190 = vmatprep.subr.bf16.mxu0 0
    %1191 = vmatpush2.bf16.msra.mxu0 %v1157
    %1192 = vmatprep.subr.bf16.mxu0 0
    %1193 = vmatpush2.bf16.msra.mxu0 %v1156
    %1194 = vmatprep.subr.bf16.mxu0 0
    %1195 = vmatpush2.bf16.msra.mxu0 %v1155
    %1196 = vmatprep.subr.bf16.mxu0 0
    %1197 = vmatpush2.bf16.msra.mxu0 %v1154
    %1198 = vmatprep.subr.bf16.mxu0 0
    %1199 = vmatpush2.bf16.msra.mxu0 %v1153
    %1200 = vmatprep.subr.bf16.mxu0 0
    %1201 = vmatpush2.bf16.msra.mxu0 %v1152
    %1202 = vmatprep.subr.bf16.mxu0 0
    %1203 = vmatpush2.bf16.msra.mxu0 %v1151
    %1204 = vmatprep.subr.bf16.mxu0 0
    %1205 = vmatpush2.bf16.msra.mxu0 %v1150
    %1206 = vmatprep.mubr.bf16.mxu0 %v1045
    %1207 = vmatmul.mubr.bf16.gmra.mxu0 %v1044
    %v1208 = vpop.f32.mrf.mxu0
    %v1209 = vadd.f32 %v195, %v1208
    %v1210 = vpop.f32.mrf.mxu0
    %v1211 = vpop.f32.mrf.mxu0
    %v1212 = vpop.f32.mrf.mxu0
    %1213 = vdwg.mxu0
    %vm1214 = vcmp.gt.f32.partialorder %v1209, 20.0
    %v1215 = vmin.f32 %v1209, 20.0
    %v1216 = vmul.f32 %v1215, 1.442695
    %v1217 = vpow.pop %v1216
    %v1218 = vadd.f32 %v1217, 1.0
    %v1219 = vlog2.pop %v1218
    %v1220 = vmul.f32 %v1219, 0.6931472
    %v1221 = vmul.f32 -0.5, %v1217
    %v1222 = vadd.f32 %v1221, 1.0
    %v1223 = vmul.f32 %v1222, %v1217
    %v1224 = vand.u32 2147483647, %v1217
    %vm1225 = vcmp.lt.f32.partialorder %v1224, 0.0004427343
    %v1226 = vsel %vm1225, %v1223, %v1220
    %v1227 = vsel %vm1214, %v1209, %v1226
    %v1228 = vld [vmem:[%s3] sm:$0xff]
    %1230 = vrot.lane.b32.xlu0 %v1228, 4
    %v1231 = vpop.permute.xlu0 %1230
    %v1233 = vmul.f32 %v1227, %v1231
    %1235 = vrot.lane.b32.xlu0 %v1233, 124
    %v1236 = vpop.permute.xlu0 %1235
    %v1238 = vadd.f32 %v1209, %v1236
    %vm1239 = vcmask 31744
    %1240 = vst.msk [vmem:[%s19] sm:$0xff] %vm1239, %v1238
    %1242 = vset.pattern.permute.xlu0 0
    %1243 = vperm.xlu0 %1242, %v1238
    %v1244 = vpop.permute.xlu0 %1243
    %v1246 = vmul.f32 %v1244, %v206
    %v1247 = vadd.f32 %v147, %v1246
    %1248 = vset.pattern.permute.xlu0 1
    %1249 = vperm.xlu0 %1248, %v1238
    %v1250 = vpop.permute.xlu0 %1249
    %v1252 = vmul.f32 %v1250, %v216
    %v1253 = vadd.f32 %v1247, %v1252
    %1254 = vset.pattern.permute.xlu0 2
    %1255 = vperm.xlu0 %1254, %v1238
    %v1256 = vpop.permute.xlu0 %1255
    %v1258 = vmul.f32 %v1256, %v226
    %v1259 = vadd.f32 %v1253, %v1258
    %1260 = vset.pattern.permute.xlu0 3
    %1261 = vperm.xlu0 %1260, %v1238
    %v1262 = vpop.permute.xlu0 %1261
    %v1264 = vmul.f32 %v1262, %v236
    %v1265 = vadd.f32 %v1259, %v1264
    %v1266 = vxor.u32 %v1265, 2147483648
    %v1267 = vmul.f32 %v1266, 1.442695
    %v1268 = vpow.pop %v1267
    %v1269 = vadd.f32 %v1268, 1.0
    %v1270 = vrcp.pop %v1269
    %v1271 = vmul.f32 1.0, %v1270
    %v1272 = vrot.slane %v1271, 4
    %v1273 = vadd.f32 %v1271, %v1272
    %v1274 = vrot.slane %v1273, 2
    %v1275 = vadd.f32 %v1273, %v1274
    %v1276 = vrot.slane %v1275, 1
    %v1277 = vadd.f32 %v1275, %v1276
    %v1278 = vmul.f32 %v1277, %v251
    %v1279 = vmul.f32 %v1271, %v1271
    %v1280 = vrot.slane %v1279, 4
    %v1281 = vadd.f32 %v1279, %v1280
    %v1282 = vrot.slane %v1281, 2
    %v1283 = vadd.f32 %v1281, %v1282
    %v1284 = vrot.slane %v1283, 1
    %v1285 = vadd.f32 %v1283, %v1284
    %v1286 = vmul.f32 %v1285, %v251
    %v1287 = vmul.f32 %v1278, %v1278
    %v1288 = vsub.f32 %v1286, %v1287
    %v1289 = vmax.f32 %v1288, 0.0
    %v1290 = vadd.f32 %v1289, 1e-05
    %v1291 = vrsqrt.pop %v1290
    %v1292 = vmul.f32 %v138, %v1291
    %v1293 = vmul.f32 %v1278, %v1292
    %v1294 = vsub.f32 %v139, %v1293
    %v1296 = vlaneseq
    %v1297 = vshrl.u32 %v1296, 7
    %v1298 = vsub.s32 0, %v1297
    %v1299 = vrot.slane %v1292, %v1298
    %v1301 = vmul.f32 %v1271, %v1299
    %v1303 = vlaneseq
    %v1304 = vshrl.u32 %v1303, 7
    %v1305 = vsub.s32 0, %v1304
    %v1306 = vrot.slane %v1294, %v1305
    %v1308 = vadd.f32 %v1301, %v1306
    %v1309 = vpack.c.bf16 %v1308, %v1308
    %v1310 = vld [vmem:[%s8] sm:$0xf]
    %v1311 = vld [vmem:[%s8 + $0x4] sm:$0xf]
    %v1312 = vld [vmem:[%s8 + $0x8] sm:$0xf]
    %v1313 = vld [vmem:[%s8 + $0xc] sm:$0xf]
    %v1314 = vld [vmem:[%s8 + $0x10] sm:$0xf]
    %v1315 = vld [vmem:[%s8 + $0x14] sm:$0xf]
    %v1316 = vld [vmem:[%s8 + $0x18] sm:$0xf]
    %v1317 = vld [vmem:[%s8 + $0x1c] sm:$0xf]
    %v1318 = vld [vmem:[%s8 + $0x20] sm:$0xf]
    %v1319 = vld [vmem:[%s8 + $0x24] sm:$0xf]
    %v1320 = vld [vmem:[%s8 + $0x28] sm:$0xf]
    %v1321 = vld [vmem:[%s8 + $0x2c] sm:$0xf]
    %v1322 = vld [vmem:[%s8 + $0x30] sm:$0xf]
    %v1323 = vld [vmem:[%s8 + $0x34] sm:$0xf]
    %v1324 = vld [vmem:[%s8 + $0x38] sm:$0xf]
    %v1325 = vld [vmem:[%s8 + $0x3c] sm:$0xf]
    %v1342 = vunpack.c.l.b16 %v1310
    %v1343 = vunpack.c.l.b16 %v1311
    %v1344 = vunpack.c.l.b16 %v1312
    %v1345 = vunpack.c.l.b16 %v1313
    %v1346 = vunpack.c.l.b16 %v1314
    %v1347 = vunpack.c.l.b16 %v1315
    %v1348 = vunpack.c.l.b16 %v1316
    %v1349 = vunpack.c.l.b16 %v1317
    %v1350 = vunpack.c.l.b16 %v1318
    %v1351 = vunpack.c.l.b16 %v1319
    %v1352 = vunpack.c.l.b16 %v1320
    %v1353 = vunpack.c.l.b16 %v1321
    %v1354 = vunpack.c.l.b16 %v1322
    %v1355 = vunpack.c.l.b16 %v1323
    %v1356 = vunpack.c.l.b16 %v1324
    %v1357 = vunpack.c.l.b16 %v1325
    %v1358 = vpack.c.b16 %v1343, %v1342
    %v1359 = vpack.c.b16 %v1345, %v1344
    %v1360 = vpack.c.b16 %v1347, %v1346
    %v1361 = vpack.c.b16 %v1349, %v1348
    %v1362 = vpack.c.b16 %v1351, %v1350
    %v1363 = vpack.c.b16 %v1353, %v1352
    %v1364 = vpack.c.b16 %v1355, %v1354
    %v1365 = vpack.c.b16 %v1357, %v1356
    %1374 = vmatprep.subr.bf16.mxu0 0
    %1375 = vmatpush1.bf16.msra.mxu0 %v1365
    %1376 = vmatprep.subr.bf16.mxu0 0
    %1377 = vmatpush1.bf16.msra.mxu0 %v1364
    %1378 = vmatprep.subr.bf16.mxu0 0
    %1379 = vmatpush1.bf16.msra.mxu0 %v1363
    %1380 = vmatprep.subr.bf16.mxu0 0
    %1381 = vmatpush1.bf16.msra.mxu0 %v1362
    %1382 = vmatprep.subr.bf16.mxu0 0
    %1383 = vmatpush1.bf16.msra.mxu0 %v1361
    %1384 = vmatprep.subr.bf16.mxu0 0
    %1385 = vmatpush1.bf16.msra.mxu0 %v1360
    %1386 = vmatprep.subr.bf16.mxu0 0
    %1387 = vmatpush1.bf16.msra.mxu0 %v1359
    %1388 = vmatprep.subr.bf16.mxu0 0
    %1389 = vmatpush1.bf16.msra.mxu0 %v1358
    %1390 = vmatprep.subr.bf16.mxu0 0
    %1391 = vmatpush2.bf16.msra.mxu0 0
    %1392 = vmatprep.subr.bf16.mxu0 0
    %1393 = vmatpush2.bf16.msra.mxu0 0
    %1394 = vmatprep.subr.bf16.mxu0 0
    %1395 = vmatpush2.bf16.msra.mxu0 0
    %1396 = vmatprep.subr.bf16.mxu0 0
    %1397 = vmatpush2.bf16.msra.mxu0 0
    %1398 = vmatprep.subr.bf16.mxu0 0
    %1399 = vmatpush2.bf16.msra.mxu0 0
    %1400 = vmatprep.subr.bf16.mxu0 0
    %1401 = vmatpush2.bf16.msra.mxu0 0
    %1402 = vmatprep.subr.bf16.mxu0 0
    %1403 = vmatpush2.bf16.msra.mxu0 0
    %1404 = vmatprep.subr.bf16.mxu0 0
    %1405 = vmatpush2.bf16.msra.mxu0 0
    %1406 = vmatprep.mubr.bf16.mxu0 0
    %1407 = vmatmul.mubr.bf16.gmra.mxu0 %v1309
    %v1408 = vpop.f32.mrf.mxu0
    %v1409 = vadd.f32 %v154, %v1408
    %v1410 = vpop.f32.mrf.mxu0
    %v1411 = vpop.f32.mrf.mxu0
    %v1412 = vpop.f32.mrf.mxu0
    %1413 = vdwg.mxu0
    %s1414 = scalar_lea.vmem %s2, 8
    %v1415 = vld [vmem:[%s1414] sm:$0xff]
    %v1416 = vmax.f32 %v1415, -1.0
    %v1417 = vmin.f32 %v1416, 1.0
    %v1418 = vpack.c.bf16 %v1409, %v1409
    %v1419 = vld [vmem:[%s11] sm:$0xff]
    %v1420 = vld [vmem:[%s11 + $0x8] sm:$0xff]
    %v1421 = vld [vmem:[%s11 + $0x10] sm:$0xff]
    %v1422 = vld [vmem:[%s11 + $0x18] sm:$0xff]
    %v1423 = vld [vmem:[%s11 + $0x20] sm:$0xff]
    %v1424 = vld [vmem:[%s11 + $0x28] sm:$0xff]
    %v1425 = vld [vmem:[%s11 + $0x30] sm:$0xff]
    %v1426 = vld [vmem:[%s11 + $0x38] sm:$0xff]
    %v1427 = vld [vmem:[%s11 + $0x40] sm:$0xff]
    %v1428 = vld [vmem:[%s11 + $0x48] sm:$0xff]
    %v1429 = vld [vmem:[%s11 + $0x50] sm:$0xff]
    %v1430 = vld [vmem:[%s11 + $0x58] sm:$0xff]
    %v1431 = vld [vmem:[%s11 + $0x60] sm:$0xff]
    %v1432 = vld [vmem:[%s11 + $0x68] sm:$0xff]
    %v1433 = vld [vmem:[%s11 + $0x70] sm:$0xff]
    %v1434 = vld [vmem:[%s11 + $0x78] sm:$0xff]
    %v1435 = vld [vmem:[%s11 + $0x80] sm:$0xff]
    %v1436 = vld [vmem:[%s11 + $0x88] sm:$0xff]
    %v1437 = vld [vmem:[%s11 + $0x90] sm:$0xff]
    %v1438 = vld [vmem:[%s11 + $0x98] sm:$0xff]
    %v1439 = vld [vmem:[%s11 + $0xa0] sm:$0xff]
    %v1440 = vld [vmem:[%s11 + $0xa8] sm:$0xff]
    %v1441 = vld [vmem:[%s11 + $0xb0] sm:$0xff]
    %v1442 = vld [vmem:[%s11 + $0xb8] sm:$0xff]
    %v1443 = vld [vmem:[%s11 + $0xc0] sm:$0xff]
    %v1444 = vld [vmem:[%s11 + $0xc8] sm:$0xff]
    %v1445 = vld [vmem:[%s11 + $0xd0] sm:$0xff]
    %v1446 = vld [vmem:[%s11 + $0xd8] sm:$0xff]
    %v1447 = vld [vmem:[%s11 + $0xe0] sm:$0xff]
    %v1448 = vld [vmem:[%s11 + $0xe8] sm:$0xff]
    %v1449 = vld [vmem:[%s11 + $0xf0] sm:$0xff]
    %v1450 = vld [vmem:[%s11 + $0xf8] sm:$0xff]
    %v1483 = vunpack.c.l.b16 %v1419
    %v1484 = vunpack.c.h.b16 %v1419
    %v1485 = vunpack.c.l.b16 %v1420
    %v1486 = vunpack.c.h.b16 %v1420
    %v1487 = vunpack.c.l.b16 %v1421
    %v1488 = vunpack.c.h.b16 %v1421
    %v1489 = vunpack.c.l.b16 %v1422
    %v1490 = vunpack.c.h.b16 %v1422
    %v1491 = vunpack.c.l.b16 %v1423
    %v1492 = vunpack.c.h.b16 %v1423
    %v1493 = vunpack.c.l.b16 %v1424
    %v1494 = vunpack.c.h.b16 %v1424
    %v1495 = vunpack.c.l.b16 %v1425
    %v1496 = vunpack.c.h.b16 %v1425
    %v1497 = vunpack.c.l.b16 %v1426
    %v1498 = vunpack.c.h.b16 %v1426
    %v1499 = vunpack.c.l.b16 %v1427
    %v1500 = vunpack.c.h.b16 %v1427
    %v1501 = vunpack.c.l.b16 %v1428
    %v1502 = vunpack.c.h.b16 %v1428
    %v1503 = vunpack.c.l.b16 %v1429
    %v1504 = vunpack.c.h.b16 %v1429
    %v1505 = vunpack.c.l.b16 %v1430
    %v1506 = vunpack.c.h.b16 %v1430
    %v1507 = vunpack.c.l.b16 %v1431
    %v1508 = vunpack.c.h.b16 %v1431
    %v1509 = vunpack.c.l.b16 %v1432
    %v1510 = vunpack.c.h.b16 %v1432
    %v1511 = vunpack.c.l.b16 %v1433
    %v1512 = vunpack.c.h.b16 %v1433
    %v1513 = vunpack.c.l.b16 %v1434
    %v1514 = vunpack.c.h.b16 %v1434
    %v1515 = vunpack.c.l.b16 %v1435
    %v1516 = vunpack.c.h.b16 %v1435
    %v1517 = vunpack.c.l.b16 %v1436
    %v1518 = vunpack.c.h.b16 %v1436
    %v1519 = vunpack.c.l.b16 %v1437
    %v1520 = vunpack.c.h.b16 %v1437
    %v1521 = vunpack.c.l.b16 %v1438
    %v1522 = vunpack.c.h.b16 %v1438
    %v1523 = vunpack.c.l.b16 %v1439
    %v1524 = vunpack.c.h.b16 %v1439
    %v1525 = vunpack.c.l.b16 %v1440
    %v1526 = vunpack.c.h.b16 %v1440
    %v1527 = vunpack.c.l.b16 %v1441
    %v1528 = vunpack.c.h.b16 %v1441
    %v1529 = vunpack.c.l.b16 %v1442
    %v1530 = vunpack.c.h.b16 %v1442
    %v1531 = vunpack.c.l.b16 %v1443
    %v1532 = vunpack.c.h.b16 %v1443
    %v1533 = vunpack.c.l.b16 %v1444
    %v1534 = vunpack.c.h.b16 %v1444
    %v1535 = vunpack.c.l.b16 %v1445
    %v1536 = vunpack.c.h.b16 %v1445
    %v1537 = vunpack.c.l.b16 %v1446
    %v1538 = vunpack.c.h.b16 %v1446
    %v1539 = vunpack.c.l.b16 %v1447
    %v1540 = vunpack.c.h.b16 %v1447
    %v1541 = vunpack.c.l.b16 %v1448
    %v1542 = vunpack.c.h.b16 %v1448
    %v1543 = vunpack.c.l.b16 %v1449
    %v1544 = vunpack.c.h.b16 %v1449
    %v1545 = vunpack.c.l.b16 %v1450
    %v1546 = vunpack.c.h.b16 %v1450
    %v1547 = vpack.c.b16 %v1487, %v1483
    %v1548 = vpack.c.b16 %v1488, %v1484
    %v1549 = vpack.c.b16 %v1489, %v1485
    %v1550 = vpack.c.b16 %v1490, %v1486
    %v1551 = vpack.c.b16 %v1495, %v1491
    %v1552 = vpack.c.b16 %v1496, %v1492
    %v1553 = vpack.c.b16 %v1497, %v1493
    %v1554 = vpack.c.b16 %v1498, %v1494
    %v1555 = vpack.c.b16 %v1503, %v1499
    %v1556 = vpack.c.b16 %v1504, %v1500
    %v1557 = vpack.c.b16 %v1505, %v1501
    %v1558 = vpack.c.b16 %v1506, %v1502
    %v1559 = vpack.c.b16 %v1511, %v1507
    %v1560 = vpack.c.b16 %v1512, %v1508
    %v1561 = vpack.c.b16 %v1513, %v1509
    %v1562 = vpack.c.b16 %v1514, %v1510
    %v1563 = vpack.c.b16 %v1519, %v1515
    %v1564 = vpack.c.b16 %v1520, %v1516
    %v1565 = vpack.c.b16 %v1521, %v1517
    %v1566 = vpack.c.b16 %v1522, %v1518
    %v1567 = vpack.c.b16 %v1527, %v1523
    %v1568 = vpack.c.b16 %v1528, %v1524
    %v1569 = vpack.c.b16 %v1529, %v1525
    %v1570 = vpack.c.b16 %v1530, %v1526
    %v1571 = vpack.c.b16 %v1535, %v1531
    %v1572 = vpack.c.b16 %v1536, %v1532
    %v1573 = vpack.c.b16 %v1537, %v1533
    %v1574 = vpack.c.b16 %v1538, %v1534
    %v1575 = vpack.c.b16 %v1543, %v1539
    %v1576 = vpack.c.b16 %v1544, %v1540
    %v1577 = vpack.c.b16 %v1545, %v1541
    %v1578 = vpack.c.b16 %v1546, %v1542
    %1611 = vmatprep.subr.bf16.mxu0 %v1576
    %1612 = vmatpush1.bf16.msra.mxu0 %v1575
    %1613 = vmatprep.subr.bf16.mxu0 %v1572
    %1614 = vmatpush1.bf16.msra.mxu0 %v1571
    %1615 = vmatprep.subr.bf16.mxu0 %v1568
    %1616 = vmatpush1.bf16.msra.mxu0 %v1567
    %1617 = vmatprep.subr.bf16.mxu0 %v1564
    %1618 = vmatpush1.bf16.msra.mxu0 %v1563
    %1619 = vmatprep.subr.bf16.mxu0 %v1560
    %1620 = vmatpush1.bf16.msra.mxu0 %v1559
    %1621 = vmatprep.subr.bf16.mxu0 %v1556
    %1622 = vmatpush1.bf16.msra.mxu0 %v1555
    %1623 = vmatprep.subr.bf16.mxu0 %v1552
    %1624 = vmatpush1.bf16.msra.mxu0 %v1551
    %1625 = vmatprep.subr.bf16.mxu0 %v1548
    %1626 = vmatpush1.bf16.msra.mxu0 %v1547
    %1627 = vmatprep.subr.bf16.mxu0 0
    %1628 = vmatpush2.bf16.msra.mxu0 0
    %1629 = vmatprep.subr.bf16.mxu0 0
    %1630 = vmatpush2.bf16.msra.mxu0 0
    %1631 = vmatprep.subr.bf16.mxu0 0
    %1632 = vmatpush2.bf16.msra.mxu0 0
    %1633 = vmatprep.subr.bf16.mxu0 0
    %1634 = vmatpush2.bf16.msra.mxu0 0
    %1635 = vmatprep.subr.bf16.mxu0 0
    %1636 = vmatpush2.bf16.msra.mxu0 0
    %1637 = vmatprep.subr.bf16.mxu0 0
    %1638 = vmatpush2.bf16.msra.mxu0 0
    %1639 = vmatprep.subr.bf16.mxu0 0
    %1640 = vmatpush2.bf16.msra.mxu0 0
    %1641 = vmatprep.subr.bf16.mxu0 0
    %1642 = vmatpush2.bf16.msra.mxu0 0
    %1643 = vmatprep.mubr.bf16.mxu0 0
    %1644 = vmatmul.mubr.bf16.gmra.mxu0 %v1418
    %v1645 = vpop.f32.mrf.mxu0
    %v1646 = vadd.f32 %v161, %v1645
    %v1647 = vpop.f32.mrf.mxu0
    %v1648 = vadd.f32 %v165, %v1647
    %v1649 = vpop.f32.mrf.mxu0
    %v1650 = vpop.f32.mrf.mxu0
    %1651 = vdwg.mxu0
    %1652 = vmatprep.subr.bf16.mxu0 %v1578
    %1653 = vmatpush1.bf16.msra.mxu0 %v1577
    %1654 = vmatprep.subr.bf16.mxu0 %v1574
    %1655 = vmatpush1.bf16.msra.mxu0 %v1573
    %1656 = vmatprep.subr.bf16.mxu0 %v1570
    %1657 = vmatpush1.bf16.msra.mxu0 %v1569
    %1658 = vmatprep.subr.bf16.mxu0 %v1566
    %1659 = vmatpush1.bf16.msra.mxu0 %v1565
    %1660 = vmatprep.subr.bf16.mxu0 %v1562
    %1661 = vmatpush1.bf16.msra.mxu0 %v1561
    %1662 = vmatprep.subr.bf16.mxu0 %v1558
    %1663 = vmatpush1.bf16.msra.mxu0 %v1557
    %1664 = vmatprep.subr.bf16.mxu0 %v1554
    %1665 = vmatpush1.bf16.msra.mxu0 %v1553
    %1666 = vmatprep.subr.bf16.mxu0 %v1550
    %1667 = vmatpush1.bf16.msra.mxu0 %v1549
    %1668 = vmatprep.subr.bf16.mxu0 0
    %1669 = vmatpush2.bf16.msra.mxu0 0
    %1670 = vmatprep.subr.bf16.mxu0 0
    %1671 = vmatpush2.bf16.msra.mxu0 0
    %1672 = vmatprep.subr.bf16.mxu0 0
    %1673 = vmatpush2.bf16.msra.mxu0 0
    %1674 = vmatprep.subr.bf16.mxu0 0
    %1675 = vmatpush2.bf16.msra.mxu0 0
    %1676 = vmatprep.subr.bf16.mxu0 0
    %1677 = vmatpush2.bf16.msra.mxu0 0
    %1678 = vmatprep.subr.bf16.mxu0 0
    %1679 = vmatpush2.bf16.msra.mxu0 0
    %1680 = vmatprep.subr.bf16.mxu0 0
    %1681 = vmatpush2.bf16.msra.mxu0 0
    %1682 = vmatprep.subr.bf16.mxu0 0
    %1683 = vmatpush2.bf16.msra.mxu0 0
    %1684 = vmatprep.mubr.bf16.mxu0 0
    %1685 = vmatmul.mubr.bf16.gmra.mxu0 %v1418
    %v1686 = vpop.f32.mrf.mxu0
    %v1687 = vadd.f32 %v169, %v1686
    %v1688 = vpop.f32.mrf.mxu0
    %v1689 = vadd.f32 %v173, %v1688
    %v1690 = vpop.f32.mrf.mxu0
    %v1691 = vpop.f32.mrf.mxu0
    %1692 = vdwg.mxu0
    %1694 = vset.pattern.permute.xlu0 0
    %1695 = vperm.xlu0 %1694, %v1417
    %v1696 = vpop.permute.xlu0 %1695
    %v1698 = vmul.f32 %v1696, %v695
    %v1699 = vmul.f32 %v1696, %v699
    %v1700 = vmul.f32 %v1696, %v703
    %v1701 = vmul.f32 %v1696, %v707
    %v1702 = vadd.f32 %v1646, %v1698
    %v1703 = vadd.f32 %v1648, %v1699
    %v1704 = vadd.f32 %v1687, %v1700
    %v1705 = vadd.f32 %v1689, %v1701
    %1706 = vset.pattern.permute.xlu0 1
    %1707 = vperm.xlu0 %1706, %v1417
    %v1708 = vpop.permute.xlu0 %1707
    %v1710 = vmul.f32 %v1708, %v743
    %v1711 = vmul.f32 %v1708, %v747
    %v1712 = vmul.f32 %v1708, %v751
    %v1713 = vmul.f32 %v1708, %v755
    %v1714 = vadd.f32 %v1702, %v1710
    %v1715 = vadd.f32 %v1703, %v1711
    %v1716 = vadd.f32 %v1704, %v1712
    %v1717 = vadd.f32 %v1705, %v1713
    %v1718 = vxor.u32 %v1714, 2147483648
    %v1719 = vmul.f32 %v1718, 1.442695
    %v1720 = vpow.pop %v1719
    %v1721 = vadd.f32 %v1720, 1.0
    %v1722 = vrcp.pop %v1721
    %v1723 = vmul.f32 1.0, %v1722
    %v1724 = vxor.u32 %v1715, 2147483648
    %v1725 = vmul.f32 %v1724, 1.442695
    %v1726 = vpow.pop %v1725
    %v1727 = vadd.f32 %v1726, 1.0
    %v1728 = vrcp.pop %v1727
    %v1729 = vmul.f32 1.0, %v1728
    %v1730 = vtanh.pop %v1716
    %v1731 = vxor.u32 %v1717, 2147483648
    %v1732 = vmul.f32 %v1731, 1.442695
    %v1733 = vpow.pop %v1732
    %v1734 = vadd.f32 %v1733, 1.0
    %v1735 = vrcp.pop %v1734
    %v1736 = vmul.f32 1.0, %v1735
    %v1737 = vmul.f32 %v1729, %v135
    %v1738 = vmul.f32 %v1723, %v1730
    %v1739 = vadd.f32 %v1737, %v1738
    %v1740 = vtanh.pop %v1739
    %v1741 = vmul.f32 %v1736, %v1740
    %v1742 = vpack.c.bf16 %v1741, %v1741
    %v1743 = vld [vmem:[#allocation10] sm:$0xff]
    %v1744 = vld [vmem:[#allocation10 + $0x8] sm:$0xff]
    %v1745 = vld [vmem:[#allocation10 + $0x10] sm:$0xff]
    %v1746 = vld [vmem:[#allocation10 + $0x18] sm:$0xff]
    %v1747 = vld [vmem:[#allocation10 + $0x20] sm:$0xff]
    %v1748 = vld [vmem:[#allocation10 + $0x28] sm:$0xff]
    %v1749 = vld [vmem:[#allocation10 + $0x30] sm:$0xff]
    %v1750 = vld [vmem:[#allocation10 + $0x38] sm:$0xff]
    %v1751 = vld [vmem:[#allocation10 + $0x40] sm:$0xff]
    %v1752 = vld [vmem:[#allocation10 + $0x48] sm:$0xff]
    %v1753 = vld [vmem:[#allocation10 + $0x50] sm:$0xff]
    %v1754 = vld [vmem:[#allocation10 + $0x58] sm:$0xff]
    %v1755 = vld [vmem:[#allocation10 + $0x60] sm:$0xff]
    %v1756 = vld [vmem:[#allocation10 + $0x68] sm:$0xff]
    %v1757 = vld [vmem:[#allocation10 + $0x70] sm:$0xff]
    %v1758 = vld [vmem:[#allocation10 + $0x78] sm:$0xff]
    %v1775 = vunpack.c.l.b16 %v1743
    %v1776 = vunpack.c.h.b16 %v1743
    %v1777 = vunpack.c.l.b16 %v1744
    %v1778 = vunpack.c.h.b16 %v1744
    %v1779 = vunpack.c.l.b16 %v1745
    %v1780 = vunpack.c.h.b16 %v1745
    %v1781 = vunpack.c.l.b16 %v1746
    %v1782 = vunpack.c.h.b16 %v1746
    %v1783 = vunpack.c.l.b16 %v1747
    %v1784 = vunpack.c.h.b16 %v1747
    %v1785 = vunpack.c.l.b16 %v1748
    %v1786 = vunpack.c.h.b16 %v1748
    %v1787 = vunpack.c.l.b16 %v1749
    %v1788 = vunpack.c.h.b16 %v1749
    %v1789 = vunpack.c.l.b16 %v1750
    %v1790 = vunpack.c.h.b16 %v1750
    %v1791 = vunpack.c.l.b16 %v1751
    %v1792 = vunpack.c.h.b16 %v1751
    %v1793 = vunpack.c.l.b16 %v1752
    %v1794 = vunpack.c.h.b16 %v1752
    %v1795 = vunpack.c.l.b16 %v1753
    %v1796 = vunpack.c.h.b16 %v1753
    %v1797 = vunpack.c.l.b16 %v1754
    %v1798 = vunpack.c.h.b16 %v1754
    %v1799 = vunpack.c.l.b16 %v1755
    %v1800 = vunpack.c.h.b16 %v1755
    %v1801 = vunpack.c.l.b16 %v1756
    %v1802 = vunpack.c.h.b16 %v1756
    %v1803 = vunpack.c.l.b16 %v1757
    %v1804 = vunpack.c.h.b16 %v1757
    %v1805 = vunpack.c.l.b16 %v1758
    %v1806 = vunpack.c.h.b16 %v1758
    %v1807 = vpack.c.b16 %v1777, %v1775
    %v1808 = vpack.c.b16 %v1778, %v1776
    %v1809 = vpack.c.b16 %v1781, %v1779
    %v1810 = vpack.c.b16 %v1782, %v1780
    %v1811 = vpack.c.b16 %v1785, %v1783
    %v1812 = vpack.c.b16 %v1786, %v1784
    %v1813 = vpack.c.b16 %v1789, %v1787
    %v1814 = vpack.c.b16 %v1790, %v1788
    %v1815 = vpack.c.b16 %v1793, %v1791
    %v1816 = vpack.c.b16 %v1794, %v1792
    %v1817 = vpack.c.b16 %v1797, %v1795
    %v1818 = vpack.c.b16 %v1798, %v1796
    %v1819 = vpack.c.b16 %v1801, %v1799
    %v1820 = vpack.c.b16 %v1802, %v1800
    %v1821 = vpack.c.b16 %v1805, %v1803
    %v1822 = vpack.c.b16 %v1806, %v1804
    %1839 = vmatprep.subr.bf16.mxu0 %v1822
    %1840 = vmatpush1.bf16.msra.mxu0 %v1821
    %1841 = vmatprep.subr.bf16.mxu0 %v1820
    %1842 = vmatpush1.bf16.msra.mxu0 %v1819
    %1843 = vmatprep.subr.bf16.mxu0 %v1818
    %1844 = vmatpush1.bf16.msra.mxu0 %v1817
    %1845 = vmatprep.subr.bf16.mxu0 %v1816
    %1846 = vmatpush1.bf16.msra.mxu0 %v1815
    %1847 = vmatprep.subr.bf16.mxu0 %v1814
    %1848 = vmatpush1.bf16.msra.mxu0 %v1813
    %1849 = vmatprep.subr.bf16.mxu0 %v1812
    %1850 = vmatpush1.bf16.msra.mxu0 %v1811
    %1851 = vmatprep.subr.bf16.mxu0 %v1810
    %1852 = vmatpush1.bf16.msra.mxu0 %v1809
    %1853 = vmatprep.subr.bf16.mxu0 %v1808
    %1854 = vmatpush1.bf16.msra.mxu0 %v1807
    %1855 = vmatprep.subr.bf16.mxu0 0
    %1856 = vmatpush2.bf16.msra.mxu0 0
    %1857 = vmatprep.subr.bf16.mxu0 0
    %1858 = vmatpush2.bf16.msra.mxu0 0
    %1859 = vmatprep.subr.bf16.mxu0 0
    %1860 = vmatpush2.bf16.msra.mxu0 0
    %1861 = vmatprep.subr.bf16.mxu0 0
    %1862 = vmatpush2.bf16.msra.mxu0 0
    %1863 = vmatprep.subr.bf16.mxu0 0
    %1864 = vmatpush2.bf16.msra.mxu0 0
    %1865 = vmatprep.subr.bf16.mxu0 0
    %1866 = vmatpush2.bf16.msra.mxu0 0
    %1867 = vmatprep.subr.bf16.mxu0 0
    %1868 = vmatpush2.bf16.msra.mxu0 0
    %1869 = vmatprep.subr.bf16.mxu0 0
    %1870 = vmatpush2.bf16.msra.mxu0 0
    %1871 = vmatprep.mubr.bf16.mxu0 0
    %1872 = vmatmul.mubr.bf16.gmra.mxu0 %v1742
    %v1873 = vpop.f32.mrf.mxu0
    %v1874 = vadd.f32 %v183, %v1873
    %v1875 = vpop.f32.mrf.mxu0
    %v1876 = vadd.f32 %v187, %v1875
    %v1877 = vpop.f32.mrf.mxu0
    %v1878 = vpop.f32.mrf.mxu0
    %1879 = vdwg.mxu0
    %v1880 = vxor.u32 %v1874, 2147483648
    %v1881 = vxor.u32 %v1876, 2147483648
    %v1882 = vmul.f32 %v1880, 1.442695
    %v1883 = vpow.pop %v1882
    %v1884 = vmul.f32 %v1881, 1.442695
    %v1885 = vpow.pop %v1884
    %v1886 = vadd.f32 %v1883, 1.0
    %v1887 = vadd.f32 %v1885, 1.0
    %v1888 = vrcp.pop %v1886
    %v1889 = vmul.f32 1.0, %v1888
    %v1890 = vrcp.pop %v1887
    %v1891 = vmul.f32 1.0, %v1890
    %v1892 = vrot.slane %v1889, 4
    %v1893 = vadd.f32 %v1889, %v1892
    %v1894 = vrot.slane %v1893, 2
    %v1895 = vadd.f32 %v1893, %v1894
    %v1896 = vrot.slane %v1895, 1
    %v1897 = vadd.f32 %v1895, %v1896
    %v1898 = vrot.slane %v1891, 4
    %v1899 = vadd.f32 %v1891, %v1898
    %v1900 = vrot.slane %v1899, 2
    %v1901 = vadd.f32 %v1899, %v1900
    %v1902 = vrot.slane %v1901, 1
    %v1903 = vadd.f32 %v1901, %v1902
    %v1904 = vmul.f32 %v1897, %v251
    %v1905 = vmul.f32 %v1903, %v251
    %v1906 = vmul.f32 %v1889, %v1889
    %v1907 = vmul.f32 %v1891, %v1891
    %v1908 = vrot.slane %v1906, 4
    %v1909 = vadd.f32 %v1906, %v1908
    %v1910 = vrot.slane %v1909, 2
    %v1911 = vadd.f32 %v1909, %v1910
    %v1912 = vrot.slane %v1911, 1
    %v1913 = vadd.f32 %v1911, %v1912
    %v1914 = vrot.slane %v1907, 4
    %v1915 = vadd.f32 %v1907, %v1914
    %v1916 = vrot.slane %v1915, 2
    %v1917 = vadd.f32 %v1915, %v1916
    %v1918 = vrot.slane %v1917, 1
    %v1919 = vadd.f32 %v1917, %v1918
    %v1920 = vmul.f32 %v1913, %v251
    %v1921 = vmul.f32 %v1919, %v251
    %v1922 = vmul.f32 %v1904, %v1904
    %v1923 = vmul.f32 %v1905, %v1905
    %v1924 = vsub.f32 %v1920, %v1922
    %v1925 = vsub.f32 %v1921, %v1923
    %v1926 = vmax.f32 %v1924, 0.0
    %v1927 = vmax.f32 %v1925, 0.0
    %v1928 = vadd.f32 %v1926, 1e-05
    %v1929 = vadd.f32 %v1927, 1e-05
    %v1930 = vrsqrt.pop %v1928
    %v1931 = vrsqrt.pop %v1929
    %v1934 = vcombine.low %v1930, %v1931
    %v1936 = vunpack.c.l.s4 1966171168
    %v1937 = vunpack.c.0.s8 %v1936
    %v1938 = vlaneseq
    %v1939 = vshrl.u32 %v1938, 7
    %v1940 = vsub.s32 %v1937, %v1939
    %v1941 = vrot.slane %v1934, %v1940
    %v1943 = vunpack.c.l.s4 1966171168
    %v1944 = vunpack.c.0.s8 %v1943
    %v1945 = vlaneseq
    %v1946 = vshrl.u32 %v1945, 7
    %v1947 = vsub.s32 %v1944, %v1946
    %v1948 = vrot.slane %v1941, %v1947
    %v1950 = vmul.f32 %v140, %v1948
    %v1952 = vlaneseq
    %v1953 = vshrl.u32 %v1952, 7
    %v1954 = vsub.s32 0, %v1953
    %v1955 = vrot.slane %v1950, %v1954
    %v1956 = vlaneseq
    %v1957 = vshrl.u32 %v1956, 7
    %v1958 = vsub.s32 1, %v1957
    %v1959 = vrot.slane %v1950, %v1958
    %v1962 = vmul.f32 %v1904, %v1955
    %v1963 = vmul.f32 %v1905, %v1959
    %v1966 = vcombine.low %v1962, %v1963
    %v1968 = vunpack.c.l.s4 1966171168
    %v1969 = vunpack.c.0.s8 %v1968
    %v1970 = vlaneseq
    %v1971 = vshrl.u32 %v1970, 7
    %v1972 = vsub.s32 %v1969, %v1971
    %v1973 = vrot.slane %v1966, %v1972
    %v1975 = vunpack.c.l.s4 1966171168
    %v1976 = vunpack.c.0.s8 %v1975
    %v1977 = vlaneseq
    %v1978 = vshrl.u32 %v1977, 7
    %v1979 = vsub.s32 %v1976, %v1978
    %v1980 = vrot.slane %v1973, %v1979
    %v1982 = vsub.f32 %v141, %v1980
    %v1983 = vmul.f32 %v1889, %v1955
    %v1984 = vmul.f32 %v1891, %v1959
    %v1986 = vlaneseq
    %v1987 = vshrl.u32 %v1986, 7
    %v1988 = vsub.s32 0, %v1987
    %v1989 = vrot.slane %v1982, %v1988
    %v1990 = vlaneseq
    %v1991 = vshrl.u32 %v1990, 7
    %v1992 = vsub.s32 1, %v1991
    %v1993 = vrot.slane %v1982, %v1992
    %v1996 = vadd.f32 %v1983, %v1989
    %v1997 = vadd.f32 %v1984, %v1993
    %v1998 = vpack.c.bf16 %v1996, %v1996
    %v1999 = vpack.c.bf16 %v1997, %v1997
    %v2000 = vld [vmem:[%s17] sm:$0xf]
    %v2001 = vld [vmem:[%s17 + $0x4] sm:$0xf]
    %v2002 = vld [vmem:[%s17 + $0x8] sm:$0xf]
    %v2003 = vld [vmem:[%s17 + $0xc] sm:$0xf]
    %v2004 = vld [vmem:[%s17 + $0x10] sm:$0xf]
    %v2005 = vld [vmem:[%s17 + $0x14] sm:$0xf]
    %v2006 = vld [vmem:[%s17 + $0x18] sm:$0xf]
    %v2007 = vld [vmem:[%s17 + $0x1c] sm:$0xf]
    %v2008 = vld [vmem:[%s17 + $0x20] sm:$0xf]
    %v2009 = vld [vmem:[%s17 + $0x24] sm:$0xf]
    %v2010 = vld [vmem:[%s17 + $0x28] sm:$0xf]
    %v2011 = vld [vmem:[%s17 + $0x2c] sm:$0xf]
    %v2012 = vld [vmem:[%s17 + $0x30] sm:$0xf]
    %v2013 = vld [vmem:[%s17 + $0x34] sm:$0xf]
    %v2014 = vld [vmem:[%s17 + $0x38] sm:$0xf]
    %v2015 = vld [vmem:[%s17 + $0x3c] sm:$0xf]
    %v2016 = vld [vmem:[%s17 + $0x40] sm:$0xf]
    %v2017 = vld [vmem:[%s17 + $0x44] sm:$0xf]
    %v2018 = vld [vmem:[%s17 + $0x48] sm:$0xf]
    %v2019 = vld [vmem:[%s17 + $0x4c] sm:$0xf]
    %v2020 = vld [vmem:[%s17 + $0x50] sm:$0xf]
    %v2021 = vld [vmem:[%s17 + $0x54] sm:$0xf]
    %v2022 = vld [vmem:[%s17 + $0x58] sm:$0xf]
    %v2023 = vld [vmem:[%s17 + $0x5c] sm:$0xf]
    %v2024 = vld [vmem:[%s17 + $0x60] sm:$0xf]
    %v2025 = vld [vmem:[%s17 + $0x64] sm:$0xf]
    %v2026 = vld [vmem:[%s17 + $0x68] sm:$0xf]
    %v2027 = vld [vmem:[%s17 + $0x6c] sm:$0xf]
    %v2028 = vld [vmem:[%s17 + $0x70] sm:$0xf]
    %v2029 = vld [vmem:[%s17 + $0x74] sm:$0xf]
    %v2030 = vld [vmem:[%s17 + $0x78] sm:$0xf]
    %v2031 = vld [vmem:[%s17 + $0x7c] sm:$0xf]
    %v2064 = vunpack.c.l.b16 %v2000
    %v2065 = vunpack.c.l.b16 %v2001
    %v2066 = vunpack.c.l.b16 %v2002
    %v2067 = vunpack.c.l.b16 %v2003
    %v2068 = vunpack.c.l.b16 %v2004
    %v2069 = vunpack.c.l.b16 %v2005
    %v2070 = vunpack.c.l.b16 %v2006
    %v2071 = vunpack.c.l.b16 %v2007
    %v2072 = vunpack.c.l.b16 %v2008
    %v2073 = vunpack.c.l.b16 %v2009
    %v2074 = vunpack.c.l.b16 %v2010
    %v2075 = vunpack.c.l.b16 %v2011
    %v2076 = vunpack.c.l.b16 %v2012
    %v2077 = vunpack.c.l.b16 %v2013
    %v2078 = vunpack.c.l.b16 %v2014
    %v2079 = vunpack.c.l.b16 %v2015
    %v2080 = vunpack.c.l.b16 %v2016
    %v2081 = vunpack.c.l.b16 %v2017
    %v2082 = vunpack.c.l.b16 %v2018
    %v2083 = vunpack.c.l.b16 %v2019
    %v2084 = vunpack.c.l.b16 %v2020
    %v2085 = vunpack.c.l.b16 %v2021
    %v2086 = vunpack.c.l.b16 %v2022
    %v2087 = vunpack.c.l.b16 %v2023
    %v2088 = vunpack.c.l.b16 %v2024
    %v2089 = vunpack.c.l.b16 %v2025
    %v2090 = vunpack.c.l.b16 %v2026
    %v2091 = vunpack.c.l.b16 %v2027
    %v2092 = vunpack.c.l.b16 %v2028
    %v2093 = vunpack.c.l.b16 %v2029
    %v2094 = vunpack.c.l.b16 %v2030
    %v2095 = vunpack.c.l.b16 %v2031
    %v2096 = vpack.c.b16 %v2065, %v2064
    %v2097 = vpack.c.b16 %v2067, %v2066
    %v2098 = vpack.c.b16 %v2069, %v2068
    %v2099 = vpack.c.b16 %v2071, %v2070
    %v2100 = vpack.c.b16 %v2073, %v2072
    %v2101 = vpack.c.b16 %v2075, %v2074
    %v2102 = vpack.c.b16 %v2077, %v2076
    %v2103 = vpack.c.b16 %v2079, %v2078
    %v2104 = vpack.c.b16 %v2081, %v2080
    %v2105 = vpack.c.b16 %v2083, %v2082
    %v2106 = vpack.c.b16 %v2085, %v2084
    %v2107 = vpack.c.b16 %v2087, %v2086
    %v2108 = vpack.c.b16 %v2089, %v2088
    %v2109 = vpack.c.b16 %v2091, %v2090
    %v2110 = vpack.c.b16 %v2093, %v2092
    %v2111 = vpack.c.b16 %v2095, %v2094
    %2128 = vmatprep.subr.bf16.mxu0 0
    %2129 = vmatpush1.bf16.msra.mxu0 %v2103
    %2130 = vmatprep.subr.bf16.mxu0 0
    %2131 = vmatpush1.bf16.msra.mxu0 %v2102
    %2132 = vmatprep.subr.bf16.mxu0 0
    %2133 = vmatpush1.bf16.msra.mxu0 %v2101
    %2134 = vmatprep.subr.bf16.mxu0 0
    %2135 = vmatpush1.bf16.msra.mxu0 %v2100
    %2136 = vmatprep.subr.bf16.mxu0 0
    %2137 = vmatpush1.bf16.msra.mxu0 %v2099
    %2138 = vmatprep.subr.bf16.mxu0 0
    %2139 = vmatpush1.bf16.msra.mxu0 %v2098
    %2140 = vmatprep.subr.bf16.mxu0 0
    %2141 = vmatpush1.bf16.msra.mxu0 %v2097
    %2142 = vmatprep.subr.bf16.mxu0 0
    %2143 = vmatpush1.bf16.msra.mxu0 %v2096
    %2144 = vmatprep.subr.bf16.mxu0 0
    %2145 = vmatpush2.bf16.msra.mxu0 %v2111
    %2146 = vmatprep.subr.bf16.mxu0 0
    %2147 = vmatpush2.bf16.msra.mxu0 %v2110
    %2148 = vmatprep.subr.bf16.mxu0 0
    %2149 = vmatpush2.bf16.msra.mxu0 %v2109
    %2150 = vmatprep.subr.bf16.mxu0 0
    %2151 = vmatpush2.bf16.msra.mxu0 %v2108
    %2152 = vmatprep.subr.bf16.mxu0 0
    %2153 = vmatpush2.bf16.msra.mxu0 %v2107
    %2154 = vmatprep.subr.bf16.mxu0 0
    %2155 = vmatpush2.bf16.msra.mxu0 %v2106
    %2156 = vmatprep.subr.bf16.mxu0 0
    %2157 = vmatpush2.bf16.msra.mxu0 %v2105
    %2158 = vmatprep.subr.bf16.mxu0 0
    %2159 = vmatpush2.bf16.msra.mxu0 %v2104
    %2160 = vmatprep.mubr.bf16.mxu0 %v1999
    %2161 = vmatmul.mubr.bf16.gmra.mxu0 %v1998
    %v2162 = vpop.f32.mrf.mxu0
    %v2163 = vadd.f32 %v195, %v2162
    %v2164 = vpop.f32.mrf.mxu0
    %v2165 = vpop.f32.mrf.mxu0
    %v2166 = vpop.f32.mrf.mxu0
    %2167 = vdwg.mxu0
    %vm2168 = vcmp.gt.f32.partialorder %v2163, 20.0
    %v2169 = vmin.f32 %v2163, 20.0
    %v2170 = vmul.f32 %v2169, 1.442695
    %v2171 = vpow.pop %v2170
    %v2172 = vadd.f32 %v2171, 1.0
    %v2173 = vlog2.pop %v2172
    %v2174 = vmul.f32 %v2173, 0.6931472
    %v2175 = vmul.f32 -0.5, %v2171
    %v2176 = vadd.f32 %v2175, 1.0
    %v2177 = vmul.f32 %v2176, %v2171
    %v2178 = vand.u32 2147483647, %v2171
    %vm2179 = vcmp.lt.f32.partialorder %v2178, 0.0004427343
    %v2180 = vsel %vm2179, %v2177, %v2174
    %v2181 = vsel %vm2168, %v2163, %v2180
    %s2182 = scalar_lea.vmem %s3, 8
    %v2183 = vld [vmem:[%s2182] sm:$0xff]
    %2185 = vrot.lane.b32.xlu0 %v2183, 4
    %v2186 = vpop.permute.xlu0 %2185
    %v2188 = vmul.f32 %v2181, %v2186
    %2190 = vrot.lane.b32.xlu0 %v2188, 124
    %v2191 = vpop.permute.xlu0 %2190
    %v2193 = vadd.f32 %v2163, %v2191
    %s2194 = scalar_lea.vmem %s19, 8
    %2195 = vst.msk [vmem:[%s2194] sm:$0xff] %vm1239, %v2193
    %2197 = vset.pattern.permute.xlu0 0
    %2198 = vperm.xlu0 %2197, %v2193
    %v2199 = vpop.permute.xlu0 %2198
    %v2201 = vmul.f32 %v2199, %v206
    %v2202 = vadd.f32 %v147, %v2201
    %2203 = vset.pattern.permute.xlu0 1
    %2204 = vperm.xlu0 %2203, %v2193
    %v2205 = vpop.permute.xlu0 %2204
    %v2207 = vmul.f32 %v2205, %v216
    %v2208 = vadd.f32 %v2202, %v2207
    %2209 = vset.pattern.permute.xlu0 2
    %2210 = vperm.xlu0 %2209, %v2193
    %v2211 = vpop.permute.xlu0 %2210
    %v2213 = vmul.f32 %v2211, %v226
    %v2214 = vadd.f32 %v2208, %v2213
    %2215 = vset.pattern.permute.xlu0 3
    %2216 = vperm.xlu0 %2215, %v2193
    %v2217 = vpop.permute.xlu0 %2216
    %v2219 = vmul.f32 %v2217, %v236
    %v2220 = vadd.f32 %v2214, %v2219
    %v2221 = vxor.u32 %v2220, 2147483648
    %v2222 = vmul.f32 %v2221, 1.442695
    %v2223 = vpow.pop %v2222
    %v2224 = vadd.f32 %v2223, 1.0
    %v2225 = vrcp.pop %v2224
    %v2226 = vmul.f32 1.0, %v2225
    %v2227 = vrot.slane %v2226, 4
    %v2228 = vadd.f32 %v2226, %v2227
    %v2229 = vrot.slane %v2228, 2
    %v2230 = vadd.f32 %v2228, %v2229
    %v2231 = vrot.slane %v2230, 1
    %v2232 = vadd.f32 %v2230, %v2231
    %v2233 = vmul.f32 %v2232, %v251
    %v2234 = vmul.f32 %v2226, %v2226
    %v2235 = vrot.slane %v2234, 4
    %v2236 = vadd.f32 %v2234, %v2235
    %v2237 = vrot.slane %v2236, 2
    %v2238 = vadd.f32 %v2236, %v2237
    %v2239 = vrot.slane %v2238, 1
    %v2240 = vadd.f32 %v2238, %v2239
    %v2241 = vmul.f32 %v2240, %v251
    %v2242 = vmul.f32 %v2233, %v2233
    %v2243 = vsub.f32 %v2241, %v2242
    %v2244 = vmax.f32 %v2243, 0.0
    %v2245 = vadd.f32 %v2244, 1e-05
    %v2246 = vrsqrt.pop %v2245
    %v2247 = vmul.f32 %v138, %v2246
    %v2248 = vmul.f32 %v2233, %v2247
    %v2249 = vsub.f32 %v139, %v2248
    %v2251 = vlaneseq
    %v2252 = vshrl.u32 %v2251, 7
    %v2253 = vsub.s32 0, %v2252
    %v2254 = vrot.slane %v2247, %v2253
    %v2256 = vmul.f32 %v2226, %v2254
    %v2258 = vlaneseq
    %v2259 = vshrl.u32 %v2258, 7
    %v2260 = vsub.s32 0, %v2259
    %v2261 = vrot.slane %v2249, %v2260
    %v2263 = vadd.f32 %v2256, %v2261
    %v2264 = vpack.c.bf16 %v2263, %v2263
    %v2265 = vld [vmem:[%s8] sm:$0xf]
    %v2266 = vld [vmem:[%s8 + $0x4] sm:$0xf]
    %v2267 = vld [vmem:[%s8 + $0x8] sm:$0xf]
    %v2268 = vld [vmem:[%s8 + $0xc] sm:$0xf]
    %v2269 = vld [vmem:[%s8 + $0x10] sm:$0xf]
    %v2270 = vld [vmem:[%s8 + $0x14] sm:$0xf]
    %v2271 = vld [vmem:[%s8 + $0x18] sm:$0xf]
    %v2272 = vld [vmem:[%s8 + $0x1c] sm:$0xf]
    %v2273 = vld [vmem:[%s8 + $0x20] sm:$0xf]
    %v2274 = vld [vmem:[%s8 + $0x24] sm:$0xf]
    %v2275 = vld [vmem:[%s8 + $0x28] sm:$0xf]
    %v2276 = vld [vmem:[%s8 + $0x2c] sm:$0xf]
    %v2277 = vld [vmem:[%s8 + $0x30] sm:$0xf]
    %v2278 = vld [vmem:[%s8 + $0x34] sm:$0xf]
    %v2279 = vld [vmem:[%s8 + $0x38] sm:$0xf]
    %v2280 = vld [vmem:[%s8 + $0x3c] sm:$0xf]
    %v2297 = vunpack.c.l.b16 %v2265
    %v2298 = vunpack.c.l.b16 %v2266
    %v2299 = vunpack.c.l.b16 %v2267
    %v2300 = vunpack.c.l.b16 %v2268
    %v2301 = vunpack.c.l.b16 %v2269
    %v2302 = vunpack.c.l.b16 %v2270
    %v2303 = vunpack.c.l.b16 %v2271
    %v2304 = vunpack.c.l.b16 %v2272
    %v2305 = vunpack.c.l.b16 %v2273
    %v2306 = vunpack.c.l.b16 %v2274
    %v2307 = vunpack.c.l.b16 %v2275
    %v2308 = vunpack.c.l.b16 %v2276
    %v2309 = vunpack.c.l.b16 %v2277
    %v2310 = vunpack.c.l.b16 %v2278
    %v2311 = vunpack.c.l.b16 %v2279
    %v2312 = vunpack.c.l.b16 %v2280
    %v2313 = vpack.c.b16 %v2298, %v2297
    %v2314 = vpack.c.b16 %v2300, %v2299
    %v2315 = vpack.c.b16 %v2302, %v2301
    %v2316 = vpack.c.b16 %v2304, %v2303
    %v2317 = vpack.c.b16 %v2306, %v2305
    %v2318 = vpack.c.b16 %v2308, %v2307
    %v2319 = vpack.c.b16 %v2310, %v2309
    %v2320 = vpack.c.b16 %v2312, %v2311
    %2329 = vmatprep.subr.bf16.mxu0 0
    %2330 = vmatpush1.bf16.msra.mxu0 %v2320
    %2331 = vmatprep.subr.bf16.mxu0 0
    %2332 = vmatpush1.bf16.msra.mxu0 %v2319
    %2333 = vmatprep.subr.bf16.mxu0 0
    %2334 = vmatpush1.bf16.msra.mxu0 %v2318
    %2335 = vmatprep.subr.bf16.mxu0 0
    %2336 = vmatpush1.bf16.msra.mxu0 %v2317
    %2337 = vmatprep.subr.bf16.mxu0 0
    %2338 = vmatpush1.bf16.msra.mxu0 %v2316
    %2339 = vmatprep.subr.bf16.mxu0 0
    %2340 = vmatpush1.bf16.msra.mxu0 %v2315
    %2341 = vmatprep.subr.bf16.mxu0 0
    %2342 = vmatpush1.bf16.msra.mxu0 %v2314
    %2343 = vmatprep.subr.bf16.mxu0 0
    %2344 = vmatpush1.bf16.msra.mxu0 %v2313
    %2345 = vmatprep.subr.bf16.mxu0 0
    %2346 = vmatpush2.bf16.msra.mxu0 0
    %2347 = vmatprep.subr.bf16.mxu0 0
    %2348 = vmatpush2.bf16.msra.mxu0 0
    %2349 = vmatprep.subr.bf16.mxu0 0
    %2350 = vmatpush2.bf16.msra.mxu0 0
    %2351 = vmatprep.subr.bf16.mxu0 0
    %2352 = vmatpush2.bf16.msra.mxu0 0
    %2353 = vmatprep.subr.bf16.mxu0 0
    %2354 = vmatpush2.bf16.msra.mxu0 0
    %2355 = vmatprep.subr.bf16.mxu0 0
    %2356 = vmatpush2.bf16.msra.mxu0 0
    %2357 = vmatprep.subr.bf16.mxu0 0
    %2358 = vmatpush2.bf16.msra.mxu0 0
    %2359 = vmatprep.subr.bf16.mxu0 0
    %2360 = vmatpush2.bf16.msra.mxu0 0
    %2361 = vmatprep.mubr.bf16.mxu0 0
    %2362 = vmatmul.mubr.bf16.gmra.mxu0 %v2264
    %v2363 = vpop.f32.mrf.mxu0
    %v2364 = vadd.f32 %v154, %v2363
    %v2365 = vpop.f32.mrf.mxu0
    %v2366 = vpop.f32.mrf.mxu0
    %v2367 = vpop.f32.mrf.mxu0
    %2368 = vdwg.mxu0
    %s2369 = scalar_lea.vmem %s2, 16
    %v2370 = vld [vmem:[%s2369] sm:$0xff]
    %v2371 = vmax.f32 %v2370, -1.0
    %v2372 = vmin.f32 %v2371, 1.0
    %v2373 = vpack.c.bf16 %v2364, %v2364
    %v2374 = vld [vmem:[%s11] sm:$0xff]
    %v2375 = vld [vmem:[%s11 + $0x8] sm:$0xff]
    %v2376 = vld [vmem:[%s11 + $0x10] sm:$0xff]
    %v2377 = vld [vmem:[%s11 + $0x18] sm:$0xff]
    %v2378 = vld [vmem:[%s11 + $0x20] sm:$0xff]
    %v2379 = vld [vmem:[%s11 + $0x28] sm:$0xff]
    %v2380 = vld [vmem:[%s11 + $0x30] sm:$0xff]
    %v2381 = vld [vmem:[%s11 + $0x38] sm:$0xff]
    %v2382 = vld [vmem:[%s11 + $0x40] sm:$0xff]
    %v2383 = vld [vmem:[%s11 + $0x48] sm:$0xff]
    %v2384 = vld [vmem:[%s11 + $0x50] sm:$0xff]
    %v2385 = vld [vmem:[%s11 + $0x58] sm:$0xff]
    %v2386 = vld [vmem:[%s11 + $0x60] sm:$0xff]
    %v2387 = vld [vmem:[%s11 + $0x68] sm:$0xff]
    %v2388 = vld [vmem:[%s11 + $0x70] sm:$0xff]
    %v2389 = vld [vmem:[%s11 + $0x78] sm:$0xff]
    %v2390 = vld [vmem:[%s11 + $0x80] sm:$0xff]
    %v2391 = vld [vmem:[%s11 + $0x88] sm:$0xff]
    %v2392 = vld [vmem:[%s11 + $0x90] sm:$0xff]
    %v2393 = vld [vmem:[%s11 + $0x98] sm:$0xff]
    %v2394 = vld [vmem:[%s11 + $0xa0] sm:$0xff]
    %v2395 = vld [vmem:[%s11 + $0xa8] sm:$0xff]
    %v2396 = vld [vmem:[%s11 + $0xb0] sm:$0xff]
    %v2397 = vld [vmem:[%s11 + $0xb8] sm:$0xff]
    %v2398 = vld [vmem:[%s11 + $0xc0] sm:$0xff]
    %v2399 = vld [vmem:[%s11 + $0xc8] sm:$0xff]
    %v2400 = vld [vmem:[%s11 + $0xd0] sm:$0xff]
    %v2401 = vld [vmem:[%s11 + $0xd8] sm:$0xff]
    %v2402 = vld [vmem:[%s11 + $0xe0] sm:$0xff]
    %v2403 = vld [vmem:[%s11 + $0xe8] sm:$0xff]
    %v2404 = vld [vmem:[%s11 + $0xf0] sm:$0xff]
    %v2405 = vld [vmem:[%s11 + $0xf8] sm:$0xff]
    %v2438 = vunpack.c.l.b16 %v2374
    %v2439 = vunpack.c.h.b16 %v2374
    %v2440 = vunpack.c.l.b16 %v2375
    %v2441 = vunpack.c.h.b16 %v2375
    %v2442 = vunpack.c.l.b16 %v2376
    %v2443 = vunpack.c.h.b16 %v2376
    %v2444 = vunpack.c.l.b16 %v2377
    %v2445 = vunpack.c.h.b16 %v2377
    %v2446 = vunpack.c.l.b16 %v2378
    %v2447 = vunpack.c.h.b16 %v2378
    %v2448 = vunpack.c.l.b16 %v2379
    %v2449 = vunpack.c.h.b16 %v2379
    %v2450 = vunpack.c.l.b16 %v2380
    %v2451 = vunpack.c.h.b16 %v2380
    %v2452 = vunpack.c.l.b16 %v2381
    %v2453 = vunpack.c.h.b16 %v2381
    %v2454 = vunpack.c.l.b16 %v2382
    %v2455 = vunpack.c.h.b16 %v2382
    %v2456 = vunpack.c.l.b16 %v2383
    %v2457 = vunpack.c.h.b16 %v2383
    %v2458 = vunpack.c.l.b16 %v2384
    %v2459 = vunpack.c.h.b16 %v2384
    %v2460 = vunpack.c.l.b16 %v2385
    %v2461 = vunpack.c.h.b16 %v2385
    %v2462 = vunpack.c.l.b16 %v2386
    %v2463 = vunpack.c.h.b16 %v2386
    %v2464 = vunpack.c.l.b16 %v2387
    %v2465 = vunpack.c.h.b16 %v2387
    %v2466 = vunpack.c.l.b16 %v2388
    %v2467 = vunpack.c.h.b16 %v2388
    %v2468 = vunpack.c.l.b16 %v2389
    %v2469 = vunpack.c.h.b16 %v2389
    %v2470 = vunpack.c.l.b16 %v2390
    %v2471 = vunpack.c.h.b16 %v2390
    %v2472 = vunpack.c.l.b16 %v2391
    %v2473 = vunpack.c.h.b16 %v2391
    %v2474 = vunpack.c.l.b16 %v2392
    %v2475 = vunpack.c.h.b16 %v2392
    %v2476 = vunpack.c.l.b16 %v2393
    %v2477 = vunpack.c.h.b16 %v2393
    %v2478 = vunpack.c.l.b16 %v2394
    %v2479 = vunpack.c.h.b16 %v2394
    %v2480 = vunpack.c.l.b16 %v2395
    %v2481 = vunpack.c.h.b16 %v2395
    %v2482 = vunpack.c.l.b16 %v2396
    %v2483 = vunpack.c.h.b16 %v2396
    %v2484 = vunpack.c.l.b16 %v2397
    %v2485 = vunpack.c.h.b16 %v2397
    %v2486 = vunpack.c.l.b16 %v2398
    %v2487 = vunpack.c.h.b16 %v2398
    %v2488 = vunpack.c.l.b16 %v2399
    %v2489 = vunpack.c.h.b16 %v2399
    %v2490 = vunpack.c.l.b16 %v2400
    %v2491 = vunpack.c.h.b16 %v2400
    %v2492 = vunpack.c.l.b16 %v2401
    %v2493 = vunpack.c.h.b16 %v2401
    %v2494 = vunpack.c.l.b16 %v2402
    %v2495 = vunpack.c.h.b16 %v2402
    %v2496 = vunpack.c.l.b16 %v2403
    %v2497 = vunpack.c.h.b16 %v2403
    %v2498 = vunpack.c.l.b16 %v2404
    %v2499 = vunpack.c.h.b16 %v2404
    %v2500 = vunpack.c.l.b16 %v2405
    %v2501 = vunpack.c.h.b16 %v2405
    %v2502 = vpack.c.b16 %v2442, %v2438
    %v2503 = vpack.c.b16 %v2443, %v2439
    %v2504 = vpack.c.b16 %v2444, %v2440
    %v2505 = vpack.c.b16 %v2445, %v2441
    %v2506 = vpack.c.b16 %v2450, %v2446
    %v2507 = vpack.c.b16 %v2451, %v2447
    %v2508 = vpack.c.b16 %v2452, %v2448
    %v2509 = vpack.c.b16 %v2453, %v2449
    %v2510 = vpack.c.b16 %v2458, %v2454
    %v2511 = vpack.c.b16 %v2459, %v2455
    %v2512 = vpack.c.b16 %v2460, %v2456
    %v2513 = vpack.c.b16 %v2461, %v2457
    %v2514 = vpack.c.b16 %v2466, %v2462
    %v2515 = vpack.c.b16 %v2467, %v2463
    %v2516 = vpack.c.b16 %v2468, %v2464
    %v2517 = vpack.c.b16 %v2469, %v2465
    %v2518 = vpack.c.b16 %v2474, %v2470
    %v2519 = vpack.c.b16 %v2475, %v2471
    %v2520 = vpack.c.b16 %v2476, %v2472
    %v2521 = vpack.c.b16 %v2477, %v2473
    %v2522 = vpack.c.b16 %v2482, %v2478
    %v2523 = vpack.c.b16 %v2483, %v2479
    %v2524 = vpack.c.b16 %v2484, %v2480
    %v2525 = vpack.c.b16 %v2485, %v2481
    %v2526 = vpack.c.b16 %v2490, %v2486
    %v2527 = vpack.c.b16 %v2491, %v2487
    %v2528 = vpack.c.b16 %v2492, %v2488
    %v2529 = vpack.c.b16 %v2493, %v2489
    %v2530 = vpack.c.b16 %v2498, %v2494
    %v2531 = vpack.c.b16 %v2499, %v2495
    %v2532 = vpack.c.b16 %v2500, %v2496
    %v2533 = vpack.c.b16 %v2501, %v2497
    %2566 = vmatprep.subr.bf16.mxu0 %v2531
    %2567 = vmatpush1.bf16.msra.mxu0 %v2530
    %2568 = vmatprep.subr.bf16.mxu0 %v2527
    %2569 = vmatpush1.bf16.msra.mxu0 %v2526
    %2570 = vmatprep.subr.bf16.mxu0 %v2523
    %2571 = vmatpush1.bf16.msra.mxu0 %v2522
    %2572 = vmatprep.subr.bf16.mxu0 %v2519
    %2573 = vmatpush1.bf16.msra.mxu0 %v2518
    %2574 = vmatprep.subr.bf16.mxu0 %v2515
    %2575 = vmatpush1.bf16.msra.mxu0 %v2514
    %2576 = vmatprep.subr.bf16.mxu0 %v2511
    %2577 = vmatpush1.bf16.msra.mxu0 %v2510
    %2578 = vmatprep.subr.bf16.mxu0 %v2507
    %2579 = vmatpush1.bf16.msra.mxu0 %v2506
    %2580 = vmatprep.subr.bf16.mxu0 %v2503
    %2581 = vmatpush1.bf16.msra.mxu0 %v2502
    %2582 = vmatprep.subr.bf16.mxu0 0
    %2583 = vmatpush2.bf16.msra.mxu0 0
    %2584 = vmatprep.subr.bf16.mxu0 0
    %2585 = vmatpush2.bf16.msra.mxu0 0
    %2586 = vmatprep.subr.bf16.mxu0 0
    %2587 = vmatpush2.bf16.msra.mxu0 0
    %2588 = vmatprep.subr.bf16.mxu0 0
    %2589 = vmatpush2.bf16.msra.mxu0 0
    %2590 = vmatprep.subr.bf16.mxu0 0
    %2591 = vmatpush2.bf16.msra.mxu0 0
    %2592 = vmatprep.subr.bf16.mxu0 0
    %2593 = vmatpush2.bf16.msra.mxu0 0
    %2594 = vmatprep.subr.bf16.mxu0 0
    %2595 = vmatpush2.bf16.msra.mxu0 0
    %2596 = vmatprep.subr.bf16.mxu0 0
    %2597 = vmatpush2.bf16.msra.mxu0 0
    %2598 = vmatprep.mubr.bf16.mxu0 0
    %2599 = vmatmul.mubr.bf16.gmra.mxu0 %v2373
    %v2600 = vpop.f32.mrf.mxu0
    %v2601 = vadd.f32 %v161, %v2600
    %v2602 = vpop.f32.mrf.mxu0
    %v2603 = vadd.f32 %v165, %v2602
    %v2604 = vpop.f32.mrf.mxu0
    %v2605 = vpop.f32.mrf.mxu0
    %2606 = vdwg.mxu0
    %2607 = vmatprep.subr.bf16.mxu0 %v2533
    %2608 = vmatpush1.bf16.msra.mxu0 %v2532
    %2609 = vmatprep.subr.bf16.mxu0 %v2529
    %2610 = vmatpush1.bf16.msra.mxu0 %v2528
    %2611 = vmatprep.subr.bf16.mxu0 %v2525
    %2612 = vmatpush1.bf16.msra.mxu0 %v2524
    %2613 = vmatprep.subr.bf16.mxu0 %v2521
    %2614 = vmatpush1.bf16.msra.mxu0 %v2520
    %2615 = vmatprep.subr.bf16.mxu0 %v2517
    %2616 = vmatpush1.bf16.msra.mxu0 %v2516
    %2617 = vmatprep.subr.bf16.mxu0 %v2513
    %2618 = vmatpush1.bf16.msra.mxu0 %v2512
    %2619 = vmatprep.subr.bf16.mxu0 %v2509
    %2620 = vmatpush1.bf16.msra.mxu0 %v2508
    %2621 = vmatprep.subr.bf16.mxu0 %v2505
    %2622 = vmatpush1.bf16.msra.mxu0 %v2504
    %2623 = vmatprep.subr.bf16.mxu0 0
    %2624 = vmatpush2.bf16.msra.mxu0 0
    %2625 = vmatprep.subr.bf16.mxu0 0
    %2626 = vmatpush2.bf16.msra.mxu0 0
    %2627 = vmatprep.subr.bf16.mxu0 0
    %2628 = vmatpush2.bf16.msra.mxu0 0
    %2629 = vmatprep.subr.bf16.mxu0 0
    %2630 = vmatpush2.bf16.msra.mxu0 0
    %2631 = vmatprep.subr.bf16.mxu0 0
    %2632 = vmatpush2.bf16.msra.mxu0 0
    %2633 = vmatprep.subr.bf16.mxu0 0
    %2634 = vmatpush2.bf16.msra.mxu0 0
    %2635 = vmatprep.subr.bf16.mxu0 0
    %2636 = vmatpush2.bf16.msra.mxu0 0
    %2637 = vmatprep.subr.bf16.mxu0 0
    %2638 = vmatpush2.bf16.msra.mxu0 0
    %2639 = vmatprep.mubr.bf16.mxu0 0
    %2640 = vmatmul.mubr.bf16.gmra.mxu0 %v2373
    %v2641 = vpop.f32.mrf.mxu0
    %v2642 = vadd.f32 %v169, %v2641
    %v2643 = vpop.f32.mrf.mxu0
    %v2644 = vadd.f32 %v173, %v2643
    %v2645 = vpop.f32.mrf.mxu0
    %v2646 = vpop.f32.mrf.mxu0
    %2647 = vdwg.mxu0
    %2649 = vset.pattern.permute.xlu0 0
    %2650 = vperm.xlu0 %2649, %v2372
    %v2651 = vpop.permute.xlu0 %2650
    %v2653 = vmul.f32 %v2651, %v695
    %v2654 = vmul.f32 %v2651, %v699
    %v2655 = vmul.f32 %v2651, %v703
    %v2656 = vmul.f32 %v2651, %v707
    %v2657 = vadd.f32 %v2601, %v2653
    %v2658 = vadd.f32 %v2603, %v2654
    %v2659 = vadd.f32 %v2642, %v2655
    %v2660 = vadd.f32 %v2644, %v2656
    %2661 = vset.pattern.permute.xlu0 1
    %2662 = vperm.xlu0 %2661, %v2372
    %v2663 = vpop.permute.xlu0 %2662
    %v2665 = vmul.f32 %v2663, %v743
    %v2666 = vmul.f32 %v2663, %v747
    %v2667 = vmul.f32 %v2663, %v751
    %v2668 = vmul.f32 %v2663, %v755
    %v2669 = vadd.f32 %v2657, %v2665
    %v2670 = vadd.f32 %v2658, %v2666
    %v2671 = vadd.f32 %v2659, %v2667
    %v2672 = vadd.f32 %v2660, %v2668
    %v2673 = vxor.u32 %v2669, 2147483648
    %v2674 = vmul.f32 %v2673, 1.442695
    %v2675 = vpow.pop %v2674
    %v2676 = vadd.f32 %v2675, 1.0
    %v2677 = vrcp.pop %v2676
    %v2678 = vmul.f32 1.0, %v2677
    %v2679 = vxor.u32 %v2670, 2147483648
    %v2680 = vmul.f32 %v2679, 1.442695
    %v2681 = vpow.pop %v2680
    %v2682 = vadd.f32 %v2681, 1.0
    %v2683 = vrcp.pop %v2682
    %v2684 = vmul.f32 1.0, %v2683
    %v2685 = vtanh.pop %v2671
    %v2686 = vxor.u32 %v2672, 2147483648
    %v2687 = vmul.f32 %v2686, 1.442695
    %v2688 = vpow.pop %v2687
    %v2689 = vadd.f32 %v2688, 1.0
    %v2690 = vrcp.pop %v2689
    %v2691 = vmul.f32 1.0, %v2690
    %v2692 = vmul.f32 %v2684, %v135
    %v2693 = vmul.f32 %v2678, %v2685
    %v2694 = vadd.f32 %v2692, %v2693
    %v2695 = vtanh.pop %v2694
    %v2696 = vmul.f32 %v2691, %v2695
    %v2697 = vpack.c.bf16 %v2696, %v2696
    %v2698 = vld [vmem:[#allocation10] sm:$0xff]
    %v2699 = vld [vmem:[#allocation10 + $0x8] sm:$0xff]
    %v2700 = vld [vmem:[#allocation10 + $0x10] sm:$0xff]
    %v2701 = vld [vmem:[#allocation10 + $0x18] sm:$0xff]
    %v2702 = vld [vmem:[#allocation10 + $0x20] sm:$0xff]
    %v2703 = vld [vmem:[#allocation10 + $0x28] sm:$0xff]
    %v2704 = vld [vmem:[#allocation10 + $0x30] sm:$0xff]
    %v2705 = vld [vmem:[#allocation10 + $0x38] sm:$0xff]
    %v2706 = vld [vmem:[#allocation10 + $0x40] sm:$0xff]
    %v2707 = vld [vmem:[#allocation10 + $0x48] sm:$0xff]
    %v2708 = vld [vmem:[#allocation10 + $0x50] sm:$0xff]
    %v2709 = vld [vmem:[#allocation10 + $0x58] sm:$0xff]
    %v2710 = vld [vmem:[#allocation10 + $0x60] sm:$0xff]
    %v2711 = vld [vmem:[#allocation10 + $0x68] sm:$0xff]
    %v2712 = vld [vmem:[#allocation10 + $0x70] sm:$0xff]
    %v2713 = vld [vmem:[#allocation10 + $0x78] sm:$0xff]
    %v2730 = vunpack.c.l.b16 %v2698
    %v2731 = vunpack.c.h.b16 %v2698
    %v2732 = vunpack.c.l.b16 %v2699
    %v2733 = vunpack.c.h.b16 %v2699
    %v2734 = vunpack.c.l.b16 %v2700
    %v2735 = vunpack.c.h.b16 %v2700
    %v2736 = vunpack.c.l.b16 %v2701
    %v2737 = vunpack.c.h.b16 %v2701
    %v2738 = vunpack.c.l.b16 %v2702
    %v2739 = vunpack.c.h.b16 %v2702
    %v2740 = vunpack.c.l.b16 %v2703
    %v2741 = vunpack.c.h.b16 %v2703
    %v2742 = vunpack.c.l.b16 %v2704
    %v2743 = vunpack.c.h.b16 %v2704
    %v2744 = vunpack.c.l.b16 %v2705
    %v2745 = vunpack.c.h.b16 %v2705
    %v2746 = vunpack.c.l.b16 %v2706
    %v2747 = vunpack.c.h.b16 %v2706
    %v2748 = vunpack.c.l.b16 %v2707
    %v2749 = vunpack.c.h.b16 %v2707
    %v2750 = vunpack.c.l.b16 %v2708
    %v2751 = vunpack.c.h.b16 %v2708
    %v2752 = vunpack.c.l.b16 %v2709
    %v2753 = vunpack.c.h.b16 %v2709
    %v2754 = vunpack.c.l.b16 %v2710
    %v2755 = vunpack.c.h.b16 %v2710
    %v2756 = vunpack.c.l.b16 %v2711
    %v2757 = vunpack.c.h.b16 %v2711
    %v2758 = vunpack.c.l.b16 %v2712
    %v2759 = vunpack.c.h.b16 %v2712
    %v2760 = vunpack.c.l.b16 %v2713
    %v2761 = vunpack.c.h.b16 %v2713
    %v2762 = vpack.c.b16 %v2732, %v2730
    %v2763 = vpack.c.b16 %v2733, %v2731
    %v2764 = vpack.c.b16 %v2736, %v2734
    %v2765 = vpack.c.b16 %v2737, %v2735
    %v2766 = vpack.c.b16 %v2740, %v2738
    %v2767 = vpack.c.b16 %v2741, %v2739
    %v2768 = vpack.c.b16 %v2744, %v2742
    %v2769 = vpack.c.b16 %v2745, %v2743
    %v2770 = vpack.c.b16 %v2748, %v2746
    %v2771 = vpack.c.b16 %v2749, %v2747
    %v2772 = vpack.c.b16 %v2752, %v2750
    %v2773 = vpack.c.b16 %v2753, %v2751
    %v2774 = vpack.c.b16 %v2756, %v2754
    %v2775 = vpack.c.b16 %v2757, %v2755
    %v2776 = vpack.c.b16 %v2760, %v2758
    %v2777 = vpack.c.b16 %v2761, %v2759
    %2794 = vmatprep.subr.bf16.mxu0 %v2777
    %2795 = vmatpush1.bf16.msra.mxu0 %v2776
    %2796 = vmatprep.subr.bf16.mxu0 %v2775
    %2797 = vmatpush1.bf16.msra.mxu0 %v2774
    %2798 = vmatprep.subr.bf16.mxu0 %v2773
    %2799 = vmatpush1.bf16.msra.mxu0 %v2772
    %2800 = vmatprep.subr.bf16.mxu0 %v2771
    %2801 = vmatpush1.bf16.msra.mxu0 %v2770
    %2802 = vmatprep.subr.bf16.mxu0 %v2769
    %2803 = vmatpush1.bf16.msra.mxu0 %v2768
    %2804 = vmatprep.subr.bf16.mxu0 %v2767
    %2805 = vmatpush1.bf16.msra.mxu0 %v2766
    %2806 = vmatprep.subr.bf16.mxu0 %v2765
    %2807 = vmatpush1.bf16.msra.mxu0 %v2764
    %2808 = vmatprep.subr.bf16.mxu0 %v2763
    %2809 = vmatpush1.bf16.msra.mxu0 %v2762
    %2810 = vmatprep.subr.bf16.mxu0 0
    %2811 = vmatpush2.bf16.msra.mxu0 0
    %2812 = vmatprep.subr.bf16.mxu0 0
    %2813 = vmatpush2.bf16.msra.mxu0 0
    %2814 = vmatprep.subr.bf16.mxu0 0
    %2815 = vmatpush2.bf16.msra.mxu0 0
    %2816 = vmatprep.subr.bf16.mxu0 0
    %2817 = vmatpush2.bf16.msra.mxu0 0
    %2818 = vmatprep.subr.bf16.mxu0 0
    %2819 = vmatpush2.bf16.msra.mxu0 0
    %2820 = vmatprep.subr.bf16.mxu0 0
    %2821 = vmatpush2.bf16.msra.mxu0 0
    %2822 = vmatprep.subr.bf16.mxu0 0
    %2823 = vmatpush2.bf16.msra.mxu0 0
    %2824 = vmatprep.subr.bf16.mxu0 0
    %2825 = vmatpush2.bf16.msra.mxu0 0
    %2826 = vmatprep.mubr.bf16.mxu0 0
    %2827 = vmatmul.mubr.bf16.gmra.mxu0 %v2697
    %v2828 = vpop.f32.mrf.mxu0
    %v2829 = vadd.f32 %v183, %v2828
    %v2830 = vpop.f32.mrf.mxu0
    %v2831 = vadd.f32 %v187, %v2830
    %v2832 = vpop.f32.mrf.mxu0
    %v2833 = vpop.f32.mrf.mxu0
    %2834 = vdwg.mxu0
    %v2835 = vxor.u32 %v2829, 2147483648
    %v2836 = vxor.u32 %v2831, 2147483648
    %v2837 = vmul.f32 %v2835, 1.442695
    %v2838 = vpow.pop %v2837
    %v2839 = vmul.f32 %v2836, 1.442695
    %v2840 = vpow.pop %v2839
    %v2841 = vadd.f32 %v2838, 1.0
    %v2842 = vadd.f32 %v2840, 1.0
    %v2843 = vrcp.pop %v2841
    %v2844 = vmul.f32 1.0, %v2843
    %v2845 = vrcp.pop %v2842
    %v2846 = vmul.f32 1.0, %v2845
    %v2847 = vrot.slane %v2844, 4
    %v2848 = vadd.f32 %v2844, %v2847
    %v2849 = vrot.slane %v2848, 2
    %v2850 = vadd.f32 %v2848, %v2849
    %v2851 = vrot.slane %v2850, 1
    %v2852 = vadd.f32 %v2850, %v2851
    %v2853 = vrot.slane %v2846, 4
    %v2854 = vadd.f32 %v2846, %v2853
    %v2855 = vrot.slane %v2854, 2
    %v2856 = vadd.f32 %v2854, %v2855
    %v2857 = vrot.slane %v2856, 1
    %v2858 = vadd.f32 %v2856, %v2857
    %v2859 = vmul.f32 %v2852, %v251
    %v2860 = vmul.f32 %v2858, %v251
    %v2861 = vmul.f32 %v2844, %v2844
    %v2862 = vmul.f32 %v2846, %v2846
    %v2863 = vrot.slane %v2861, 4
    %v2864 = vadd.f32 %v2861, %v2863
    %v2865 = vrot.slane %v2864, 2
    %v2866 = vadd.f32 %v2864, %v2865
    %v2867 = vrot.slane %v2866, 1
    %v2868 = vadd.f32 %v2866, %v2867
    %v2869 = vrot.slane %v2862, 4
    %v2870 = vadd.f32 %v2862, %v2869
    %v2871 = vrot.slane %v2870, 2
    %v2872 = vadd.f32 %v2870, %v2871
    %v2873 = vrot.slane %v2872, 1
    %v2874 = vadd.f32 %v2872, %v2873
    %v2875 = vmul.f32 %v2868, %v251
    %v2876 = vmul.f32 %v2874, %v251
    %v2877 = vmul.f32 %v2859, %v2859
    %v2878 = vmul.f32 %v2860, %v2860
    %v2879 = vsub.f32 %v2875, %v2877
    %v2880 = vsub.f32 %v2876, %v2878
    %v2881 = vmax.f32 %v2879, 0.0
    %v2882 = vmax.f32 %v2880, 0.0
    %v2883 = vadd.f32 %v2881, 1e-05
    %v2884 = vadd.f32 %v2882, 1e-05
    %v2885 = vrsqrt.pop %v2883
    %v2886 = vrsqrt.pop %v2884
    %v2889 = vcombine.low %v2885, %v2886
    %v2891 = vunpack.c.l.s4 1966171168
    %v2892 = vunpack.c.0.s8 %v2891
    %v2893 = vlaneseq
    %v2894 = vshrl.u32 %v2893, 7
    %v2895 = vsub.s32 %v2892, %v2894
    %v2896 = vrot.slane %v2889, %v2895
    %v2898 = vunpack.c.l.s4 1966171168
    %v2899 = vunpack.c.0.s8 %v2898
    %v2900 = vlaneseq
    %v2901 = vshrl.u32 %v2900, 7
    %v2902 = vsub.s32 %v2899, %v2901
    %v2903 = vrot.slane %v2896, %v2902
    %v2905 = vmul.f32 %v140, %v2903
    %v2907 = vlaneseq
    %v2908 = vshrl.u32 %v2907, 7
    %v2909 = vsub.s32 0, %v2908
    %v2910 = vrot.slane %v2905, %v2909
    %v2911 = vlaneseq
    %v2912 = vshrl.u32 %v2911, 7
    %v2913 = vsub.s32 1, %v2912
    %v2914 = vrot.slane %v2905, %v2913
    %v2917 = vmul.f32 %v2859, %v2910
    %v2918 = vmul.f32 %v2860, %v2914
    %v2921 = vcombine.low %v2917, %v2918
    %v2923 = vunpack.c.l.s4 1966171168
    %v2924 = vunpack.c.0.s8 %v2923
    %v2925 = vlaneseq
    %v2926 = vshrl.u32 %v2925, 7
    %v2927 = vsub.s32 %v2924, %v2926
    %v2928 = vrot.slane %v2921, %v2927
    %v2930 = vunpack.c.l.s4 1966171168
    %v2931 = vunpack.c.0.s8 %v2930
    %v2932 = vlaneseq
    %v2933 = vshrl.u32 %v2932, 7
    %v2934 = vsub.s32 %v2931, %v2933
    %v2935 = vrot.slane %v2928, %v2934
    %v2937 = vsub.f32 %v141, %v2935
    %v2938 = vmul.f32 %v2844, %v2910
    %v2939 = vmul.f32 %v2846, %v2914
    %v2941 = vlaneseq
    %v2942 = vshrl.u32 %v2941, 7
    %v2943 = vsub.s32 0, %v2942
    %v2944 = vrot.slane %v2937, %v2943
    %v2945 = vlaneseq
    %v2946 = vshrl.u32 %v2945, 7
    %v2947 = vsub.s32 1, %v2946
    %v2948 = vrot.slane %v2937, %v2947
    %v2951 = vadd.f32 %v2938, %v2944
    %v2952 = vadd.f32 %v2939, %v2948
    %v2953 = vpack.c.bf16 %v2951, %v2951
    %v2954 = vpack.c.bf16 %v2952, %v2952
    %v2955 = vld [vmem:[%s17] sm:$0xf]
    %v2956 = vld [vmem:[%s17 + $0x4] sm:$0xf]
    %v2957 = vld [vmem:[%s17 + $0x8] sm:$0xf]
    %v2958 = vld [vmem:[%s17 + $0xc] sm:$0xf]
    %v2959 = vld [vmem:[%s17 + $0x10] sm:$0xf]
    %v2960 = vld [vmem:[%s17 + $0x14] sm:$0xf]
    %v2961 = vld [vmem:[%s17 + $0x18] sm:$0xf]
    %v2962 = vld [vmem:[%s17 + $0x1c] sm:$0xf]
    %v2963 = vld [vmem:[%s17 + $0x20] sm:$0xf]
    %v2964 = vld [vmem:[%s17 + $0x24] sm:$0xf]
    %v2965 = vld [vmem:[%s17 + $0x28] sm:$0xf]
    %v2966 = vld [vmem:[%s17 + $0x2c] sm:$0xf]
    %v2967 = vld [vmem:[%s17 + $0x30] sm:$0xf]
    %v2968 = vld [vmem:[%s17 + $0x34] sm:$0xf]
    %v2969 = vld [vmem:[%s17 + $0x38] sm:$0xf]
    %v2970 = vld [vmem:[%s17 + $0x3c] sm:$0xf]
    %v2971 = vld [vmem:[%s17 + $0x40] sm:$0xf]
    %v2972 = vld [vmem:[%s17 + $0x44] sm:$0xf]
    %v2973 = vld [vmem:[%s17 + $0x48] sm:$0xf]
    %v2974 = vld [vmem:[%s17 + $0x4c] sm:$0xf]
    %v2975 = vld [vmem:[%s17 + $0x50] sm:$0xf]
    %v2976 = vld [vmem:[%s17 + $0x54] sm:$0xf]
    %v2977 = vld [vmem:[%s17 + $0x58] sm:$0xf]
    %v2978 = vld [vmem:[%s17 + $0x5c] sm:$0xf]
    %v2979 = vld [vmem:[%s17 + $0x60] sm:$0xf]
    %v2980 = vld [vmem:[%s17 + $0x64] sm:$0xf]
    %v2981 = vld [vmem:[%s17 + $0x68] sm:$0xf]
    %v2982 = vld [vmem:[%s17 + $0x6c] sm:$0xf]
    %v2983 = vld [vmem:[%s17 + $0x70] sm:$0xf]
    %v2984 = vld [vmem:[%s17 + $0x74] sm:$0xf]
    %v2985 = vld [vmem:[%s17 + $0x78] sm:$0xf]
    %v2986 = vld [vmem:[%s17 + $0x7c] sm:$0xf]
    %v3019 = vunpack.c.l.b16 %v2955
    %v3020 = vunpack.c.l.b16 %v2956
    %v3021 = vunpack.c.l.b16 %v2957
    %v3022 = vunpack.c.l.b16 %v2958
    %v3023 = vunpack.c.l.b16 %v2959
    %v3024 = vunpack.c.l.b16 %v2960
    %v3025 = vunpack.c.l.b16 %v2961
    %v3026 = vunpack.c.l.b16 %v2962
    %v3027 = vunpack.c.l.b16 %v2963
    %v3028 = vunpack.c.l.b16 %v2964
    %v3029 = vunpack.c.l.b16 %v2965
    %v3030 = vunpack.c.l.b16 %v2966
    %v3031 = vunpack.c.l.b16 %v2967
    %v3032 = vunpack.c.l.b16 %v2968
    %v3033 = vunpack.c.l.b16 %v2969
    %v3034 = vunpack.c.l.b16 %v2970
    %v3035 = vunpack.c.l.b16 %v2971
    %v3036 = vunpack.c.l.b16 %v2972
    %v3037 = vunpack.c.l.b16 %v2973
    %v3038 = vunpack.c.l.b16 %v2974
    %v3039 = vunpack.c.l.b16 %v2975
    %v3040 = vunpack.c.l.b16 %v2976
    %v3041 = vunpack.c.l.b16 %v2977
    %v3042 = vunpack.c.l.b16 %v2978
    %v3043 = vunpack.c.l.b16 %v2979
    %v3044 = vunpack.c.l.b16 %v2980
    %v3045 = vunpack.c.l.b16 %v2981
    %v3046 = vunpack.c.l.b16 %v2982
    %v3047 = vunpack.c.l.b16 %v2983
    %v3048 = vunpack.c.l.b16 %v2984
    %v3049 = vunpack.c.l.b16 %v2985
    %v3050 = vunpack.c.l.b16 %v2986
    %v3051 = vpack.c.b16 %v3020, %v3019
    %v3052 = vpack.c.b16 %v3022, %v3021
    %v3053 = vpack.c.b16 %v3024, %v3023
    %v3054 = vpack.c.b16 %v3026, %v3025
    %v3055 = vpack.c.b16 %v3028, %v3027
    %v3056 = vpack.c.b16 %v3030, %v3029
    %v3057 = vpack.c.b16 %v3032, %v3031
    %v3058 = vpack.c.b16 %v3034, %v3033
    %v3059 = vpack.c.b16 %v3036, %v3035
    %v3060 = vpack.c.b16 %v3038, %v3037
    %v3061 = vpack.c.b16 %v3040, %v3039
    %v3062 = vpack.c.b16 %v3042, %v3041
    %v3063 = vpack.c.b16 %v3044, %v3043
    %v3064 = vpack.c.b16 %v3046, %v3045
    %v3065 = vpack.c.b16 %v3048, %v3047
    %v3066 = vpack.c.b16 %v3050, %v3049
    %3083 = vmatprep.subr.bf16.mxu0 0
    %3084 = vmatpush1.bf16.msra.mxu0 %v3058
    %3085 = vmatprep.subr.bf16.mxu0 0
    %3086 = vmatpush1.bf16.msra.mxu0 %v3057
    %3087 = vmatprep.subr.bf16.mxu0 0
    %3088 = vmatpush1.bf16.msra.mxu0 %v3056
    %3089 = vmatprep.subr.bf16.mxu0 0
    %3090 = vmatpush1.bf16.msra.mxu0 %v3055
    %3091 = vmatprep.subr.bf16.mxu0 0
    %3092 = vmatpush1.bf16.msra.mxu0 %v3054
    %3093 = vmatprep.subr.bf16.mxu0 0
    %3094 = vmatpush1.bf16.msra.mxu0 %v3053
    %3095 = vmatprep.subr.bf16.mxu0 0
    %3096 = vmatpush1.bf16.msra.mxu0 %v3052
    %3097 = vmatprep.subr.bf16.mxu0 0
    %3098 = vmatpush1.bf16.msra.mxu0 %v3051
    %3099 = vmatprep.subr.bf16.mxu0 0
    %3100 = vmatpush2.bf16.msra.mxu0 %v3066
    %3101 = vmatprep.subr.bf16.mxu0 0
    %3102 = vmatpush2.bf16.msra.mxu0 %v3065
    %3103 = vmatprep.subr.bf16.mxu0 0
    %3104 = vmatpush2.bf16.msra.mxu0 %v3064
    %3105 = vmatprep.subr.bf16.mxu0 0
    %3106 = vmatpush2.bf16.msra.mxu0 %v3063
    %3107 = vmatprep.subr.bf16.mxu0 0
    %3108 = vmatpush2.bf16.msra.mxu0 %v3062
    %3109 = vmatprep.subr.bf16.mxu0 0
    %3110 = vmatpush2.bf16.msra.mxu0 %v3061
    %3111 = vmatprep.subr.bf16.mxu0 0
    %3112 = vmatpush2.bf16.msra.mxu0 %v3060
    %3113 = vmatprep.subr.bf16.mxu0 0
    %3114 = vmatpush2.bf16.msra.mxu0 %v3059
    %3115 = vmatprep.mubr.bf16.mxu0 %v2954
    %3116 = vmatmul.mubr.bf16.gmra.mxu0 %v2953
    %v3117 = vpop.f32.mrf.mxu0
    %v3118 = vadd.f32 %v195, %v3117
    %v3119 = vpop.f32.mrf.mxu0
    %v3120 = vpop.f32.mrf.mxu0
    %v3121 = vpop.f32.mrf.mxu0
    %3122 = vdwg.mxu0
    %vm3123 = vcmp.gt.f32.partialorder %v3118, 20.0
    %v3124 = vmin.f32 %v3118, 20.0
    %v3125 = vmul.f32 %v3124, 1.442695
    %v3126 = vpow.pop %v3125
    %v3127 = vadd.f32 %v3126, 1.0
    %v3128 = vlog2.pop %v3127
    %v3129 = vmul.f32 %v3128, 0.6931472
    %v3130 = vmul.f32 -0.5, %v3126
    %v3131 = vadd.f32 %v3130, 1.0
    %v3132 = vmul.f32 %v3131, %v3126
    %v3133 = vand.u32 2147483647, %v3126
    %vm3134 = vcmp.lt.f32.partialorder %v3133, 0.0004427343
    %v3135 = vsel %vm3134, %v3132, %v3129
    %v3136 = vsel %vm3123, %v3118, %v3135
    %s3137 = scalar_lea.vmem %s3, 16
    %v3138 = vld [vmem:[%s3137] sm:$0xff]
    %3140 = vrot.lane.b32.xlu0 %v3138, 4
    %v3141 = vpop.permute.xlu0 %3140
    %v3143 = vmul.f32 %v3136, %v3141
    %3145 = vrot.lane.b32.xlu0 %v3143, 124
    %v3146 = vpop.permute.xlu0 %3145
    %v3148 = vadd.f32 %v3118, %v3146
    %s3149 = scalar_lea.vmem %s19, 16
    %3150 = vst.msk [vmem:[%s3149] sm:$0xff] %vm1239, %v3148
    %3152 = vset.pattern.permute.xlu0 0
    %3153 = vperm.xlu0 %3152, %v3148
    %v3154 = vpop.permute.xlu0 %3153
    %v3156 = vmul.f32 %v3154, %v206
    %v3157 = vadd.f32 %v147, %v3156
    %3158 = vset.pattern.permute.xlu0 1
    %3159 = vperm.xlu0 %3158, %v3148
    %v3160 = vpop.permute.xlu0 %3159
    %v3162 = vmul.f32 %v3160, %v216
    %v3163 = vadd.f32 %v3157, %v3162
    %3164 = vset.pattern.permute.xlu0 2
    %3165 = vperm.xlu0 %3164, %v3148
    %v3166 = vpop.permute.xlu0 %3165
    %v3168 = vmul.f32 %v3166, %v226
    %v3169 = vadd.f32 %v3163, %v3168
    %3170 = vset.pattern.permute.xlu0 3
    %3171 = vperm.xlu0 %3170, %v3148
    %v3172 = vpop.permute.xlu0 %3171
    %v3174 = vmul.f32 %v3172, %v236
    %v3175 = vadd.f32 %v3169, %v3174
    %v3176 = vxor.u32 %v3175, 2147483648
    %v3177 = vmul.f32 %v3176, 1.442695
    %v3178 = vpow.pop %v3177
    %v3179 = vadd.f32 %v3178, 1.0
    %v3180 = vrcp.pop %v3179
    %v3181 = vmul.f32 1.0, %v3180
    %v3182 = vrot.slane %v3181, 4
    %v3183 = vadd.f32 %v3181, %v3182
    %v3184 = vrot.slane %v3183, 2
    %v3185 = vadd.f32 %v3183, %v3184
    %v3186 = vrot.slane %v3185, 1
    %v3187 = vadd.f32 %v3185, %v3186
    %v3188 = vmul.f32 %v3187, %v251
    %v3189 = vmul.f32 %v3181, %v3181
    %v3190 = vrot.slane %v3189, 4
    %v3191 = vadd.f32 %v3189, %v3190
    %v3192 = vrot.slane %v3191, 2
    %v3193 = vadd.f32 %v3191, %v3192
    %v3194 = vrot.slane %v3193, 1
    %v3195 = vadd.f32 %v3193, %v3194
    %v3196 = vmul.f32 %v3195, %v251
    %v3197 = vmul.f32 %v3188, %v3188
    %v3198 = vsub.f32 %v3196, %v3197
    %v3199 = vmax.f32 %v3198, 0.0
    %v3200 = vadd.f32 %v3199, 1e-05
    %v3201 = vrsqrt.pop %v3200
    %v3202 = vmul.f32 %v138, %v3201
    %v3203 = vmul.f32 %v3188, %v3202
    %v3204 = vsub.f32 %v139, %v3203
    %v3206 = vlaneseq
    %v3207 = vshrl.u32 %v3206, 7
    %v3208 = vsub.s32 0, %v3207
    %v3209 = vrot.slane %v3202, %v3208
    %v3211 = vmul.f32 %v3181, %v3209
    %v3213 = vlaneseq
    %v3214 = vshrl.u32 %v3213, 7
    %v3215 = vsub.s32 0, %v3214
    %v3216 = vrot.slane %v3204, %v3215
    %v3218 = vadd.f32 %v3211, %v3216
    %v3219 = vpack.c.bf16 %v3218, %v3218
    %v3220 = vld [vmem:[%s8] sm:$0xf]
    %v3221 = vld [vmem:[%s8 + $0x4] sm:$0xf]
    %v3222 = vld [vmem:[%s8 + $0x8] sm:$0xf]
    %v3223 = vld [vmem:[%s8 + $0xc] sm:$0xf]
    %v3224 = vld [vmem:[%s8 + $0x10] sm:$0xf]
    %v3225 = vld [vmem:[%s8 + $0x14] sm:$0xf]
    %v3226 = vld [vmem:[%s8 + $0x18] sm:$0xf]
    %v3227 = vld [vmem:[%s8 + $0x1c] sm:$0xf]
    %v3228 = vld [vmem:[%s8 + $0x20] sm:$0xf]
    %v3229 = vld [vmem:[%s8 + $0x24] sm:$0xf]
    %v3230 = vld [vmem:[%s8 + $0x28] sm:$0xf]
    %v3231 = vld [vmem:[%s8 + $0x2c] sm:$0xf]
    %v3232 = vld [vmem:[%s8 + $0x30] sm:$0xf]
    %v3233 = vld [vmem:[%s8 + $0x34] sm:$0xf]
    %v3234 = vld [vmem:[%s8 + $0x38] sm:$0xf]
    %v3235 = vld [vmem:[%s8 + $0x3c] sm:$0xf]
    %v3252 = vunpack.c.l.b16 %v3220
    %v3253 = vunpack.c.l.b16 %v3221
    %v3254 = vunpack.c.l.b16 %v3222
    %v3255 = vunpack.c.l.b16 %v3223
    %v3256 = vunpack.c.l.b16 %v3224
    %v3257 = vunpack.c.l.b16 %v3225
    %v3258 = vunpack.c.l.b16 %v3226
    %v3259 = vunpack.c.l.b16 %v3227
    %v3260 = vunpack.c.l.b16 %v3228
    %v3261 = vunpack.c.l.b16 %v3229
    %v3262 = vunpack.c.l.b16 %v3230
    %v3263 = vunpack.c.l.b16 %v3231
    %v3264 = vunpack.c.l.b16 %v3232
    %v3265 = vunpack.c.l.b16 %v3233
    %v3266 = vunpack.c.l.b16 %v3234
    %v3267 = vunpack.c.l.b16 %v3235
    %v3268 = vpack.c.b16 %v3253, %v3252
    %v3269 = vpack.c.b16 %v3255, %v3254
    %v3270 = vpack.c.b16 %v3257, %v3256
    %v3271 = vpack.c.b16 %v3259, %v3258
    %v3272 = vpack.c.b16 %v3261, %v3260
    %v3273 = vpack.c.b16 %v3263, %v3262
    %v3274 = vpack.c.b16 %v3265, %v3264
    %v3275 = vpack.c.b16 %v3267, %v3266
    %3284 = vmatprep.subr.bf16.mxu0 0
    %3285 = vmatpush1.bf16.msra.mxu0 %v3275
    %3286 = vmatprep.subr.bf16.mxu0 0
    %3287 = vmatpush1.bf16.msra.mxu0 %v3274
    %3288 = vmatprep.subr.bf16.mxu0 0
    %3289 = vmatpush1.bf16.msra.mxu0 %v3273
    %3290 = vmatprep.subr.bf16.mxu0 0
    %3291 = vmatpush1.bf16.msra.mxu0 %v3272
    %3292 = vmatprep.subr.bf16.mxu0 0
    %3293 = vmatpush1.bf16.msra.mxu0 %v3271
    %3294 = vmatprep.subr.bf16.mxu0 0
    %3295 = vmatpush1.bf16.msra.mxu0 %v3270
    %3296 = vmatprep.subr.bf16.mxu0 0
    %3297 = vmatpush1.bf16.msra.mxu0 %v3269
    %3298 = vmatprep.subr.bf16.mxu0 0
    %3299 = vmatpush1.bf16.msra.mxu0 %v3268
    %3300 = vmatprep.subr.bf16.mxu0 0
    %3301 = vmatpush2.bf16.msra.mxu0 0
    %3302 = vmatprep.subr.bf16.mxu0 0
    %3303 = vmatpush2.bf16.msra.mxu0 0
    %3304 = vmatprep.subr.bf16.mxu0 0
    %3305 = vmatpush2.bf16.msra.mxu0 0
    %3306 = vmatprep.subr.bf16.mxu0 0
    %3307 = vmatpush2.bf16.msra.mxu0 0
    %3308 = vmatprep.subr.bf16.mxu0 0
    %3309 = vmatpush2.bf16.msra.mxu0 0
    %3310 = vmatprep.subr.bf16.mxu0 0
    %3311 = vmatpush2.bf16.msra.mxu0 0
    %3312 = vmatprep.subr.bf16.mxu0 0
    %3313 = vmatpush2.bf16.msra.mxu0 0
    %3314 = vmatprep.subr.bf16.mxu0 0
    %3315 = vmatpush2.bf16.msra.mxu0 0
    %3316 = vmatprep.mubr.bf16.mxu0 0
    %3317 = vmatmul.mubr.bf16.gmra.mxu0 %v3219
    %v3318 = vpop.f32.mrf.mxu0
    %v3319 = vadd.f32 %v154, %v3318
    %v3320 = vpop.f32.mrf.mxu0
    %v3321 = vpop.f32.mrf.mxu0
    %v3322 = vpop.f32.mrf.mxu0
    %3323 = vdwg.mxu0
    %s3324 = scalar_lea.vmem %s2, 24
    %v3325 = vld [vmem:[%s3324] sm:$0xff]
    %v3326 = vmax.f32 %v3325, -1.0
    %v3327 = vmin.f32 %v3326, 1.0
    %v3328 = vpack.c.bf16 %v3319, %v3319
    %v3329 = vld [vmem:[%s11] sm:$0xff]
    %v3330 = vld [vmem:[%s11 + $0x8] sm:$0xff]
    %v3331 = vld [vmem:[%s11 + $0x10] sm:$0xff]
    %v3332 = vld [vmem:[%s11 + $0x18] sm:$0xff]
    %v3333 = vld [vmem:[%s11 + $0x20] sm:$0xff]
    %v3334 = vld [vmem:[%s11 + $0x28] sm:$0xff]
    %v3335 = vld [vmem:[%s11 + $0x30] sm:$0xff]
    %v3336 = vld [vmem:[%s11 + $0x38] sm:$0xff]
    %v3337 = vld [vmem:[%s11 + $0x40] sm:$0xff]
    %v3338 = vld [vmem:[%s11 + $0x48] sm:$0xff]
    %v3339 = vld [vmem:[%s11 + $0x50] sm:$0xff]
    %v3340 = vld [vmem:[%s11 + $0x58] sm:$0xff]
    %v3341 = vld [vmem:[%s11 + $0x60] sm:$0xff]
    %v3342 = vld [vmem:[%s11 + $0x68] sm:$0xff]
    %v3343 = vld [vmem:[%s11 + $0x70] sm:$0xff]
    %v3344 = vld [vmem:[%s11 + $0x78] sm:$0xff]
    %v3345 = vld [vmem:[%s11 + $0x80] sm:$0xff]
    %v3346 = vld [vmem:[%s11 + $0x88] sm:$0xff]
    %v3347 = vld [vmem:[%s11 + $0x90] sm:$0xff]
    %v3348 = vld [vmem:[%s11 + $0x98] sm:$0xff]
    %v3349 = vld [vmem:[%s11 + $0xa0] sm:$0xff]
    %v3350 = vld [vmem:[%s11 + $0xa8] sm:$0xff]
    %v3351 = vld [vmem:[%s11 + $0xb0] sm:$0xff]
    %v3352 = vld [vmem:[%s11 + $0xb8] sm:$0xff]
    %v3353 = vld [vmem:[%s11 + $0xc0] sm:$0xff]
    %v3354 = vld [vmem:[%s11 + $0xc8] sm:$0xff]
    %v3355 = vld [vmem:[%s11 + $0xd0] sm:$0xff]
    %v3356 = vld [vmem:[%s11 + $0xd8] sm:$0xff]
    %v3357 = vld [vmem:[%s11 + $0xe0] sm:$0xff]
    %v3358 = vld [vmem:[%s11 + $0xe8] sm:$0xff]
    %v3359 = vld [vmem:[%s11 + $0xf0] sm:$0xff]
    %v3360 = vld [vmem:[%s11 + $0xf8] sm:$0xff]
    %v3393 = vunpack.c.l.b16 %v3329
    %v3394 = vunpack.c.h.b16 %v3329
    %v3395 = vunpack.c.l.b16 %v3330
    %v3396 = vunpack.c.h.b16 %v3330
    %v3397 = vunpack.c.l.b16 %v3331
    %v3398 = vunpack.c.h.b16 %v3331
    %v3399 = vunpack.c.l.b16 %v3332
    %v3400 = vunpack.c.h.b16 %v3332
    %v3401 = vunpack.c.l.b16 %v3333
    %v3402 = vunpack.c.h.b16 %v3333
    %v3403 = vunpack.c.l.b16 %v3334
    %v3404 = vunpack.c.h.b16 %v3334
    %v3405 = vunpack.c.l.b16 %v3335
    %v3406 = vunpack.c.h.b16 %v3335
    %v3407 = vunpack.c.l.b16 %v3336
    %v3408 = vunpack.c.h.b16 %v3336
    %v3409 = vunpack.c.l.b16 %v3337
    %v3410 = vunpack.c.h.b16 %v3337
    %v3411 = vunpack.c.l.b16 %v3338
    %v3412 = vunpack.c.h.b16 %v3338
    %v3413 = vunpack.c.l.b16 %v3339
    %v3414 = vunpack.c.h.b16 %v3339
    %v3415 = vunpack.c.l.b16 %v3340
    %v3416 = vunpack.c.h.b16 %v3340
    %v3417 = vunpack.c.l.b16 %v3341
    %v3418 = vunpack.c.h.b16 %v3341
    %v3419 = vunpack.c.l.b16 %v3342
    %v3420 = vunpack.c.h.b16 %v3342
    %v3421 = vunpack.c.l.b16 %v3343
    %v3422 = vunpack.c.h.b16 %v3343
    %v3423 = vunpack.c.l.b16 %v3344
    %v3424 = vunpack.c.h.b16 %v3344
    %v3425 = vunpack.c.l.b16 %v3345
    %v3426 = vunpack.c.h.b16 %v3345
    %v3427 = vunpack.c.l.b16 %v3346
    %v3428 = vunpack.c.h.b16 %v3346
    %v3429 = vunpack.c.l.b16 %v3347
    %v3430 = vunpack.c.h.b16 %v3347
    %v3431 = vunpack.c.l.b16 %v3348
    %v3432 = vunpack.c.h.b16 %v3348
    %v3433 = vunpack.c.l.b16 %v3349
    %v3434 = vunpack.c.h.b16 %v3349
    %v3435 = vunpack.c.l.b16 %v3350
    %v3436 = vunpack.c.h.b16 %v3350
    %v3437 = vunpack.c.l.b16 %v3351
    %v3438 = vunpack.c.h.b16 %v3351
    %v3439 = vunpack.c.l.b16 %v3352
    %v3440 = vunpack.c.h.b16 %v3352
    %v3441 = vunpack.c.l.b16 %v3353
    %v3442 = vunpack.c.h.b16 %v3353
    %v3443 = vunpack.c.l.b16 %v3354
    %v3444 = vunpack.c.h.b16 %v3354
    %v3445 = vunpack.c.l.b16 %v3355
    %v3446 = vunpack.c.h.b16 %v3355
    %v3447 = vunpack.c.l.b16 %v3356
    %v3448 = vunpack.c.h.b16 %v3356
    %v3449 = vunpack.c.l.b16 %v3357
    %v3450 = vunpack.c.h.b16 %v3357
    %v3451 = vunpack.c.l.b16 %v3358
    %v3452 = vunpack.c.h.b16 %v3358
    %v3453 = vunpack.c.l.b16 %v3359
    %v3454 = vunpack.c.h.b16 %v3359
    %v3455 = vunpack.c.l.b16 %v3360
    %v3456 = vunpack.c.h.b16 %v3360
    %v3457 = vpack.c.b16 %v3397, %v3393
    %v3458 = vpack.c.b16 %v3398, %v3394
    %v3459 = vpack.c.b16 %v3399, %v3395
    %v3460 = vpack.c.b16 %v3400, %v3396
    %v3461 = vpack.c.b16 %v3405, %v3401
    %v3462 = vpack.c.b16 %v3406, %v3402
    %v3463 = vpack.c.b16 %v3407, %v3403
    %v3464 = vpack.c.b16 %v3408, %v3404
    %v3465 = vpack.c.b16 %v3413, %v3409
    %v3466 = vpack.c.b16 %v3414, %v3410
    %v3467 = vpack.c.b16 %v3415, %v3411
    %v3468 = vpack.c.b16 %v3416, %v3412
    %v3469 = vpack.c.b16 %v3421, %v3417
    %v3470 = vpack.c.b16 %v3422, %v3418
    %v3471 = vpack.c.b16 %v3423, %v3419
    %v3472 = vpack.c.b16 %v3424, %v3420
    %v3473 = vpack.c.b16 %v3429, %v3425
    %v3474 = vpack.c.b16 %v3430, %v3426
    %v3475 = vpack.c.b16 %v3431, %v3427
    %v3476 = vpack.c.b16 %v3432, %v3428
    %v3477 = vpack.c.b16 %v3437, %v3433
    %v3478 = vpack.c.b16 %v3438, %v3434
    %v3479 = vpack.c.b16 %v3439, %v3435
    %v3480 = vpack.c.b16 %v3440, %v3436
    %v3481 = vpack.c.b16 %v3445, %v3441
    %v3482 = vpack.c.b16 %v3446, %v3442
    %v3483 = vpack.c.b16 %v3447, %v3443
    %v3484 = vpack.c.b16 %v3448, %v3444
    %v3485 = vpack.c.b16 %v3453, %v3449
    %v3486 = vpack.c.b16 %v3454, %v3450
    %v3487 = vpack.c.b16 %v3455, %v3451
    %v3488 = vpack.c.b16 %v3456, %v3452
    %3521 = vmatprep.subr.bf16.mxu0 %v3486
    %3522 = vmatpush1.bf16.msra.mxu0 %v3485
    %3523 = vmatprep.subr.bf16.mxu0 %v3482
    %3524 = vmatpush1.bf16.msra.mxu0 %v3481
    %3525 = vmatprep.subr.bf16.mxu0 %v3478
    %3526 = vmatpush1.bf16.msra.mxu0 %v3477
    %3527 = vmatprep.subr.bf16.mxu0 %v3474
    %3528 = vmatpush1.bf16.msra.mxu0 %v3473
    %3529 = vmatprep.subr.bf16.mxu0 %v3470
    %3530 = vmatpush1.bf16.msra.mxu0 %v3469
    %3531 = vmatprep.subr.bf16.mxu0 %v3466
    %3532 = vmatpush1.bf16.msra.mxu0 %v3465
    %3533 = vmatprep.subr.bf16.mxu0 %v3462
    %3534 = vmatpush1.bf16.msra.mxu0 %v3461
    %3535 = vmatprep.subr.bf16.mxu0 %v3458
    %3536 = vmatpush1.bf16.msra.mxu0 %v3457
    %3537 = vmatprep.subr.bf16.mxu0 0
    %3538 = vmatpush2.bf16.msra.mxu0 0
    %3539 = vmatprep.subr.bf16.mxu0 0
    %3540 = vmatpush2.bf16.msra.mxu0 0
    %3541 = vmatprep.subr.bf16.mxu0 0
    %3542 = vmatpush2.bf16.msra.mxu0 0
    %3543 = vmatprep.subr.bf16.mxu0 0
    %3544 = vmatpush2.bf16.msra.mxu0 0
    %3545 = vmatprep.subr.bf16.mxu0 0
    %3546 = vmatpush2.bf16.msra.mxu0 0
    %3547 = vmatprep.subr.bf16.mxu0 0
    %3548 = vmatpush2.bf16.msra.mxu0 0
    %3549 = vmatprep.subr.bf16.mxu0 0
    %3550 = vmatpush2.bf16.msra.mxu0 0
    %3551 = vmatprep.subr.bf16.mxu0 0
    %3552 = vmatpush2.bf16.msra.mxu0 0
    %3553 = vmatprep.mubr.bf16.mxu0 0
    %3554 = vmatmul.mubr.bf16.gmra.mxu0 %v3328
    %v3555 = vpop.f32.mrf.mxu0
    %v3556 = vadd.f32 %v161, %v3555
    %v3557 = vpop.f32.mrf.mxu0
    %v3558 = vadd.f32 %v165, %v3557
    %v3559 = vpop.f32.mrf.mxu0
    %v3560 = vpop.f32.mrf.mxu0
    %3561 = vdwg.mxu0
    %3562 = vmatprep.subr.bf16.mxu0 %v3488
    %3563 = vmatpush1.bf16.msra.mxu0 %v3487
    %3564 = vmatprep.subr.bf16.mxu0 %v3484
    %3565 = vmatpush1.bf16.msra.mxu0 %v3483
    %3566 = vmatprep.subr.bf16.mxu0 %v3480
    %3567 = vmatpush1.bf16.msra.mxu0 %v3479
    %3568 = vmatprep.subr.bf16.mxu0 %v3476
    %3569 = vmatpush1.bf16.msra.mxu0 %v3475
    %3570 = vmatprep.subr.bf16.mxu0 %v3472
    %3571 = vmatpush1.bf16.msra.mxu0 %v3471
    %3572 = vmatprep.subr.bf16.mxu0 %v3468
    %3573 = vmatpush1.bf16.msra.mxu0 %v3467
    %3574 = vmatprep.subr.bf16.mxu0 %v3464
    %3575 = vmatpush1.bf16.msra.mxu0 %v3463
    %3576 = vmatprep.subr.bf16.mxu0 %v3460
    %3577 = vmatpush1.bf16.msra.mxu0 %v3459
    %3578 = vmatprep.subr.bf16.mxu0 0
    %3579 = vmatpush2.bf16.msra.mxu0 0
    %3580 = vmatprep.subr.bf16.mxu0 0
    %3581 = vmatpush2.bf16.msra.mxu0 0
    %3582 = vmatprep.subr.bf16.mxu0 0
    %3583 = vmatpush2.bf16.msra.mxu0 0
    %3584 = vmatprep.subr.bf16.mxu0 0
    %3585 = vmatpush2.bf16.msra.mxu0 0
    %3586 = vmatprep.subr.bf16.mxu0 0
    %3587 = vmatpush2.bf16.msra.mxu0 0
    %3588 = vmatprep.subr.bf16.mxu0 0
    %3589 = vmatpush2.bf16.msra.mxu0 0
    %3590 = vmatprep.subr.bf16.mxu0 0
    %3591 = vmatpush2.bf16.msra.mxu0 0
    %3592 = vmatprep.subr.bf16.mxu0 0
    %3593 = vmatpush2.bf16.msra.mxu0 0
    %3594 = vmatprep.mubr.bf16.mxu0 0
    %3595 = vmatmul.mubr.bf16.gmra.mxu0 %v3328
    %v3596 = vpop.f32.mrf.mxu0
    %v3597 = vadd.f32 %v169, %v3596
    %v3598 = vpop.f32.mrf.mxu0
    %v3599 = vadd.f32 %v173, %v3598
    %v3600 = vpop.f32.mrf.mxu0
    %v3601 = vpop.f32.mrf.mxu0
    %3602 = vdwg.mxu0
    %3604 = vset.pattern.permute.xlu0 0
    %3605 = vperm.xlu0 %3604, %v3327
    %v3606 = vpop.permute.xlu0 %3605
    %v3608 = vmul.f32 %v3606, %v695
    %v3609 = vmul.f32 %v3606, %v699
    %v3610 = vmul.f32 %v3606, %v703
    %v3611 = vmul.f32 %v3606, %v707
    %v3612 = vadd.f32 %v3556, %v3608
    %v3613 = vadd.f32 %v3558, %v3609
    %v3614 = vadd.f32 %v3597, %v3610
    %v3615 = vadd.f32 %v3599, %v3611
    %3616 = vset.pattern.permute.xlu0 1
    %3617 = vperm.xlu0 %3616, %v3327
    %v3618 = vpop.permute.xlu0 %3617
    %v3620 = vmul.f32 %v3618, %v743
    %v3621 = vmul.f32 %v3618, %v747
    %v3622 = vmul.f32 %v3618, %v751
    %v3623 = vmul.f32 %v3618, %v755
    %v3624 = vadd.f32 %v3612, %v3620
    %v3625 = vadd.f32 %v3613, %v3621
    %v3626 = vadd.f32 %v3614, %v3622
    %v3627 = vadd.f32 %v3615, %v3623
    %v3628 = vxor.u32 %v3624, 2147483648
    %v3629 = vmul.f32 %v3628, 1.442695
    %v3630 = vpow.pop %v3629
    %v3631 = vadd.f32 %v3630, 1.0
    %v3632 = vrcp.pop %v3631
    %v3633 = vmul.f32 1.0, %v3632
    %v3634 = vxor.u32 %v3625, 2147483648
    %v3635 = vmul.f32 %v3634, 1.442695
    %v3636 = vpow.pop %v3635
    %v3637 = vadd.f32 %v3636, 1.0
    %v3638 = vrcp.pop %v3637
    %v3639 = vmul.f32 1.0, %v3638
    %v3640 = vtanh.pop %v3626
    %v3641 = vxor.u32 %v3627, 2147483648
    %v3642 = vmul.f32 %v3641, 1.442695
    %v3643 = vpow.pop %v3642
    %v3644 = vadd.f32 %v3643, 1.0
    %v3645 = vrcp.pop %v3644
    %v3646 = vmul.f32 1.0, %v3645
    %v3647 = vmul.f32 %v3639, %v135
    %v3648 = vmul.f32 %v3633, %v3640
    %v3649 = vadd.f32 %v3647, %v3648
    %v3650 = vtanh.pop %v3649
    %v3651 = vmul.f32 %v3646, %v3650
    %v3652 = vpack.c.bf16 %v3651, %v3651
    %v3653 = vld [vmem:[#allocation10] sm:$0xff]
    %v3654 = vld [vmem:[#allocation10 + $0x8] sm:$0xff]
    %v3655 = vld [vmem:[#allocation10 + $0x10] sm:$0xff]
    %v3656 = vld [vmem:[#allocation10 + $0x18] sm:$0xff]
    %v3657 = vld [vmem:[#allocation10 + $0x20] sm:$0xff]
    %v3658 = vld [vmem:[#allocation10 + $0x28] sm:$0xff]
    %v3659 = vld [vmem:[#allocation10 + $0x30] sm:$0xff]
    %v3660 = vld [vmem:[#allocation10 + $0x38] sm:$0xff]
    %v3661 = vld [vmem:[#allocation10 + $0x40] sm:$0xff]
    %v3662 = vld [vmem:[#allocation10 + $0x48] sm:$0xff]
    %v3663 = vld [vmem:[#allocation10 + $0x50] sm:$0xff]
    %v3664 = vld [vmem:[#allocation10 + $0x58] sm:$0xff]
    %v3665 = vld [vmem:[#allocation10 + $0x60] sm:$0xff]
    %v3666 = vld [vmem:[#allocation10 + $0x68] sm:$0xff]
    %v3667 = vld [vmem:[#allocation10 + $0x70] sm:$0xff]
    %v3668 = vld [vmem:[#allocation10 + $0x78] sm:$0xff]
    %v3685 = vunpack.c.l.b16 %v3653
    %v3686 = vunpack.c.h.b16 %v3653
    %v3687 = vunpack.c.l.b16 %v3654
    %v3688 = vunpack.c.h.b16 %v3654
    %v3689 = vunpack.c.l.b16 %v3655
    %v3690 = vunpack.c.h.b16 %v3655
    %v3691 = vunpack.c.l.b16 %v3656
    %v3692 = vunpack.c.h.b16 %v3656
    %v3693 = vunpack.c.l.b16 %v3657
    %v3694 = vunpack.c.h.b16 %v3657
    %v3695 = vunpack.c.l.b16 %v3658
    %v3696 = vunpack.c.h.b16 %v3658
    %v3697 = vunpack.c.l.b16 %v3659
    %v3698 = vunpack.c.h.b16 %v3659
    %v3699 = vunpack.c.l.b16 %v3660
    %v3700 = vunpack.c.h.b16 %v3660
    %v3701 = vunpack.c.l.b16 %v3661
    %v3702 = vunpack.c.h.b16 %v3661
    %v3703 = vunpack.c.l.b16 %v3662
    %v3704 = vunpack.c.h.b16 %v3662
    %v3705 = vunpack.c.l.b16 %v3663
    %v3706 = vunpack.c.h.b16 %v3663
    %v3707 = vunpack.c.l.b16 %v3664
    %v3708 = vunpack.c.h.b16 %v3664
    %v3709 = vunpack.c.l.b16 %v3665
    %v3710 = vunpack.c.h.b16 %v3665
    %v3711 = vunpack.c.l.b16 %v3666
    %v3712 = vunpack.c.h.b16 %v3666
    %v3713 = vunpack.c.l.b16 %v3667
    %v3714 = vunpack.c.h.b16 %v3667
    %v3715 = vunpack.c.l.b16 %v3668
    %v3716 = vunpack.c.h.b16 %v3668
    %v3717 = vpack.c.b16 %v3687, %v3685
    %v3718 = vpack.c.b16 %v3688, %v3686
    %v3719 = vpack.c.b16 %v3691, %v3689
    %v3720 = vpack.c.b16 %v3692, %v3690
    %v3721 = vpack.c.b16 %v3695, %v3693
    %v3722 = vpack.c.b16 %v3696, %v3694
    %v3723 = vpack.c.b16 %v3699, %v3697
    %v3724 = vpack.c.b16 %v3700, %v3698
    %v3725 = vpack.c.b16 %v3703, %v3701
    %v3726 = vpack.c.b16 %v3704, %v3702
    %v3727 = vpack.c.b16 %v3707, %v3705
    %v3728 = vpack.c.b16 %v3708, %v3706
    %v3729 = vpack.c.b16 %v3711, %v3709
    %v3730 = vpack.c.b16 %v3712, %v3710
    %v3731 = vpack.c.b16 %v3715, %v3713
    %v3732 = vpack.c.b16 %v3716, %v3714
    %3749 = vmatprep.subr.bf16.mxu0 %v3732
    %3750 = vmatpush1.bf16.msra.mxu0 %v3731
    %3751 = vmatprep.subr.bf16.mxu0 %v3730
    %3752 = vmatpush1.bf16.msra.mxu0 %v3729
    %3753 = vmatprep.subr.bf16.mxu0 %v3728
    %3754 = vmatpush1.bf16.msra.mxu0 %v3727
    %3755 = vmatprep.subr.bf16.mxu0 %v3726
    %3756 = vmatpush1.bf16.msra.mxu0 %v3725
    %3757 = vmatprep.subr.bf16.mxu0 %v3724
    %3758 = vmatpush1.bf16.msra.mxu0 %v3723
    %3759 = vmatprep.subr.bf16.mxu0 %v3722
    %3760 = vmatpush1.bf16.msra.mxu0 %v3721
    %3761 = vmatprep.subr.bf16.mxu0 %v3720
    %3762 = vmatpush1.bf16.msra.mxu0 %v3719
    %3763 = vmatprep.subr.bf16.mxu0 %v3718
    %3764 = vmatpush1.bf16.msra.mxu0 %v3717
    %3765 = vmatprep.subr.bf16.mxu0 0
    %3766 = vmatpush2.bf16.msra.mxu0 0
    %3767 = vmatprep.subr.bf16.mxu0 0
    %3768 = vmatpush2.bf16.msra.mxu0 0
    %3769 = vmatprep.subr.bf16.mxu0 0
    %3770 = vmatpush2.bf16.msra.mxu0 0
    %3771 = vmatprep.subr.bf16.mxu0 0
    %3772 = vmatpush2.bf16.msra.mxu0 0
    %3773 = vmatprep.subr.bf16.mxu0 0
    %3774 = vmatpush2.bf16.msra.mxu0 0
    %3775 = vmatprep.subr.bf16.mxu0 0
    %3776 = vmatpush2.bf16.msra.mxu0 0
    %3777 = vmatprep.subr.bf16.mxu0 0
    %3778 = vmatpush2.bf16.msra.mxu0 0
    %3779 = vmatprep.subr.bf16.mxu0 0
    %3780 = vmatpush2.bf16.msra.mxu0 0
    %3781 = vmatprep.mubr.bf16.mxu0 0
    %3782 = vmatmul.mubr.bf16.gmra.mxu0 %v3652
    %v3783 = vpop.f32.mrf.mxu0
    %v3784 = vadd.f32 %v183, %v3783
    %v3785 = vpop.f32.mrf.mxu0
    %v3786 = vadd.f32 %v187, %v3785
    %v3787 = vpop.f32.mrf.mxu0
    %v3788 = vpop.f32.mrf.mxu0
    %3789 = vdwg.mxu0
    %v3790 = vxor.u32 %v3784, 2147483648
    %v3791 = vxor.u32 %v3786, 2147483648
    %v3792 = vmul.f32 %v3790, 1.442695
    %v3793 = vpow.pop %v3792
    %v3794 = vmul.f32 %v3791, 1.442695
    %v3795 = vpow.pop %v3794
    %v3796 = vadd.f32 %v3793, 1.0
    %v3797 = vadd.f32 %v3795, 1.0
    %v3798 = vrcp.pop %v3796
    %v3799 = vmul.f32 1.0, %v3798
    %v3800 = vrcp.pop %v3797
    %v3801 = vmul.f32 1.0, %v3800
    %v3802 = vrot.slane %v3799, 4
    %v3803 = vadd.f32 %v3799, %v3802
    %v3804 = vrot.slane %v3803, 2
    %v3805 = vadd.f32 %v3803, %v3804
    %v3806 = vrot.slane %v3805, 1
    %v3807 = vadd.f32 %v3805, %v3806
    %v3808 = vrot.slane %v3801, 4
    %v3809 = vadd.f32 %v3801, %v3808
    %v3810 = vrot.slane %v3809, 2
    %v3811 = vadd.f32 %v3809, %v3810
    %v3812 = vrot.slane %v3811, 1
    %v3813 = vadd.f32 %v3811, %v3812
    %v3814 = vmul.f32 %v3807, %v251
    %v3815 = vmul.f32 %v3813, %v251
    %v3816 = vmul.f32 %v3799, %v3799
    %v3817 = vmul.f32 %v3801, %v3801
    %v3818 = vrot.slane %v3816, 4
    %v3819 = vadd.f32 %v3816, %v3818
    %v3820 = vrot.slane %v3819, 2
    %v3821 = vadd.f32 %v3819, %v3820
    %v3822 = vrot.slane %v3821, 1
    %v3823 = vadd.f32 %v3821, %v3822
    %v3824 = vrot.slane %v3817, 4
    %v3825 = vadd.f32 %v3817, %v3824
    %v3826 = vrot.slane %v3825, 2
    %v3827 = vadd.f32 %v3825, %v3826
    %v3828 = vrot.slane %v3827, 1
    %v3829 = vadd.f32 %v3827, %v3828
    %v3830 = vmul.f32 %v3823, %v251
    %v3831 = vmul.f32 %v3829, %v251
    %v3832 = vmul.f32 %v3814, %v3814
    %v3833 = vmul.f32 %v3815, %v3815
    %v3834 = vsub.f32 %v3830, %v3832
    %v3835 = vsub.f32 %v3831, %v3833
    %v3836 = vmax.f32 %v3834, 0.0
    %v3837 = vmax.f32 %v3835, 0.0
    %v3838 = vadd.f32 %v3836, 1e-05
    %v3839 = vadd.f32 %v3837, 1e-05
    %v3840 = vrsqrt.pop %v3838
    %v3841 = vrsqrt.pop %v3839
    %v3844 = vcombine.low %v3840, %v3841
    %v3846 = vunpack.c.l.s4 1966171168
    %v3847 = vunpack.c.0.s8 %v3846
    %v3848 = vlaneseq
    %v3849 = vshrl.u32 %v3848, 7
    %v3850 = vsub.s32 %v3847, %v3849
    %v3851 = vrot.slane %v3844, %v3850
    %v3853 = vunpack.c.l.s4 1966171168
    %v3854 = vunpack.c.0.s8 %v3853
    %v3855 = vlaneseq
    %v3856 = vshrl.u32 %v3855, 7
    %v3857 = vsub.s32 %v3854, %v3856
    %v3858 = vrot.slane %v3851, %v3857
    %v3860 = vmul.f32 %v140, %v3858
    %v3862 = vlaneseq
    %v3863 = vshrl.u32 %v3862, 7
    %v3864 = vsub.s32 0, %v3863
    %v3865 = vrot.slane %v3860, %v3864
    %v3866 = vlaneseq
    %v3867 = vshrl.u32 %v3866, 7
    %v3868 = vsub.s32 1, %v3867
    %v3869 = vrot.slane %v3860, %v3868
    %v3872 = vmul.f32 %v3814, %v3865
    %v3873 = vmul.f32 %v3815, %v3869
    %v3876 = vcombine.low %v3872, %v3873
    %v3878 = vunpack.c.l.s4 1966171168
    %v3879 = vunpack.c.0.s8 %v3878
    %v3880 = vlaneseq
    %v3881 = vshrl.u32 %v3880, 7
    %v3882 = vsub.s32 %v3879, %v3881
    %v3883 = vrot.slane %v3876, %v3882
    %v3885 = vunpack.c.l.s4 1966171168
    %v3886 = vunpack.c.0.s8 %v3885
    %v3887 = vlaneseq
    %v3888 = vshrl.u32 %v3887, 7
    %v3889 = vsub.s32 %v3886, %v3888
    %v3890 = vrot.slane %v3883, %v3889
    %v3892 = vsub.f32 %v141, %v3890
    %v3893 = vmul.f32 %v3799, %v3865
    %v3894 = vmul.f32 %v3801, %v3869
    %v3896 = vlaneseq
    %v3897 = vshrl.u32 %v3896, 7
    %v3898 = vsub.s32 0, %v3897
    %v3899 = vrot.slane %v3892, %v3898
    %v3900 = vlaneseq
    %v3901 = vshrl.u32 %v3900, 7
    %v3902 = vsub.s32 1, %v3901
    %v3903 = vrot.slane %v3892, %v3902
    %v3906 = vadd.f32 %v3893, %v3899
    %v3907 = vadd.f32 %v3894, %v3903
    %v3908 = vpack.c.bf16 %v3906, %v3906
    %v3909 = vpack.c.bf16 %v3907, %v3907
    %v3910 = vld [vmem:[%s17] sm:$0xf]
    %v3911 = vld [vmem:[%s17 + $0x4] sm:$0xf]
    %v3912 = vld [vmem:[%s17 + $0x8] sm:$0xf]
    %v3913 = vld [vmem:[%s17 + $0xc] sm:$0xf]
    %v3914 = vld [vmem:[%s17 + $0x10] sm:$0xf]
    %v3915 = vld [vmem:[%s17 + $0x14] sm:$0xf]
    %v3916 = vld [vmem:[%s17 + $0x18] sm:$0xf]
    %v3917 = vld [vmem:[%s17 + $0x1c] sm:$0xf]
    %v3918 = vld [vmem:[%s17 + $0x20] sm:$0xf]
    %v3919 = vld [vmem:[%s17 + $0x24] sm:$0xf]
    %v3920 = vld [vmem:[%s17 + $0x28] sm:$0xf]
    %v3921 = vld [vmem:[%s17 + $0x2c] sm:$0xf]
    %v3922 = vld [vmem:[%s17 + $0x30] sm:$0xf]
    %v3923 = vld [vmem:[%s17 + $0x34] sm:$0xf]
    %v3924 = vld [vmem:[%s17 + $0x38] sm:$0xf]
    %v3925 = vld [vmem:[%s17 + $0x3c] sm:$0xf]
    %v3926 = vld [vmem:[%s17 + $0x40] sm:$0xf]
    %v3927 = vld [vmem:[%s17 + $0x44] sm:$0xf]
    %v3928 = vld [vmem:[%s17 + $0x48] sm:$0xf]
    %v3929 = vld [vmem:[%s17 + $0x4c] sm:$0xf]
    %v3930 = vld [vmem:[%s17 + $0x50] sm:$0xf]
    %v3931 = vld [vmem:[%s17 + $0x54] sm:$0xf]
    %v3932 = vld [vmem:[%s17 + $0x58] sm:$0xf]
    %v3933 = vld [vmem:[%s17 + $0x5c] sm:$0xf]
    %v3934 = vld [vmem:[%s17 + $0x60] sm:$0xf]
    %v3935 = vld [vmem:[%s17 + $0x64] sm:$0xf]
    %v3936 = vld [vmem:[%s17 + $0x68] sm:$0xf]
    %v3937 = vld [vmem:[%s17 + $0x6c] sm:$0xf]
    %v3938 = vld [vmem:[%s17 + $0x70] sm:$0xf]
    %v3939 = vld [vmem:[%s17 + $0x74] sm:$0xf]
    %v3940 = vld [vmem:[%s17 + $0x78] sm:$0xf]
    %v3941 = vld [vmem:[%s17 + $0x7c] sm:$0xf]
    %v3974 = vunpack.c.l.b16 %v3910
    %v3975 = vunpack.c.l.b16 %v3911
    %v3976 = vunpack.c.l.b16 %v3912
    %v3977 = vunpack.c.l.b16 %v3913
    %v3978 = vunpack.c.l.b16 %v3914
    %v3979 = vunpack.c.l.b16 %v3915
    %v3980 = vunpack.c.l.b16 %v3916
    %v3981 = vunpack.c.l.b16 %v3917
    %v3982 = vunpack.c.l.b16 %v3918
    %v3983 = vunpack.c.l.b16 %v3919
    %v3984 = vunpack.c.l.b16 %v3920
    %v3985 = vunpack.c.l.b16 %v3921
    %v3986 = vunpack.c.l.b16 %v3922
    %v3987 = vunpack.c.l.b16 %v3923
    %v3988 = vunpack.c.l.b16 %v3924
    %v3989 = vunpack.c.l.b16 %v3925
    %v3990 = vunpack.c.l.b16 %v3926
    %v3991 = vunpack.c.l.b16 %v3927
    %v3992 = vunpack.c.l.b16 %v3928
    %v3993 = vunpack.c.l.b16 %v3929
    %v3994 = vunpack.c.l.b16 %v3930
    %v3995 = vunpack.c.l.b16 %v3931
    %v3996 = vunpack.c.l.b16 %v3932
    %v3997 = vunpack.c.l.b16 %v3933
    %v3998 = vunpack.c.l.b16 %v3934
    %v3999 = vunpack.c.l.b16 %v3935
    %v4000 = vunpack.c.l.b16 %v3936
    %v4001 = vunpack.c.l.b16 %v3937
    %v4002 = vunpack.c.l.b16 %v3938
    %v4003 = vunpack.c.l.b16 %v3939
    %v4004 = vunpack.c.l.b16 %v3940
    %v4005 = vunpack.c.l.b16 %v3941
    %v4006 = vpack.c.b16 %v3975, %v3974
    %v4007 = vpack.c.b16 %v3977, %v3976
    %v4008 = vpack.c.b16 %v3979, %v3978
    %v4009 = vpack.c.b16 %v3981, %v3980
    %v4010 = vpack.c.b16 %v3983, %v3982
    %v4011 = vpack.c.b16 %v3985, %v3984
    %v4012 = vpack.c.b16 %v3987, %v3986
    %v4013 = vpack.c.b16 %v3989, %v3988
    %v4014 = vpack.c.b16 %v3991, %v3990
    %v4015 = vpack.c.b16 %v3993, %v3992
    %v4016 = vpack.c.b16 %v3995, %v3994
    %v4017 = vpack.c.b16 %v3997, %v3996
    %v4018 = vpack.c.b16 %v3999, %v3998
    %v4019 = vpack.c.b16 %v4001, %v4000
    %v4020 = vpack.c.b16 %v4003, %v4002
    %v4021 = vpack.c.b16 %v4005, %v4004
    %4038 = vmatprep.subr.bf16.mxu0 0
    %4039 = vmatpush1.bf16.msra.mxu0 %v4013
    %4040 = vmatprep.subr.bf16.mxu0 0
    %4041 = vmatpush1.bf16.msra.mxu0 %v4012
    %4042 = vmatprep.subr.bf16.mxu0 0
    %4043 = vmatpush1.bf16.msra.mxu0 %v4011
    %4044 = vmatprep.subr.bf16.mxu0 0
    %4045 = vmatpush1.bf16.msra.mxu0 %v4010
    %4046 = vmatprep.subr.bf16.mxu0 0
    %4047 = vmatpush1.bf16.msra.mxu0 %v4009
    %4048 = vmatprep.subr.bf16.mxu0 0
    %4049 = vmatpush1.bf16.msra.mxu0 %v4008
    %4050 = vmatprep.subr.bf16.mxu0 0
    %4051 = vmatpush1.bf16.msra.mxu0 %v4007
    %4052 = vmatprep.subr.bf16.mxu0 0
    %4053 = vmatpush1.bf16.msra.mxu0 %v4006
    %4054 = vmatprep.subr.bf16.mxu0 0
    %4055 = vmatpush2.bf16.msra.mxu0 %v4021
    %4056 = vmatprep.subr.bf16.mxu0 0
    %4057 = vmatpush2.bf16.msra.mxu0 %v4020
    %4058 = vmatprep.subr.bf16.mxu0 0
    %4059 = vmatpush2.bf16.msra.mxu0 %v4019
    %4060 = vmatprep.subr.bf16.mxu0 0
    %4061 = vmatpush2.bf16.msra.mxu0 %v4018
    %4062 = vmatprep.subr.bf16.mxu0 0
    %4063 = vmatpush2.bf16.msra.mxu0 %v4017
    %4064 = vmatprep.subr.bf16.mxu0 0
    %4065 = vmatpush2.bf16.msra.mxu0 %v4016
    %4066 = vmatprep.subr.bf16.mxu0 0
    %4067 = vmatpush2.bf16.msra.mxu0 %v4015
    %4068 = vmatprep.subr.bf16.mxu0 0
    %4069 = vmatpush2.bf16.msra.mxu0 %v4014
    %4070 = vmatprep.mubr.bf16.mxu0 %v3909
    %4071 = vmatmul.mubr.bf16.gmra.mxu0 %v3908
    %v4072 = vpop.f32.mrf.mxu0
    %v4073 = vadd.f32 %v195, %v4072
    %v4074 = vpop.f32.mrf.mxu0
    %v4075 = vpop.f32.mrf.mxu0
    %v4076 = vpop.f32.mrf.mxu0
    %4077 = vdwg.mxu0
    %vm4078 = vcmp.gt.f32.partialorder %v4073, 20.0
    %v4079 = vmin.f32 %v4073, 20.0
    %v4080 = vmul.f32 %v4079, 1.442695
    %v4081 = vpow.pop %v4080
    %v4082 = vadd.f32 %v4081, 1.0
    %v4083 = vlog2.pop %v4082
    %v4084 = vmul.f32 %v4083, 0.6931472
    %v4085 = vmul.f32 -0.5, %v4081
    %v4086 = vadd.f32 %v4085, 1.0
    %v4087 = vmul.f32 %v4086, %v4081
    %v4088 = vand.u32 2147483647, %v4081
    %vm4089 = vcmp.lt.f32.partialorder %v4088, 0.0004427343
    %v4090 = vsel %vm4089, %v4087, %v4084
    %v4091 = vsel %vm4078, %v4073, %v4090
    %s4092 = scalar_lea.vmem %s3, 24
    %v4093 = vld [vmem:[%s4092] sm:$0xff]
    %4095 = vrot.lane.b32.xlu0 %v4093, 4
    %v4096 = vpop.permute.xlu0 %4095
    %v4098 = vmul.f32 %v4091, %v4096
    %4100 = vrot.lane.b32.xlu0 %v4098, 124
    %v4101 = vpop.permute.xlu0 %4100
    %v4103 = vadd.f32 %v4073, %v4101
    %s4104 = scalar_lea.vmem %s19, 24
    %4105 = vst.msk [vmem:[%s4104] sm:$0xff] %vm1239, %v4103
    %4107 = vset.pattern.permute.xlu0 0
    %4108 = vperm.xlu0 %4107, %v4103
    %v4109 = vpop.permute.xlu0 %4108
    %v4111 = vmul.f32 %v4109, %v206
    %v4112 = vadd.f32 %v147, %v4111
    %4113 = vset.pattern.permute.xlu0 1
    %4114 = vperm.xlu0 %4113, %v4103
    %v4115 = vpop.permute.xlu0 %4114
    %v4117 = vmul.f32 %v4115, %v216
    %v4118 = vadd.f32 %v4112, %v4117
    %4119 = vset.pattern.permute.xlu0 2
    %4120 = vperm.xlu0 %4119, %v4103
    %v4121 = vpop.permute.xlu0 %4120
    %v4123 = vmul.f32 %v4121, %v226
    %v4124 = vadd.f32 %v4118, %v4123
    %4125 = vset.pattern.permute.xlu0 3
    %4126 = vperm.xlu0 %4125, %v4103
    %v4127 = vpop.permute.xlu0 %4126
    %v4129 = vmul.f32 %v4127, %v236
    %v4130 = vadd.f32 %v4124, %v4129
    %v4131 = vxor.u32 %v4130, 2147483648
    %v4132 = vmul.f32 %v4131, 1.442695
    %v4133 = vpow.pop %v4132
    %v4134 = vadd.f32 %v4133, 1.0
    %v4135 = vrcp.pop %v4134
    %v4136 = vmul.f32 1.0, %v4135
    %v4137 = vrot.slane %v4136, 4
    %v4138 = vadd.f32 %v4136, %v4137
    %v4139 = vrot.slane %v4138, 2
    %v4140 = vadd.f32 %v4138, %v4139
    %v4141 = vrot.slane %v4140, 1
    %v4142 = vadd.f32 %v4140, %v4141
    %v4143 = vmul.f32 %v4142, %v251
    %v4144 = vmul.f32 %v4136, %v4136
    %v4145 = vrot.slane %v4144, 4
    %v4146 = vadd.f32 %v4144, %v4145
    %v4147 = vrot.slane %v4146, 2
    %v4148 = vadd.f32 %v4146, %v4147
    %v4149 = vrot.slane %v4148, 1
    %v4150 = vadd.f32 %v4148, %v4149
    %v4151 = vmul.f32 %v4150, %v251
    %v4152 = vmul.f32 %v4143, %v4143
    %v4153 = vsub.f32 %v4151, %v4152
    %v4154 = vmax.f32 %v4153, 0.0
    %v4155 = vadd.f32 %v4154, 1e-05
    %v4156 = vrsqrt.pop %v4155
    %v4157 = vmul.f32 %v138, %v4156
    %v4158 = vmul.f32 %v4143, %v4157
    %v4159 = vsub.f32 %v139, %v4158
    %v4161 = vlaneseq
    %v4162 = vshrl.u32 %v4161, 7
    %v4163 = vsub.s32 0, %v4162
    %v4164 = vrot.slane %v4157, %v4163
    %v4166 = vmul.f32 %v4136, %v4164
    %v4168 = vlaneseq
    %v4169 = vshrl.u32 %v4168, 7
    %v4170 = vsub.s32 0, %v4169
    %v4171 = vrot.slane %v4159, %v4170
    %v4173 = vadd.f32 %v4166, %v4171
    %v4174 = vpack.c.bf16 %v4173, %v4173
    %v4175 = vld [vmem:[%s8] sm:$0xf]
    %v4176 = vld [vmem:[%s8 + $0x4] sm:$0xf]
    %v4177 = vld [vmem:[%s8 + $0x8] sm:$0xf]
    %v4178 = vld [vmem:[%s8 + $0xc] sm:$0xf]
    %v4179 = vld [vmem:[%s8 + $0x10] sm:$0xf]
    %v4180 = vld [vmem:[%s8 + $0x14] sm:$0xf]
    %v4181 = vld [vmem:[%s8 + $0x18] sm:$0xf]
    %v4182 = vld [vmem:[%s8 + $0x1c] sm:$0xf]
    %v4183 = vld [vmem:[%s8 + $0x20] sm:$0xf]
    %v4184 = vld [vmem:[%s8 + $0x24] sm:$0xf]
    %v4185 = vld [vmem:[%s8 + $0x28] sm:$0xf]
    %v4186 = vld [vmem:[%s8 + $0x2c] sm:$0xf]
    %v4187 = vld [vmem:[%s8 + $0x30] sm:$0xf]
    %v4188 = vld [vmem:[%s8 + $0x34] sm:$0xf]
    %v4189 = vld [vmem:[%s8 + $0x38] sm:$0xf]
    %v4190 = vld [vmem:[%s8 + $0x3c] sm:$0xf]
    %v4207 = vunpack.c.l.b16 %v4175
    %v4208 = vunpack.c.l.b16 %v4176
    %v4209 = vunpack.c.l.b16 %v4177
    %v4210 = vunpack.c.l.b16 %v4178
    %v4211 = vunpack.c.l.b16 %v4179
    %v4212 = vunpack.c.l.b16 %v4180
    %v4213 = vunpack.c.l.b16 %v4181
    %v4214 = vunpack.c.l.b16 %v4182
    %v4215 = vunpack.c.l.b16 %v4183
    %v4216 = vunpack.c.l.b16 %v4184
    %v4217 = vunpack.c.l.b16 %v4185
    %v4218 = vunpack.c.l.b16 %v4186
    %v4219 = vunpack.c.l.b16 %v4187
    %v4220 = vunpack.c.l.b16 %v4188
    %v4221 = vunpack.c.l.b16 %v4189
    %v4222 = vunpack.c.l.b16 %v4190
    %v4223 = vpack.c.b16 %v4208, %v4207
    %v4224 = vpack.c.b16 %v4210, %v4209
    %v4225 = vpack.c.b16 %v4212, %v4211
    %v4226 = vpack.c.b16 %v4214, %v4213
    %v4227 = vpack.c.b16 %v4216, %v4215
    %v4228 = vpack.c.b16 %v4218, %v4217
    %v4229 = vpack.c.b16 %v4220, %v4219
    %v4230 = vpack.c.b16 %v4222, %v4221
    %4239 = vmatprep.subr.bf16.mxu0 0
    %4240 = vmatpush1.bf16.msra.mxu0 %v4230
    %4241 = vmatprep.subr.bf16.mxu0 0
    %4242 = vmatpush1.bf16.msra.mxu0 %v4229
    %4243 = vmatprep.subr.bf16.mxu0 0
    %4244 = vmatpush1.bf16.msra.mxu0 %v4228
    %4245 = vmatprep.subr.bf16.mxu0 0
    %4246 = vmatpush1.bf16.msra.mxu0 %v4227
    %4247 = vmatprep.subr.bf16.mxu0 0
    %4248 = vmatpush1.bf16.msra.mxu0 %v4226
    %4249 = vmatprep.subr.bf16.mxu0 0
    %4250 = vmatpush1.bf16.msra.mxu0 %v4225
    %4251 = vmatprep.subr.bf16.mxu0 0
    %4252 = vmatpush1.bf16.msra.mxu0 %v4224
    %4253 = vmatprep.subr.bf16.mxu0 0
    %4254 = vmatpush1.bf16.msra.mxu0 %v4223
    %4255 = vmatprep.subr.bf16.mxu0 0
    %4256 = vmatpush2.bf16.msra.mxu0 0
    %4257 = vmatprep.subr.bf16.mxu0 0
    %4258 = vmatpush2.bf16.msra.mxu0 0
    %4259 = vmatprep.subr.bf16.mxu0 0
    %4260 = vmatpush2.bf16.msra.mxu0 0
    %4261 = vmatprep.subr.bf16.mxu0 0
    %4262 = vmatpush2.bf16.msra.mxu0 0
    %4263 = vmatprep.subr.bf16.mxu0 0
    %4264 = vmatpush2.bf16.msra.mxu0 0
    %4265 = vmatprep.subr.bf16.mxu0 0
    %4266 = vmatpush2.bf16.msra.mxu0 0
    %4267 = vmatprep.subr.bf16.mxu0 0
    %4268 = vmatpush2.bf16.msra.mxu0 0
    %4269 = vmatprep.subr.bf16.mxu0 0
    %4270 = vmatpush2.bf16.msra.mxu0 0
    %4271 = vmatprep.mubr.bf16.mxu0 0
    %4272 = vmatmul.mubr.bf16.gmra.mxu0 %v4174
    %v4273 = vpop.f32.mrf.mxu0
    %v4274 = vadd.f32 %v154, %v4273
    %v4275 = vpop.f32.mrf.mxu0
    %v4276 = vpop.f32.mrf.mxu0
    %v4277 = vpop.f32.mrf.mxu0
    %4278 = vdwg.mxu0
    %s4279 = scalar_lea.vmem %s2, 32
    %v4280 = vld [vmem:[%s4279] sm:$0xff]
    %v4281 = vmax.f32 %v4280, -1.0
    %v4282 = vmin.f32 %v4281, 1.0
    %v4283 = vpack.c.bf16 %v4274, %v4274
    %v4284 = vld [vmem:[%s11] sm:$0xff]
    %v4285 = vld [vmem:[%s11 + $0x8] sm:$0xff]
    %v4286 = vld [vmem:[%s11 + $0x10] sm:$0xff]
    %v4287 = vld [vmem:[%s11 + $0x18] sm:$0xff]
    %v4288 = vld [vmem:[%s11 + $0x20] sm:$0xff]
    %v4289 = vld [vmem:[%s11 + $0x28] sm:$0xff]
    %v4290 = vld [vmem:[%s11 + $0x30] sm:$0xff]
    %v4291 = vld [vmem:[%s11 + $0x38] sm:$0xff]
    %v4292 = vld [vmem:[%s11 + $0x40] sm:$0xff]
    %v4293 = vld [vmem:[%s11 + $0x48] sm:$0xff]
    %v4294 = vld [vmem:[%s11 + $0x50] sm:$0xff]
    %v4295 = vld [vmem:[%s11 + $0x58] sm:$0xff]
    %v4296 = vld [vmem:[%s11 + $0x60] sm:$0xff]
    %v4297 = vld [vmem:[%s11 + $0x68] sm:$0xff]
    %v4298 = vld [vmem:[%s11 + $0x70] sm:$0xff]
    %v4299 = vld [vmem:[%s11 + $0x78] sm:$0xff]
    %v4300 = vld [vmem:[%s11 + $0x80] sm:$0xff]
    %v4301 = vld [vmem:[%s11 + $0x88] sm:$0xff]
    %v4302 = vld [vmem:[%s11 + $0x90] sm:$0xff]
    %v4303 = vld [vmem:[%s11 + $0x98] sm:$0xff]
    %v4304 = vld [vmem:[%s11 + $0xa0] sm:$0xff]
    %v4305 = vld [vmem:[%s11 + $0xa8] sm:$0xff]
    %v4306 = vld [vmem:[%s11 + $0xb0] sm:$0xff]
    %v4307 = vld [vmem:[%s11 + $0xb8] sm:$0xff]
    %v4308 = vld [vmem:[%s11 + $0xc0] sm:$0xff]
    %v4309 = vld [vmem:[%s11 + $0xc8] sm:$0xff]
    %v4310 = vld [vmem:[%s11 + $0xd0] sm:$0xff]
    %v4311 = vld [vmem:[%s11 + $0xd8] sm:$0xff]
    %v4312 = vld [vmem:[%s11 + $0xe0] sm:$0xff]
    %v4313 = vld [vmem:[%s11 + $0xe8] sm:$0xff]
    %v4314 = vld [vmem:[%s11 + $0xf0] sm:$0xff]
    %v4315 = vld [vmem:[%s11 + $0xf8] sm:$0xff]
    %v4348 = vunpack.c.l.b16 %v4284
    %v4349 = vunpack.c.h.b16 %v4284
    %v4350 = vunpack.c.l.b16 %v4285
    %v4351 = vunpack.c.h.b16 %v4285
    %v4352 = vunpack.c.l.b16 %v4286
    %v4353 = vunpack.c.h.b16 %v4286
    %v4354 = vunpack.c.l.b16 %v4287
    %v4355 = vunpack.c.h.b16 %v4287
    %v4356 = vunpack.c.l.b16 %v4288
    %v4357 = vunpack.c.h.b16 %v4288
    %v4358 = vunpack.c.l.b16 %v4289
    %v4359 = vunpack.c.h.b16 %v4289
    %v4360 = vunpack.c.l.b16 %v4290
    %v4361 = vunpack.c.h.b16 %v4290
    %v4362 = vunpack.c.l.b16 %v4291
    %v4363 = vunpack.c.h.b16 %v4291
    %v4364 = vunpack.c.l.b16 %v4292
    %v4365 = vunpack.c.h.b16 %v4292
    %v4366 = vunpack.c.l.b16 %v4293
    %v4367 = vunpack.c.h.b16 %v4293
    %v4368 = vunpack.c.l.b16 %v4294
    %v4369 = vunpack.c.h.b16 %v4294
    %v4370 = vunpack.c.l.b16 %v4295
    %v4371 = vunpack.c.h.b16 %v4295
    %v4372 = vunpack.c.l.b16 %v4296
    %v4373 = vunpack.c.h.b16 %v4296
    %v4374 = vunpack.c.l.b16 %v4297
    %v4375 = vunpack.c.h.b16 %v4297
    %v4376 = vunpack.c.l.b16 %v4298
    %v4377 = vunpack.c.h.b16 %v4298
    %v4378 = vunpack.c.l.b16 %v4299
    %v4379 = vunpack.c.h.b16 %v4299
    %v4380 = vunpack.c.l.b16 %v4300
    %v4381 = vunpack.c.h.b16 %v4300
    %v4382 = vunpack.c.l.b16 %v4301
    %v4383 = vunpack.c.h.b16 %v4301
    %v4384 = vunpack.c.l.b16 %v4302
    %v4385 = vunpack.c.h.b16 %v4302
    %v4386 = vunpack.c.l.b16 %v4303
    %v4387 = vunpack.c.h.b16 %v4303
    %v4388 = vunpack.c.l.b16 %v4304
    %v4389 = vunpack.c.h.b16 %v4304
    %v4390 = vunpack.c.l.b16 %v4305
    %v4391 = vunpack.c.h.b16 %v4305
    %v4392 = vunpack.c.l.b16 %v4306
    %v4393 = vunpack.c.h.b16 %v4306
    %v4394 = vunpack.c.l.b16 %v4307
    %v4395 = vunpack.c.h.b16 %v4307
    %v4396 = vunpack.c.l.b16 %v4308
    %v4397 = vunpack.c.h.b16 %v4308
    %v4398 = vunpack.c.l.b16 %v4309
    %v4399 = vunpack.c.h.b16 %v4309
    %v4400 = vunpack.c.l.b16 %v4310
    %v4401 = vunpack.c.h.b16 %v4310
    %v4402 = vunpack.c.l.b16 %v4311
    %v4403 = vunpack.c.h.b16 %v4311
    %v4404 = vunpack.c.l.b16 %v4312
    %v4405 = vunpack.c.h.b16 %v4312
    %v4406 = vunpack.c.l.b16 %v4313
    %v4407 = vunpack.c.h.b16 %v4313
    %v4408 = vunpack.c.l.b16 %v4314
    %v4409 = vunpack.c.h.b16 %v4314
    %v4410 = vunpack.c.l.b16 %v4315
    %v4411 = vunpack.c.h.b16 %v4315
    %v4412 = vpack.c.b16 %v4352, %v4348
    %v4413 = vpack.c.b16 %v4353, %v4349
    %v4414 = vpack.c.b16 %v4354, %v4350
    %v4415 = vpack.c.b16 %v4355, %v4351
    %v4416 = vpack.c.b16 %v4360, %v4356
    %v4417 = vpack.c.b16 %v4361, %v4357
    %v4418 = vpack.c.b16 %v4362, %v4358
    %v4419 = vpack.c.b16 %v4363, %v4359
    %v4420 = vpack.c.b16 %v4368, %v4364
    %v4421 = vpack.c.b16 %v4369, %v4365
    %v4422 = vpack.c.b16 %v4370, %v4366
    %v4423 = vpack.c.b16 %v4371, %v4367
    %v4424 = vpack.c.b16 %v4376, %v4372
    %v4425 = vpack.c.b16 %v4377, %v4373
    %v4426 = vpack.c.b16 %v4378, %v4374
    %v4427 = vpack.c.b16 %v4379, %v4375
    %v4428 = vpack.c.b16 %v4384, %v4380
    %v4429 = vpack.c.b16 %v4385, %v4381
    %v4430 = vpack.c.b16 %v4386, %v4382
    %v4431 = vpack.c.b16 %v4387, %v4383
    %v4432 = vpack.c.b16 %v4392, %v4388
    %v4433 = vpack.c.b16 %v4393, %v4389
    %v4434 = vpack.c.b16 %v4394, %v4390
    %v4435 = vpack.c.b16 %v4395, %v4391
    %v4436 = vpack.c.b16 %v4400, %v4396
    %v4437 = vpack.c.b16 %v4401, %v4397
    %v4438 = vpack.c.b16 %v4402, %v4398
    %v4439 = vpack.c.b16 %v4403, %v4399
    %v4440 = vpack.c.b16 %v4408, %v4404
    %v4441 = vpack.c.b16 %v4409, %v4405
    %v4442 = vpack.c.b16 %v4410, %v4406
    %v4443 = vpack.c.b16 %v4411, %v4407
    %4476 = vmatprep.subr.bf16.mxu0 %v4441
    %4477 = vmatpush1.bf16.msra.mxu0 %v4440
    %4478 = vmatprep.subr.bf16.mxu0 %v4437
    %4479 = vmatpush1.bf16.msra.mxu0 %v4436
    %4480 = vmatprep.subr.bf16.mxu0 %v4433
    %4481 = vmatpush1.bf16.msra.mxu0 %v4432
    %4482 = vmatprep.subr.bf16.mxu0 %v4429
    %4483 = vmatpush1.bf16.msra.mxu0 %v4428
    %4484 = vmatprep.subr.bf16.mxu0 %v4425
    %4485 = vmatpush1.bf16.msra.mxu0 %v4424
    %4486 = vmatprep.subr.bf16.mxu0 %v4421
    %4487 = vmatpush1.bf16.msra.mxu0 %v4420
    %4488 = vmatprep.subr.bf16.mxu0 %v4417
    %4489 = vmatpush1.bf16.msra.mxu0 %v4416
    %4490 = vmatprep.subr.bf16.mxu0 %v4413
    %4491 = vmatpush1.bf16.msra.mxu0 %v4412
    %4492 = vmatprep.subr.bf16.mxu0 0
    %4493 = vmatpush2.bf16.msra.mxu0 0
    %4494 = vmatprep.subr.bf16.mxu0 0
    %4495 = vmatpush2.bf16.msra.mxu0 0
    %4496 = vmatprep.subr.bf16.mxu0 0
    %4497 = vmatpush2.bf16.msra.mxu0 0
    %4498 = vmatprep.subr.bf16.mxu0 0
    %4499 = vmatpush2.bf16.msra.mxu0 0
    %4500 = vmatprep.subr.bf16.mxu0 0
    %4501 = vmatpush2.bf16.msra.mxu0 0
    %4502 = vmatprep.subr.bf16.mxu0 0
    %4503 = vmatpush2.bf16.msra.mxu0 0
    %4504 = vmatprep.subr.bf16.mxu0 0
    %4505 = vmatpush2.bf16.msra.mxu0 0
    %4506 = vmatprep.subr.bf16.mxu0 0
    %4507 = vmatpush2.bf16.msra.mxu0 0
    %4508 = vmatprep.mubr.bf16.mxu0 0
    %4509 = vmatmul.mubr.bf16.gmra.mxu0 %v4283
    %v4510 = vpop.f32.mrf.mxu0
    %v4511 = vadd.f32 %v161, %v4510
    %v4512 = vpop.f32.mrf.mxu0
    %v4513 = vadd.f32 %v165, %v4512
    %v4514 = vpop.f32.mrf.mxu0
    %v4515 = vpop.f32.mrf.mxu0
    %4516 = vdwg.mxu0
    %4517 = vmatprep.subr.bf16.mxu0 %v4443
    %4518 = vmatpush1.bf16.msra.mxu0 %v4442
    %4519 = vmatprep.subr.bf16.mxu0 %v4439
    %4520 = vmatpush1.bf16.msra.mxu0 %v4438
    %4521 = vmatprep.subr.bf16.mxu0 %v4435
    %4522 = vmatpush1.bf16.msra.mxu0 %v4434
    %4523 = vmatprep.subr.bf16.mxu0 %v4431
    %4524 = vmatpush1.bf16.msra.mxu0 %v4430
    %4525 = vmatprep.subr.bf16.mxu0 %v4427
    %4526 = vmatpush1.bf16.msra.mxu0 %v4426
    %4527 = vmatprep.subr.bf16.mxu0 %v4423
    %4528 = vmatpush1.bf16.msra.mxu0 %v4422
    %4529 = vmatprep.subr.bf16.mxu0 %v4419
    %4530 = vmatpush1.bf16.msra.mxu0 %v4418
    %4531 = vmatprep.subr.bf16.mxu0 %v4415
    %4532 = vmatpush1.bf16.msra.mxu0 %v4414
    %4533 = vmatprep.subr.bf16.mxu0 0
    %4534 = vmatpush2.bf16.msra.mxu0 0
    %4535 = vmatprep.subr.bf16.mxu0 0
    %4536 = vmatpush2.bf16.msra.mxu0 0
    %4537 = vmatprep.subr.bf16.mxu0 0
    %4538 = vmatpush2.bf16.msra.mxu0 0
    %4539 = vmatprep.subr.bf16.mxu0 0
    %4540 = vmatpush2.bf16.msra.mxu0 0
    %4541 = vmatprep.subr.bf16.mxu0 0
    %4542 = vmatpush2.bf16.msra.mxu0 0
    %4543 = vmatprep.subr.bf16.mxu0 0
    %4544 = vmatpush2.bf16.msra.mxu0 0
    %4545 = vmatprep.subr.bf16.mxu0 0
    %4546 = vmatpush2.bf16.msra.mxu0 0
    %4547 = vmatprep.subr.bf16.mxu0 0
    %4548 = vmatpush2.bf16.msra.mxu0 0
    %4549 = vmatprep.mubr.bf16.mxu0 0
    %4550 = vmatmul.mubr.bf16.gmra.mxu0 %v4283
    %v4551 = vpop.f32.mrf.mxu0
    %v4552 = vadd.f32 %v169, %v4551
    %v4553 = vpop.f32.mrf.mxu0
    %v4554 = vadd.f32 %v173, %v4553
    %v4555 = vpop.f32.mrf.mxu0
    %v4556 = vpop.f32.mrf.mxu0
    %4557 = vdwg.mxu0
    %4559 = vset.pattern.permute.xlu0 0
    %4560 = vperm.xlu0 %4559, %v4282
    %v4561 = vpop.permute.xlu0 %4560
    %v4563 = vmul.f32 %v4561, %v695
    %v4564 = vmul.f32 %v4561, %v699
    %v4565 = vmul.f32 %v4561, %v703
    %v4566 = vmul.f32 %v4561, %v707
    %v4567 = vadd.f32 %v4511, %v4563
    %v4568 = vadd.f32 %v4513, %v4564
    %v4569 = vadd.f32 %v4552, %v4565
    %v4570 = vadd.f32 %v4554, %v4566
    %4571 = vset.pattern.permute.xlu0 1
    %4572 = vperm.xlu0 %4571, %v4282
    %v4573 = vpop.permute.xlu0 %4572
    %v4575 = vmul.f32 %v4573, %v743
    %v4576 = vmul.f32 %v4573, %v747
    %v4577 = vmul.f32 %v4573, %v751
    %v4578 = vmul.f32 %v4573, %v755
    %v4579 = vadd.f32 %v4567, %v4575
    %v4580 = vadd.f32 %v4568, %v4576
    %v4581 = vadd.f32 %v4569, %v4577
    %v4582 = vadd.f32 %v4570, %v4578
    %v4583 = vxor.u32 %v4579, 2147483648
    %v4584 = vmul.f32 %v4583, 1.442695
    %v4585 = vpow.pop %v4584
    %v4586 = vadd.f32 %v4585, 1.0
    %v4587 = vrcp.pop %v4586
    %v4588 = vmul.f32 1.0, %v4587
    %v4589 = vxor.u32 %v4580, 2147483648
    %v4590 = vmul.f32 %v4589, 1.442695
    %v4591 = vpow.pop %v4590
    %v4592 = vadd.f32 %v4591, 1.0
    %v4593 = vrcp.pop %v4592
    %v4594 = vmul.f32 1.0, %v4593
    %v4595 = vtanh.pop %v4581
    %v4596 = vxor.u32 %v4582, 2147483648
    %v4597 = vmul.f32 %v4596, 1.442695
    %v4598 = vpow.pop %v4597
    %v4599 = vadd.f32 %v4598, 1.0
    %v4600 = vrcp.pop %v4599
    %v4601 = vmul.f32 1.0, %v4600
    %v4602 = vmul.f32 %v4594, %v135
    %v4603 = vmul.f32 %v4588, %v4595
    %v4604 = vadd.f32 %v4602, %v4603
    %v4605 = vtanh.pop %v4604
    %v4606 = vmul.f32 %v4601, %v4605
    %v4607 = vpack.c.bf16 %v4606, %v4606
    %v4608 = vld [vmem:[#allocation10] sm:$0xff]
    %v4609 = vld [vmem:[#allocation10 + $0x8] sm:$0xff]
    %v4610 = vld [vmem:[#allocation10 + $0x10] sm:$0xff]
    %v4611 = vld [vmem:[#allocation10 + $0x18] sm:$0xff]
    %v4612 = vld [vmem:[#allocation10 + $0x20] sm:$0xff]
    %v4613 = vld [vmem:[#allocation10 + $0x28] sm:$0xff]
    %v4614 = vld [vmem:[#allocation10 + $0x30] sm:$0xff]
    %v4615 = vld [vmem:[#allocation10 + $0x38] sm:$0xff]
    %v4616 = vld [vmem:[#allocation10 + $0x40] sm:$0xff]
    %v4617 = vld [vmem:[#allocation10 + $0x48] sm:$0xff]
    %v4618 = vld [vmem:[#allocation10 + $0x50] sm:$0xff]
    %v4619 = vld [vmem:[#allocation10 + $0x58] sm:$0xff]
    %v4620 = vld [vmem:[#allocation10 + $0x60] sm:$0xff]
    %v4621 = vld [vmem:[#allocation10 + $0x68] sm:$0xff]
    %v4622 = vld [vmem:[#allocation10 + $0x70] sm:$0xff]
    %v4623 = vld [vmem:[#allocation10 + $0x78] sm:$0xff]
    %v4640 = vunpack.c.l.b16 %v4608
    %v4641 = vunpack.c.h.b16 %v4608
    %v4642 = vunpack.c.l.b16 %v4609
    %v4643 = vunpack.c.h.b16 %v4609
    %v4644 = vunpack.c.l.b16 %v4610
    %v4645 = vunpack.c.h.b16 %v4610
    %v4646 = vunpack.c.l.b16 %v4611
    %v4647 = vunpack.c.h.b16 %v4611
    %v4648 = vunpack.c.l.b16 %v4612
    %v4649 = vunpack.c.h.b16 %v4612
    %v4650 = vunpack.c.l.b16 %v4613
    %v4651 = vunpack.c.h.b16 %v4613
    %v4652 = vunpack.c.l.b16 %v4614
    %v4653 = vunpack.c.h.b16 %v4614
    %v4654 = vunpack.c.l.b16 %v4615
    %v4655 = vunpack.c.h.b16 %v4615
    %v4656 = vunpack.c.l.b16 %v4616
    %v4657 = vunpack.c.h.b16 %v4616
    %v4658 = vunpack.c.l.b16 %v4617
    %v4659 = vunpack.c.h.b16 %v4617
    %v4660 = vunpack.c.l.b16 %v4618
    %v4661 = vunpack.c.h.b16 %v4618
    %v4662 = vunpack.c.l.b16 %v4619
    %v4663 = vunpack.c.h.b16 %v4619
    %v4664 = vunpack.c.l.b16 %v4620
    %v4665 = vunpack.c.h.b16 %v4620
    %v4666 = vunpack.c.l.b16 %v4621
    %v4667 = vunpack.c.h.b16 %v4621
    %v4668 = vunpack.c.l.b16 %v4622
    %v4669 = vunpack.c.h.b16 %v4622
    %v4670 = vunpack.c.l.b16 %v4623
    %v4671 = vunpack.c.h.b16 %v4623
    %v4672 = vpack.c.b16 %v4642, %v4640
    %v4673 = vpack.c.b16 %v4643, %v4641
    %v4674 = vpack.c.b16 %v4646, %v4644
    %v4675 = vpack.c.b16 %v4647, %v4645
    %v4676 = vpack.c.b16 %v4650, %v4648
    %v4677 = vpack.c.b16 %v4651, %v4649
    %v4678 = vpack.c.b16 %v4654, %v4652
    %v4679 = vpack.c.b16 %v4655, %v4653
    %v4680 = vpack.c.b16 %v4658, %v4656
    %v4681 = vpack.c.b16 %v4659, %v4657
    %v4682 = vpack.c.b16 %v4662, %v4660
    %v4683 = vpack.c.b16 %v4663, %v4661
    %v4684 = vpack.c.b16 %v4666, %v4664
    %v4685 = vpack.c.b16 %v4667, %v4665
    %v4686 = vpack.c.b16 %v4670, %v4668
    %v4687 = vpack.c.b16 %v4671, %v4669
    %4704 = vmatprep.subr.bf16.mxu0 %v4687
    %4705 = vmatpush1.bf16.msra.mxu0 %v4686
    %4706 = vmatprep.subr.bf16.mxu0 %v4685
    %4707 = vmatpush1.bf16.msra.mxu0 %v4684
    %4708 = vmatprep.subr.bf16.mxu0 %v4683
    %4709 = vmatpush1.bf16.msra.mxu0 %v4682
    %4710 = vmatprep.subr.bf16.mxu0 %v4681
    %4711 = vmatpush1.bf16.msra.mxu0 %v4680
    %4712 = vmatprep.subr.bf16.mxu0 %v4679
    %4713 = vmatpush1.bf16.msra.mxu0 %v4678
    %4714 = vmatprep.subr.bf16.mxu0 %v4677
    %4715 = vmatpush1.bf16.msra.mxu0 %v4676
    %4716 = vmatprep.subr.bf16.mxu0 %v4675
    %4717 = vmatpush1.bf16.msra.mxu0 %v4674
    %4718 = vmatprep.subr.bf16.mxu0 %v4673
    %4719 = vmatpush1.bf16.msra.mxu0 %v4672
    %4720 = vmatprep.subr.bf16.mxu0 0
    %4721 = vmatpush2.bf16.msra.mxu0 0
    %4722 = vmatprep.subr.bf16.mxu0 0
    %4723 = vmatpush2.bf16.msra.mxu0 0
    %4724 = vmatprep.subr.bf16.mxu0 0
    %4725 = vmatpush2.bf16.msra.mxu0 0
    %4726 = vmatprep.subr.bf16.mxu0 0
    %4727 = vmatpush2.bf16.msra.mxu0 0
    %4728 = vmatprep.subr.bf16.mxu0 0
    %4729 = vmatpush2.bf16.msra.mxu0 0
    %4730 = vmatprep.subr.bf16.mxu0 0
    %4731 = vmatpush2.bf16.msra.mxu0 0
    %4732 = vmatprep.subr.bf16.mxu0 0
    %4733 = vmatpush2.bf16.msra.mxu0 0
    %4734 = vmatprep.subr.bf16.mxu0 0
    %4735 = vmatpush2.bf16.msra.mxu0 0
    %4736 = vmatprep.mubr.bf16.mxu0 0
    %4737 = vmatmul.mubr.bf16.gmra.mxu0 %v4607
    %v4738 = vpop.f32.mrf.mxu0
    %v4739 = vadd.f32 %v183, %v4738
    %v4740 = vpop.f32.mrf.mxu0
    %v4741 = vadd.f32 %v187, %v4740
    %v4742 = vpop.f32.mrf.mxu0
    %v4743 = vpop.f32.mrf.mxu0
    %4744 = vdwg.mxu0
    %v4745 = vxor.u32 %v4739, 2147483648
    %v4746 = vxor.u32 %v4741, 2147483648
    %v4747 = vmul.f32 %v4745, 1.442695
    %v4748 = vpow.pop %v4747
    %v4749 = vmul.f32 %v4746, 1.442695
    %v4750 = vpow.pop %v4749
    %v4751 = vadd.f32 %v4748, 1.0
    %v4752 = vadd.f32 %v4750, 1.0
    %v4753 = vrcp.pop %v4751
    %v4754 = vmul.f32 1.0, %v4753
    %v4755 = vrcp.pop %v4752
    %v4756 = vmul.f32 1.0, %v4755
    %v4757 = vrot.slane %v4754, 4
    %v4758 = vadd.f32 %v4754, %v4757
    %v4759 = vrot.slane %v4758, 2
    %v4760 = vadd.f32 %v4758, %v4759
    %v4761 = vrot.slane %v4760, 1
    %v4762 = vadd.f32 %v4760, %v4761
    %v4763 = vrot.slane %v4756, 4
    %v4764 = vadd.f32 %v4756, %v4763
    %v4765 = vrot.slane %v4764, 2
    %v4766 = vadd.f32 %v4764, %v4765
    %v4767 = vrot.slane %v4766, 1
    %v4768 = vadd.f32 %v4766, %v4767
    %v4769 = vmul.f32 %v4762, %v251
    %v4770 = vmul.f32 %v4768, %v251
    %v4771 = vmul.f32 %v4754, %v4754
    %v4772 = vmul.f32 %v4756, %v4756
    %v4773 = vrot.slane %v4771, 4
    %v4774 = vadd.f32 %v4771, %v4773
    %v4775 = vrot.slane %v4774, 2
    %v4776 = vadd.f32 %v4774, %v4775
    %v4777 = vrot.slane %v4776, 1
    %v4778 = vadd.f32 %v4776, %v4777
    %v4779 = vrot.slane %v4772, 4
    %v4780 = vadd.f32 %v4772, %v4779
    %v4781 = vrot.slane %v4780, 2
    %v4782 = vadd.f32 %v4780, %v4781
    %v4783 = vrot.slane %v4782, 1
    %v4784 = vadd.f32 %v4782, %v4783
    %v4785 = vmul.f32 %v4778, %v251
    %v4786 = vmul.f32 %v4784, %v251
    %v4787 = vmul.f32 %v4769, %v4769
    %v4788 = vmul.f32 %v4770, %v4770
    %v4789 = vsub.f32 %v4785, %v4787
    %v4790 = vsub.f32 %v4786, %v4788
    %v4791 = vmax.f32 %v4789, 0.0
    %v4792 = vmax.f32 %v4790, 0.0
    %v4793 = vadd.f32 %v4791, 1e-05
    %v4794 = vadd.f32 %v4792, 1e-05
    %v4795 = vrsqrt.pop %v4793
    %v4796 = vrsqrt.pop %v4794
    %v4799 = vcombine.low %v4795, %v4796
    %v4801 = vunpack.c.l.s4 1966171168
    %v4802 = vunpack.c.0.s8 %v4801
    %v4803 = vlaneseq
    %v4804 = vshrl.u32 %v4803, 7
    %v4805 = vsub.s32 %v4802, %v4804
    %v4806 = vrot.slane %v4799, %v4805
    %v4808 = vunpack.c.l.s4 1966171168
    %v4809 = vunpack.c.0.s8 %v4808
    %v4810 = vlaneseq
    %v4811 = vshrl.u32 %v4810, 7
    %v4812 = vsub.s32 %v4809, %v4811
    %v4813 = vrot.slane %v4806, %v4812
    %v4815 = vmul.f32 %v140, %v4813
    %v4817 = vlaneseq
    %v4818 = vshrl.u32 %v4817, 7
    %v4819 = vsub.s32 0, %v4818
    %v4820 = vrot.slane %v4815, %v4819
    %v4821 = vlaneseq
    %v4822 = vshrl.u32 %v4821, 7
    %v4823 = vsub.s32 1, %v4822
    %v4824 = vrot.slane %v4815, %v4823
    %v4827 = vmul.f32 %v4769, %v4820
    %v4828 = vmul.f32 %v4770, %v4824
    %v4831 = vcombine.low %v4827, %v4828
    %v4833 = vunpack.c.l.s4 1966171168
    %v4834 = vunpack.c.0.s8 %v4833
    %v4835 = vlaneseq
    %v4836 = vshrl.u32 %v4835, 7
    %v4837 = vsub.s32 %v4834, %v4836
    %v4838 = vrot.slane %v4831, %v4837
    %v4840 = vunpack.c.l.s4 1966171168
    %v4841 = vunpack.c.0.s8 %v4840
    %v4842 = vlaneseq
    %v4843 = vshrl.u32 %v4842, 7
    %v4844 = vsub.s32 %v4841, %v4843
    %v4845 = vrot.slane %v4838, %v4844
    %v4847 = vsub.f32 %v141, %v4845
    %v4848 = vmul.f32 %v4754, %v4820
    %v4849 = vmul.f32 %v4756, %v4824
    %v4851 = vlaneseq
    %v4852 = vshrl.u32 %v4851, 7
    %v4853 = vsub.s32 0, %v4852
    %v4854 = vrot.slane %v4847, %v4853
    %v4855 = vlaneseq
    %v4856 = vshrl.u32 %v4855, 7
    %v4857 = vsub.s32 1, %v4856
    %v4858 = vrot.slane %v4847, %v4857
    %v4861 = vadd.f32 %v4848, %v4854
    %v4862 = vadd.f32 %v4849, %v4858
    %v4863 = vpack.c.bf16 %v4861, %v4861
    %v4864 = vpack.c.bf16 %v4862, %v4862
    %v4865 = vld [vmem:[%s17] sm:$0xf]
    %v4866 = vld [vmem:[%s17 + $0x4] sm:$0xf]
    %v4867 = vld [vmem:[%s17 + $0x8] sm:$0xf]
    %v4868 = vld [vmem:[%s17 + $0xc] sm:$0xf]
    %v4869 = vld [vmem:[%s17 + $0x10] sm:$0xf]
    %v4870 = vld [vmem:[%s17 + $0x14] sm:$0xf]
    %v4871 = vld [vmem:[%s17 + $0x18] sm:$0xf]
    %v4872 = vld [vmem:[%s17 + $0x1c] sm:$0xf]
    %v4873 = vld [vmem:[%s17 + $0x20] sm:$0xf]
    %v4874 = vld [vmem:[%s17 + $0x24] sm:$0xf]
    %v4875 = vld [vmem:[%s17 + $0x28] sm:$0xf]
    %v4876 = vld [vmem:[%s17 + $0x2c] sm:$0xf]
    %v4877 = vld [vmem:[%s17 + $0x30] sm:$0xf]
    %v4878 = vld [vmem:[%s17 + $0x34] sm:$0xf]
    %v4879 = vld [vmem:[%s17 + $0x38] sm:$0xf]
    %v4880 = vld [vmem:[%s17 + $0x3c] sm:$0xf]
    %v4881 = vld [vmem:[%s17 + $0x40] sm:$0xf]
    %v4882 = vld [vmem:[%s17 + $0x44] sm:$0xf]
    %v4883 = vld [vmem:[%s17 + $0x48] sm:$0xf]
    %v4884 = vld [vmem:[%s17 + $0x4c] sm:$0xf]
    %v4885 = vld [vmem:[%s17 + $0x50] sm:$0xf]
    %v4886 = vld [vmem:[%s17 + $0x54] sm:$0xf]
    %v4887 = vld [vmem:[%s17 + $0x58] sm:$0xf]
    %v4888 = vld [vmem:[%s17 + $0x5c] sm:$0xf]
    %v4889 = vld [vmem:[%s17 + $0x60] sm:$0xf]
    %v4890 = vld [vmem:[%s17 + $0x64] sm:$0xf]
    %v4891 = vld [vmem:[%s17 + $0x68] sm:$0xf]
    %v4892 = vld [vmem:[%s17 + $0x6c] sm:$0xf]
    %v4893 = vld [vmem:[%s17 + $0x70] sm:$0xf]
    %v4894 = vld [vmem:[%s17 + $0x74] sm:$0xf]
    %v4895 = vld [vmem:[%s17 + $0x78] sm:$0xf]
    %v4896 = vld [vmem:[%s17 + $0x7c] sm:$0xf]
    %v4929 = vunpack.c.l.b16 %v4865
    %v4930 = vunpack.c.l.b16 %v4866
    %v4931 = vunpack.c.l.b16 %v4867
    %v4932 = vunpack.c.l.b16 %v4868
    %v4933 = vunpack.c.l.b16 %v4869
    %v4934 = vunpack.c.l.b16 %v4870
    %v4935 = vunpack.c.l.b16 %v4871
    %v4936 = vunpack.c.l.b16 %v4872
    %v4937 = vunpack.c.l.b16 %v4873
    %v4938 = vunpack.c.l.b16 %v4874
    %v4939 = vunpack.c.l.b16 %v4875
    %v4940 = vunpack.c.l.b16 %v4876
    %v4941 = vunpack.c.l.b16 %v4877
    %v4942 = vunpack.c.l.b16 %v4878
    %v4943 = vunpack.c.l.b16 %v4879
    %v4944 = vunpack.c.l.b16 %v4880
    %v4945 = vunpack.c.l.b16 %v4881
    %v4946 = vunpack.c.l.b16 %v4882
    %v4947 = vunpack.c.l.b16 %v4883
    %v4948 = vunpack.c.l.b16 %v4884
    %v4949 = vunpack.c.l.b16 %v4885
    %v4950 = vunpack.c.l.b16 %v4886
    %v4951 = vunpack.c.l.b16 %v4887
    %v4952 = vunpack.c.l.b16 %v4888
    %v4953 = vunpack.c.l.b16 %v4889
    %v4954 = vunpack.c.l.b16 %v4890
    %v4955 = vunpack.c.l.b16 %v4891
    %v4956 = vunpack.c.l.b16 %v4892
    %v4957 = vunpack.c.l.b16 %v4893
    %v4958 = vunpack.c.l.b16 %v4894
    %v4959 = vunpack.c.l.b16 %v4895
    %v4960 = vunpack.c.l.b16 %v4896
    %v4961 = vpack.c.b16 %v4930, %v4929
    %v4962 = vpack.c.b16 %v4932, %v4931
    %v4963 = vpack.c.b16 %v4934, %v4933
    %v4964 = vpack.c.b16 %v4936, %v4935
    %v4965 = vpack.c.b16 %v4938, %v4937
    %v4966 = vpack.c.b16 %v4940, %v4939
    %v4967 = vpack.c.b16 %v4942, %v4941
    %v4968 = vpack.c.b16 %v4944, %v4943
    %v4969 = vpack.c.b16 %v4946, %v4945
    %v4970 = vpack.c.b16 %v4948, %v4947
    %v4971 = vpack.c.b16 %v4950, %v4949
    %v4972 = vpack.c.b16 %v4952, %v4951
    %v4973 = vpack.c.b16 %v4954, %v4953
    %v4974 = vpack.c.b16 %v4956, %v4955
    %v4975 = vpack.c.b16 %v4958, %v4957
    %v4976 = vpack.c.b16 %v4960, %v4959
    %4993 = vmatprep.subr.bf16.mxu0 0
    %4994 = vmatpush1.bf16.msra.mxu0 %v4968
    %4995 = vmatprep.subr.bf16.mxu0 0
    %4996 = vmatpush1.bf16.msra.mxu0 %v4967
    %4997 = vmatprep.subr.bf16.mxu0 0
    %4998 = vmatpush1.bf16.msra.mxu0 %v4966
    %4999 = vmatprep.subr.bf16.mxu0 0
    %5000 = vmatpush1.bf16.msra.mxu0 %v4965
    %5001 = vmatprep.subr.bf16.mxu0 0
    %5002 = vmatpush1.bf16.msra.mxu0 %v4964
    %5003 = vmatprep.subr.bf16.mxu0 0
    %5004 = vmatpush1.bf16.msra.mxu0 %v4963
    %5005 = vmatprep.subr.bf16.mxu0 0
    %5006 = vmatpush1.bf16.msra.mxu0 %v4962
    %5007 = vmatprep.subr.bf16.mxu0 0
    %5008 = vmatpush1.bf16.msra.mxu0 %v4961
    %5009 = vmatprep.subr.bf16.mxu0 0
    %5010 = vmatpush2.bf16.msra.mxu0 %v4976
    %5011 = vmatprep.subr.bf16.mxu0 0
    %5012 = vmatpush2.bf16.msra.mxu0 %v4975
    %5013 = vmatprep.subr.bf16.mxu0 0
    %5014 = vmatpush2.bf16.msra.mxu0 %v4974
    %5015 = vmatprep.subr.bf16.mxu0 0
    %5016 = vmatpush2.bf16.msra.mxu0 %v4973
    %5017 = vmatprep.subr.bf16.mxu0 0
    %5018 = vmatpush2.bf16.msra.mxu0 %v4972
    %5019 = vmatprep.subr.bf16.mxu0 0
    %5020 = vmatpush2.bf16.msra.mxu0 %v4971
    %5021 = vmatprep.subr.bf16.mxu0 0
    %5022 = vmatpush2.bf16.msra.mxu0 %v4970
    %5023 = vmatprep.subr.bf16.mxu0 0
    %5024 = vmatpush2.bf16.msra.mxu0 %v4969
    %5025 = vmatprep.mubr.bf16.mxu0 %v4864
    %5026 = vmatmul.mubr.bf16.gmra.mxu0 %v4863
    %v5027 = vpop.f32.mrf.mxu0
    %v5028 = vadd.f32 %v195, %v5027
    %v5029 = vpop.f32.mrf.mxu0
    %v5030 = vpop.f32.mrf.mxu0
    %v5031 = vpop.f32.mrf.mxu0
    %5032 = vdwg.mxu0
    %vm5033 = vcmp.gt.f32.partialorder %v5028, 20.0
    %v5034 = vmin.f32 %v5028, 20.0
    %v5035 = vmul.f32 %v5034, 1.442695
    %v5036 = vpow.pop %v5035
    %v5037 = vadd.f32 %v5036, 1.0
    %v5038 = vlog2.pop %v5037
    %v5039 = vmul.f32 %v5038, 0.6931472
    %v5040 = vmul.f32 -0.5, %v5036
    %v5041 = vadd.f32 %v5040, 1.0
    %v5042 = vmul.f32 %v5041, %v5036
    %v5043 = vand.u32 2147483647, %v5036
    %vm5044 = vcmp.lt.f32.partialorder %v5043, 0.0004427343
    %v5045 = vsel %vm5044, %v5042, %v5039
    %v5046 = vsel %vm5033, %v5028, %v5045
    %s5047 = scalar_lea.vmem %s3, 32
    %v5048 = vld [vmem:[%s5047] sm:$0xff]
    %5050 = vrot.lane.b32.xlu0 %v5048, 4
    %v5051 = vpop.permute.xlu0 %5050
    %v5053 = vmul.f32 %v5046, %v5051
    %5055 = vrot.lane.b32.xlu0 %v5053, 124
    %v5056 = vpop.permute.xlu0 %5055
    %v5058 = vadd.f32 %v5028, %v5056
    %s5059 = scalar_lea.vmem %s19, 32
    %5060 = vst.msk [vmem:[%s5059] sm:$0xff] %vm1239, %v5058
    %5062 = vset.pattern.permute.xlu0 0
    %5063 = vperm.xlu0 %5062, %v5058
    %v5064 = vpop.permute.xlu0 %5063
    %v5066 = vmul.f32 %v5064, %v206
    %v5067 = vadd.f32 %v147, %v5066
    %5068 = vset.pattern.permute.xlu0 1
    %5069 = vperm.xlu0 %5068, %v5058
    %v5070 = vpop.permute.xlu0 %5069
    %v5072 = vmul.f32 %v5070, %v216
    %v5073 = vadd.f32 %v5067, %v5072
    %5074 = vset.pattern.permute.xlu0 2
    %5075 = vperm.xlu0 %5074, %v5058
    %v5076 = vpop.permute.xlu0 %5075
    %v5078 = vmul.f32 %v5076, %v226
    %v5079 = vadd.f32 %v5073, %v5078
    %5080 = vset.pattern.permute.xlu0 3
    %5081 = vperm.xlu0 %5080, %v5058
    %v5082 = vpop.permute.xlu0 %5081
    %v5084 = vmul.f32 %v5082, %v236
    %v5085 = vadd.f32 %v5079, %v5084
    %v5086 = vxor.u32 %v5085, 2147483648
    %v5087 = vmul.f32 %v5086, 1.442695
    %v5088 = vpow.pop %v5087
    %v5089 = vadd.f32 %v5088, 1.0
    %v5090 = vrcp.pop %v5089
    %v5091 = vmul.f32 1.0, %v5090
    %v5092 = vrot.slane %v5091, 4
    %v5093 = vadd.f32 %v5091, %v5092
    %v5094 = vrot.slane %v5093, 2
    %v5095 = vadd.f32 %v5093, %v5094
    %v5096 = vrot.slane %v5095, 1
    %v5097 = vadd.f32 %v5095, %v5096
    %v5098 = vmul.f32 %v5097, %v251
    %v5099 = vmul.f32 %v5091, %v5091
    %v5100 = vrot.slane %v5099, 4
    %v5101 = vadd.f32 %v5099, %v5100
    %v5102 = vrot.slane %v5101, 2
    %v5103 = vadd.f32 %v5101, %v5102
    %v5104 = vrot.slane %v5103, 1
    %v5105 = vadd.f32 %v5103, %v5104
    %v5106 = vmul.f32 %v5105, %v251
    %v5107 = vmul.f32 %v5098, %v5098
    %v5108 = vsub.f32 %v5106, %v5107
    %v5109 = vmax.f32 %v5108, 0.0
    %v5110 = vadd.f32 %v5109, 1e-05
    %v5111 = vrsqrt.pop %v5110
    %v5112 = vmul.f32 %v138, %v5111
    %v5113 = vmul.f32 %v5098, %v5112
    %v5114 = vsub.f32 %v139, %v5113
    %v5116 = vlaneseq
    %v5117 = vshrl.u32 %v5116, 7
    %v5118 = vsub.s32 0, %v5117
    %v5119 = vrot.slane %v5112, %v5118
    %v5121 = vmul.f32 %v5091, %v5119
    %v5123 = vlaneseq
    %v5124 = vshrl.u32 %v5123, 7
    %v5125 = vsub.s32 0, %v5124
    %v5126 = vrot.slane %v5114, %v5125
    %v5128 = vadd.f32 %v5121, %v5126
    %v5129 = vpack.c.bf16 %v5128, %v5128
    %v5130 = vld [vmem:[%s8] sm:$0xf]
    %v5131 = vld [vmem:[%s8 + $0x4] sm:$0xf]
    %v5132 = vld [vmem:[%s8 + $0x8] sm:$0xf]
    %v5133 = vld [vmem:[%s8 + $0xc] sm:$0xf]
    %v5134 = vld [vmem:[%s8 + $0x10] sm:$0xf]
    %v5135 = vld [vmem:[%s8 + $0x14] sm:$0xf]
    %v5136 = vld [vmem:[%s8 + $0x18] sm:$0xf]
    %v5137 = vld [vmem:[%s8 + $0x1c] sm:$0xf]
    %v5138 = vld [vmem:[%s8 + $0x20] sm:$0xf]
    %v5139 = vld [vmem:[%s8 + $0x24] sm:$0xf]
    %v5140 = vld [vmem:[%s8 + $0x28] sm:$0xf]
    %v5141 = vld [vmem:[%s8 + $0x2c] sm:$0xf]
    %v5142 = vld [vmem:[%s8 + $0x30] sm:$0xf]
    %v5143 = vld [vmem:[%s8 + $0x34] sm:$0xf]
    %v5144 = vld [vmem:[%s8 + $0x38] sm:$0xf]
    %v5145 = vld [vmem:[%s8 + $0x3c] sm:$0xf]
    %v5162 = vunpack.c.l.b16 %v5130
    %v5163 = vunpack.c.l.b16 %v5131
    %v5164 = vunpack.c.l.b16 %v5132
    %v5165 = vunpack.c.l.b16 %v5133
    %v5166 = vunpack.c.l.b16 %v5134
    %v5167 = vunpack.c.l.b16 %v5135
    %v5168 = vunpack.c.l.b16 %v5136
    %v5169 = vunpack.c.l.b16 %v5137
    %v5170 = vunpack.c.l.b16 %v5138
    %v5171 = vunpack.c.l.b16 %v5139
    %v5172 = vunpack.c.l.b16 %v5140
    %v5173 = vunpack.c.l.b16 %v5141
    %v5174 = vunpack.c.l.b16 %v5142
    %v5175 = vunpack.c.l.b16 %v5143
    %v5176 = vunpack.c.l.b16 %v5144
    %v5177 = vunpack.c.l.b16 %v5145
    %v5178 = vpack.c.b16 %v5163, %v5162
    %v5179 = vpack.c.b16 %v5165, %v5164
    %v5180 = vpack.c.b16 %v5167, %v5166
    %v5181 = vpack.c.b16 %v5169, %v5168
    %v5182 = vpack.c.b16 %v5171, %v5170
    %v5183 = vpack.c.b16 %v5173, %v5172
    %v5184 = vpack.c.b16 %v5175, %v5174
    %v5185 = vpack.c.b16 %v5177, %v5176
    %5194 = vmatprep.subr.bf16.mxu0 0
    %5195 = vmatpush1.bf16.msra.mxu0 %v5185
    %5196 = vmatprep.subr.bf16.mxu0 0
    %5197 = vmatpush1.bf16.msra.mxu0 %v5184
    %5198 = vmatprep.subr.bf16.mxu0 0
    %5199 = vmatpush1.bf16.msra.mxu0 %v5183
    %5200 = vmatprep.subr.bf16.mxu0 0
    %5201 = vmatpush1.bf16.msra.mxu0 %v5182
    %5202 = vmatprep.subr.bf16.mxu0 0
    %5203 = vmatpush1.bf16.msra.mxu0 %v5181
    %5204 = vmatprep.subr.bf16.mxu0 0
    %5205 = vmatpush1.bf16.msra.mxu0 %v5180
    %5206 = vmatprep.subr.bf16.mxu0 0
    %5207 = vmatpush1.bf16.msra.mxu0 %v5179
    %5208 = vmatprep.subr.bf16.mxu0 0
    %5209 = vmatpush1.bf16.msra.mxu0 %v5178
    %5210 = vmatprep.subr.bf16.mxu0 0
    %5211 = vmatpush2.bf16.msra.mxu0 0
    %5212 = vmatprep.subr.bf16.mxu0 0
    %5213 = vmatpush2.bf16.msra.mxu0 0
    %5214 = vmatprep.subr.bf16.mxu0 0
    %5215 = vmatpush2.bf16.msra.mxu0 0
    %5216 = vmatprep.subr.bf16.mxu0 0
    %5217 = vmatpush2.bf16.msra.mxu0 0
    %5218 = vmatprep.subr.bf16.mxu0 0
    %5219 = vmatpush2.bf16.msra.mxu0 0
    %5220 = vmatprep.subr.bf16.mxu0 0
    %5221 = vmatpush2.bf16.msra.mxu0 0
    %5222 = vmatprep.subr.bf16.mxu0 0
    %5223 = vmatpush2.bf16.msra.mxu0 0
    %5224 = vmatprep.subr.bf16.mxu0 0
    %5225 = vmatpush2.bf16.msra.mxu0 0
    %5226 = vmatprep.mubr.bf16.mxu0 0
    %5227 = vmatmul.mubr.bf16.gmra.mxu0 %v5129
    %v5228 = vpop.f32.mrf.mxu0
    %v5229 = vadd.f32 %v154, %v5228
    %v5230 = vpop.f32.mrf.mxu0
    %v5231 = vpop.f32.mrf.mxu0
    %v5232 = vpop.f32.mrf.mxu0
    %5233 = vdwg.mxu0
    %s5234 = scalar_lea.vmem %s2, 40
    %v5235 = vld [vmem:[%s5234] sm:$0xff]
    %v5236 = vmax.f32 %v5235, -1.0
    %v5237 = vmin.f32 %v5236, 1.0
    %v5238 = vpack.c.bf16 %v5229, %v5229
    %v5239 = vld [vmem:[%s11] sm:$0xff]
    %v5240 = vld [vmem:[%s11 + $0x8] sm:$0xff]
    %v5241 = vld [vmem:[%s11 + $0x10] sm:$0xff]
    %v5242 = vld [vmem:[%s11 + $0x18] sm:$0xff]
    %v5243 = vld [vmem:[%s11 + $0x20] sm:$0xff]
    %v5244 = vld [vmem:[%s11 + $0x28] sm:$0xff]
    %v5245 = vld [vmem:[%s11 + $0x30] sm:$0xff]
    %v5246 = vld [vmem:[%s11 + $0x38] sm:$0xff]
    %v5247 = vld [vmem:[%s11 + $0x40] sm:$0xff]
    %v5248 = vld [vmem:[%s11 + $0x48] sm:$0xff]
    %v5249 = vld [vmem:[%s11 + $0x50] sm:$0xff]
    %v5250 = vld [vmem:[%s11 + $0x58] sm:$0xff]
    %v5251 = vld [vmem:[%s11 + $0x60] sm:$0xff]
    %v5252 = vld [vmem:[%s11 + $0x68] sm:$0xff]
    %v5253 = vld [vmem:[%s11 + $0x70] sm:$0xff]
    %v5254 = vld [vmem:[%s11 + $0x78] sm:$0xff]
    %v5255 = vld [vmem:[%s11 + $0x80] sm:$0xff]
    %v5256 = vld [vmem:[%s11 + $0x88] sm:$0xff]
    %v5257 = vld [vmem:[%s11 + $0x90] sm:$0xff]
    %v5258 = vld [vmem:[%s11 + $0x98] sm:$0xff]
    %v5259 = vld [vmem:[%s11 + $0xa0] sm:$0xff]
    %v5260 = vld [vmem:[%s11 + $0xa8] sm:$0xff]
    %v5261 = vld [vmem:[%s11 + $0xb0] sm:$0xff]
    %v5262 = vld [vmem:[%s11 + $0xb8] sm:$0xff]
    %v5263 = vld [vmem:[%s11 + $0xc0] sm:$0xff]
    %v5264 = vld [vmem:[%s11 + $0xc8] sm:$0xff]
    %v5265 = vld [vmem:[%s11 + $0xd0] sm:$0xff]
    %v5266 = vld [vmem:[%s11 + $0xd8] sm:$0xff]
    %v5267 = vld [vmem:[%s11 + $0xe0] sm:$0xff]
    %v5268 = vld [vmem:[%s11 + $0xe8] sm:$0xff]
    %v5269 = vld [vmem:[%s11 + $0xf0] sm:$0xff]
    %v5270 = vld [vmem:[%s11 + $0xf8] sm:$0xff]
    %v5303 = vunpack.c.l.b16 %v5239
    %v5304 = vunpack.c.h.b16 %v5239
    %v5305 = vunpack.c.l.b16 %v5240
    %v5306 = vunpack.c.h.b16 %v5240
    %v5307 = vunpack.c.l.b16 %v5241
    %v5308 = vunpack.c.h.b16 %v5241
    %v5309 = vunpack.c.l.b16 %v5242
    %v5310 = vunpack.c.h.b16 %v5242
    %v5311 = vunpack.c.l.b16 %v5243
    %v5312 = vunpack.c.h.b16 %v5243
    %v5313 = vunpack.c.l.b16 %v5244
    %v5314 = vunpack.c.h.b16 %v5244
    %v5315 = vunpack.c.l.b16 %v5245
    %v5316 = vunpack.c.h.b16 %v5245
    %v5317 = vunpack.c.l.b16 %v5246
    %v5318 = vunpack.c.h.b16 %v5246
    %v5319 = vunpack.c.l.b16 %v5247
    %v5320 = vunpack.c.h.b16 %v5247
    %v5321 = vunpack.c.l.b16 %v5248
    %v5322 = vunpack.c.h.b16 %v5248
    %v5323 = vunpack.c.l.b16 %v5249
    %v5324 = vunpack.c.h.b16 %v5249
    %v5325 = vunpack.c.l.b16 %v5250
    %v5326 = vunpack.c.h.b16 %v5250
    %v5327 = vunpack.c.l.b16 %v5251
    %v5328 = vunpack.c.h.b16 %v5251
    %v5329 = vunpack.c.l.b16 %v5252
    %v5330 = vunpack.c.h.b16 %v5252
    %v5331 = vunpack.c.l.b16 %v5253
    %v5332 = vunpack.c.h.b16 %v5253
    %v5333 = vunpack.c.l.b16 %v5254
    %v5334 = vunpack.c.h.b16 %v5254
    %v5335 = vunpack.c.l.b16 %v5255
    %v5336 = vunpack.c.h.b16 %v5255
    %v5337 = vunpack.c.l.b16 %v5256
    %v5338 = vunpack.c.h.b16 %v5256
    %v5339 = vunpack.c.l.b16 %v5257
    %v5340 = vunpack.c.h.b16 %v5257
    %v5341 = vunpack.c.l.b16 %v5258
    %v5342 = vunpack.c.h.b16 %v5258
    %v5343 = vunpack.c.l.b16 %v5259
    %v5344 = vunpack.c.h.b16 %v5259
    %v5345 = vunpack.c.l.b16 %v5260
    %v5346 = vunpack.c.h.b16 %v5260
    %v5347 = vunpack.c.l.b16 %v5261
    %v5348 = vunpack.c.h.b16 %v5261
    %v5349 = vunpack.c.l.b16 %v5262
    %v5350 = vunpack.c.h.b16 %v5262
    %v5351 = vunpack.c.l.b16 %v5263
    %v5352 = vunpack.c.h.b16 %v5263
    %v5353 = vunpack.c.l.b16 %v5264
    %v5354 = vunpack.c.h.b16 %v5264
    %v5355 = vunpack.c.l.b16 %v5265
    %v5356 = vunpack.c.h.b16 %v5265
    %v5357 = vunpack.c.l.b16 %v5266
    %v5358 = vunpack.c.h.b16 %v5266
    %v5359 = vunpack.c.l.b16 %v5267
    %v5360 = vunpack.c.h.b16 %v5267
    %v5361 = vunpack.c.l.b16 %v5268
    %v5362 = vunpack.c.h.b16 %v5268
    %v5363 = vunpack.c.l.b16 %v5269
    %v5364 = vunpack.c.h.b16 %v5269
    %v5365 = vunpack.c.l.b16 %v5270
    %v5366 = vunpack.c.h.b16 %v5270
    %v5367 = vpack.c.b16 %v5307, %v5303
    %v5368 = vpack.c.b16 %v5308, %v5304
    %v5369 = vpack.c.b16 %v5309, %v5305
    %v5370 = vpack.c.b16 %v5310, %v5306
    %v5371 = vpack.c.b16 %v5315, %v5311
    %v5372 = vpack.c.b16 %v5316, %v5312
    %v5373 = vpack.c.b16 %v5317, %v5313
    %v5374 = vpack.c.b16 %v5318, %v5314
    %v5375 = vpack.c.b16 %v5323, %v5319
    %v5376 = vpack.c.b16 %v5324, %v5320
    %v5377 = vpack.c.b16 %v5325, %v5321
    %v5378 = vpack.c.b16 %v5326, %v5322
    %v5379 = vpack.c.b16 %v5331, %v5327
    %v5380 = vpack.c.b16 %v5332, %v5328
    %v5381 = vpack.c.b16 %v5333, %v5329
    %v5382 = vpack.c.b16 %v5334, %v5330
    %v5383 = vpack.c.b16 %v5339, %v5335
    %v5384 = vpack.c.b16 %v5340, %v5336
    %v5385 = vpack.c.b16 %v5341, %v5337
    %v5386 = vpack.c.b16 %v5342, %v5338
    %v5387 = vpack.c.b16 %v5347, %v5343
    %v5388 = vpack.c.b16 %v5348, %v5344
    %v5389 = vpack.c.b16 %v5349, %v5345
    %v5390 = vpack.c.b16 %v5350, %v5346
    %v5391 = vpack.c.b16 %v5355, %v5351
    %v5392 = vpack.c.b16 %v5356, %v5352
    %v5393 = vpack.c.b16 %v5357, %v5353
    %v5394 = vpack.c.b16 %v5358, %v5354
    %v5395 = vpack.c.b16 %v5363, %v5359
    %v5396 = vpack.c.b16 %v5364, %v5360
    %v5397 = vpack.c.b16 %v5365, %v5361
    %v5398 = vpack.c.b16 %v5366, %v5362
    %5431 = vmatprep.subr.bf16.mxu0 %v5396
    %5432 = vmatpush1.bf16.msra.mxu0 %v5395
    %5433 = vmatprep.subr.bf16.mxu0 %v5392
    %5434 = vmatpush1.bf16.msra.mxu0 %v5391
    %5435 = vmatprep.subr.bf16.mxu0 %v5388
    %5436 = vmatpush1.bf16.msra.mxu0 %v5387
    %5437 = vmatprep.subr.bf16.mxu0 %v5384
    %5438 = vmatpush1.bf16.msra.mxu0 %v5383
    %5439 = vmatprep.subr.bf16.mxu0 %v5380
    %5440 = vmatpush1.bf16.msra.mxu0 %v5379
    %5441 = vmatprep.subr.bf16.mxu0 %v5376
    %5442 = vmatpush1.bf16.msra.mxu0 %v5375
    %5443 = vmatprep.subr.bf16.mxu0 %v5372
    %5444 = vmatpush1.bf16.msra.mxu0 %v5371
    %5445 = vmatprep.subr.bf16.mxu0 %v5368
    %5446 = vmatpush1.bf16.msra.mxu0 %v5367
    %5447 = vmatprep.subr.bf16.mxu0 0
    %5448 = vmatpush2.bf16.msra.mxu0 0
    %5449 = vmatprep.subr.bf16.mxu0 0
    %5450 = vmatpush2.bf16.msra.mxu0 0
    %5451 = vmatprep.subr.bf16.mxu0 0
    %5452 = vmatpush2.bf16.msra.mxu0 0
    %5453 = vmatprep.subr.bf16.mxu0 0
    %5454 = vmatpush2.bf16.msra.mxu0 0
    %5455 = vmatprep.subr.bf16.mxu0 0
    %5456 = vmatpush2.bf16.msra.mxu0 0
    %5457 = vmatprep.subr.bf16.mxu0 0
    %5458 = vmatpush2.bf16.msra.mxu0 0
    %5459 = vmatprep.subr.bf16.mxu0 0
    %5460 = vmatpush2.bf16.msra.mxu0 0
    %5461 = vmatprep.subr.bf16.mxu0 0
    %5462 = vmatpush2.bf16.msra.mxu0 0
    %5463 = vmatprep.mubr.bf16.mxu0 0
    %5464 = vmatmul.mubr.bf16.gmra.mxu0 %v5238
    %v5465 = vpop.f32.mrf.mxu0
    %v5466 = vadd.f32 %v161, %v5465
    %v5467 = vpop.f32.mrf.mxu0
    %v5468 = vadd.f32 %v165, %v5467
    %v5469 = vpop.f32.mrf.mxu0
    %v5470 = vpop.f32.mrf.mxu0
    %5471 = vdwg.mxu0
    %5472 = vmatprep.subr.bf16.mxu0 %v5398
    %5473 = vmatpush1.bf16.msra.mxu0 %v5397
    %5474 = vmatprep.subr.bf16.mxu0 %v5394
    %5475 = vmatpush1.bf16.msra.mxu0 %v5393
    %5476 = vmatprep.subr.bf16.mxu0 %v5390
    %5477 = vmatpush1.bf16.msra.mxu0 %v5389
    %5478 = vmatprep.subr.bf16.mxu0 %v5386
    %5479 = vmatpush1.bf16.msra.mxu0 %v5385
    %5480 = vmatprep.subr.bf16.mxu0 %v5382
    %5481 = vmatpush1.bf16.msra.mxu0 %v5381
    %5482 = vmatprep.subr.bf16.mxu0 %v5378
    %5483 = vmatpush1.bf16.msra.mxu0 %v5377
    %5484 = vmatprep.subr.bf16.mxu0 %v5374
    %5485 = vmatpush1.bf16.msra.mxu0 %v5373
    %5486 = vmatprep.subr.bf16.mxu0 %v5370
    %5487 = vmatpush1.bf16.msra.mxu0 %v5369
    %5488 = vmatprep.subr.bf16.mxu0 0
    %5489 = vmatpush2.bf16.msra.mxu0 0
    %5490 = vmatprep.subr.bf16.mxu0 0
    %5491 = vmatpush2.bf16.msra.mxu0 0
    %5492 = vmatprep.subr.bf16.mxu0 0
    %5493 = vmatpush2.bf16.msra.mxu0 0
    %5494 = vmatprep.subr.bf16.mxu0 0
    %5495 = vmatpush2.bf16.msra.mxu0 0
    %5496 = vmatprep.subr.bf16.mxu0 0
    %5497 = vmatpush2.bf16.msra.mxu0 0
    %5498 = vmatprep.subr.bf16.mxu0 0
    %5499 = vmatpush2.bf16.msra.mxu0 0
    %5500 = vmatprep.subr.bf16.mxu0 0
    %5501 = vmatpush2.bf16.msra.mxu0 0
    %5502 = vmatprep.subr.bf16.mxu0 0
    %5503 = vmatpush2.bf16.msra.mxu0 0
    %5504 = vmatprep.mubr.bf16.mxu0 0
    %5505 = vmatmul.mubr.bf16.gmra.mxu0 %v5238
    %v5506 = vpop.f32.mrf.mxu0
    %v5507 = vadd.f32 %v169, %v5506
    %v5508 = vpop.f32.mrf.mxu0
    %v5509 = vadd.f32 %v173, %v5508
    %v5510 = vpop.f32.mrf.mxu0
    %v5511 = vpop.f32.mrf.mxu0
    %5512 = vdwg.mxu0
    %5514 = vset.pattern.permute.xlu0 0
    %5515 = vperm.xlu0 %5514, %v5237
    %v5516 = vpop.permute.xlu0 %5515
    %v5518 = vmul.f32 %v5516, %v695
    %v5519 = vmul.f32 %v5516, %v699
    %v5520 = vmul.f32 %v5516, %v703
    %v5521 = vmul.f32 %v5516, %v707
    %v5522 = vadd.f32 %v5466, %v5518
    %v5523 = vadd.f32 %v5468, %v5519
    %v5524 = vadd.f32 %v5507, %v5520
    %v5525 = vadd.f32 %v5509, %v5521
    %5526 = vset.pattern.permute.xlu0 1
    %5527 = vperm.xlu0 %5526, %v5237
    %v5528 = vpop.permute.xlu0 %5527
    %v5530 = vmul.f32 %v5528, %v743
    %v5531 = vmul.f32 %v5528, %v747
    %v5532 = vmul.f32 %v5528, %v751
    %v5533 = vmul.f32 %v5528, %v755
    %v5534 = vadd.f32 %v5522, %v5530
    %v5535 = vadd.f32 %v5523, %v5531
    %v5536 = vadd.f32 %v5524, %v5532
    %v5537 = vadd.f32 %v5525, %v5533
    %v5538 = vxor.u32 %v5534, 2147483648
    %v5539 = vmul.f32 %v5538, 1.442695
    %v5540 = vpow.pop %v5539
    %v5541 = vadd.f32 %v5540, 1.0
    %v5542 = vrcp.pop %v5541
    %v5543 = vmul.f32 1.0, %v5542
    %v5544 = vxor.u32 %v5535, 2147483648
    %v5545 = vmul.f32 %v5544, 1.442695
    %v5546 = vpow.pop %v5545
    %v5547 = vadd.f32 %v5546, 1.0
    %v5548 = vrcp.pop %v5547
    %v5549 = vmul.f32 1.0, %v5548
    %v5550 = vtanh.pop %v5536
    %v5551 = vxor.u32 %v5537, 2147483648
    %v5552 = vmul.f32 %v5551, 1.442695
    %v5553 = vpow.pop %v5552
    %v5554 = vadd.f32 %v5553, 1.0
    %v5555 = vrcp.pop %v5554
    %v5556 = vmul.f32 1.0, %v5555
    %v5557 = vmul.f32 %v5549, %v135
    %v5558 = vmul.f32 %v5543, %v5550
    %v5559 = vadd.f32 %v5557, %v5558
    %v5560 = vtanh.pop %v5559
    %v5561 = vmul.f32 %v5556, %v5560
    %v5562 = vpack.c.bf16 %v5561, %v5561
    %v5563 = vld [vmem:[#allocation10] sm:$0xff]
    %v5564 = vld [vmem:[#allocation10 + $0x8] sm:$0xff]
    %v5565 = vld [vmem:[#allocation10 + $0x10] sm:$0xff]
    %v5566 = vld [vmem:[#allocation10 + $0x18] sm:$0xff]
    %v5567 = vld [vmem:[#allocation10 + $0x20] sm:$0xff]
    %v5568 = vld [vmem:[#allocation10 + $0x28] sm:$0xff]
    %v5569 = vld [vmem:[#allocation10 + $0x30] sm:$0xff]
    %v5570 = vld [vmem:[#allocation10 + $0x38] sm:$0xff]
    %v5571 = vld [vmem:[#allocation10 + $0x40] sm:$0xff]
    %v5572 = vld [vmem:[#allocation10 + $0x48] sm:$0xff]
    %v5573 = vld [vmem:[#allocation10 + $0x50] sm:$0xff]
    %v5574 = vld [vmem:[#allocation10 + $0x58] sm:$0xff]
    %v5575 = vld [vmem:[#allocation10 + $0x60] sm:$0xff]
    %v5576 = vld [vmem:[#allocation10 + $0x68] sm:$0xff]
    %v5577 = vld [vmem:[#allocation10 + $0x70] sm:$0xff]
    %v5578 = vld [vmem:[#allocation10 + $0x78] sm:$0xff]
    %v5595 = vunpack.c.l.b16 %v5563
    %v5596 = vunpack.c.h.b16 %v5563
    %v5597 = vunpack.c.l.b16 %v5564
    %v5598 = vunpack.c.h.b16 %v5564
    %v5599 = vunpack.c.l.b16 %v5565
    %v5600 = vunpack.c.h.b16 %v5565
    %v5601 = vunpack.c.l.b16 %v5566
    %v5602 = vunpack.c.h.b16 %v5566
    %v5603 = vunpack.c.l.b16 %v5567
    %v5604 = vunpack.c.h.b16 %v5567
    %v5605 = vunpack.c.l.b16 %v5568
    %v5606 = vunpack.c.h.b16 %v5568
    %v5607 = vunpack.c.l.b16 %v5569
    %v5608 = vunpack.c.h.b16 %v5569
    %v5609 = vunpack.c.l.b16 %v5570
    %v5610 = vunpack.c.h.b16 %v5570
    %v5611 = vunpack.c.l.b16 %v5571
    %v5612 = vunpack.c.h.b16 %v5571
    %v5613 = vunpack.c.l.b16 %v5572
    %v5614 = vunpack.c.h.b16 %v5572
    %v5615 = vunpack.c.l.b16 %v5573
    %v5616 = vunpack.c.h.b16 %v5573
    %v5617 = vunpack.c.l.b16 %v5574
    %v5618 = vunpack.c.h.b16 %v5574
    %v5619 = vunpack.c.l.b16 %v5575
    %v5620 = vunpack.c.h.b16 %v5575
    %v5621 = vunpack.c.l.b16 %v5576
    %v5622 = vunpack.c.h.b16 %v5576
    %v5623 = vunpack.c.l.b16 %v5577
    %v5624 = vunpack.c.h.b16 %v5577
    %v5625 = vunpack.c.l.b16 %v5578
    %v5626 = vunpack.c.h.b16 %v5578
    %v5627 = vpack.c.b16 %v5597, %v5595
    %v5628 = vpack.c.b16 %v5598, %v5596
    %v5629 = vpack.c.b16 %v5601, %v5599
    %v5630 = vpack.c.b16 %v5602, %v5600
    %v5631 = vpack.c.b16 %v5605, %v5603
    %v5632 = vpack.c.b16 %v5606, %v5604
    %v5633 = vpack.c.b16 %v5609, %v5607
    %v5634 = vpack.c.b16 %v5610, %v5608
    %v5635 = vpack.c.b16 %v5613, %v5611
    %v5636 = vpack.c.b16 %v5614, %v5612
    %v5637 = vpack.c.b16 %v5617, %v5615
    %v5638 = vpack.c.b16 %v5618, %v5616
    %v5639 = vpack.c.b16 %v5621, %v5619
    %v5640 = vpack.c.b16 %v5622, %v5620
    %v5641 = vpack.c.b16 %v5625, %v5623
    %v5642 = vpack.c.b16 %v5626, %v5624
    %5659 = vmatprep.subr.bf16.mxu0 %v5642
    %5660 = vmatpush1.bf16.msra.mxu0 %v5641
    %5661 = vmatprep.subr.bf16.mxu0 %v5640
    %5662 = vmatpush1.bf16.msra.mxu0 %v5639
    %5663 = vmatprep.subr.bf16.mxu0 %v5638
    %5664 = vmatpush1.bf16.msra.mxu0 %v5637
    %5665 = vmatprep.subr.bf16.mxu0 %v5636
    %5666 = vmatpush1.bf16.msra.mxu0 %v5635
    %5667 = vmatprep.subr.bf16.mxu0 %v5634
    %5668 = vmatpush1.bf16.msra.mxu0 %v5633
    %5669 = vmatprep.subr.bf16.mxu0 %v5632
    %5670 = vmatpush1.bf16.msra.mxu0 %v5631
    %5671 = vmatprep.subr.bf16.mxu0 %v5630
    %5672 = vmatpush1.bf16.msra.mxu0 %v5629
    %5673 = vmatprep.subr.bf16.mxu0 %v5628
    %5674 = vmatpush1.bf16.msra.mxu0 %v5627
    %5675 = vmatprep.subr.bf16.mxu0 0
    %5676 = vmatpush2.bf16.msra.mxu0 0
    %5677 = vmatprep.subr.bf16.mxu0 0
    %5678 = vmatpush2.bf16.msra.mxu0 0
    %5679 = vmatprep.subr.bf16.mxu0 0
    %5680 = vmatpush2.bf16.msra.mxu0 0
    %5681 = vmatprep.subr.bf16.mxu0 0
    %5682 = vmatpush2.bf16.msra.mxu0 0
    %5683 = vmatprep.subr.bf16.mxu0 0
    %5684 = vmatpush2.bf16.msra.mxu0 0
    %5685 = vmatprep.subr.bf16.mxu0 0
    %5686 = vmatpush2.bf16.msra.mxu0 0
    %5687 = vmatprep.subr.bf16.mxu0 0
    %5688 = vmatpush2.bf16.msra.mxu0 0
    %5689 = vmatprep.subr.bf16.mxu0 0
    %5690 = vmatpush2.bf16.msra.mxu0 0
    %5691 = vmatprep.mubr.bf16.mxu0 0
    %5692 = vmatmul.mubr.bf16.gmra.mxu0 %v5562
    %v5693 = vpop.f32.mrf.mxu0
    %v5694 = vadd.f32 %v183, %v5693
    %v5695 = vpop.f32.mrf.mxu0
    %v5696 = vadd.f32 %v187, %v5695
    %v5697 = vpop.f32.mrf.mxu0
    %v5698 = vpop.f32.mrf.mxu0
    %5699 = vdwg.mxu0
    %v5700 = vxor.u32 %v5694, 2147483648
    %v5701 = vxor.u32 %v5696, 2147483648
    %v5702 = vmul.f32 %v5700, 1.442695
    %v5703 = vpow.pop %v5702
    %v5704 = vmul.f32 %v5701, 1.442695
    %v5705 = vpow.pop %v5704
    %v5706 = vadd.f32 %v5703, 1.0
    %v5707 = vadd.f32 %v5705, 1.0
    %v5708 = vrcp.pop %v5706
    %v5709 = vmul.f32 1.0, %v5708
    %v5710 = vrcp.pop %v5707
    %v5711 = vmul.f32 1.0, %v5710
    %v5712 = vrot.slane %v5709, 4
    %v5713 = vadd.f32 %v5709, %v5712
    %v5714 = vrot.slane %v5713, 2
    %v5715 = vadd.f32 %v5713, %v5714
    %v5716 = vrot.slane %v5715, 1
    %v5717 = vadd.f32 %v5715, %v5716
    %v5718 = vrot.slane %v5711, 4
    %v5719 = vadd.f32 %v5711, %v5718
    %v5720 = vrot.slane %v5719, 2
    %v5721 = vadd.f32 %v5719, %v5720
    %v5722 = vrot.slane %v5721, 1
    %v5723 = vadd.f32 %v5721, %v5722
    %v5724 = vmul.f32 %v5717, %v251
    %v5725 = vmul.f32 %v5723, %v251
    %v5726 = vmul.f32 %v5709, %v5709
    %v5727 = vmul.f32 %v5711, %v5711
    %v5728 = vrot.slane %v5726, 4
    %v5729 = vadd.f32 %v5726, %v5728
    %v5730 = vrot.slane %v5729, 2
    %v5731 = vadd.f32 %v5729, %v5730
    %v5732 = vrot.slane %v5731, 1
    %v5733 = vadd.f32 %v5731, %v5732
    %v5734 = vrot.slane %v5727, 4
    %v5735 = vadd.f32 %v5727, %v5734
    %v5736 = vrot.slane %v5735, 2
    %v5737 = vadd.f32 %v5735, %v5736
    %v5738 = vrot.slane %v5737, 1
    %v5739 = vadd.f32 %v5737, %v5738
    %v5740 = vmul.f32 %v5733, %v251
    %v5741 = vmul.f32 %v5739, %v251
    %v5742 = vmul.f32 %v5724, %v5724
    %v5743 = vmul.f32 %v5725, %v5725
    %v5744 = vsub.f32 %v5740, %v5742
    %v5745 = vsub.f32 %v5741, %v5743
    %v5746 = vmax.f32 %v5744, 0.0
    %v5747 = vmax.f32 %v5745, 0.0
    %v5748 = vadd.f32 %v5746, 1e-05
    %v5749 = vadd.f32 %v5747, 1e-05
    %v5750 = vrsqrt.pop %v5748
    %v5751 = vrsqrt.pop %v5749
    %v5754 = vcombine.low %v5750, %v5751
    %v5756 = vunpack.c.l.s4 1966171168
    %v5757 = vunpack.c.0.s8 %v5756
    %v5758 = vlaneseq
    %v5759 = vshrl.u32 %v5758, 7
    %v5760 = vsub.s32 %v5757, %v5759
    %v5761 = vrot.slane %v5754, %v5760
    %v5763 = vunpack.c.l.s4 1966171168
    %v5764 = vunpack.c.0.s8 %v5763
    %v5765 = vlaneseq
    %v5766 = vshrl.u32 %v5765, 7
    %v5767 = vsub.s32 %v5764, %v5766
    %v5768 = vrot.slane %v5761, %v5767
    %v5770 = vmul.f32 %v140, %v5768
    %v5772 = vlaneseq
    %v5773 = vshrl.u32 %v5772, 7
    %v5774 = vsub.s32 0, %v5773
    %v5775 = vrot.slane %v5770, %v5774
    %v5776 = vlaneseq
    %v5777 = vshrl.u32 %v5776, 7
    %v5778 = vsub.s32 1, %v5777
    %v5779 = vrot.slane %v5770, %v5778
    %v5782 = vmul.f32 %v5724, %v5775
    %v5783 = vmul.f32 %v5725, %v5779
    %v5786 = vcombine.low %v5782, %v5783
    %v5788 = vunpack.c.l.s4 1966171168
    %v5789 = vunpack.c.0.s8 %v5788
    %v5790 = vlaneseq
    %v5791 = vshrl.u32 %v5790, 7
    %v5792 = vsub.s32 %v5789, %v5791
    %v5793 = vrot.slane %v5786, %v5792
    %v5795 = vunpack.c.l.s4 1966171168
    %v5796 = vunpack.c.0.s8 %v5795
    %v5797 = vlaneseq
    %v5798 = vshrl.u32 %v5797, 7
    %v5799 = vsub.s32 %v5796, %v5798
    %v5800 = vrot.slane %v5793, %v5799
    %v5802 = vsub.f32 %v141, %v5800
    %v5803 = vmul.f32 %v5709, %v5775
    %v5804 = vmul.f32 %v5711, %v5779
    %v5806 = vlaneseq
    %v5807 = vshrl.u32 %v5806, 7
    %v5808 = vsub.s32 0, %v5807
    %v5809 = vrot.slane %v5802, %v5808
    %v5810 = vlaneseq
    %v5811 = vshrl.u32 %v5810, 7
    %v5812 = vsub.s32 1, %v5811
    %v5813 = vrot.slane %v5802, %v5812
    %v5816 = vadd.f32 %v5803, %v5809
    %v5817 = vadd.f32 %v5804, %v5813
    %v5818 = vpack.c.bf16 %v5816, %v5816
    %v5819 = vpack.c.bf16 %v5817, %v5817
    %v5820 = vld [vmem:[%s17] sm:$0xf]
    %v5821 = vld [vmem:[%s17 + $0x4] sm:$0xf]
    %v5822 = vld [vmem:[%s17 + $0x8] sm:$0xf]
    %v5823 = vld [vmem:[%s17 + $0xc] sm:$0xf]
    %v5824 = vld [vmem:[%s17 + $0x10] sm:$0xf]
    %v5825 = vld [vmem:[%s17 + $0x14] sm:$0xf]
    %v5826 = vld [vmem:[%s17 + $0x18] sm:$0xf]
    %v5827 = vld [vmem:[%s17 + $0x1c] sm:$0xf]
    %v5828 = vld [vmem:[%s17 + $0x20] sm:$0xf]
    %v5829 = vld [vmem:[%s17 + $0x24] sm:$0xf]
    %v5830 = vld [vmem:[%s17 + $0x28] sm:$0xf]
    %v5831 = vld [vmem:[%s17 + $0x2c] sm:$0xf]
    %v5832 = vld [vmem:[%s17 + $0x30] sm:$0xf]
    %v5833 = vld [vmem:[%s17 + $0x34] sm:$0xf]
    %v5834 = vld [vmem:[%s17 + $0x38] sm:$0xf]
    %v5835 = vld [vmem:[%s17 + $0x3c] sm:$0xf]
    %v5836 = vld [vmem:[%s17 + $0x40] sm:$0xf]
    %v5837 = vld [vmem:[%s17 + $0x44] sm:$0xf]
    %v5838 = vld [vmem:[%s17 + $0x48] sm:$0xf]
    %v5839 = vld [vmem:[%s17 + $0x4c] sm:$0xf]
    %v5840 = vld [vmem:[%s17 + $0x50] sm:$0xf]
    %v5841 = vld [vmem:[%s17 + $0x54] sm:$0xf]
    %v5842 = vld [vmem:[%s17 + $0x58] sm:$0xf]
    %v5843 = vld [vmem:[%s17 + $0x5c] sm:$0xf]
    %v5844 = vld [vmem:[%s17 + $0x60] sm:$0xf]
    %v5845 = vld [vmem:[%s17 + $0x64] sm:$0xf]
    %v5846 = vld [vmem:[%s17 + $0x68] sm:$0xf]
    %v5847 = vld [vmem:[%s17 + $0x6c] sm:$0xf]
    %v5848 = vld [vmem:[%s17 + $0x70] sm:$0xf]
    %v5849 = vld [vmem:[%s17 + $0x74] sm:$0xf]
    %v5850 = vld [vmem:[%s17 + $0x78] sm:$0xf]
    %v5851 = vld [vmem:[%s17 + $0x7c] sm:$0xf]
    %v5884 = vunpack.c.l.b16 %v5820
    %v5885 = vunpack.c.l.b16 %v5821
    %v5886 = vunpack.c.l.b16 %v5822
    %v5887 = vunpack.c.l.b16 %v5823
    %v5888 = vunpack.c.l.b16 %v5824
    %v5889 = vunpack.c.l.b16 %v5825
    %v5890 = vunpack.c.l.b16 %v5826
    %v5891 = vunpack.c.l.b16 %v5827
    %v5892 = vunpack.c.l.b16 %v5828
    %v5893 = vunpack.c.l.b16 %v5829
    %v5894 = vunpack.c.l.b16 %v5830
    %v5895 = vunpack.c.l.b16 %v5831
    %v5896 = vunpack.c.l.b16 %v5832
    %v5897 = vunpack.c.l.b16 %v5833
    %v5898 = vunpack.c.l.b16 %v5834
    %v5899 = vunpack.c.l.b16 %v5835
    %v5900 = vunpack.c.l.b16 %v5836
    %v5901 = vunpack.c.l.b16 %v5837
    %v5902 = vunpack.c.l.b16 %v5838
    %v5903 = vunpack.c.l.b16 %v5839
    %v5904 = vunpack.c.l.b16 %v5840
    %v5905 = vunpack.c.l.b16 %v5841
    %v5906 = vunpack.c.l.b16 %v5842
    %v5907 = vunpack.c.l.b16 %v5843
    %v5908 = vunpack.c.l.b16 %v5844
    %v5909 = vunpack.c.l.b16 %v5845
    %v5910 = vunpack.c.l.b16 %v5846
    %v5911 = vunpack.c.l.b16 %v5847
    %v5912 = vunpack.c.l.b16 %v5848
    %v5913 = vunpack.c.l.b16 %v5849
    %v5914 = vunpack.c.l.b16 %v5850
    %v5915 = vunpack.c.l.b16 %v5851
    %v5916 = vpack.c.b16 %v5885, %v5884
    %v5917 = vpack.c.b16 %v5887, %v5886
    %v5918 = vpack.c.b16 %v5889, %v5888
    %v5919 = vpack.c.b16 %v5891, %v5890
    %v5920 = vpack.c.b16 %v5893, %v5892
    %v5921 = vpack.c.b16 %v5895, %v5894
    %v5922 = vpack.c.b16 %v5897, %v5896
    %v5923 = vpack.c.b16 %v5899, %v5898
    %v5924 = vpack.c.b16 %v5901, %v5900
    %v5925 = vpack.c.b16 %v5903, %v5902
    %v5926 = vpack.c.b16 %v5905, %v5904
    %v5927 = vpack.c.b16 %v5907, %v5906
    %v5928 = vpack.c.b16 %v5909, %v5908
    %v5929 = vpack.c.b16 %v5911, %v5910
    %v5930 = vpack.c.b16 %v5913, %v5912
    %v5931 = vpack.c.b16 %v5915, %v5914
    %5948 = vmatprep.subr.bf16.mxu0 0
    %5949 = vmatpush1.bf16.msra.mxu0 %v5923
    %5950 = vmatprep.subr.bf16.mxu0 0
    %5951 = vmatpush1.bf16.msra.mxu0 %v5922
    %5952 = vmatprep.subr.bf16.mxu0 0
    %5953 = vmatpush1.bf16.msra.mxu0 %v5921
    %5954 = vmatprep.subr.bf16.mxu0 0
    %5955 = vmatpush1.bf16.msra.mxu0 %v5920
    %5956 = vmatprep.subr.bf16.mxu0 0
    %5957 = vmatpush1.bf16.msra.mxu0 %v5919
    %5958 = vmatprep.subr.bf16.mxu0 0
    %5959 = vmatpush1.bf16.msra.mxu0 %v5918
    %5960 = vmatprep.subr.bf16.mxu0 0
    %5961 = vmatpush1.bf16.msra.mxu0 %v5917
    %5962 = vmatprep.subr.bf16.mxu0 0
    %5963 = vmatpush1.bf16.msra.mxu0 %v5916
    %5964 = vmatprep.subr.bf16.mxu0 0
    %5965 = vmatpush2.bf16.msra.mxu0 %v5931
    %5966 = vmatprep.subr.bf16.mxu0 0
    %5967 = vmatpush2.bf16.msra.mxu0 %v5930
    %5968 = vmatprep.subr.bf16.mxu0 0
    %5969 = vmatpush2.bf16.msra.mxu0 %v5929
    %5970 = vmatprep.subr.bf16.mxu0 0
    %5971 = vmatpush2.bf16.msra.mxu0 %v5928
    %5972 = vmatprep.subr.bf16.mxu0 0
    %5973 = vmatpush2.bf16.msra.mxu0 %v5927
    %5974 = vmatprep.subr.bf16.mxu0 0
    %5975 = vmatpush2.bf16.msra.mxu0 %v5926
    %5976 = vmatprep.subr.bf16.mxu0 0
    %5977 = vmatpush2.bf16.msra.mxu0 %v5925
    %5978 = vmatprep.subr.bf16.mxu0 0
    %5979 = vmatpush2.bf16.msra.mxu0 %v5924
    %5980 = vmatprep.mubr.bf16.mxu0 %v5819
    %5981 = vmatmul.mubr.bf16.gmra.mxu0 %v5818
    %v5982 = vpop.f32.mrf.mxu0
    %v5983 = vadd.f32 %v195, %v5982
    %v5984 = vpop.f32.mrf.mxu0
    %v5985 = vpop.f32.mrf.mxu0
    %v5986 = vpop.f32.mrf.mxu0
    %5987 = vdwg.mxu0
    %vm5988 = vcmp.gt.f32.partialorder %v5983, 20.0
    %v5989 = vmin.f32 %v5983, 20.0
    %v5990 = vmul.f32 %v5989, 1.442695
    %v5991 = vpow.pop %v5990
    %v5992 = vadd.f32 %v5991, 1.0
    %v5993 = vlog2.pop %v5992
    %v5994 = vmul.f32 %v5993, 0.6931472
    %v5995 = vmul.f32 -0.5, %v5991
    %v5996 = vadd.f32 %v5995, 1.0
    %v5997 = vmul.f32 %v5996, %v5991
    %v5998 = vand.u32 2147483647, %v5991
    %vm5999 = vcmp.lt.f32.partialorder %v5998, 0.0004427343
    %v6000 = vsel %vm5999, %v5997, %v5994
    %v6001 = vsel %vm5988, %v5983, %v6000
    %s6002 = scalar_lea.vmem %s3, 40
    %v6003 = vld [vmem:[%s6002] sm:$0xff]
    %6005 = vrot.lane.b32.xlu0 %v6003, 4
    %v6006 = vpop.permute.xlu0 %6005
    %v6008 = vmul.f32 %v6001, %v6006
    %6010 = vrot.lane.b32.xlu0 %v6008, 124
    %v6011 = vpop.permute.xlu0 %6010
    %v6013 = vadd.f32 %v5983, %v6011
    %s6014 = scalar_lea.vmem %s19, 40
    %6015 = vst.msk [vmem:[%s6014] sm:$0xff] %vm1239, %v6013
    %6017 = vset.pattern.permute.xlu0 0
    %6018 = vperm.xlu0 %6017, %v6013
    %v6019 = vpop.permute.xlu0 %6018
    %v6021 = vmul.f32 %v6019, %v206
    %v6022 = vadd.f32 %v147, %v6021
    %6023 = vset.pattern.permute.xlu0 1
    %6024 = vperm.xlu0 %6023, %v6013
    %v6025 = vpop.permute.xlu0 %6024
    %v6027 = vmul.f32 %v6025, %v216
    %v6028 = vadd.f32 %v6022, %v6027
    %6029 = vset.pattern.permute.xlu0 2
    %6030 = vperm.xlu0 %6029, %v6013
    %v6031 = vpop.permute.xlu0 %6030
    %v6033 = vmul.f32 %v6031, %v226
    %v6034 = vadd.f32 %v6028, %v6033
    %6035 = vset.pattern.permute.xlu0 3
    %6036 = vperm.xlu0 %6035, %v6013
    %v6037 = vpop.permute.xlu0 %6036
    %v6039 = vmul.f32 %v6037, %v236
    %v6040 = vadd.f32 %v6034, %v6039
    %v6041 = vxor.u32 %v6040, 2147483648
    %v6042 = vmul.f32 %v6041, 1.442695
    %v6043 = vpow.pop %v6042
    %v6044 = vadd.f32 %v6043, 1.0
    %v6045 = vrcp.pop %v6044
    %v6046 = vmul.f32 1.0, %v6045
    %v6047 = vrot.slane %v6046, 4
    %v6048 = vadd.f32 %v6046, %v6047
    %v6049 = vrot.slane %v6048, 2
    %v6050 = vadd.f32 %v6048, %v6049
    %v6051 = vrot.slane %v6050, 1
    %v6052 = vadd.f32 %v6050, %v6051
    %v6053 = vmul.f32 %v6052, %v251
    %v6054 = vmul.f32 %v6046, %v6046
    %v6055 = vrot.slane %v6054, 4
    %v6056 = vadd.f32 %v6054, %v6055
    %v6057 = vrot.slane %v6056, 2
    %v6058 = vadd.f32 %v6056, %v6057
    %v6059 = vrot.slane %v6058, 1
    %v6060 = vadd.f32 %v6058, %v6059
    %v6061 = vmul.f32 %v6060, %v251
    %v6062 = vmul.f32 %v6053, %v6053
    %v6063 = vsub.f32 %v6061, %v6062
    %v6064 = vmax.f32 %v6063, 0.0
    %v6065 = vadd.f32 %v6064, 1e-05
    %v6066 = vrsqrt.pop %v6065
    %v6067 = vmul.f32 %v138, %v6066
    %v6068 = vmul.f32 %v6053, %v6067
    %v6069 = vsub.f32 %v139, %v6068
    %v6071 = vlaneseq
    %v6072 = vshrl.u32 %v6071, 7
    %v6073 = vsub.s32 0, %v6072
    %v6074 = vrot.slane %v6067, %v6073
    %v6076 = vmul.f32 %v6046, %v6074
    %v6078 = vlaneseq
    %v6079 = vshrl.u32 %v6078, 7
    %v6080 = vsub.s32 0, %v6079
    %v6081 = vrot.slane %v6069, %v6080
    %v6083 = vadd.f32 %v6076, %v6081
    %v6084 = vpack.c.bf16 %v6083, %v6083
    %v6085 = vld [vmem:[%s8] sm:$0xf]
    %v6086 = vld [vmem:[%s8 + $0x4] sm:$0xf]
    %v6087 = vld [vmem:[%s8 + $0x8] sm:$0xf]
    %v6088 = vld [vmem:[%s8 + $0xc] sm:$0xf]
    %v6089 = vld [vmem:[%s8 + $0x10] sm:$0xf]
    %v6090 = vld [vmem:[%s8 + $0x14] sm:$0xf]
    %v6091 = vld [vmem:[%s8 + $0x18] sm:$0xf]
    %v6092 = vld [vmem:[%s8 + $0x1c] sm:$0xf]
    %v6093 = vld [vmem:[%s8 + $0x20] sm:$0xf]
    %v6094 = vld [vmem:[%s8 + $0x24] sm:$0xf]
    %v6095 = vld [vmem:[%s8 + $0x28] sm:$0xf]
    %v6096 = vld [vmem:[%s8 + $0x2c] sm:$0xf]
    %v6097 = vld [vmem:[%s8 + $0x30] sm:$0xf]
    %v6098 = vld [vmem:[%s8 + $0x34] sm:$0xf]
    %v6099 = vld [vmem:[%s8 + $0x38] sm:$0xf]
    %v6100 = vld [vmem:[%s8 + $0x3c] sm:$0xf]
    %v6117 = vunpack.c.l.b16 %v6085
    %v6118 = vunpack.c.l.b16 %v6086
    %v6119 = vunpack.c.l.b16 %v6087
    %v6120 = vunpack.c.l.b16 %v6088
    %v6121 = vunpack.c.l.b16 %v6089
    %v6122 = vunpack.c.l.b16 %v6090
    %v6123 = vunpack.c.l.b16 %v6091
    %v6124 = vunpack.c.l.b16 %v6092
    %v6125 = vunpack.c.l.b16 %v6093
    %v6126 = vunpack.c.l.b16 %v6094
    %v6127 = vunpack.c.l.b16 %v6095
    %v6128 = vunpack.c.l.b16 %v6096
    %v6129 = vunpack.c.l.b16 %v6097
    %v6130 = vunpack.c.l.b16 %v6098
    %v6131 = vunpack.c.l.b16 %v6099
    %v6132 = vunpack.c.l.b16 %v6100
    %v6133 = vpack.c.b16 %v6118, %v6117
    %v6134 = vpack.c.b16 %v6120, %v6119
    %v6135 = vpack.c.b16 %v6122, %v6121
    %v6136 = vpack.c.b16 %v6124, %v6123
    %v6137 = vpack.c.b16 %v6126, %v6125
    %v6138 = vpack.c.b16 %v6128, %v6127
    %v6139 = vpack.c.b16 %v6130, %v6129
    %v6140 = vpack.c.b16 %v6132, %v6131
    %6149 = vmatprep.subr.bf16.mxu0 0
    %6150 = vmatpush1.bf16.msra.mxu0 %v6140
    %6151 = vmatprep.subr.bf16.mxu0 0
    %6152 = vmatpush1.bf16.msra.mxu0 %v6139
    %6153 = vmatprep.subr.bf16.mxu0 0
    %6154 = vmatpush1.bf16.msra.mxu0 %v6138
    %6155 = vmatprep.subr.bf16.mxu0 0
    %6156 = vmatpush1.bf16.msra.mxu0 %v6137
    %6157 = vmatprep.subr.bf16.mxu0 0
    %6158 = vmatpush1.bf16.msra.mxu0 %v6136
    %6159 = vmatprep.subr.bf16.mxu0 0
    %6160 = vmatpush1.bf16.msra.mxu0 %v6135
    %6161 = vmatprep.subr.bf16.mxu0 0
    %6162 = vmatpush1.bf16.msra.mxu0 %v6134
    %6163 = vmatprep.subr.bf16.mxu0 0
    %6164 = vmatpush1.bf16.msra.mxu0 %v6133
    %6165 = vmatprep.subr.bf16.mxu0 0
    %6166 = vmatpush2.bf16.msra.mxu0 0
    %6167 = vmatprep.subr.bf16.mxu0 0
    %6168 = vmatpush2.bf16.msra.mxu0 0
    %6169 = vmatprep.subr.bf16.mxu0 0
    %6170 = vmatpush2.bf16.msra.mxu0 0
    %6171 = vmatprep.subr.bf16.mxu0 0
    %6172 = vmatpush2.bf16.msra.mxu0 0
    %6173 = vmatprep.subr.bf16.mxu0 0
    %6174 = vmatpush2.bf16.msra.mxu0 0
    %6175 = vmatprep.subr.bf16.mxu0 0
    %6176 = vmatpush2.bf16.msra.mxu0 0
    %6177 = vmatprep.subr.bf16.mxu0 0
    %6178 = vmatpush2.bf16.msra.mxu0 0
    %6179 = vmatprep.subr.bf16.mxu0 0
    %6180 = vmatpush2.bf16.msra.mxu0 0
    %6181 = vmatprep.mubr.bf16.mxu0 0
    %6182 = vmatmul.mubr.bf16.gmra.mxu0 %v6084
    %v6183 = vpop.f32.mrf.mxu0
    %v6184 = vadd.f32 %v154, %v6183
    %v6185 = vpop.f32.mrf.mxu0
    %v6186 = vpop.f32.mrf.mxu0
    %v6187 = vpop.f32.mrf.mxu0
    %6188 = vdwg.mxu0
    %s6189 = scalar_lea.vmem %s2, 48
    %v6190 = vld [vmem:[%s6189] sm:$0xff]
    %v6191 = vmax.f32 %v6190, -1.0
    %v6192 = vmin.f32 %v6191, 1.0
    %v6193 = vpack.c.bf16 %v6184, %v6184
    %v6194 = vld [vmem:[%s11] sm:$0xff]
    %v6195 = vld [vmem:[%s11 + $0x8] sm:$0xff]
    %v6196 = vld [vmem:[%s11 + $0x10] sm:$0xff]
    %v6197 = vld [vmem:[%s11 + $0x18] sm:$0xff]
    %v6198 = vld [vmem:[%s11 + $0x20] sm:$0xff]
    %v6199 = vld [vmem:[%s11 + $0x28] sm:$0xff]
    %v6200 = vld [vmem:[%s11 + $0x30] sm:$0xff]
    %v6201 = vld [vmem:[%s11 + $0x38] sm:$0xff]
    %v6202 = vld [vmem:[%s11 + $0x40] sm:$0xff]
    %v6203 = vld [vmem:[%s11 + $0x48] sm:$0xff]
    %v6204 = vld [vmem:[%s11 + $0x50] sm:$0xff]
    %v6205 = vld [vmem:[%s11 + $0x58] sm:$0xff]
    %v6206 = vld [vmem:[%s11 + $0x60] sm:$0xff]
    %v6207 = vld [vmem:[%s11 + $0x68] sm:$0xff]
    %v6208 = vld [vmem:[%s11 + $0x70] sm:$0xff]
    %v6209 = vld [vmem:[%s11 + $0x78] sm:$0xff]
    %v6210 = vld [vmem:[%s11 + $0x80] sm:$0xff]
    %v6211 = vld [vmem:[%s11 + $0x88] sm:$0xff]
    %v6212 = vld [vmem:[%s11 + $0x90] sm:$0xff]
    %v6213 = vld [vmem:[%s11 + $0x98] sm:$0xff]
    %v6214 = vld [vmem:[%s11 + $0xa0] sm:$0xff]
    %v6215 = vld [vmem:[%s11 + $0xa8] sm:$0xff]
    %v6216 = vld [vmem:[%s11 + $0xb0] sm:$0xff]
    %v6217 = vld [vmem:[%s11 + $0xb8] sm:$0xff]
    %v6218 = vld [vmem:[%s11 + $0xc0] sm:$0xff]
    %v6219 = vld [vmem:[%s11 + $0xc8] sm:$0xff]
    %v6220 = vld [vmem:[%s11 + $0xd0] sm:$0xff]
    %v6221 = vld [vmem:[%s11 + $0xd8] sm:$0xff]
    %v6222 = vld [vmem:[%s11 + $0xe0] sm:$0xff]
    %v6223 = vld [vmem:[%s11 + $0xe8] sm:$0xff]
    %v6224 = vld [vmem:[%s11 + $0xf0] sm:$0xff]
    %v6225 = vld [vmem:[%s11 + $0xf8] sm:$0xff]
    %v6258 = vunpack.c.l.b16 %v6194
    %v6259 = vunpack.c.h.b16 %v6194
    %v6260 = vunpack.c.l.b16 %v6195
    %v6261 = vunpack.c.h.b16 %v6195
    %v6262 = vunpack.c.l.b16 %v6196
    %v6263 = vunpack.c.h.b16 %v6196
    %v6264 = vunpack.c.l.b16 %v6197
    %v6265 = vunpack.c.h.b16 %v6197
    %v6266 = vunpack.c.l.b16 %v6198
    %v6267 = vunpack.c.h.b16 %v6198
    %v6268 = vunpack.c.l.b16 %v6199
    %v6269 = vunpack.c.h.b16 %v6199
    %v6270 = vunpack.c.l.b16 %v6200
    %v6271 = vunpack.c.h.b16 %v6200
    %v6272 = vunpack.c.l.b16 %v6201
    %v6273 = vunpack.c.h.b16 %v6201
    %v6274 = vunpack.c.l.b16 %v6202
    %v6275 = vunpack.c.h.b16 %v6202
    %v6276 = vunpack.c.l.b16 %v6203
    %v6277 = vunpack.c.h.b16 %v6203
    %v6278 = vunpack.c.l.b16 %v6204
    %v6279 = vunpack.c.h.b16 %v6204
    %v6280 = vunpack.c.l.b16 %v6205
    %v6281 = vunpack.c.h.b16 %v6205
    %v6282 = vunpack.c.l.b16 %v6206
    %v6283 = vunpack.c.h.b16 %v6206
    %v6284 = vunpack.c.l.b16 %v6207
    %v6285 = vunpack.c.h.b16 %v6207
    %v6286 = vunpack.c.l.b16 %v6208
    %v6287 = vunpack.c.h.b16 %v6208
    %v6288 = vunpack.c.l.b16 %v6209
    %v6289 = vunpack.c.h.b16 %v6209
    %v6290 = vunpack.c.l.b16 %v6210
    %v6291 = vunpack.c.h.b16 %v6210
    %v6292 = vunpack.c.l.b16 %v6211
    %v6293 = vunpack.c.h.b16 %v6211
    %v6294 = vunpack.c.l.b16 %v6212
    %v6295 = vunpack.c.h.b16 %v6212
    %v6296 = vunpack.c.l.b16 %v6213
    %v6297 = vunpack.c.h.b16 %v6213
    %v6298 = vunpack.c.l.b16 %v6214
    %v6299 = vunpack.c.h.b16 %v6214
    %v6300 = vunpack.c.l.b16 %v6215
    %v6301 = vunpack.c.h.b16 %v6215
    %v6302 = vunpack.c.l.b16 %v6216
    %v6303 = vunpack.c.h.b16 %v6216
    %v6304 = vunpack.c.l.b16 %v6217
    %v6305 = vunpack.c.h.b16 %v6217
    %v6306 = vunpack.c.l.b16 %v6218
    %v6307 = vunpack.c.h.b16 %v6218
    %v6308 = vunpack.c.l.b16 %v6219
    %v6309 = vunpack.c.h.b16 %v6219
    %v6310 = vunpack.c.l.b16 %v6220
    %v6311 = vunpack.c.h.b16 %v6220
    %v6312 = vunpack.c.l.b16 %v6221
    %v6313 = vunpack.c.h.b16 %v6221
    %v6314 = vunpack.c.l.b16 %v6222
    %v6315 = vunpack.c.h.b16 %v6222
    %v6316 = vunpack.c.l.b16 %v6223
    %v6317 = vunpack.c.h.b16 %v6223
    %v6318 = vunpack.c.l.b16 %v6224
    %v6319 = vunpack.c.h.b16 %v6224
    %v6320 = vunpack.c.l.b16 %v6225
    %v6321 = vunpack.c.h.b16 %v6225
    %v6322 = vpack.c.b16 %v6262, %v6258
    %v6323 = vpack.c.b16 %v6263, %v6259
    %v6324 = vpack.c.b16 %v6264, %v6260
    %v6325 = vpack.c.b16 %v6265, %v6261
    %v6326 = vpack.c.b16 %v6270, %v6266
    %v6327 = vpack.c.b16 %v6271, %v6267
    %v6328 = vpack.c.b16 %v6272, %v6268
    %v6329 = vpack.c.b16 %v6273, %v6269
    %v6330 = vpack.c.b16 %v6278, %v6274
    %v6331 = vpack.c.b16 %v6279, %v6275
    %v6332 = vpack.c.b16 %v6280, %v6276
    %v6333 = vpack.c.b16 %v6281, %v6277
    %v6334 = vpack.c.b16 %v6286, %v6282
    %v6335 = vpack.c.b16 %v6287, %v6283
    %v6336 = vpack.c.b16 %v6288, %v6284
    %v6337 = vpack.c.b16 %v6289, %v6285
    %v6338 = vpack.c.b16 %v6294, %v6290
    %v6339 = vpack.c.b16 %v6295, %v6291
    %v6340 = vpack.c.b16 %v6296, %v6292
    %v6341 = vpack.c.b16 %v6297, %v6293
    %v6342 = vpack.c.b16 %v6302, %v6298
    %v6343 = vpack.c.b16 %v6303, %v6299
    %v6344 = vpack.c.b16 %v6304, %v6300
    %v6345 = vpack.c.b16 %v6305, %v6301
    %v6346 = vpack.c.b16 %v6310, %v6306
    %v6347 = vpack.c.b16 %v6311, %v6307
    %v6348 = vpack.c.b16 %v6312, %v6308
    %v6349 = vpack.c.b16 %v6313, %v6309
    %v6350 = vpack.c.b16 %v6318, %v6314
    %v6351 = vpack.c.b16 %v6319, %v6315
    %v6352 = vpack.c.b16 %v6320, %v6316
    %v6353 = vpack.c.b16 %v6321, %v6317
    %6386 = vmatprep.subr.bf16.mxu0 %v6351
    %6387 = vmatpush1.bf16.msra.mxu0 %v6350
    %6388 = vmatprep.subr.bf16.mxu0 %v6347
    %6389 = vmatpush1.bf16.msra.mxu0 %v6346
    %6390 = vmatprep.subr.bf16.mxu0 %v6343
    %6391 = vmatpush1.bf16.msra.mxu0 %v6342
    %6392 = vmatprep.subr.bf16.mxu0 %v6339
    %6393 = vmatpush1.bf16.msra.mxu0 %v6338
    %6394 = vmatprep.subr.bf16.mxu0 %v6335
    %6395 = vmatpush1.bf16.msra.mxu0 %v6334
    %6396 = vmatprep.subr.bf16.mxu0 %v6331
    %6397 = vmatpush1.bf16.msra.mxu0 %v6330
    %6398 = vmatprep.subr.bf16.mxu0 %v6327
    %6399 = vmatpush1.bf16.msra.mxu0 %v6326
    %6400 = vmatprep.subr.bf16.mxu0 %v6323
    %6401 = vmatpush1.bf16.msra.mxu0 %v6322
    %6402 = vmatprep.subr.bf16.mxu0 0
    %6403 = vmatpush2.bf16.msra.mxu0 0
    %6404 = vmatprep.subr.bf16.mxu0 0
    %6405 = vmatpush2.bf16.msra.mxu0 0
    %6406 = vmatprep.subr.bf16.mxu0 0
    %6407 = vmatpush2.bf16.msra.mxu0 0
    %6408 = vmatprep.subr.bf16.mxu0 0
    %6409 = vmatpush2.bf16.msra.mxu0 0
    %6410 = vmatprep.subr.bf16.mxu0 0
    %6411 = vmatpush2.bf16.msra.mxu0 0
    %6412 = vmatprep.subr.bf16.mxu0 0
    %6413 = vmatpush2.bf16.msra.mxu0 0
    %6414 = vmatprep.subr.bf16.mxu0 0
    %6415 = vmatpush2.bf16.msra.mxu0 0
    %6416 = vmatprep.subr.bf16.mxu0 0
    %6417 = vmatpush2.bf16.msra.mxu0 0
    %6418 = vmatprep.mubr.bf16.mxu0 0
    %6419 = vmatmul.mubr.bf16.gmra.mxu0 %v6193
    %v6420 = vpop.f32.mrf.mxu0
    %v6421 = vadd.f32 %v161, %v6420
    %v6422 = vpop.f32.mrf.mxu0
    %v6423 = vadd.f32 %v165, %v6422
    %v6424 = vpop.f32.mrf.mxu0
    %v6425 = vpop.f32.mrf.mxu0
    %6426 = vdwg.mxu0
    %6427 = vmatprep.subr.bf16.mxu0 %v6353
    %6428 = vmatpush1.bf16.msra.mxu0 %v6352
    %6429 = vmatprep.subr.bf16.mxu0 %v6349
    %6430 = vmatpush1.bf16.msra.mxu0 %v6348
    %6431 = vmatprep.subr.bf16.mxu0 %v6345
    %6432 = vmatpush1.bf16.msra.mxu0 %v6344
    %6433 = vmatprep.subr.bf16.mxu0 %v6341
    %6434 = vmatpush1.bf16.msra.mxu0 %v6340
    %6435 = vmatprep.subr.bf16.mxu0 %v6337
    %6436 = vmatpush1.bf16.msra.mxu0 %v6336
    %6437 = vmatprep.subr.bf16.mxu0 %v6333
    %6438 = vmatpush1.bf16.msra.mxu0 %v6332
    %6439 = vmatprep.subr.bf16.mxu0 %v6329
    %6440 = vmatpush1.bf16.msra.mxu0 %v6328
    %6441 = vmatprep.subr.bf16.mxu0 %v6325
    %6442 = vmatpush1.bf16.msra.mxu0 %v6324
    %6443 = vmatprep.subr.bf16.mxu0 0
    %6444 = vmatpush2.bf16.msra.mxu0 0
    %6445 = vmatprep.subr.bf16.mxu0 0
    %6446 = vmatpush2.bf16.msra.mxu0 0
    %6447 = vmatprep.subr.bf16.mxu0 0
    %6448 = vmatpush2.bf16.msra.mxu0 0
    %6449 = vmatprep.subr.bf16.mxu0 0
    %6450 = vmatpush2.bf16.msra.mxu0 0
    %6451 = vmatprep.subr.bf16.mxu0 0
    %6452 = vmatpush2.bf16.msra.mxu0 0
    %6453 = vmatprep.subr.bf16.mxu0 0
    %6454 = vmatpush2.bf16.msra.mxu0 0
    %6455 = vmatprep.subr.bf16.mxu0 0
    %6456 = vmatpush2.bf16.msra.mxu0 0
    %6457 = vmatprep.subr.bf16.mxu0 0
    %6458 = vmatpush2.bf16.msra.mxu0 0
    %6459 = vmatprep.mubr.bf16.mxu0 0
    %6460 = vmatmul.mubr.bf16.gmra.mxu0 %v6193
    %v6461 = vpop.f32.mrf.mxu0
    %v6462 = vadd.f32 %v169, %v6461
    %v6463 = vpop.f32.mrf.mxu0
    %v6464 = vadd.f32 %v173, %v6463
    %v6465 = vpop.f32.mrf.mxu0
    %v6466 = vpop.f32.mrf.mxu0
    %6467 = vdwg.mxu0
    %6469 = vset.pattern.permute.xlu0 0
    %6470 = vperm.xlu0 %6469, %v6192
    %v6471 = vpop.permute.xlu0 %6470
    %v6473 = vmul.f32 %v6471, %v695
    %v6474 = vmul.f32 %v6471, %v699
    %v6475 = vmul.f32 %v6471, %v703
    %v6476 = vmul.f32 %v6471, %v707
    %v6477 = vadd.f32 %v6421, %v6473
    %v6478 = vadd.f32 %v6423, %v6474
    %v6479 = vadd.f32 %v6462, %v6475
    %v6480 = vadd.f32 %v6464, %v6476
    %6481 = vset.pattern.permute.xlu0 1
    %6482 = vperm.xlu0 %6481, %v6192
    %v6483 = vpop.permute.xlu0 %6482
    %v6485 = vmul.f32 %v6483, %v743
    %v6486 = vmul.f32 %v6483, %v747
    %v6487 = vmul.f32 %v6483, %v751
    %v6488 = vmul.f32 %v6483, %v755
    %v6489 = vadd.f32 %v6477, %v6485
    %v6490 = vadd.f32 %v6478, %v6486
    %v6491 = vadd.f32 %v6479, %v6487
    %v6492 = vadd.f32 %v6480, %v6488
    %v6493 = vxor.u32 %v6489, 2147483648
    %v6494 = vmul.f32 %v6493, 1.442695
    %v6495 = vpow.pop %v6494
    %v6496 = vadd.f32 %v6495, 1.0
    %v6497 = vrcp.pop %v6496
    %v6498 = vmul.f32 1.0, %v6497
    %v6499 = vxor.u32 %v6490, 2147483648
    %v6500 = vmul.f32 %v6499, 1.442695
    %v6501 = vpow.pop %v6500
    %v6502 = vadd.f32 %v6501, 1.0
    %v6503 = vrcp.pop %v6502
    %v6504 = vmul.f32 1.0, %v6503
    %v6505 = vtanh.pop %v6491
    %v6506 = vxor.u32 %v6492, 2147483648
    %v6507 = vmul.f32 %v6506, 1.442695
    %v6508 = vpow.pop %v6507
    %v6509 = vadd.f32 %v6508, 1.0
    %v6510 = vrcp.pop %v6509
    %v6511 = vmul.f32 1.0, %v6510
    %v6512 = vmul.f32 %v6504, %v135
    %v6513 = vmul.f32 %v6498, %v6505
    %v6514 = vadd.f32 %v6512, %v6513
    %v6515 = vtanh.pop %v6514
    %v6516 = vmul.f32 %v6511, %v6515
    %v6517 = vpack.c.bf16 %v6516, %v6516
    %v6518 = vld [vmem:[#allocation10] sm:$0xff]
    %v6519 = vld [vmem:[#allocation10 + $0x8] sm:$0xff]
    %v6520 = vld [vmem:[#allocation10 + $0x10] sm:$0xff]
    %v6521 = vld [vmem:[#allocation10 + $0x18] sm:$0xff]
    %v6522 = vld [vmem:[#allocation10 + $0x20] sm:$0xff]
    %v6523 = vld [vmem:[#allocation10 + $0x28] sm:$0xff]
    %v6524 = vld [vmem:[#allocation10 + $0x30] sm:$0xff]
    %v6525 = vld [vmem:[#allocation10 + $0x38] sm:$0xff]
    %v6526 = vld [vmem:[#allocation10 + $0x40] sm:$0xff]
    %v6527 = vld [vmem:[#allocation10 + $0x48] sm:$0xff]
    %v6528 = vld [vmem:[#allocation10 + $0x50] sm:$0xff]
    %v6529 = vld [vmem:[#allocation10 + $0x58] sm:$0xff]
    %v6530 = vld [vmem:[#allocation10 + $0x60] sm:$0xff]
    %v6531 = vld [vmem:[#allocation10 + $0x68] sm:$0xff]
    %v6532 = vld [vmem:[#allocation10 + $0x70] sm:$0xff]
    %v6533 = vld [vmem:[#allocation10 + $0x78] sm:$0xff]
    %v6550 = vunpack.c.l.b16 %v6518
    %v6551 = vunpack.c.h.b16 %v6518
    %v6552 = vunpack.c.l.b16 %v6519
    %v6553 = vunpack.c.h.b16 %v6519
    %v6554 = vunpack.c.l.b16 %v6520
    %v6555 = vunpack.c.h.b16 %v6520
    %v6556 = vunpack.c.l.b16 %v6521
    %v6557 = vunpack.c.h.b16 %v6521
    %v6558 = vunpack.c.l.b16 %v6522
    %v6559 = vunpack.c.h.b16 %v6522
    %v6560 = vunpack.c.l.b16 %v6523
    %v6561 = vunpack.c.h.b16 %v6523
    %v6562 = vunpack.c.l.b16 %v6524
    %v6563 = vunpack.c.h.b16 %v6524
    %v6564 = vunpack.c.l.b16 %v6525
    %v6565 = vunpack.c.h.b16 %v6525
    %v6566 = vunpack.c.l.b16 %v6526
    %v6567 = vunpack.c.h.b16 %v6526
    %v6568 = vunpack.c.l.b16 %v6527
    %v6569 = vunpack.c.h.b16 %v6527
    %v6570 = vunpack.c.l.b16 %v6528
    %v6571 = vunpack.c.h.b16 %v6528
    %v6572 = vunpack.c.l.b16 %v6529
    %v6573 = vunpack.c.h.b16 %v6529
    %v6574 = vunpack.c.l.b16 %v6530
    %v6575 = vunpack.c.h.b16 %v6530
    %v6576 = vunpack.c.l.b16 %v6531
    %v6577 = vunpack.c.h.b16 %v6531
    %v6578 = vunpack.c.l.b16 %v6532
    %v6579 = vunpack.c.h.b16 %v6532
    %v6580 = vunpack.c.l.b16 %v6533
    %v6581 = vunpack.c.h.b16 %v6533
    %v6582 = vpack.c.b16 %v6552, %v6550
    %v6583 = vpack.c.b16 %v6553, %v6551
    %v6584 = vpack.c.b16 %v6556, %v6554
    %v6585 = vpack.c.b16 %v6557, %v6555
    %v6586 = vpack.c.b16 %v6560, %v6558
    %v6587 = vpack.c.b16 %v6561, %v6559
    %v6588 = vpack.c.b16 %v6564, %v6562
    %v6589 = vpack.c.b16 %v6565, %v6563
    %v6590 = vpack.c.b16 %v6568, %v6566
    %v6591 = vpack.c.b16 %v6569, %v6567
    %v6592 = vpack.c.b16 %v6572, %v6570
    %v6593 = vpack.c.b16 %v6573, %v6571
    %v6594 = vpack.c.b16 %v6576, %v6574
    %v6595 = vpack.c.b16 %v6577, %v6575
    %v6596 = vpack.c.b16 %v6580, %v6578
    %v6597 = vpack.c.b16 %v6581, %v6579
    %6614 = vmatprep.subr.bf16.mxu0 %v6597
    %6615 = vmatpush1.bf16.msra.mxu0 %v6596
    %6616 = vmatprep.subr.bf16.mxu0 %v6595
    %6617 = vmatpush1.bf16.msra.mxu0 %v6594
    %6618 = vmatprep.subr.bf16.mxu0 %v6593
    %6619 = vmatpush1.bf16.msra.mxu0 %v6592
    %6620 = vmatprep.subr.bf16.mxu0 %v6591
    %6621 = vmatpush1.bf16.msra.mxu0 %v6590
    %6622 = vmatprep.subr.bf16.mxu0 %v6589
    %6623 = vmatpush1.bf16.msra.mxu0 %v6588
    %6624 = vmatprep.subr.bf16.mxu0 %v6587
    %6625 = vmatpush1.bf16.msra.mxu0 %v6586
    %6626 = vmatprep.subr.bf16.mxu0 %v6585
    %6627 = vmatpush1.bf16.msra.mxu0 %v6584
    %6628 = vmatprep.subr.bf16.mxu0 %v6583
    %6629 = vmatpush1.bf16.msra.mxu0 %v6582
    %6630 = vmatprep.subr.bf16.mxu0 0
    %6631 = vmatpush2.bf16.msra.mxu0 0
    %6632 = vmatprep.subr.bf16.mxu0 0
    %6633 = vmatpush2.bf16.msra.mxu0 0
    %6634 = vmatprep.subr.bf16.mxu0 0
    %6635 = vmatpush2.bf16.msra.mxu0 0
    %6636 = vmatprep.subr.bf16.mxu0 0
    %6637 = vmatpush2.bf16.msra.mxu0 0
    %6638 = vmatprep.subr.bf16.mxu0 0
    %6639 = vmatpush2.bf16.msra.mxu0 0
    %6640 = vmatprep.subr.bf16.mxu0 0
    %6641 = vmatpush2.bf16.msra.mxu0 0
    %6642 = vmatprep.subr.bf16.mxu0 0
    %6643 = vmatpush2.bf16.msra.mxu0 0
    %6644 = vmatprep.subr.bf16.mxu0 0
    %6645 = vmatpush2.bf16.msra.mxu0 0
    %6646 = vmatprep.mubr.bf16.mxu0 0
    %6647 = vmatmul.mubr.bf16.gmra.mxu0 %v6517
    %v6648 = vpop.f32.mrf.mxu0
    %v6649 = vadd.f32 %v183, %v6648
    %v6650 = vpop.f32.mrf.mxu0
    %v6651 = vadd.f32 %v187, %v6650
    %v6652 = vpop.f32.mrf.mxu0
    %v6653 = vpop.f32.mrf.mxu0
    %6654 = vdwg.mxu0
    %v6655 = vxor.u32 %v6649, 2147483648
    %v6656 = vxor.u32 %v6651, 2147483648
    %v6657 = vmul.f32 %v6655, 1.442695
    %v6658 = vpow.pop %v6657
    %v6659 = vmul.f32 %v6656, 1.442695
    %v6660 = vpow.pop %v6659
    %v6661 = vadd.f32 %v6658, 1.0
    %v6662 = vadd.f32 %v6660, 1.0
    %v6663 = vrcp.pop %v6661
    %v6664 = vmul.f32 1.0, %v6663
    %v6665 = vrcp.pop %v6662
    %v6666 = vmul.f32 1.0, %v6665
    %v6667 = vrot.slane %v6664, 4
    %v6668 = vadd.f32 %v6664, %v6667
    %v6669 = vrot.slane %v6668, 2
    %v6670 = vadd.f32 %v6668, %v6669
    %v6671 = vrot.slane %v6670, 1
    %v6672 = vadd.f32 %v6670, %v6671
    %v6673 = vrot.slane %v6666, 4
    %v6674 = vadd.f32 %v6666, %v6673
    %v6675 = vrot.slane %v6674, 2
    %v6676 = vadd.f32 %v6674, %v6675
    %v6677 = vrot.slane %v6676, 1
    %v6678 = vadd.f32 %v6676, %v6677
    %v6679 = vmul.f32 %v6672, %v251
    %v6680 = vmul.f32 %v6678, %v251
    %v6681 = vmul.f32 %v6664, %v6664
    %v6682 = vmul.f32 %v6666, %v6666
    %v6683 = vrot.slane %v6681, 4
    %v6684 = vadd.f32 %v6681, %v6683
    %v6685 = vrot.slane %v6684, 2
    %v6686 = vadd.f32 %v6684, %v6685
    %v6687 = vrot.slane %v6686, 1
    %v6688 = vadd.f32 %v6686, %v6687
    %v6689 = vrot.slane %v6682, 4
    %v6690 = vadd.f32 %v6682, %v6689
    %v6691 = vrot.slane %v6690, 2
    %v6692 = vadd.f32 %v6690, %v6691
    %v6693 = vrot.slane %v6692, 1
    %v6694 = vadd.f32 %v6692, %v6693
    %v6695 = vmul.f32 %v6688, %v251
    %v6696 = vmul.f32 %v6694, %v251
    %v6697 = vmul.f32 %v6679, %v6679
    %v6698 = vmul.f32 %v6680, %v6680
    %v6699 = vsub.f32 %v6695, %v6697
    %v6700 = vsub.f32 %v6696, %v6698
    %v6701 = vmax.f32 %v6699, 0.0
    %v6702 = vmax.f32 %v6700, 0.0
    %v6703 = vadd.f32 %v6701, 1e-05
    %v6704 = vadd.f32 %v6702, 1e-05
    %v6705 = vrsqrt.pop %v6703
    %v6706 = vrsqrt.pop %v6704
    %v6709 = vcombine.low %v6705, %v6706
    %v6711 = vunpack.c.l.s4 1966171168
    %v6712 = vunpack.c.0.s8 %v6711
    %v6713 = vlaneseq
    %v6714 = vshrl.u32 %v6713, 7
    %v6715 = vsub.s32 %v6712, %v6714
    %v6716 = vrot.slane %v6709, %v6715
    %v6718 = vunpack.c.l.s4 1966171168
    %v6719 = vunpack.c.0.s8 %v6718
    %v6720 = vlaneseq
    %v6721 = vshrl.u32 %v6720, 7
    %v6722 = vsub.s32 %v6719, %v6721
    %v6723 = vrot.slane %v6716, %v6722
    %v6725 = vmul.f32 %v140, %v6723
    %v6727 = vlaneseq
    %v6728 = vshrl.u32 %v6727, 7
    %v6729 = vsub.s32 0, %v6728
    %v6730 = vrot.slane %v6725, %v6729
    %v6731 = vlaneseq
    %v6732 = vshrl.u32 %v6731, 7
    %v6733 = vsub.s32 1, %v6732
    %v6734 = vrot.slane %v6725, %v6733
    %v6737 = vmul.f32 %v6679, %v6730
    %v6738 = vmul.f32 %v6680, %v6734
    %v6741 = vcombine.low %v6737, %v6738
    %v6743 = vunpack.c.l.s4 1966171168
    %v6744 = vunpack.c.0.s8 %v6743
    %v6745 = vlaneseq
    %v6746 = vshrl.u32 %v6745, 7
    %v6747 = vsub.s32 %v6744, %v6746
    %v6748 = vrot.slane %v6741, %v6747
    %v6750 = vunpack.c.l.s4 1966171168
    %v6751 = vunpack.c.0.s8 %v6750
    %v6752 = vlaneseq
    %v6753 = vshrl.u32 %v6752, 7
    %v6754 = vsub.s32 %v6751, %v6753
    %v6755 = vrot.slane %v6748, %v6754
    %v6757 = vsub.f32 %v141, %v6755
    %v6758 = vmul.f32 %v6664, %v6730
    %v6759 = vmul.f32 %v6666, %v6734
    %v6761 = vlaneseq
    %v6762 = vshrl.u32 %v6761, 7
    %v6763 = vsub.s32 0, %v6762
    %v6764 = vrot.slane %v6757, %v6763
    %v6765 = vlaneseq
    %v6766 = vshrl.u32 %v6765, 7
    %v6767 = vsub.s32 1, %v6766
    %v6768 = vrot.slane %v6757, %v6767
    %v6771 = vadd.f32 %v6758, %v6764
    %v6772 = vadd.f32 %v6759, %v6768
    %v6773 = vpack.c.bf16 %v6771, %v6771
    %v6774 = vpack.c.bf16 %v6772, %v6772
    %v6775 = vld [vmem:[%s17] sm:$0xf]
    %v6776 = vld [vmem:[%s17 + $0x4] sm:$0xf]
    %v6777 = vld [vmem:[%s17 + $0x8] sm:$0xf]
    %v6778 = vld [vmem:[%s17 + $0xc] sm:$0xf]
    %v6779 = vld [vmem:[%s17 + $0x10] sm:$0xf]
    %v6780 = vld [vmem:[%s17 + $0x14] sm:$0xf]
    %v6781 = vld [vmem:[%s17 + $0x18] sm:$0xf]
    %v6782 = vld [vmem:[%s17 + $0x1c] sm:$0xf]
    %v6783 = vld [vmem:[%s17 + $0x20] sm:$0xf]
    %v6784 = vld [vmem:[%s17 + $0x24] sm:$0xf]
    %v6785 = vld [vmem:[%s17 + $0x28] sm:$0xf]
    %v6786 = vld [vmem:[%s17 + $0x2c] sm:$0xf]
    %v6787 = vld [vmem:[%s17 + $0x30] sm:$0xf]
    %v6788 = vld [vmem:[%s17 + $0x34] sm:$0xf]
    %v6789 = vld [vmem:[%s17 + $0x38] sm:$0xf]
    %v6790 = vld [vmem:[%s17 + $0x3c] sm:$0xf]
    %v6791 = vld [vmem:[%s17 + $0x40] sm:$0xf]
    %v6792 = vld [vmem:[%s17 + $0x44] sm:$0xf]
    %v6793 = vld [vmem:[%s17 + $0x48] sm:$0xf]
    %v6794 = vld [vmem:[%s17 + $0x4c] sm:$0xf]
    %v6795 = vld [vmem:[%s17 + $0x50] sm:$0xf]
    %v6796 = vld [vmem:[%s17 + $0x54] sm:$0xf]
    %v6797 = vld [vmem:[%s17 + $0x58] sm:$0xf]
    %v6798 = vld [vmem:[%s17 + $0x5c] sm:$0xf]
    %v6799 = vld [vmem:[%s17 + $0x60] sm:$0xf]
    %v6800 = vld [vmem:[%s17 + $0x64] sm:$0xf]
    %v6801 = vld [vmem:[%s17 + $0x68] sm:$0xf]
    %v6802 = vld [vmem:[%s17 + $0x6c] sm:$0xf]
    %v6803 = vld [vmem:[%s17 + $0x70] sm:$0xf]
    %v6804 = vld [vmem:[%s17 + $0x74] sm:$0xf]
    %v6805 = vld [vmem:[%s17 + $0x78] sm:$0xf]
    %v6806 = vld [vmem:[%s17 + $0x7c] sm:$0xf]
    %v6839 = vunpack.c.l.b16 %v6775
    %v6840 = vunpack.c.l.b16 %v6776
    %v6841 = vunpack.c.l.b16 %v6777
    %v6842 = vunpack.c.l.b16 %v6778
    %v6843 = vunpack.c.l.b16 %v6779
    %v6844 = vunpack.c.l.b16 %v6780
    %v6845 = vunpack.c.l.b16 %v6781
    %v6846 = vunpack.c.l.b16 %v6782
    %v6847 = vunpack.c.l.b16 %v6783
    %v6848 = vunpack.c.l.b16 %v6784
    %v6849 = vunpack.c.l.b16 %v6785
    %v6850 = vunpack.c.l.b16 %v6786
    %v6851 = vunpack.c.l.b16 %v6787
    %v6852 = vunpack.c.l.b16 %v6788
    %v6853 = vunpack.c.l.b16 %v6789
    %v6854 = vunpack.c.l.b16 %v6790
    %v6855 = vunpack.c.l.b16 %v6791
    %v6856 = vunpack.c.l.b16 %v6792
    %v6857 = vunpack.c.l.b16 %v6793
    %v6858 = vunpack.c.l.b16 %v6794
    %v6859 = vunpack.c.l.b16 %v6795
    %v6860 = vunpack.c.l.b16 %v6796
    %v6861 = vunpack.c.l.b16 %v6797
    %v6862 = vunpack.c.l.b16 %v6798
    %v6863 = vunpack.c.l.b16 %v6799
    %v6864 = vunpack.c.l.b16 %v6800
    %v6865 = vunpack.c.l.b16 %v6801
    %v6866 = vunpack.c.l.b16 %v6802
    %v6867 = vunpack.c.l.b16 %v6803
    %v6868 = vunpack.c.l.b16 %v6804
    %v6869 = vunpack.c.l.b16 %v6805
    %v6870 = vunpack.c.l.b16 %v6806
    %v6871 = vpack.c.b16 %v6840, %v6839
    %v6872 = vpack.c.b16 %v6842, %v6841
    %v6873 = vpack.c.b16 %v6844, %v6843
    %v6874 = vpack.c.b16 %v6846, %v6845
    %v6875 = vpack.c.b16 %v6848, %v6847
    %v6876 = vpack.c.b16 %v6850, %v6849
    %v6877 = vpack.c.b16 %v6852, %v6851
    %v6878 = vpack.c.b16 %v6854, %v6853
    %v6879 = vpack.c.b16 %v6856, %v6855
    %v6880 = vpack.c.b16 %v6858, %v6857
    %v6881 = vpack.c.b16 %v6860, %v6859
    %v6882 = vpack.c.b16 %v6862, %v6861
    %v6883 = vpack.c.b16 %v6864, %v6863
    %v6884 = vpack.c.b16 %v6866, %v6865
    %v6885 = vpack.c.b16 %v6868, %v6867
    %v6886 = vpack.c.b16 %v6870, %v6869
    %6903 = vmatprep.subr.bf16.mxu0 0
    %6904 = vmatpush1.bf16.msra.mxu0 %v6878
    %6905 = vmatprep.subr.bf16.mxu0 0
    %6906 = vmatpush1.bf16.msra.mxu0 %v6877
    %6907 = vmatprep.subr.bf16.mxu0 0
    %6908 = vmatpush1.bf16.msra.mxu0 %v6876
    %6909 = vmatprep.subr.bf16.mxu0 0
    %6910 = vmatpush1.bf16.msra.mxu0 %v6875
    %6911 = vmatprep.subr.bf16.mxu0 0
    %6912 = vmatpush1.bf16.msra.mxu0 %v6874
    %6913 = vmatprep.subr.bf16.mxu0 0
    %6914 = vmatpush1.bf16.msra.mxu0 %v6873
    %6915 = vmatprep.subr.bf16.mxu0 0
    %6916 = vmatpush1.bf16.msra.mxu0 %v6872
    %6917 = vmatprep.subr.bf16.mxu0 0
    %6918 = vmatpush1.bf16.msra.mxu0 %v6871
    %6919 = vmatprep.subr.bf16.mxu0 0
    %6920 = vmatpush2.bf16.msra.mxu0 %v6886
    %6921 = vmatprep.subr.bf16.mxu0 0
    %6922 = vmatpush2.bf16.msra.mxu0 %v6885
    %6923 = vmatprep.subr.bf16.mxu0 0
    %6924 = vmatpush2.bf16.msra.mxu0 %v6884
    %6925 = vmatprep.subr.bf16.mxu0 0
    %6926 = vmatpush2.bf16.msra.mxu0 %v6883
    %6927 = vmatprep.subr.bf16.mxu0 0
    %6928 = vmatpush2.bf16.msra.mxu0 %v6882
    %6929 = vmatprep.subr.bf16.mxu0 0
    %6930 = vmatpush2.bf16.msra.mxu0 %v6881
    %6931 = vmatprep.subr.bf16.mxu0 0
    %6932 = vmatpush2.bf16.msra.mxu0 %v6880
    %6933 = vmatprep.subr.bf16.mxu0 0
    %6934 = vmatpush2.bf16.msra.mxu0 %v6879
    %6935 = vmatprep.mubr.bf16.mxu0 %v6774
    %6936 = vmatmul.mubr.bf16.gmra.mxu0 %v6773
    %v6937 = vpop.f32.mrf.mxu0
    %v6938 = vadd.f32 %v195, %v6937
    %v6939 = vpop.f32.mrf.mxu0
    %v6940 = vpop.f32.mrf.mxu0
    %v6941 = vpop.f32.mrf.mxu0
    %6942 = vdwg.mxu0
    %vm6943 = vcmp.gt.f32.partialorder %v6938, 20.0
    %v6944 = vmin.f32 %v6938, 20.0
    %v6945 = vmul.f32 %v6944, 1.442695
    %v6946 = vpow.pop %v6945
    %v6947 = vadd.f32 %v6946, 1.0
    %v6948 = vlog2.pop %v6947
    %v6949 = vmul.f32 %v6948, 0.6931472
    %v6950 = vmul.f32 -0.5, %v6946
    %v6951 = vadd.f32 %v6950, 1.0
    %v6952 = vmul.f32 %v6951, %v6946
    %v6953 = vand.u32 2147483647, %v6946
    %vm6954 = vcmp.lt.f32.partialorder %v6953, 0.0004427343
    %v6955 = vsel %vm6954, %v6952, %v6949
    %v6956 = vsel %vm6943, %v6938, %v6955
    %s6957 = scalar_lea.vmem %s3, 48
    %v6958 = vld [vmem:[%s6957] sm:$0xff]
    %6960 = vrot.lane.b32.xlu0 %v6958, 4
    %v6961 = vpop.permute.xlu0 %6960
    %v6963 = vmul.f32 %v6956, %v6961
    %6965 = vrot.lane.b32.xlu0 %v6963, 124
    %v6966 = vpop.permute.xlu0 %6965
    %v6968 = vadd.f32 %v6938, %v6966
    %s6969 = scalar_lea.vmem %s19, 48
    %6970 = vst.msk [vmem:[%s6969] sm:$0xff] %vm1239, %v6968
    %6972 = vset.pattern.permute.xlu0 0
    %6973 = vperm.xlu0 %6972, %v6968
    %v6974 = vpop.permute.xlu0 %6973
    %v6976 = vmul.f32 %v6974, %v206
    %v6977 = vadd.f32 %v147, %v6976
    %6978 = vset.pattern.permute.xlu0 1
    %6979 = vperm.xlu0 %6978, %v6968
    %v6980 = vpop.permute.xlu0 %6979
    %v6982 = vmul.f32 %v6980, %v216
    %v6983 = vadd.f32 %v6977, %v6982
    %6984 = vset.pattern.permute.xlu0 2
    %6985 = vperm.xlu0 %6984, %v6968
    %v6986 = vpop.permute.xlu0 %6985
    %v6988 = vmul.f32 %v6986, %v226
    %v6989 = vadd.f32 %v6983, %v6988
    %6990 = vset.pattern.permute.xlu0 3
    %6991 = vperm.xlu0 %6990, %v6968
    %v6992 = vpop.permute.xlu0 %6991
    %v6994 = vmul.f32 %v6992, %v236
    %v6995 = vadd.f32 %v6989, %v6994
    %v6996 = vxor.u32 %v6995, 2147483648
    %v6997 = vmul.f32 %v6996, 1.442695
    %v6998 = vpow.pop %v6997
    %v6999 = vadd.f32 %v6998, 1.0
    %v7000 = vrcp.pop %v6999
    %v7001 = vmul.f32 1.0, %v7000
    %v7002 = vrot.slane %v7001, 4
    %v7003 = vadd.f32 %v7001, %v7002
    %v7004 = vrot.slane %v7003, 2
    %v7005 = vadd.f32 %v7003, %v7004
    %v7006 = vrot.slane %v7005, 1
    %v7007 = vadd.f32 %v7005, %v7006
    %v7008 = vmul.f32 %v7007, %v251
    %v7009 = vmul.f32 %v7001, %v7001
    %v7010 = vrot.slane %v7009, 4
    %v7011 = vadd.f32 %v7009, %v7010
    %v7012 = vrot.slane %v7011, 2
    %v7013 = vadd.f32 %v7011, %v7012
    %v7014 = vrot.slane %v7013, 1
    %v7015 = vadd.f32 %v7013, %v7014
    %v7016 = vmul.f32 %v7015, %v251
    %v7017 = vmul.f32 %v7008, %v7008
    %v7018 = vsub.f32 %v7016, %v7017
    %v7019 = vmax.f32 %v7018, 0.0
    %v7020 = vadd.f32 %v7019, 1e-05
    %v7021 = vrsqrt.pop %v7020
    %v7022 = vmul.f32 %v138, %v7021
    %v7023 = vmul.f32 %v7008, %v7022
    %v7024 = vsub.f32 %v139, %v7023
    %v7026 = vlaneseq
    %v7027 = vshrl.u32 %v7026, 7
    %v7028 = vsub.s32 0, %v7027
    %v7029 = vrot.slane %v7022, %v7028
    %v7031 = vmul.f32 %v7001, %v7029
    %v7033 = vlaneseq
    %v7034 = vshrl.u32 %v7033, 7
    %v7035 = vsub.s32 0, %v7034
    %v7036 = vrot.slane %v7024, %v7035
    %v7038 = vadd.f32 %v7031, %v7036
    %v7039 = vpack.c.bf16 %v7038, %v7038
    %v7040 = vld [vmem:[%s8] sm:$0xf]
    %v7041 = vld [vmem:[%s8 + $0x4] sm:$0xf]
    %v7042 = vld [vmem:[%s8 + $0x8] sm:$0xf]
    %v7043 = vld [vmem:[%s8 + $0xc] sm:$0xf]
    %v7044 = vld [vmem:[%s8 + $0x10] sm:$0xf]
    %v7045 = vld [vmem:[%s8 + $0x14] sm:$0xf]
    %v7046 = vld [vmem:[%s8 + $0x18] sm:$0xf]
    %v7047 = vld [vmem:[%s8 + $0x1c] sm:$0xf]
    %v7048 = vld [vmem:[%s8 + $0x20] sm:$0xf]
    %v7049 = vld [vmem:[%s8 + $0x24] sm:$0xf]
    %v7050 = vld [vmem:[%s8 + $0x28] sm:$0xf]
    %v7051 = vld [vmem:[%s8 + $0x2c] sm:$0xf]
    %v7052 = vld [vmem:[%s8 + $0x30] sm:$0xf]
    %v7053 = vld [vmem:[%s8 + $0x34] sm:$0xf]
    %v7054 = vld [vmem:[%s8 + $0x38] sm:$0xf]
    %v7055 = vld [vmem:[%s8 + $0x3c] sm:$0xf]
    %v7072 = vunpack.c.l.b16 %v7040
    %v7073 = vunpack.c.l.b16 %v7041
    %v7074 = vunpack.c.l.b16 %v7042
    %v7075 = vunpack.c.l.b16 %v7043
    %v7076 = vunpack.c.l.b16 %v7044
    %v7077 = vunpack.c.l.b16 %v7045
    %v7078 = vunpack.c.l.b16 %v7046
    %v7079 = vunpack.c.l.b16 %v7047
    %v7080 = vunpack.c.l.b16 %v7048
    %v7081 = vunpack.c.l.b16 %v7049
    %v7082 = vunpack.c.l.b16 %v7050
    %v7083 = vunpack.c.l.b16 %v7051
    %v7084 = vunpack.c.l.b16 %v7052
    %v7085 = vunpack.c.l.b16 %v7053
    %v7086 = vunpack.c.l.b16 %v7054
    %v7087 = vunpack.c.l.b16 %v7055
    %v7088 = vpack.c.b16 %v7073, %v7072
    %v7089 = vpack.c.b16 %v7075, %v7074
    %v7090 = vpack.c.b16 %v7077, %v7076
    %v7091 = vpack.c.b16 %v7079, %v7078
    %v7092 = vpack.c.b16 %v7081, %v7080
    %v7093 = vpack.c.b16 %v7083, %v7082
    %v7094 = vpack.c.b16 %v7085, %v7084
    %v7095 = vpack.c.b16 %v7087, %v7086
    %7104 = vmatprep.subr.bf16.mxu0 0
    %7105 = vmatpush1.bf16.msra.mxu0 %v7095
    %7106 = vmatprep.subr.bf16.mxu0 0
    %7107 = vmatpush1.bf16.msra.mxu0 %v7094
    %7108 = vmatprep.subr.bf16.mxu0 0
    %7109 = vmatpush1.bf16.msra.mxu0 %v7093
    %7110 = vmatprep.subr.bf16.mxu0 0
    %7111 = vmatpush1.bf16.msra.mxu0 %v7092
    %7112 = vmatprep.subr.bf16.mxu0 0
    %7113 = vmatpush1.bf16.msra.mxu0 %v7091
    %7114 = vmatprep.subr.bf16.mxu0 0
    %7115 = vmatpush1.bf16.msra.mxu0 %v7090
    %7116 = vmatprep.subr.bf16.mxu0 0
    %7117 = vmatpush1.bf16.msra.mxu0 %v7089
    %7118 = vmatprep.subr.bf16.mxu0 0
    %7119 = vmatpush1.bf16.msra.mxu0 %v7088
    %7120 = vmatprep.subr.bf16.mxu0 0
    %7121 = vmatpush2.bf16.msra.mxu0 0
    %7122 = vmatprep.subr.bf16.mxu0 0
    %7123 = vmatpush2.bf16.msra.mxu0 0
    %7124 = vmatprep.subr.bf16.mxu0 0
    %7125 = vmatpush2.bf16.msra.mxu0 0
    %7126 = vmatprep.subr.bf16.mxu0 0
    %7127 = vmatpush2.bf16.msra.mxu0 0
    %7128 = vmatprep.subr.bf16.mxu0 0
    %7129 = vmatpush2.bf16.msra.mxu0 0
    %7130 = vmatprep.subr.bf16.mxu0 0
    %7131 = vmatpush2.bf16.msra.mxu0 0
    %7132 = vmatprep.subr.bf16.mxu0 0
    %7133 = vmatpush2.bf16.msra.mxu0 0
    %7134 = vmatprep.subr.bf16.mxu0 0
    %7135 = vmatpush2.bf16.msra.mxu0 0
    %7136 = vmatprep.mubr.bf16.mxu0 0
    %7137 = vmatmul.mubr.bf16.gmra.mxu0 %v7039
    %v7138 = vpop.f32.mrf.mxu0
    %v7139 = vadd.f32 %v154, %v7138
    %v7140 = vpop.f32.mrf.mxu0
    %v7141 = vpop.f32.mrf.mxu0
    %v7142 = vpop.f32.mrf.mxu0
    %7143 = vdwg.mxu0
    %s7144 = scalar_lea.vmem %s2, 56
    %v7145 = vld [vmem:[%s7144] sm:$0xff]
    %v7146 = vmax.f32 %v7145, -1.0
    %v7147 = vmin.f32 %v7146, 1.0
    %v7148 = vpack.c.bf16 %v7139, %v7139
    %v7149 = vld [vmem:[%s11] sm:$0xff]
    %v7150 = vld [vmem:[%s11 + $0x8] sm:$0xff]
    %v7151 = vld [vmem:[%s11 + $0x10] sm:$0xff]
    %v7152 = vld [vmem:[%s11 + $0x18] sm:$0xff]
    %v7153 = vld [vmem:[%s11 + $0x20] sm:$0xff]
    %v7154 = vld [vmem:[%s11 + $0x28] sm:$0xff]
    %v7155 = vld [vmem:[%s11 + $0x30] sm:$0xff]
    %v7156 = vld [vmem:[%s11 + $0x38] sm:$0xff]
    %v7157 = vld [vmem:[%s11 + $0x40] sm:$0xff]
    %v7158 = vld [vmem:[%s11 + $0x48] sm:$0xff]
    %v7159 = vld [vmem:[%s11 + $0x50] sm:$0xff]
    %v7160 = vld [vmem:[%s11 + $0x58] sm:$0xff]
    %v7161 = vld [vmem:[%s11 + $0x60] sm:$0xff]
    %v7162 = vld [vmem:[%s11 + $0x68] sm:$0xff]
    %v7163 = vld [vmem:[%s11 + $0x70] sm:$0xff]
    %v7164 = vld [vmem:[%s11 + $0x78] sm:$0xff]
    %v7165 = vld [vmem:[%s11 + $0x80] sm:$0xff]
    %v7166 = vld [vmem:[%s11 + $0x88] sm:$0xff]
    %v7167 = vld [vmem:[%s11 + $0x90] sm:$0xff]
    %v7168 = vld [vmem:[%s11 + $0x98] sm:$0xff]
    %v7169 = vld [vmem:[%s11 + $0xa0] sm:$0xff]
    %v7170 = vld [vmem:[%s11 + $0xa8] sm:$0xff]
    %v7171 = vld [vmem:[%s11 + $0xb0] sm:$0xff]
    %v7172 = vld [vmem:[%s11 + $0xb8] sm:$0xff]
    %v7173 = vld [vmem:[%s11 + $0xc0] sm:$0xff]
    %v7174 = vld [vmem:[%s11 + $0xc8] sm:$0xff]
    %v7175 = vld [vmem:[%s11 + $0xd0] sm:$0xff]
    %v7176 = vld [vmem:[%s11 + $0xd8] sm:$0xff]
    %v7177 = vld [vmem:[%s11 + $0xe0] sm:$0xff]
    %v7178 = vld [vmem:[%s11 + $0xe8] sm:$0xff]
    %v7179 = vld [vmem:[%s11 + $0xf0] sm:$0xff]
    %v7180 = vld [vmem:[%s11 + $0xf8] sm:$0xff]
    %v7213 = vunpack.c.l.b16 %v7149
    %v7214 = vunpack.c.h.b16 %v7149
    %v7215 = vunpack.c.l.b16 %v7150
    %v7216 = vunpack.c.h.b16 %v7150
    %v7217 = vunpack.c.l.b16 %v7151
    %v7218 = vunpack.c.h.b16 %v7151
    %v7219 = vunpack.c.l.b16 %v7152
    %v7220 = vunpack.c.h.b16 %v7152
    %v7221 = vunpack.c.l.b16 %v7153
    %v7222 = vunpack.c.h.b16 %v7153
    %v7223 = vunpack.c.l.b16 %v7154
    %v7224 = vunpack.c.h.b16 %v7154
    %v7225 = vunpack.c.l.b16 %v7155
    %v7226 = vunpack.c.h.b16 %v7155
    %v7227 = vunpack.c.l.b16 %v7156
    %v7228 = vunpack.c.h.b16 %v7156
    %v7229 = vunpack.c.l.b16 %v7157
    %v7230 = vunpack.c.h.b16 %v7157
    %v7231 = vunpack.c.l.b16 %v7158
    %v7232 = vunpack.c.h.b16 %v7158
    %v7233 = vunpack.c.l.b16 %v7159
    %v7234 = vunpack.c.h.b16 %v7159
    %v7235 = vunpack.c.l.b16 %v7160
    %v7236 = vunpack.c.h.b16 %v7160
    %v7237 = vunpack.c.l.b16 %v7161
    %v7238 = vunpack.c.h.b16 %v7161
    %v7239 = vunpack.c.l.b16 %v7162
    %v7240 = vunpack.c.h.b16 %v7162
    %v7241 = vunpack.c.l.b16 %v7163
    %v7242 = vunpack.c.h.b16 %v7163
    %v7243 = vunpack.c.l.b16 %v7164
    %v7244 = vunpack.c.h.b16 %v7164
    %v7245 = vunpack.c.l.b16 %v7165
    %v7246 = vunpack.c.h.b16 %v7165
    %v7247 = vunpack.c.l.b16 %v7166
    %v7248 = vunpack.c.h.b16 %v7166
    %v7249 = vunpack.c.l.b16 %v7167
    %v7250 = vunpack.c.h.b16 %v7167
    %v7251 = vunpack.c.l.b16 %v7168
    %v7252 = vunpack.c.h.b16 %v7168
    %v7253 = vunpack.c.l.b16 %v7169
    %v7254 = vunpack.c.h.b16 %v7169
    %v7255 = vunpack.c.l.b16 %v7170
    %v7256 = vunpack.c.h.b16 %v7170
    %v7257 = vunpack.c.l.b16 %v7171
    %v7258 = vunpack.c.h.b16 %v7171
    %v7259 = vunpack.c.l.b16 %v7172
    %v7260 = vunpack.c.h.b16 %v7172
    %v7261 = vunpack.c.l.b16 %v7173
    %v7262 = vunpack.c.h.b16 %v7173
    %v7263 = vunpack.c.l.b16 %v7174
    %v7264 = vunpack.c.h.b16 %v7174
    %v7265 = vunpack.c.l.b16 %v7175
    %v7266 = vunpack.c.h.b16 %v7175
    %v7267 = vunpack.c.l.b16 %v7176
    %v7268 = vunpack.c.h.b16 %v7176
    %v7269 = vunpack.c.l.b16 %v7177
    %v7270 = vunpack.c.h.b16 %v7177
    %v7271 = vunpack.c.l.b16 %v7178
    %v7272 = vunpack.c.h.b16 %v7178
    %v7273 = vunpack.c.l.b16 %v7179
    %v7274 = vunpack.c.h.b16 %v7179
    %v7275 = vunpack.c.l.b16 %v7180
    %v7276 = vunpack.c.h.b16 %v7180
    %v7277 = vpack.c.b16 %v7217, %v7213
    %v7278 = vpack.c.b16 %v7218, %v7214
    %v7279 = vpack.c.b16 %v7219, %v7215
    %v7280 = vpack.c.b16 %v7220, %v7216
    %v7281 = vpack.c.b16 %v7225, %v7221
    %v7282 = vpack.c.b16 %v7226, %v7222
    %v7283 = vpack.c.b16 %v7227, %v7223
    %v7284 = vpack.c.b16 %v7228, %v7224
    %v7285 = vpack.c.b16 %v7233, %v7229
    %v7286 = vpack.c.b16 %v7234, %v7230
    %v7287 = vpack.c.b16 %v7235, %v7231
    %v7288 = vpack.c.b16 %v7236, %v7232
    %v7289 = vpack.c.b16 %v7241, %v7237
    %v7290 = vpack.c.b16 %v7242, %v7238
    %v7291 = vpack.c.b16 %v7243, %v7239
    %v7292 = vpack.c.b16 %v7244, %v7240
    %v7293 = vpack.c.b16 %v7249, %v7245
    %v7294 = vpack.c.b16 %v7250, %v7246
    %v7295 = vpack.c.b16 %v7251, %v7247
    %v7296 = vpack.c.b16 %v7252, %v7248
    %v7297 = vpack.c.b16 %v7257, %v7253
    %v7298 = vpack.c.b16 %v7258, %v7254
    %v7299 = vpack.c.b16 %v7259, %v7255
    %v7300 = vpack.c.b16 %v7260, %v7256
    %v7301 = vpack.c.b16 %v7265, %v7261
    %v7302 = vpack.c.b16 %v7266, %v7262
    %v7303 = vpack.c.b16 %v7267, %v7263
    %v7304 = vpack.c.b16 %v7268, %v7264
    %v7305 = vpack.c.b16 %v7273, %v7269
    %v7306 = vpack.c.b16 %v7274, %v7270
    %v7307 = vpack.c.b16 %v7275, %v7271
    %v7308 = vpack.c.b16 %v7276, %v7272
    %7341 = vmatprep.subr.bf16.mxu0 %v7306
    %7342 = vmatpush1.bf16.msra.mxu0 %v7305
    %7343 = vmatprep.subr.bf16.mxu0 %v7302
    %7344 = vmatpush1.bf16.msra.mxu0 %v7301
    %7345 = vmatprep.subr.bf16.mxu0 %v7298
    %7346 = vmatpush1.bf16.msra.mxu0 %v7297
    %7347 = vmatprep.subr.bf16.mxu0 %v7294
    %7348 = vmatpush1.bf16.msra.mxu0 %v7293
    %7349 = vmatprep.subr.bf16.mxu0 %v7290
    %7350 = vmatpush1.bf16.msra.mxu0 %v7289
    %7351 = vmatprep.subr.bf16.mxu0 %v7286
    %7352 = vmatpush1.bf16.msra.mxu0 %v7285
    %7353 = vmatprep.subr.bf16.mxu0 %v7282
    %7354 = vmatpush1.bf16.msra.mxu0 %v7281
    %7355 = vmatprep.subr.bf16.mxu0 %v7278
    %7356 = vmatpush1.bf16.msra.mxu0 %v7277
    %7357 = vmatprep.subr.bf16.mxu0 0
    %7358 = vmatpush2.bf16.msra.mxu0 0
    %7359 = vmatprep.subr.bf16.mxu0 0
    %7360 = vmatpush2.bf16.msra.mxu0 0
    %7361 = vmatprep.subr.bf16.mxu0 0
    %7362 = vmatpush2.bf16.msra.mxu0 0
    %7363 = vmatprep.subr.bf16.mxu0 0
    %7364 = vmatpush2.bf16.msra.mxu0 0
    %7365 = vmatprep.subr.bf16.mxu0 0
    %7366 = vmatpush2.bf16.msra.mxu0 0
    %7367 = vmatprep.subr.bf16.mxu0 0
    %7368 = vmatpush2.bf16.msra.mxu0 0
    %7369 = vmatprep.subr.bf16.mxu0 0
    %7370 = vmatpush2.bf16.msra.mxu0 0
    %7371 = vmatprep.subr.bf16.mxu0 0
    %7372 = vmatpush2.bf16.msra.mxu0 0
    %7373 = vmatprep.mubr.bf16.mxu0 0
    %7374 = vmatmul.mubr.bf16.gmra.mxu0 %v7148
    %v7375 = vpop.f32.mrf.mxu0
    %v7376 = vadd.f32 %v161, %v7375
    %v7377 = vpop.f32.mrf.mxu0
    %v7378 = vadd.f32 %v165, %v7377
    %v7379 = vpop.f32.mrf.mxu0
    %v7380 = vpop.f32.mrf.mxu0
    %7381 = vdwg.mxu0
    %7382 = vmatprep.subr.bf16.mxu0 %v7308
    %7383 = vmatpush1.bf16.msra.mxu0 %v7307
    %7384 = vmatprep.subr.bf16.mxu0 %v7304
    %7385 = vmatpush1.bf16.msra.mxu0 %v7303
    %7386 = vmatprep.subr.bf16.mxu0 %v7300
    %7387 = vmatpush1.bf16.msra.mxu0 %v7299
    %7388 = vmatprep.subr.bf16.mxu0 %v7296
    %7389 = vmatpush1.bf16.msra.mxu0 %v7295
    %7390 = vmatprep.subr.bf16.mxu0 %v7292
    %7391 = vmatpush1.bf16.msra.mxu0 %v7291
    %7392 = vmatprep.subr.bf16.mxu0 %v7288
    %7393 = vmatpush1.bf16.msra.mxu0 %v7287
    %7394 = vmatprep.subr.bf16.mxu0 %v7284
    %7395 = vmatpush1.bf16.msra.mxu0 %v7283
    %7396 = vmatprep.subr.bf16.mxu0 %v7280
    %7397 = vmatpush1.bf16.msra.mxu0 %v7279
    %7398 = vmatprep.subr.bf16.mxu0 0
    %7399 = vmatpush2.bf16.msra.mxu0 0
    %7400 = vmatprep.subr.bf16.mxu0 0
    %7401 = vmatpush2.bf16.msra.mxu0 0
    %7402 = vmatprep.subr.bf16.mxu0 0
    %7403 = vmatpush2.bf16.msra.mxu0 0
    %7404 = vmatprep.subr.bf16.mxu0 0
    %7405 = vmatpush2.bf16.msra.mxu0 0
    %7406 = vmatprep.subr.bf16.mxu0 0
    %7407 = vmatpush2.bf16.msra.mxu0 0
    %7408 = vmatprep.subr.bf16.mxu0 0
    %7409 = vmatpush2.bf16.msra.mxu0 0
    %7410 = vmatprep.subr.bf16.mxu0 0
    %7411 = vmatpush2.bf16.msra.mxu0 0
    %7412 = vmatprep.subr.bf16.mxu0 0
    %7413 = vmatpush2.bf16.msra.mxu0 0
    %7414 = vmatprep.mubr.bf16.mxu0 0
    %7415 = vmatmul.mubr.bf16.gmra.mxu0 %v7148
    %v7416 = vpop.f32.mrf.mxu0
    %v7417 = vadd.f32 %v169, %v7416
    %v7418 = vpop.f32.mrf.mxu0
    %v7419 = vadd.f32 %v173, %v7418
    %v7420 = vpop.f32.mrf.mxu0
    %v7421 = vpop.f32.mrf.mxu0
    %7422 = vdwg.mxu0
    %7424 = vset.pattern.permute.xlu0 0
    %7425 = vperm.xlu0 %7424, %v7147
    %v7426 = vpop.permute.xlu0 %7425
    %v7428 = vmul.f32 %v7426, %v695
    %v7429 = vmul.f32 %v7426, %v699
    %v7430 = vmul.f32 %v7426, %v703
    %v7431 = vmul.f32 %v7426, %v707
    %v7432 = vadd.f32 %v7376, %v7428
    %v7433 = vadd.f32 %v7378, %v7429
    %v7434 = vadd.f32 %v7417, %v7430
    %v7435 = vadd.f32 %v7419, %v7431
    %7436 = vset.pattern.permute.xlu0 1
    %7437 = vperm.xlu0 %7436, %v7147
    %v7438 = vpop.permute.xlu0 %7437
    %v7440 = vmul.f32 %v7438, %v743
    %v7441 = vmul.f32 %v7438, %v747
    %v7442 = vmul.f32 %v7438, %v751
    %v7443 = vmul.f32 %v7438, %v755
    %v7444 = vadd.f32 %v7432, %v7440
    %v7445 = vadd.f32 %v7433, %v7441
    %v7446 = vadd.f32 %v7434, %v7442
    %v7447 = vadd.f32 %v7435, %v7443
    %v7448 = vxor.u32 %v7444, 2147483648
    %v7449 = vmul.f32 %v7448, 1.442695
    %v7450 = vpow.pop %v7449
    %v7451 = vadd.f32 %v7450, 1.0
    %v7452 = vrcp.pop %v7451
    %v7453 = vmul.f32 1.0, %v7452
    %v7454 = vxor.u32 %v7445, 2147483648
    %v7455 = vmul.f32 %v7454, 1.442695
    %v7456 = vpow.pop %v7455
    %v7457 = vadd.f32 %v7456, 1.0
    %v7458 = vrcp.pop %v7457
    %v7459 = vmul.f32 1.0, %v7458
    %v7460 = vtanh.pop %v7446
    %v7461 = vxor.u32 %v7447, 2147483648
    %v7462 = vmul.f32 %v7461, 1.442695
    %v7463 = vpow.pop %v7462
    %v7464 = vadd.f32 %v7463, 1.0
    %v7465 = vrcp.pop %v7464
    %v7466 = vmul.f32 1.0, %v7465
    %v7467 = vmul.f32 %v7459, %v135
    %v7468 = vmul.f32 %v7453, %v7460
    %v7469 = vadd.f32 %v7467, %v7468
    %v7470 = vtanh.pop %v7469
    %v7471 = vmul.f32 %v7466, %v7470
    %v7472 = vpack.c.bf16 %v7471, %v7471
    %v7473 = vld [vmem:[#allocation10] sm:$0xff]
    %v7474 = vld [vmem:[#allocation10 + $0x8] sm:$0xff]
    %v7475 = vld [vmem:[#allocation10 + $0x10] sm:$0xff]
    %v7476 = vld [vmem:[#allocation10 + $0x18] sm:$0xff]
    %v7477 = vld [vmem:[#allocation10 + $0x20] sm:$0xff]
    %v7478 = vld [vmem:[#allocation10 + $0x28] sm:$0xff]
    %v7479 = vld [vmem:[#allocation10 + $0x30] sm:$0xff]
    %v7480 = vld [vmem:[#allocation10 + $0x38] sm:$0xff]
    %v7481 = vld [vmem:[#allocation10 + $0x40] sm:$0xff]
    %v7482 = vld [vmem:[#allocation10 + $0x48] sm:$0xff]
    %v7483 = vld [vmem:[#allocation10 + $0x50] sm:$0xff]
    %v7484 = vld [vmem:[#allocation10 + $0x58] sm:$0xff]
    %v7485 = vld [vmem:[#allocation10 + $0x60] sm:$0xff]
    %v7486 = vld [vmem:[#allocation10 + $0x68] sm:$0xff]
    %v7487 = vld [vmem:[#allocation10 + $0x70] sm:$0xff]
    %v7488 = vld [vmem:[#allocation10 + $0x78] sm:$0xff]
    %v7505 = vunpack.c.l.b16 %v7473
    %v7506 = vunpack.c.h.b16 %v7473
    %v7507 = vunpack.c.l.b16 %v7474
    %v7508 = vunpack.c.h.b16 %v7474
    %v7509 = vunpack.c.l.b16 %v7475
    %v7510 = vunpack.c.h.b16 %v7475
    %v7511 = vunpack.c.l.b16 %v7476
    %v7512 = vunpack.c.h.b16 %v7476
    %v7513 = vunpack.c.l.b16 %v7477
    %v7514 = vunpack.c.h.b16 %v7477
    %v7515 = vunpack.c.l.b16 %v7478
    %v7516 = vunpack.c.h.b16 %v7478
    %v7517 = vunpack.c.l.b16 %v7479
    %v7518 = vunpack.c.h.b16 %v7479
    %v7519 = vunpack.c.l.b16 %v7480
    %v7520 = vunpack.c.h.b16 %v7480
    %v7521 = vunpack.c.l.b16 %v7481
    %v7522 = vunpack.c.h.b16 %v7481
    %v7523 = vunpack.c.l.b16 %v7482
    %v7524 = vunpack.c.h.b16 %v7482
    %v7525 = vunpack.c.l.b16 %v7483
    %v7526 = vunpack.c.h.b16 %v7483
    %v7527 = vunpack.c.l.b16 %v7484
    %v7528 = vunpack.c.h.b16 %v7484
    %v7529 = vunpack.c.l.b16 %v7485
    %v7530 = vunpack.c.h.b16 %v7485
    %v7531 = vunpack.c.l.b16 %v7486
    %v7532 = vunpack.c.h.b16 %v7486
    %v7533 = vunpack.c.l.b16 %v7487
    %v7534 = vunpack.c.h.b16 %v7487
    %v7535 = vunpack.c.l.b16 %v7488
    %v7536 = vunpack.c.h.b16 %v7488
    %v7537 = vpack.c.b16 %v7507, %v7505
    %v7538 = vpack.c.b16 %v7508, %v7506
    %v7539 = vpack.c.b16 %v7511, %v7509
    %v7540 = vpack.c.b16 %v7512, %v7510
    %v7541 = vpack.c.b16 %v7515, %v7513
    %v7542 = vpack.c.b16 %v7516, %v7514
    %v7543 = vpack.c.b16 %v7519, %v7517
    %v7544 = vpack.c.b16 %v7520, %v7518
    %v7545 = vpack.c.b16 %v7523, %v7521
    %v7546 = vpack.c.b16 %v7524, %v7522
    %v7547 = vpack.c.b16 %v7527, %v7525
    %v7548 = vpack.c.b16 %v7528, %v7526
    %v7549 = vpack.c.b16 %v7531, %v7529
    %v7550 = vpack.c.b16 %v7532, %v7530
    %v7551 = vpack.c.b16 %v7535, %v7533
    %v7552 = vpack.c.b16 %v7536, %v7534
    %7569 = vmatprep.subr.bf16.mxu0 %v7552
    %7570 = vmatpush1.bf16.msra.mxu0 %v7551
    %7571 = vmatprep.subr.bf16.mxu0 %v7550
    %7572 = vmatpush1.bf16.msra.mxu0 %v7549
    %7573 = vmatprep.subr.bf16.mxu0 %v7548
    %7574 = vmatpush1.bf16.msra.mxu0 %v7547
    %7575 = vmatprep.subr.bf16.mxu0 %v7546
    %7576 = vmatpush1.bf16.msra.mxu0 %v7545
    %7577 = vmatprep.subr.bf16.mxu0 %v7544
    %7578 = vmatpush1.bf16.msra.mxu0 %v7543
    %7579 = vmatprep.subr.bf16.mxu0 %v7542
    %7580 = vmatpush1.bf16.msra.mxu0 %v7541
    %7581 = vmatprep.subr.bf16.mxu0 %v7540
    %7582 = vmatpush1.bf16.msra.mxu0 %v7539
    %7583 = vmatprep.subr.bf16.mxu0 %v7538
    %7584 = vmatpush1.bf16.msra.mxu0 %v7537
    %7585 = vmatprep.subr.bf16.mxu0 0
    %7586 = vmatpush2.bf16.msra.mxu0 0
    %7587 = vmatprep.subr.bf16.mxu0 0
    %7588 = vmatpush2.bf16.msra.mxu0 0
    %7589 = vmatprep.subr.bf16.mxu0 0
    %7590 = vmatpush2.bf16.msra.mxu0 0
    %7591 = vmatprep.subr.bf16.mxu0 0
    %7592 = vmatpush2.bf16.msra.mxu0 0
    %7593 = vmatprep.subr.bf16.mxu0 0
    %7594 = vmatpush2.bf16.msra.mxu0 0
    %7595 = vmatprep.subr.bf16.mxu0 0
    %7596 = vmatpush2.bf16.msra.mxu0 0
    %7597 = vmatprep.subr.bf16.mxu0 0
    %7598 = vmatpush2.bf16.msra.mxu0 0
    %7599 = vmatprep.subr.bf16.mxu0 0
    %7600 = vmatpush2.bf16.msra.mxu0 0
    %7601 = vmatprep.mubr.bf16.mxu0 0
    %7602 = vmatmul.mubr.bf16.gmra.mxu0 %v7472
    %v7603 = vpop.f32.mrf.mxu0
    %v7604 = vadd.f32 %v183, %v7603
    %v7605 = vpop.f32.mrf.mxu0
    %v7606 = vadd.f32 %v187, %v7605
    %v7607 = vpop.f32.mrf.mxu0
    %v7608 = vpop.f32.mrf.mxu0
    %7609 = vdwg.mxu0
    %v7610 = vxor.u32 %v7604, 2147483648
    %v7611 = vxor.u32 %v7606, 2147483648
    %v7612 = vmul.f32 %v7610, 1.442695
    %v7613 = vpow.pop %v7612
    %v7614 = vmul.f32 %v7611, 1.442695
    %v7615 = vpow.pop %v7614
    %v7616 = vadd.f32 %v7613, 1.0
    %v7617 = vadd.f32 %v7615, 1.0
    %v7618 = vrcp.pop %v7616
    %v7619 = vmul.f32 1.0, %v7618
    %v7620 = vrcp.pop %v7617
    %v7621 = vmul.f32 1.0, %v7620
    %v7622 = vrot.slane %v7619, 4
    %v7623 = vadd.f32 %v7619, %v7622
    %v7624 = vrot.slane %v7623, 2
    %v7625 = vadd.f32 %v7623, %v7624
    %v7626 = vrot.slane %v7625, 1
    %v7627 = vadd.f32 %v7625, %v7626
    %v7628 = vrot.slane %v7621, 4
    %v7629 = vadd.f32 %v7621, %v7628
    %v7630 = vrot.slane %v7629, 2
    %v7631 = vadd.f32 %v7629, %v7630
    %v7632 = vrot.slane %v7631, 1
    %v7633 = vadd.f32 %v7631, %v7632
    %v7634 = vmul.f32 %v7627, %v251
    %v7635 = vmul.f32 %v7633, %v251
    %v7636 = vmul.f32 %v7619, %v7619
    %v7637 = vmul.f32 %v7621, %v7621
    %v7638 = vrot.slane %v7636, 4
    %v7639 = vadd.f32 %v7636, %v7638
    %v7640 = vrot.slane %v7639, 2
    %v7641 = vadd.f32 %v7639, %v7640
    %v7642 = vrot.slane %v7641, 1
    %v7643 = vadd.f32 %v7641, %v7642
    %v7644 = vrot.slane %v7637, 4
    %v7645 = vadd.f32 %v7637, %v7644
    %v7646 = vrot.slane %v7645, 2
    %v7647 = vadd.f32 %v7645, %v7646
    %v7648 = vrot.slane %v7647, 1
    %v7649 = vadd.f32 %v7647, %v7648
    %v7650 = vmul.f32 %v7643, %v251
    %v7651 = vmul.f32 %v7649, %v251
    %v7652 = vmul.f32 %v7634, %v7634
    %v7653 = vmul.f32 %v7635, %v7635
    %v7654 = vsub.f32 %v7650, %v7652
    %v7655 = vsub.f32 %v7651, %v7653
    %v7656 = vmax.f32 %v7654, 0.0
    %v7657 = vmax.f32 %v7655, 0.0
    %v7658 = vadd.f32 %v7656, 1e-05
    %v7659 = vadd.f32 %v7657, 1e-05
    %v7660 = vrsqrt.pop %v7658
    %v7661 = vrsqrt.pop %v7659
    %v7664 = vcombine.low %v7660, %v7661
    %v7666 = vunpack.c.l.s4 1966171168
    %v7667 = vunpack.c.0.s8 %v7666
    %v7668 = vlaneseq
    %v7669 = vshrl.u32 %v7668, 7
    %v7670 = vsub.s32 %v7667, %v7669
    %v7671 = vrot.slane %v7664, %v7670
    %v7673 = vunpack.c.l.s4 1966171168
    %v7674 = vunpack.c.0.s8 %v7673
    %v7675 = vlaneseq
    %v7676 = vshrl.u32 %v7675, 7
    %v7677 = vsub.s32 %v7674, %v7676
    %v7678 = vrot.slane %v7671, %v7677
    %v7680 = vmul.f32 %v140, %v7678
    %v7682 = vlaneseq
    %v7683 = vshrl.u32 %v7682, 7
    %v7684 = vsub.s32 0, %v7683
    %v7685 = vrot.slane %v7680, %v7684
    %v7686 = vlaneseq
    %v7687 = vshrl.u32 %v7686, 7
    %v7688 = vsub.s32 1, %v7687
    %v7689 = vrot.slane %v7680, %v7688
    %v7692 = vmul.f32 %v7634, %v7685
    %v7693 = vmul.f32 %v7635, %v7689
    %v7696 = vcombine.low %v7692, %v7693
    %v7698 = vunpack.c.l.s4 1966171168
    %v7699 = vunpack.c.0.s8 %v7698
    %v7700 = vlaneseq
    %v7701 = vshrl.u32 %v7700, 7
    %v7702 = vsub.s32 %v7699, %v7701
    %v7703 = vrot.slane %v7696, %v7702
    %v7705 = vunpack.c.l.s4 1966171168
    %v7706 = vunpack.c.0.s8 %v7705
    %v7707 = vlaneseq
    %v7708 = vshrl.u32 %v7707, 7
    %v7709 = vsub.s32 %v7706, %v7708
    %v7710 = vrot.slane %v7703, %v7709
    %v7712 = vsub.f32 %v141, %v7710
    %v7713 = vmul.f32 %v7619, %v7685
    %v7714 = vmul.f32 %v7621, %v7689
    %v7716 = vlaneseq
    %v7717 = vshrl.u32 %v7716, 7
    %v7718 = vsub.s32 0, %v7717
    %v7719 = vrot.slane %v7712, %v7718
    %v7720 = vlaneseq
    %v7721 = vshrl.u32 %v7720, 7
    %v7722 = vsub.s32 1, %v7721
    %v7723 = vrot.slane %v7712, %v7722
    %v7726 = vadd.f32 %v7713, %v7719
    %v7727 = vadd.f32 %v7714, %v7723
    %v7728 = vpack.c.bf16 %v7726, %v7726
    %v7729 = vpack.c.bf16 %v7727, %v7727
    %v7730 = vld [vmem:[%s17] sm:$0xf]
    %v7731 = vld [vmem:[%s17 + $0x4] sm:$0xf]
    %v7732 = vld [vmem:[%s17 + $0x8] sm:$0xf]
    %v7733 = vld [vmem:[%s17 + $0xc] sm:$0xf]
    %v7734 = vld [vmem:[%s17 + $0x10] sm:$0xf]
    %v7735 = vld [vmem:[%s17 + $0x14] sm:$0xf]
    %v7736 = vld [vmem:[%s17 + $0x18] sm:$0xf]
    %v7737 = vld [vmem:[%s17 + $0x1c] sm:$0xf]
    %v7738 = vld [vmem:[%s17 + $0x20] sm:$0xf]
    %v7739 = vld [vmem:[%s17 + $0x24] sm:$0xf]
    %v7740 = vld [vmem:[%s17 + $0x28] sm:$0xf]
    %v7741 = vld [vmem:[%s17 + $0x2c] sm:$0xf]
    %v7742 = vld [vmem:[%s17 + $0x30] sm:$0xf]
    %v7743 = vld [vmem:[%s17 + $0x34] sm:$0xf]
    %v7744 = vld [vmem:[%s17 + $0x38] sm:$0xf]
    %v7745 = vld [vmem:[%s17 + $0x3c] sm:$0xf]
    %v7746 = vld [vmem:[%s17 + $0x40] sm:$0xf]
    %v7747 = vld [vmem:[%s17 + $0x44] sm:$0xf]
    %v7748 = vld [vmem:[%s17 + $0x48] sm:$0xf]
    %v7749 = vld [vmem:[%s17 + $0x4c] sm:$0xf]
    %v7750 = vld [vmem:[%s17 + $0x50] sm:$0xf]
    %v7751 = vld [vmem:[%s17 + $0x54] sm:$0xf]
    %v7752 = vld [vmem:[%s17 + $0x58] sm:$0xf]
    %v7753 = vld [vmem:[%s17 + $0x5c] sm:$0xf]
    %v7754 = vld [vmem:[%s17 + $0x60] sm:$0xf]
    %v7755 = vld [vmem:[%s17 + $0x64] sm:$0xf]
    %v7756 = vld [vmem:[%s17 + $0x68] sm:$0xf]
    %v7757 = vld [vmem:[%s17 + $0x6c] sm:$0xf]
    %v7758 = vld [vmem:[%s17 + $0x70] sm:$0xf]
    %v7759 = vld [vmem:[%s17 + $0x74] sm:$0xf]
    %v7760 = vld [vmem:[%s17 + $0x78] sm:$0xf]
    %v7761 = vld [vmem:[%s17 + $0x7c] sm:$0xf]
    %v7794 = vunpack.c.l.b16 %v7730
    %v7795 = vunpack.c.l.b16 %v7731
    %v7796 = vunpack.c.l.b16 %v7732
    %v7797 = vunpack.c.l.b16 %v7733
    %v7798 = vunpack.c.l.b16 %v7734
    %v7799 = vunpack.c.l.b16 %v7735
    %v7800 = vunpack.c.l.b16 %v7736
    %v7801 = vunpack.c.l.b16 %v7737
    %v7802 = vunpack.c.l.b16 %v7738
    %v7803 = vunpack.c.l.b16 %v7739
    %v7804 = vunpack.c.l.b16 %v7740
    %v7805 = vunpack.c.l.b16 %v7741
    %v7806 = vunpack.c.l.b16 %v7742
    %v7807 = vunpack.c.l.b16 %v7743
    %v7808 = vunpack.c.l.b16 %v7744
    %v7809 = vunpack.c.l.b16 %v7745
    %v7810 = vunpack.c.l.b16 %v7746
    %v7811 = vunpack.c.l.b16 %v7747
    %v7812 = vunpack.c.l.b16 %v7748
    %v7813 = vunpack.c.l.b16 %v7749
    %v7814 = vunpack.c.l.b16 %v7750
    %v7815 = vunpack.c.l.b16 %v7751
    %v7816 = vunpack.c.l.b16 %v7752
    %v7817 = vunpack.c.l.b16 %v7753
    %v7818 = vunpack.c.l.b16 %v7754
    %v7819 = vunpack.c.l.b16 %v7755
    %v7820 = vunpack.c.l.b16 %v7756
    %v7821 = vunpack.c.l.b16 %v7757
    %v7822 = vunpack.c.l.b16 %v7758
    %v7823 = vunpack.c.l.b16 %v7759
    %v7824 = vunpack.c.l.b16 %v7760
    %v7825 = vunpack.c.l.b16 %v7761
    %v7826 = vpack.c.b16 %v7795, %v7794
    %v7827 = vpack.c.b16 %v7797, %v7796
    %v7828 = vpack.c.b16 %v7799, %v7798
    %v7829 = vpack.c.b16 %v7801, %v7800
    %v7830 = vpack.c.b16 %v7803, %v7802
    %v7831 = vpack.c.b16 %v7805, %v7804
    %v7832 = vpack.c.b16 %v7807, %v7806
    %v7833 = vpack.c.b16 %v7809, %v7808
    %v7834 = vpack.c.b16 %v7811, %v7810
    %v7835 = vpack.c.b16 %v7813, %v7812
    %v7836 = vpack.c.b16 %v7815, %v7814
    %v7837 = vpack.c.b16 %v7817, %v7816
    %v7838 = vpack.c.b16 %v7819, %v7818
    %v7839 = vpack.c.b16 %v7821, %v7820
    %v7840 = vpack.c.b16 %v7823, %v7822
    %v7841 = vpack.c.b16 %v7825, %v7824
    %7858 = vmatprep.subr.bf16.mxu0 0
    %7859 = vmatpush1.bf16.msra.mxu0 %v7833
    %7860 = vmatprep.subr.bf16.mxu0 0
    %7861 = vmatpush1.bf16.msra.mxu0 %v7832
    %7862 = vmatprep.subr.bf16.mxu0 0
    %7863 = vmatpush1.bf16.msra.mxu0 %v7831
    %7864 = vmatprep.subr.bf16.mxu0 0
    %7865 = vmatpush1.bf16.msra.mxu0 %v7830
    %7866 = vmatprep.subr.bf16.mxu0 0
    %7867 = vmatpush1.bf16.msra.mxu0 %v7829
    %7868 = vmatprep.subr.bf16.mxu0 0
    %7869 = vmatpush1.bf16.msra.mxu0 %v7828
    %7870 = vmatprep.subr.bf16.mxu0 0
    %7871 = vmatpush1.bf16.msra.mxu0 %v7827
    %7872 = vmatprep.subr.bf16.mxu0 0
    %7873 = vmatpush1.bf16.msra.mxu0 %v7826
    %7874 = vmatprep.subr.bf16.mxu0 0
    %7875 = vmatpush2.bf16.msra.mxu0 %v7841
    %7876 = vmatprep.subr.bf16.mxu0 0
    %7877 = vmatpush2.bf16.msra.mxu0 %v7840
    %7878 = vmatprep.subr.bf16.mxu0 0
    %7879 = vmatpush2.bf16.msra.mxu0 %v7839
    %7880 = vmatprep.subr.bf16.mxu0 0
    %7881 = vmatpush2.bf16.msra.mxu0 %v7838
    %7882 = vmatprep.subr.bf16.mxu0 0
    %7883 = vmatpush2.bf16.msra.mxu0 %v7837
    %7884 = vmatprep.subr.bf16.mxu0 0
    %7885 = vmatpush2.bf16.msra.mxu0 %v7836
    %7886 = vmatprep.subr.bf16.mxu0 0
    %7887 = vmatpush2.bf16.msra.mxu0 %v7835
    %7888 = vmatprep.subr.bf16.mxu0 0
    %7889 = vmatpush2.bf16.msra.mxu0 %v7834
    %7890 = vmatprep.mubr.bf16.mxu0 %v7729
    %7891 = vmatmul.mubr.bf16.gmra.mxu0 %v7728
    %v7892 = vpop.f32.mrf.mxu0
    %v7893 = vadd.f32 %v195, %v7892
    %v7894 = vpop.f32.mrf.mxu0
    %v7895 = vpop.f32.mrf.mxu0
    %v7896 = vpop.f32.mrf.mxu0
    %7897 = vdwg.mxu0
    %vm7898 = vcmp.gt.f32.partialorder %v7893, 20.0
    %v7899 = vmin.f32 %v7893, 20.0
    %v7900 = vmul.f32 %v7899, 1.442695
    %v7901 = vpow.pop %v7900
    %v7902 = vadd.f32 %v7901, 1.0
    %v7903 = vlog2.pop %v7902
    %v7904 = vmul.f32 %v7903, 0.6931472
    %v7905 = vmul.f32 -0.5, %v7901
    %v7906 = vadd.f32 %v7905, 1.0
    %v7907 = vmul.f32 %v7906, %v7901
    %v7908 = vand.u32 2147483647, %v7901
    %vm7909 = vcmp.lt.f32.partialorder %v7908, 0.0004427343
    %v7910 = vsel %vm7909, %v7907, %v7904
    %v7911 = vsel %vm7898, %v7893, %v7910
    %s7912 = scalar_lea.vmem %s3, 56
    %v7913 = vld [vmem:[%s7912] sm:$0xff]
    %7915 = vrot.lane.b32.xlu0 %v7913, 4
    %v7916 = vpop.permute.xlu0 %7915
    %v7918 = vmul.f32 %v7911, %v7916
    %7920 = vrot.lane.b32.xlu0 %v7918, 124
    %v7921 = vpop.permute.xlu0 %7920
    %v7923 = vadd.f32 %v7893, %v7921
    %s7924 = scalar_lea.vmem %s19, 56
    %7925 = vst.msk [vmem:[%s7924] sm:$0xff] %vm1239, %v7923
    // Predicated region
    $region102: #{tpu_custom_call.1} parent=1 // pred_check
      _
    $region103: #{tpu_custom_call.1} parent=1 // pred_check_branch
      %7927 = sbr.rel (0) target = $region105
    $region104: #{tpu_custom_call.1} parent=1 // pred_region
      _
    $region105: #{tpu_custom_call.1} parent=1 // pred_fallthru
      _
    // Predicated region
    $region106: #{tpu_custom_call.1} parent=1 // pred_check
      _
    $region107: #{tpu_custom_call.1} parent=1 // pred_check_branch
      %7929 = sbr.rel (0) target = $region109
    $region108: #{tpu_custom_call.1} parent=1 // pred_region
      _
    $region109: #{tpu_custom_call.1} parent=1 // pred_fallthru
      _
    %7930 = vsyncpa [#allocation3], 1
    %7931 = vsyncpa [#allocation5], 1
    %7932 = vsyncpa [#allocation8], 1
    %7933 = vsyncpa [#allocation11], 1

</llo_original>
